<compile_context>
chip_gen: v6e
topology: v6e:2x2x1
jax: 0.10.0
libtpu: 0.0.40
codegen_flags: <defaults>
</compile_context>

<pallas_src>
import functools

import jax
import jax.numpy as jnp
from jax.experimental import pallas as pl
from jax.experimental.pallas import tpu as pltpu


def _leaky_relu(x, slope=0.01):
    # F.leaky_relu default negative_slope = 0.01
    return jnp.where(x > 0, x, slope * x)


def _default_vmem_limit_bytes():
    """~70% of the chip's physical VMEM; safe fallback if the query fails."""
    try:
        cap = getattr(pltpu.get_tpu_info(), "vmem_capacity_bytes", None)
        if cap:
            return int(int(cap) * 0.7)
    except Exception:
        pass
    return 48 * 1024 * 1024   # safe on v7x (64 MiB/TC), conservative on v5e/v6e


# --------------------------------------------------------------------------
# Kernels
# --------------------------------------------------------------------------
def fused_kernel(th0_ref, th1_ref, th3_ref,
                 x_ref, m_ref,
                 w1_ref, b1_ref, w2_ref, b2_ref,
                 wc0_ref, wc1_ref, wc3_ref,
                 w3_ref, b3_ref, w4_ref, b4_ref,
                 out_ref):
    """Whole BWGNN forward with M resident in VMEM (small/medium graphs).

    M is read from HBM exactly once; all three propagations reuse the
    resident bf16 copy with f32 MXU accumulation.
    """
    # node-wise MLP: h = ReLU(ReLU(x W1 + b1) W2 + b2)
    h = jnp.dot(x_ref[...], w1_ref[...],
                preferred_element_type=jnp.float32) + b1_ref[...]
    h = jnp.maximum(h, 0.0)
    h = jnp.dot(h, w2_ref[...],
                preferred_element_type=jnp.float32) + b2_ref[...]
    h = jnp.maximum(h, 0.0)

    m = m_ref[...]                                     # (Np, Np) bf16, resident
    t1 = jnp.dot(m, h.astype(jnp.bfloat16),
                 preferred_element_type=jnp.float32)   # T1 = M h
    t2 = 2.0 * jnp.dot(m, t1.astype(jnp.bfloat16),
                       preferred_element_type=jnp.float32) - h    # T2
    t3 = 2.0 * jnp.dot(m, t2.astype(jnp.bfloat16),
                       preferred_element_type=jnp.float32) - t1   # T3

    # folded Chebyshev coefficients: theta[o]*(T+1)/2 == a*T + a
    a11 = 0.5 * th1_ref[1]
    a31 = 0.5 * th3_ref[1]
    a32 = 0.5 * th3_ref[2]
    a33 = 0.5 * th3_ref[3]

    s0 = th0_ref[0] * h
    s1 = th1_ref[0] * h + a11 * t1 + a11
    s3 = th3_ref[0] * h + (a31 * t1 + a32 * t2 + a33 * t3) + (a31 + a32 + a33)

    # three DomainAdjustedChebyshevConv branches (bias=False, leaky_relu)
    h0 = _leaky_relu(jnp.dot(s0, wc0_ref[...],
                             preferred_element_type=jnp.float32))
    h1 = _leaky_relu(jnp.dot(s1, wc1_ref[...],
                             preferred_element_type=jnp.float32))
    h2 = _leaky_relu(jnp.dot(s3, wc3_ref[...],
                             preferred_element_type=jnp.float32))

    H = h.shape[1]
    # concat([h0, h1, h2], -1) @ w3 expressed as three partial matmuls
    z = (jnp.dot(h0, w3_ref[0:H, :], preferred_element_type=jnp.float32)
         + jnp.dot(h1, w3_ref[H:2 * H, :], preferred_element_type=jnp.float32)
         + jnp.dot(h2, w3_ref[2 * H:3 * H, :], preferred_element_type=jnp.float32)
         + b3_ref[...])
    z = jnp.maximum(z, 0.0)

    # w4/b4 are zero-padded to 128 lanes -> unmasked, lane-dense store
    out_ref[...] = (jnp.dot(z, w4_ref[...], preferred_element_type=jnp.float32)
                    + b4_ref[...])


def mlp_kernel(x_ref, w1_ref, b1_ref, w2_ref, b2_ref, h_f32_ref, h_bf16_ref):
    """h = ReLU(ReLU(x W1 + b1) W2 + b2), per node-row stripe."""
    h = jnp.dot(x_ref[...], w1_ref[...],
                preferred_element_type=jnp.float32) + b1_ref[...]
    h = jnp.maximum(h, 0.0)
    h = jnp.dot(h, w2_ref[...],
                preferred_element_type=jnp.float32) + b2_ref[...]
    h = jnp.maximum(h, 0.0)
    h_f32_ref[...] = h
    h_bf16_ref[...] = h.astype(jnp.bfloat16)   # fused cast for the next hop


def prop_kernel(m_ref, tcur_ref, tprev_ref, t_f32_ref, t_bf16_ref, *,
                alpha, beta):
    """T_next[stripe] = alpha * (M[stripe] @ T_cur) + beta * T_prev[stripe].

    m_ref:    (tm, Np)  bf16   streamed stripe of the scaled Laplacian
    tcur_ref: (Np, H)   bf16   resident RHS (same block every stripe)
    tprev_ref:(tm, H)   f32    previous Chebyshev term (stripe)
    NOTE(v5e): the dual f32+bf16 store is normally hidden behind the
    HBM-bound M stream; revisit if M ever becomes resident on v5e.
    """
    acc = jnp.dot(m_ref[...], tcur_ref[...],
                  preferred_element_type=jnp.float32)
    if alpha != 1.0:          # alpha/beta are static Python floats
        acc = alpha * acc
    if beta != 0.0:
        acc = acc + beta * tprev_ref[...]
    t_f32_ref[...] = acc
    t_bf16_ref[...] = acc.astype(jnp.bfloat16)


def final_kernel(th0_ref, th1_ref, th3_ref,
                 m_ref, t2b_ref, h_ref, t1_ref, t2_ref,
                 wc0_ref, wc1_ref, wc3_ref, w3_ref, b3_ref, w4_ref, b4_ref,
                 out_ref):
    """Last Chebyshev hop (T3) fused with the whole per-node epilogue."""
    h = h_ref[...]
    t1 = t1_ref[...]
    t2 = t2_ref[...]

    # T3[stripe] = 2 * M[stripe] @ T2 - T1[stripe]
    t3 = 2.0 * jnp.dot(m_ref[...], t2b_ref[...],
                       preferred_element_type=jnp.float32) - t1

    a11 = 0.5 * th1_ref[1]
    a31 = 0.5 * th3_ref[1]
    a32 = 0.5 * th3_ref[2]
    a33 = 0.5 * th3_ref[3]

    s0 = th0_ref[0] * h
    s1 = th1_ref[0] * h + a11 * t1 + a11
    s3 = th3_ref[0] * h + (a31 * t1 + a32 * t2 + a33 * t3) + (a31 + a32 + a33)

    h0 = _leaky_relu(jnp.dot(s0, wc0_ref[...],
                             preferred_element_type=jnp.float32))
    h1 = _leaky_relu(jnp.dot(s1, wc1_ref[...],
                             preferred_element_type=jnp.float32))
    h2 = _leaky_relu(jnp.dot(s3, wc3_ref[...],
                             preferred_element_type=jnp.float32))

    H = h.shape[1]
    z = (jnp.dot(h0, w3_ref[0:H, :], preferred_element_type=jnp.float32)
         + jnp.dot(h1, w3_ref[H:2 * H, :], preferred_element_type=jnp.float32)
         + jnp.dot(h2, w3_ref[2 * H:3 * H, :], preferred_element_type=jnp.float32)
         + b3_ref[...])
    z = jnp.maximum(z, 0.0)

    out_ref[...] = (jnp.dot(z, w4_ref[...], preferred_element_type=jnp.float32)
                    + b4_ref[...])


# --------------------------------------------------------------------------
# Wrappers
# --------------------------------------------------------------------------
def prepare_laplacian(M, *, pad_multiple=512):
    """Pad the dense scaled Laplacian to a stripe/lane-friendly size and cast
    to bf16.  Run ONCE outside the jitted forward (hoists the O(Np^2)
    pad+cast HBM pass out of the per-forward path).  Padded rows/cols are
    exactly zero — the forward relies on that invariant."""
    N = M.shape[0]
    Np = ((N + pad_multiple - 1) // pad_multiple) * pad_multiple
    if Np != N:
        M = jnp.pad(M, ((0, Np - N), (0, Np - N)))
    return M.astype(jnp.bfloat16)


def bwgnn_forward(x, M_bf16, params, *, tm=256, vmem_limit_bytes=None,
                  force_streaming=False):
    (w1, b1, w2, b2, th0, wc0, th1, wc1, th3, wc3, w3, b3, w4, b4) = params
    N, Fin = x.shape
    Np = M_bf16.shape[0]
    H = w2.shape[1]
    C = w4.shape[1]
    assert M_bf16.shape == (Np, Np) and M_bf16.dtype == jnp.bfloat16
    assert Np >= N and Np % 128 == 0

    if vmem_limit_bytes is None:
        vmem_limit_bytes = _default_vmem_limit_bytes()

    # pad node rows of x to match the prepared Laplacian (cheap, O(N*Fin))
    x_p = jnp.pad(x, ((0, Np - N), (0, 0))) if Np != N else x

    # lane-dense output: pad the classifier to 128 output lanes
    CP = max(128, ((C + 127) // 128) * 128)
    w4p = jnp.pad(w4, ((0, 0), (0, CP - C)))
    b4p = jnp.pad(b4, ((0, 0), (0, CP - C)))

    # thetas as flat f32 scalar tables for SMEM
    th0f = th0.reshape(-1).astype(jnp.float32)
    th1f = th1.reshape(-1).astype(jnp.float32)
    th3f = th3.reshape(-1).astype(jnp.float32)

    smem = pl.BlockSpec(memory_space=pltpu.MemorySpace.SMEM)
    rep2 = lambda i: (0, 0)     # resident block (same every grid step)
    row = lambda i: (i, 0)      # stripe i of a node-major array

    # ---------------- fused resident-M path (small / medium graphs) --------
    # Conservative VMEM estimate: M bf16 (x2 pipeline buffers), padded f32
    # logits, node features, and the (Np, H) intermediates / temporaries.
    fused_vmem = (2 * (2 * Np * Np)
                  + 2 * 4 * Np * CP
                  + 4 * Np * Fin
                  + 16 * 4 * Np * H
                  + (1 << 20))
    use_fused = (not force_streaming) and fused_vmem <= int(0.85 * vmem_limit_bytes)

    if use_fused:
        out_padded = pl.pallas_call(
            fused_kernel,
            grid=(1,),
            in_specs=[smem, smem, smem,                    # th0, th1, th3
                      pl.BlockSpec((Np, Fin), rep2),       # x
                      pl.BlockSpec((Np, Np), rep2),        # M (resident, bf16)
                      pl.BlockSpec((Fin, H), rep2), pl.BlockSpec((1, H), rep2),
                      pl.BlockSpec((H, H), rep2), pl.BlockSpec((1, H), rep2),
                      pl.BlockSpec((H, H), rep2),          # wc0
                      pl.BlockSpec((H, H), rep2),          # wc1
                      pl.BlockSpec((H, H), rep2),          # wc3
                      pl.BlockSpec((3 * H, H), rep2),      # w3
                      pl.BlockSpec((1, H), rep2),          # b3
                      pl.BlockSpec((H, CP), rep2),         # w4 (lane padded)
                      pl.BlockSpec((1, CP), rep2)],        # b4 (lane padded)
            out_specs=pl.BlockSpec((Np, CP), rep2),
            out_shape=jax.ShapeDtypeStruct((Np, CP), jnp.float32),
            compiler_params=pltpu.CompilerParams(
                dimension_semantics=("arbitrary",),
                vmem_limit_bytes=vmem_limit_bytes),
            cost_estimate=pl.CostEstimate(
                flops=2 * Np * (3 * Np * H + H * (Fin + 7 * H + CP)),
                transcendentals=0,
                bytes_accessed=2 * Np * Np + 4 * Np * (Fin + CP)),
        )(th0f, th1f, th3f, x_p, M_bf16, w1, b1, w2, b2,
          wc0, wc1, wc3, w3, b3, w4p, b4p)
        return out_padded[:N, :C]

    # ---------------- streaming path (large graphs) -------------------------
    # stripe size in {128, 256, 512}; shrink so the double-buffered (tm, Np)
    # M stripe fits the VMEM budget; prefer an even stripe count so the
    # "parallel" axis balances across v7x's two TensorCores.
    tm_eff = 512 if tm >= 512 else (256 if tm >= 256 else 128)
    while tm_eff > 128 and 2 * tm_eff * Np * 2 > int(0.5 * vmem_limit_bytes):
        tm_eff //= 2
    n_stripes = Np // tm_eff
    if n_stripes > 1 and n_stripes % 2 == 1 and tm_eff > 128:
        tm_eff //= 2
        n_stripes = Np // tm_eff

    cparams = pltpu.CompilerParams(
        dimension_semantics=("parallel",),       # independent row stripes
        vmem_limit_bytes=vmem_limit_bytes)

    # ---- stage 1: node-wise MLP ------------------------------------------
    h_f32, h_bf16 = pl.pallas_call(
        mlp_kernel,
        grid=(n_stripes,),
        in_specs=[pl.BlockSpec((tm_eff, Fin), row),
                  pl.BlockSpec((Fin, H), rep2), pl.BlockSpec((1, H), rep2),
                  pl.BlockSpec((H, H), rep2), pl.BlockSpec((1, H), rep2)],
        out_specs=[pl.BlockSpec((tm_eff, H), row),
                   pl.BlockSpec((tm_eff, H), row)],
        out_shape=[jax.ShapeDtypeStruct((Np, H), jnp.float32),
                   jax.ShapeDtypeStruct((Np, H), jnp.bfloat16)],
        compiler_params=cparams,
        cost_estimate=pl.CostEstimate(
            flops=2 * Np * H * (Fin + H), transcendentals=0,
            bytes_accessed=Np * (Fin * 4 + H * 6) + 4 * (Fin * H + H * H)),
    )(x_p, w1, b1, w2, b2)

    # ---- stages 2-3: shared Chebyshev recursion (T1, T2) ------------------
    prop_cost = pl.CostEstimate(
        flops=2 * Np * Np * H, transcendentals=0,
        bytes_accessed=Np * Np * 2 + Np * H * 12)

    def prop(alpha, beta, tcur_bf16, tprev_f32):
        return pl.pallas_call(
            functools.partial(prop_kernel, alpha=alpha, beta=beta),
            grid=(n_stripes,),
            in_specs=[pl.BlockSpec((tm_eff, Np), row),   # M stripe (streamed)
                      pl.BlockSpec((Np, H), rep2),       # T_cur (resident)
                      pl.BlockSpec((tm_eff, H), row)],   # T_prev stripe
            out_specs=[pl.BlockSpec((tm_eff, H), row),
                       pl.BlockSpec((tm_eff, H), row)],
            out_shape=[jax.ShapeDtypeStruct((Np, H), jnp.float32),
                       jax.ShapeDtypeStruct((Np, H), jnp.bfloat16)],
            compiler_params=cparams,
            cost_estimate=prop_cost,
        )(M_bf16, tcur_bf16, tprev_f32)

    t1_f32, t1_bf16 = prop(1.0, 0.0, h_bf16, h_f32)     # T1 = M h
    t2_f32, t2_bf16 = prop(2.0, -1.0, t1_bf16, h_f32)   # T2 = 2 M T1 - h

    # ---- stage 4: T3 fused with theta-combine / convs / final MLP ---------
    out_padded = pl.pallas_call(
        final_kernel,
        grid=(n_stripes,),
        in_specs=[smem, smem, smem,                        # th0, th1, th3
                  pl.BlockSpec((tm_eff, Np), row),         # M stripe (streamed)
                  pl.BlockSpec((Np, H), rep2),             # T2 (resident, bf16)
                  pl.BlockSpec((tm_eff, H), row),          # h   stripe
                  pl.BlockSpec((tm_eff, H), row),          # T1  stripe
                  pl.BlockSpec((tm_eff, H), row),          # T2  stripe
                  pl.BlockSpec((H, H), rep2),              # wc0
                  pl.BlockSpec((H, H), rep2),              # wc1
                  pl.BlockSpec((H, H), rep2),              # wc3
                  pl.BlockSpec((3 * H, H), rep2),          # w3
                  pl.BlockSpec((1, H), rep2),              # b3
                  pl.BlockSpec((H, CP), rep2),             # w4 (lane padded)
                  pl.BlockSpec((1, CP), rep2)],            # b4 (lane padded)
        out_specs=pl.BlockSpec((tm_eff, CP), row),
        out_shape=jax.ShapeDtypeStruct((Np, CP), jnp.float32),
        compiler_params=cparams,
        cost_estimate=pl.CostEstimate(
            flops=2 * Np * (Np * H + 6 * H * H + H * CP), transcendentals=0,
            bytes_accessed=Np * Np * 2 + Np * (H * 14 + CP * 4)),
    )(th0f, th1f, th3f, M_bf16, t2_bf16, h_f32, t1_f32, t2_f32,
      wc0, wc1, wc3, w3, b3, w4p, b4p)

    return out_padded[:N, :C]


# --------------------------------------------------------------------------
# Pure-JAX reference mirroring the PyTorch forward (f32)
# --------------------------------------------------------------------------
def bwgnn_reference(x, M, params):
    (w1, b1, w2, b2, th0, wc0, th1, wc1, th3, wc3, w3, b3, w4, b4) = params
    h = jnp.maximum(x @ w1 + b1, 0.0)
    h = jnp.maximum(h @ w2 + b2, 0.0)

    def Lp(v):
        return M @ v

    def conv(feat, theta, w, k):
        acc = theta[0, 0] * feat
        if k >= 1:
            tp2, tp1 = feat, Lp(feat)
            acc = acc + theta[0, 1] * (tp1 + 1.0) / 2.0
            for o in range(2, k + 1):
                tk = 2.0 * Lp(tp1) - tp2
                acc = acc + theta[0, o] * (tk + 1.0) / 2.0
                tp2, tp1 = tp1, tk
        out = acc @ w
        return jnp.where(out > 0, out, 0.01 * out)

    h0 = conv(h, th0, wc0, 0)
    h1 = conv(h, th1, wc1, 1)
    h2 = conv(h, th3, wc3, 3)
    hf = jnp.concatenate([h0, h1, h2], axis=-1)
    z = jnp.maximum(hf @ w3 + b3, 0.0)
    return z @ w4 + b4


def _xavier(key, shape):
    fan_in, fan_out = shape[0], shape[1]
    bound = (6.0 / (fan_in + fan_out)) ** 0.5
    return jax.random.uniform(key, shape, jnp.float32, -bound, bound)


if __name__ == "__main__":
    # Small synthetic problem consistent with the module.
    N, in_feats, h_feats, num_classes = 384, 16, 32, 2

    root = jax.random.PRNGKey(0)
    keys = jax.random.split(root, 16)

    # node features
    x = jax.random.normal(keys[0], (N, in_feats), jnp.float32)

    # synthetic directed graph -> dense adjacency A (A[i,j]=1 iff edge i->j)
    A = (jax.random.uniform(keys[1], (N, N)) < 0.08).astype(jnp.float32)
    in_deg = jnp.maximum(A.sum(axis=0), 1.0)              # in-degree, clamp>=1
    d_invsqrt = in_deg ** -0.5
    # scaled Laplacian applied by the DGL code: L'(x) = -D^{-1/2} A^T D^{-1/2} x
    M = -(d_invsqrt[:, None] * A.T * d_invsqrt[None, :])

    # deterministic parameter init (shapes from the module __init__)
    w1 = _xavier(keys[2], (in_feats, h_feats))
    b1 = jnp.zeros((1, h_feats), jnp.float32)
    w2 = _xavier(keys[3], (h_feats, h_feats))
    b2 = jnp.zeros((1, h_feats), jnp.float32)
    th0 = 0.1 * jax.random.normal(keys[4], (1, 1), jnp.float32)   # k=0
    wc0 = _xavier(keys[5], (h_feats, h_feats))                    # conv linear
    th1 = 0.1 * jax.random.normal(keys[6], (1, 2), jnp.float32)   # k=1
    wc1 = _xavier(keys[7], (h_feats, h_feats))
    th3 = 0.1 * jax.random.normal(keys[8], (1, 4), jnp.float32)   # k=3
    wc3 = _xavier(keys[9], (h_feats, h_feats))
    w3 = _xavier(keys[10], (3 * h_feats, h_feats))
    b3 = jnp.zeros((1, h_feats), jnp.float32)
    w4 = _xavier(keys[11], (h_feats, num_classes))
    b4 = jnp.zeros((1, num_classes), jnp.float32)

    params = (w1, b1, w2, b2, th0, wc0, th1, wc1, th3, wc3, w3, b3, w4, b4)

    # Hoisted once: pad + bf16-cast the Laplacian outside the jitted forward.
    M_bf16 = prepare_laplacian(M)

    ref = bwgnn_reference(x, M, params)

    # fused resident-M path (auto-selected for this graph size)
    fwd_fused = jax.jit(lambda xx, mm, pp: bwgnn_forward(xx, mm, pp))
    out_fused = jax.block_until_ready(fwd_fused(x, M_bf16, params))
    assert out_fused.shape == (N, num_classes)
    err_fused = float(jnp.max(jnp.abs(out_fused - ref)))
    assert err_fused < 5e-2, f"fused path mismatch: max abs err {err_fused}"

    # streaming (striped) path, exercised explicitly for coverage
    fwd_stream = jax.jit(
        lambda xx, mm, pp: bwgnn_forward(xx, mm, pp, force_streaming=True))
    out_stream = jax.block_until_ready(fwd_stream(x, M_bf16, params))
    assert out_stream.shape == (N, num_classes)
    err_stream = float(jnp.max(jnp.abs(out_stream - ref)))
    assert err_stream < 5e-2, f"streaming path mismatch: max abs err {err_stream}"

    print("KERNEL_OK")
</pallas_src>

<mosaic_0001>
module attributes {stable_mosaic.version = 11 : i64} {
  func.func @fused_kernel(%arg0: i32, %arg1: memref<1xf32, #tpu.memory_space<smem>>, %arg2: memref<2xf32, #tpu.memory_space<smem>>, %arg3: memref<4xf32, #tpu.memory_space<smem>>, %arg4: memref<512x16xf32, #tpu.memory_space<vmem>>, %arg5: memref<512x512xbf16, #tpu.memory_space<vmem>>, %arg6: memref<16x32xf32, #tpu.memory_space<vmem>>, %arg7: memref<1x32xf32, #tpu.memory_space<vmem>>, %arg8: memref<32x32xf32, #tpu.memory_space<vmem>>, %arg9: memref<1x32xf32, #tpu.memory_space<vmem>>, %arg10: memref<32x32xf32, #tpu.memory_space<vmem>>, %arg11: memref<32x32xf32, #tpu.memory_space<vmem>>, %arg12: memref<32x32xf32, #tpu.memory_space<vmem>>, %arg13: memref<96x32xf32, #tpu.memory_space<vmem>>, %arg14: memref<1x32xf32, #tpu.memory_space<vmem>>, %arg15: memref<32x128xf32, #tpu.memory_space<vmem>>, %arg16: memref<1x128xf32, #tpu.memory_space<vmem>>, %arg17: memref<512x128xf32, #tpu.memory_space<vmem>>) attributes {dimension_semantics = [#tpu.dimension_semantics<arbitrary>], iteration_bounds = array<i64: 1>, scalar_prefetch = 0 : i64, scratch_operands = 0 : i64, tpu.core_type = #tpu.core_type<tc>, window_params = [{transform_indices = @transform_0, window_bounds = array<i64: 1>}, {transform_indices = @transform_1, window_bounds = array<i64: 2>}, {transform_indices = @transform_2, window_bounds = array<i64: 4>}, {pipeline_mode = #tpu.pipeline_mode<synchronous>, transform_indices = @transform_3, window_bounds = array<i64: 512, 16>}, {pipeline_mode = #tpu.pipeline_mode<synchronous>, transform_indices = @transform_4, window_bounds = array<i64: 512, 512>}, {pipeline_mode = #tpu.pipeline_mode<synchronous>, transform_indices = @transform_5, window_bounds = array<i64: 16, 32>}, {pipeline_mode = #tpu.pipeline_mode<synchronous>, transform_indices = @transform_6, window_bounds = array<i64: 1, 32>}, {pipeline_mode = #tpu.pipeline_mode<synchronous>, transform_indices = @transform_7, window_bounds = array<i64: 32, 32>}, {pipeline_mode = #tpu.pipeline_mode<synchronous>, transform_indices = @transform_8, window_bounds = array<i64: 1, 32>}, {pipeline_mode = #tpu.pipeline_mode<synchronous>, transform_indices = @transform_9, window_bounds = array<i64: 32, 32>}, {pipeline_mode = #tpu.pipeline_mode<synchronous>, transform_indices = @transform_10, window_bounds = array<i64: 32, 32>}, {pipeline_mode = #tpu.pipeline_mode<synchronous>, transform_indices = @transform_11, window_bounds = array<i64: 32, 32>}, {pipeline_mode = #tpu.pipeline_mode<synchronous>, transform_indices = @transform_12, window_bounds = array<i64: 96, 32>}, {pipeline_mode = #tpu.pipeline_mode<synchronous>, transform_indices = @transform_13, window_bounds = array<i64: 1, 32>}, {pipeline_mode = #tpu.pipeline_mode<synchronous>, transform_indices = @transform_14, window_bounds = array<i64: 32, 128>}, {pipeline_mode = #tpu.pipeline_mode<synchronous>, transform_indices = @transform_15, window_bounds = array<i64: 1, 128>}, {pipeline_mode = #tpu.pipeline_mode<synchronous>, transform_indices = @transform_16, window_bounds = array<i64: 512, 128>}]} {
    %c0 = arith.constant 0 : index
    %c0_0 = arith.constant 0 : index
    %0 = vector.load %arg4[%c0, %c0_0] : memref<512x16xf32, #tpu.memory_space<vmem>>, vector<512x16xf32>
    %c0_1 = arith.constant 0 : index
    %c0_2 = arith.constant 0 : index
    %1 = vector.load %arg6[%c0_1, %c0_2] : memref<16x32xf32, #tpu.memory_space<vmem>>, vector<16x32xf32>
    %cst = arith.constant dense<0.000000e+00> : vector<512x32xf32>
    %2 = tpu.matmul %0, %1, %cst {dimension_numbers = #tpu.dot_dimension_numbers<[1], [0], [0], [1], [0, 0, 1, 1], [], []>} : vector<512x16xf32>, vector<16x32xf32>, vector<512x32xf32> -> vector<512x32xf32>
    %c0_3 = arith.constant 0 : index
    %c0_4 = arith.constant 0 : index
    %3 = vector.load %arg7[%c0_3, %c0_4] : memref<1x32xf32, #tpu.memory_space<vmem>>, vector<1x32xf32>
    %4 = vector.broadcast %3 : vector<1x32xf32> to vector<512x32xf32>
    %5 = arith.addf %2, %4 : vector<512x32xf32>
    %cst_5 = arith.constant 0.000000e+00 : f32
    %6 = vector.broadcast %cst_5 : f32 to vector<512x32xf32>
    %7 = arith.maximumf %5, %6 : vector<512x32xf32>
    %c0_6 = arith.constant 0 : index
    %c0_7 = arith.constant 0 : index
    %8 = vector.load %arg8[%c0_6, %c0_7] : memref<32x32xf32, #tpu.memory_space<vmem>>, vector<32x32xf32>
    %cst_8 = arith.constant dense<0.000000e+00> : vector<512x32xf32>
    %9 = tpu.matmul %7, %8, %cst_8 {dimension_numbers = #tpu.dot_dimension_numbers<[1], [0], [0], [1], [0, 0, 1, 1], [], []>} : vector<512x32xf32>, vector<32x32xf32>, vector<512x32xf32> -> vector<512x32xf32>
    %c0_9 = arith.constant 0 : index
    %c0_10 = arith.constant 0 : index
    %10 = vector.load %arg9[%c0_9, %c0_10] : memref<1x32xf32, #tpu.memory_space<vmem>>, vector<1x32xf32>
    %11 = vector.broadcast %10 : vector<1x32xf32> to vector<512x32xf32>
    %12 = arith.addf %9, %11 : vector<512x32xf32>
    %cst_11 = arith.constant 0.000000e+00 : f32
    %13 = vector.broadcast %cst_11 : f32 to vector<512x32xf32>
    %14 = arith.maximumf %12, %13 : vector<512x32xf32>
    %c0_12 = arith.constant 0 : index
    %c0_13 = arith.constant 0 : index
    %15 = vector.load %arg5[%c0_12, %c0_13] : memref<512x512xbf16, #tpu.memory_space<vmem>>, vector<512x512xbf16>
    %16 = arith.truncf %14 : vector<512x32xf32> to vector<512x32xbf16>
    %cst_14 = arith.constant dense<0.000000e+00> : vector<512x32xf32>
    %17 = tpu.matmul %15, %16, %cst_14 {dimension_numbers = #tpu.dot_dimension_numbers<[1], [0], [0], [1], [0, 0, 1, 1], [], []>} : vector<512x512xbf16>, vector<512x32xbf16>, vector<512x32xf32> -> vector<512x32xf32>
    %18 = arith.truncf %17 : vector<512x32xf32> to vector<512x32xbf16>
    %cst_15 = arith.constant dense<0.000000e+00> : vector<512x32xf32>
    %19 = tpu.matmul %15, %18, %cst_15 {dimension_numbers = #tpu.dot_dimension_numbers<[1], [0], [0], [1], [0, 0, 1, 1], [], []>} : vector<512x512xbf16>, vector<512x32xbf16>, vector<512x32xf32> -> vector<512x32xf32>
    %cst_16 = arith.constant 2.000000e+00 : f32
    %20 = vector.broadcast %cst_16 : f32 to vector<512x32xf32>
    %21 = arith.mulf %20, %19 : vector<512x32xf32>
    %22 = arith.subf %21, %14 : vector<512x32xf32>
    %23 = arith.truncf %22 : vector<512x32xf32> to vector<512x32xbf16>
    %cst_17 = arith.constant dense<0.000000e+00> : vector<512x32xf32>
    %24 = tpu.matmul %15, %23, %cst_17 {dimension_numbers = #tpu.dot_dimension_numbers<[1], [0], [0], [1], [0, 0, 1, 1], [], []>} : vector<512x512xbf16>, vector<512x32xbf16>, vector<512x32xf32> -> vector<512x32xf32>
    %cst_18 = arith.constant 2.000000e+00 : f32
    %25 = vector.broadcast %cst_18 : f32 to vector<512x32xf32>
    %26 = arith.mulf %25, %24 : vector<512x32xf32>
    %27 = arith.subf %26, %17 : vector<512x32xf32>
    %c1 = arith.constant 1 : index
    %28 = memref.load %arg2[%c1] : memref<2xf32, #tpu.memory_space<smem>>
    %cst_19 = arith.constant 5.000000e-01 : f32
    %29 = arith.mulf %cst_19, %28 : f32
    %c1_20 = arith.constant 1 : index
    %30 = memref.load %arg3[%c1_20] : memref<4xf32, #tpu.memory_space<smem>>
    %cst_21 = arith.constant 5.000000e-01 : f32
    %31 = arith.mulf %cst_21, %30 : f32
    %c2 = arith.constant 2 : index
    %32 = memref.load %arg3[%c2] : memref<4xf32, #tpu.memory_space<smem>>
    %cst_22 = arith.constant 5.000000e-01 : f32
    %33 = arith.mulf %cst_22, %32 : f32
    %c3 = arith.constant 3 : index
    %34 = memref.load %arg3[%c3] : memref<4xf32, #tpu.memory_space<smem>>
    %cst_23 = arith.constant 5.000000e-01 : f32
    %35 = arith.mulf %cst_23, %34 : f32
    %c0_24 = arith.constant 0 : index
    %36 = memref.load %arg1[%c0_24] : memref<1xf32, #tpu.memory_space<smem>>
    %37 = vector.broadcast %36 : f32 to vector<512x32xf32>
    %38 = arith.mulf %37, %14 : vector<512x32xf32>
    %c0_25 = arith.constant 0 : index
    %39 = memref.load %arg2[%c0_25] : memref<2xf32, #tpu.memory_space<smem>>
    %40 = vector.broadcast %39 : f32 to vector<512x32xf32>
    %41 = arith.mulf %40, %14 : vector<512x32xf32>
    %42 = vector.broadcast %29 : f32 to vector<512x32xf32>
    %43 = arith.mulf %42, %17 : vector<512x32xf32>
    %44 = arith.addf %41, %43 : vector<512x32xf32>
    %45 = vector.broadcast %29 : f32 to vector<512x32xf32>
    %46 = arith.addf %44, %45 : vector<512x32xf32>
    %c0_26 = arith.constant 0 : index
    %47 = memref.load %arg3[%c0_26] : memref<4xf32, #tpu.memory_space<smem>>
    %48 = vector.broadcast %47 : f32 to vector<512x32xf32>
    %49 = arith.mulf %48, %14 : vector<512x32xf32>
    %50 = vector.broadcast %31 : f32 to vector<512x32xf32>
    %51 = arith.mulf %50, %17 : vector<512x32xf32>
    %52 = vector.broadcast %33 : f32 to vector<512x32xf32>
    %53 = arith.mulf %52, %22 : vector<512x32xf32>
    %54 = arith.addf %51, %53 : vector<512x32xf32>
    %55 = vector.broadcast %35 : f32 to vector<512x32xf32>
    %56 = arith.mulf %55, %27 : vector<512x32xf32>
    %57 = arith.addf %54, %56 : vector<512x32xf32>
    %58 = arith.addf %49, %57 : vector<512x32xf32>
    %59 = arith.addf %31, %33 : f32
    %60 = arith.addf %59, %35 : f32
    %61 = vector.broadcast %60 : f32 to vector<512x32xf32>
    %62 = arith.addf %58, %61 : vector<512x32xf32>
    %c0_27 = arith.constant 0 : index
    %c0_28 = arith.constant 0 : index
    %63 = vector.load %arg10[%c0_27, %c0_28] : memref<32x32xf32, #tpu.memory_space<vmem>>, vector<32x32xf32>
    %cst_29 = arith.constant dense<0.000000e+00> : vector<512x32xf32>
    %64 = tpu.matmul %38, %63, %cst_29 {dimension_numbers = #tpu.dot_dimension_numbers<[1], [0], [0], [1], [0, 0, 1, 1], [], []>} : vector<512x32xf32>, vector<32x32xf32>, vector<512x32xf32> -> vector<512x32xf32>
    %cst_30 = arith.constant 0.000000e+00 : f32
    %65 = vector.broadcast %cst_30 : f32 to vector<512x32xf32>
    %66 = arith.cmpf ogt, %64, %65 : vector<512x32xf32>
    %cst_31 = arith.constant 0.00999999977 : f32
    %67 = vector.broadcast %cst_31 : f32 to vector<512x32xf32>
    %68 = arith.mulf %67, %64 : vector<512x32xf32>
    %69 = arith.select %66, %64, %68 : vector<512x32xi1>, vector<512x32xf32>
    %c0_32 = arith.constant 0 : index
    %c0_33 = arith.constant 0 : index
    %70 = vector.load %arg11[%c0_32, %c0_33] : memref<32x32xf32, #tpu.memory_space<vmem>>, vector<32x32xf32>
    %cst_34 = arith.constant dense<0.000000e+00> : vector<512x32xf32>
    %71 = tpu.matmul %46, %70, %cst_34 {dimension_numbers = #tpu.dot_dimension_numbers<[1], [0], [0], [1], [0, 0, 1, 1], [], []>} : vector<512x32xf32>, vector<32x32xf32>, vector<512x32xf32> -> vector<512x32xf32>
    %cst_35 = arith.constant 0.000000e+00 : f32
    %72 = vector.broadcast %cst_35 : f32 to vector<512x32xf32>
    %73 = arith.cmpf ogt, %71, %72 : vector<512x32xf32>
    %cst_36 = arith.constant 0.00999999977 : f32
    %74 = vector.broadcast %cst_36 : f32 to vector<512x32xf32>
    %75 = arith.mulf %74, %71 : vector<512x32xf32>
    %76 = arith.select %73, %71, %75 : vector<512x32xi1>, vector<512x32xf32>
    %c0_37 = arith.constant 0 : index
    %c0_38 = arith.constant 0 : index
    %77 = vector.load %arg12[%c0_37, %c0_38] : memref<32x32xf32, #tpu.memory_space<vmem>>, vector<32x32xf32>
    %cst_39 = arith.constant dense<0.000000e+00> : vector<512x32xf32>
    %78 = tpu.matmul %62, %77, %cst_39 {dimension_numbers = #tpu.dot_dimension_numbers<[1], [0], [0], [1], [0, 0, 1, 1], [], []>} : vector<512x32xf32>, vector<32x32xf32>, vector<512x32xf32> -> vector<512x32xf32>
    %cst_40 = arith.constant 0.000000e+00 : f32
    %79 = vector.broadcast %cst_40 : f32 to vector<512x32xf32>
    %80 = arith.cmpf ogt, %78, %79 : vector<512x32xf32>
    %cst_41 = arith.constant 0.00999999977 : f32
    %81 = vector.broadcast %cst_41 : f32 to vector<512x32xf32>
    %82 = arith.mulf %81, %78 : vector<512x32xf32>
    %83 = arith.select %80, %78, %82 : vector<512x32xi1>, vector<512x32xf32>
    %c0_42 = arith.constant 0 : index
    %c0_43 = arith.constant 0 : index
    %84 = vector.load %arg13[%c0_42, %c0_43] : memref<96x32xf32, #tpu.memory_space<vmem>>, vector<32x32xf32>
    %cst_44 = arith.constant dense<0.000000e+00> : vector<512x32xf32>
    %85 = tpu.matmul %69, %84, %cst_44 {dimension_numbers = #tpu.dot_dimension_numbers<[1], [0], [0], [1], [0, 0, 1, 1], [], []>} : vector<512x32xf32>, vector<32x32xf32>, vector<512x32xf32> -> vector<512x32xf32>
    %c32 = arith.constant 32 : index
    %c0_45 = arith.constant 0 : index
    %86 = vector.load %arg13[%c32, %c0_45] : memref<96x32xf32, #tpu.memory_space<vmem>>, vector<32x32xf32>
    %cst_46 = arith.constant dense<0.000000e+00> : vector<512x32xf32>
    %87 = tpu.matmul %76, %86, %cst_46 {dimension_numbers = #tpu.dot_dimension_numbers<[1], [0], [0], [1], [0, 0, 1, 1], [], []>} : vector<512x32xf32>, vector<32x32xf32>, vector<512x32xf32> -> vector<512x32xf32>
    %88 = arith.addf %85, %87 : vector<512x32xf32>
    %c64 = arith.constant 64 : index
    %c0_47 = arith.constant 0 : index
    %89 = vector.load %arg13[%c64, %c0_47] : memref<96x32xf32, #tpu.memory_space<vmem>>, vector<32x32xf32>
    %cst_48 = arith.constant dense<0.000000e+00> : vector<512x32xf32>
    %90 = tpu.matmul %83, %89, %cst_48 {dimension_numbers = #tpu.dot_dimension_numbers<[1], [0], [0], [1], [0, 0, 1, 1], [], []>} : vector<512x32xf32>, vector<32x32xf32>, vector<512x32xf32> -> vector<512x32xf32>
    %91 = arith.addf %88, %90 : vector<512x32xf32>
    %c0_49 = arith.constant 0 : index
    %c0_50 = arith.constant 0 : index
    %92 = vector.load %arg14[%c0_49, %c0_50] : memref<1x32xf32, #tpu.memory_space<vmem>>, vector<1x32xf32>
    %93 = vector.broadcast %92 : vector<1x32xf32> to vector<512x32xf32>
    %94 = arith.addf %91, %93 : vector<512x32xf32>
    %cst_51 = arith.constant 0.000000e+00 : f32
    %95 = vector.broadcast %cst_51 : f32 to vector<512x32xf32>
    %96 = arith.maximumf %94, %95 : vector<512x32xf32>
    %c0_52 = arith.constant 0 : index
    %c0_53 = arith.constant 0 : index
    %97 = vector.load %arg15[%c0_52, %c0_53] : memref<32x128xf32, #tpu.memory_space<vmem>>, vector<32x128xf32>
    %cst_54 = arith.constant dense<0.000000e+00> : vector<512x128xf32>
    %98 = tpu.matmul %96, %97, %cst_54 {dimension_numbers = #tpu.dot_dimension_numbers<[1], [0], [0], [1], [0, 0, 1, 1], [], []>} : vector<512x32xf32>, vector<32x128xf32>, vector<512x128xf32> -> vector<512x128xf32>
    %c0_55 = arith.constant 0 : index
    %c0_56 = arith.constant 0 : index
    %99 = vector.load %arg16[%c0_55, %c0_56] : memref<1x128xf32, #tpu.memory_space<vmem>>, vector<1x128xf32>
    %100 = vector.broadcast %99 : vector<1x128xf32> to vector<512x128xf32>
    %101 = arith.addf %98, %100 : vector<512x128xf32>
    %c0_57 = arith.constant 0 : index
    %c0_58 = arith.constant 0 : index
    %102 = vector.load %arg17[%c0_57, %c0_58] : memref<512x128xf32, #tpu.memory_space<vmem>>, vector<512x128xf32>
    tpu.vector_store %arg17[%c0_57, %c0_58], %101 {strides = array<i32>} : memref<512x128xf32, #tpu.memory_space<vmem>>, vector<512x128xf32>,
    return
  }
  func.func @transform_0(%arg0: i32) -> i32 {
    %c0_i32 = arith.constant 0 : i32
    %c0_i32_0 = arith.constant 0 : i32
    return %c0_i32 : i32
  }
  func.func @transform_1(%arg0: i32) -> i32 {
    %c0_i32 = arith.constant 0 : i32
    %c0_i32_0 = arith.constant 0 : i32
    return %c0_i32 : i32
  }
  func.func @transform_2(%arg0: i32) -> i32 {
    %c0_i32 = arith.constant 0 : i32
    %c0_i32_0 = arith.constant 0 : i32
    return %c0_i32 : i32
  }
  func.func @transform_3(%arg0: i32) -> (i32, i32) {
    %c0_i32 = arith.constant 0 : i32
    %c0_i32_0 = arith.constant 0 : i32
    %c0_i32_1 = arith.constant 0 : i32
    return %c0_i32, %c0_i32_0 : i32, i32
  }
  func.func @transform_4(%arg0: i32) -> (i32, i32) {
    %c0_i32 = arith.constant 0 : i32
    %c0_i32_0 = arith.constant 0 : i32
    %c0_i32_1 = arith.constant 0 : i32
    return %c0_i32, %c0_i32_0 : i32, i32
  }
  func.func @transform_5(%arg0: i32) -> (i32, i32) {
    %c0_i32 = arith.constant 0 : i32
    %c0_i32_0 = arith.constant 0 : i32
    %c0_i32_1 = arith.constant 0 : i32
    return %c0_i32, %c0_i32_0 : i32, i32
  }
  func.func @transform_6(%arg0: i32) -> (i32, i32) {
    %c0_i32 = arith.constant 0 : i32
    %c0_i32_0 = arith.constant 0 : i32
    %c0_i32_1 = arith.constant 0 : i32
    return %c0_i32, %c0_i32_0 : i32, i32
  }
  func.func @transform_7(%arg0: i32) -> (i32, i32) {
    %c0_i32 = arith.constant 0 : i32
    %c0_i32_0 = arith.constant 0 : i32
    %c0_i32_1 = arith.constant 0 : i32
    return %c0_i32, %c0_i32_0 : i32, i32
  }
  func.func @transform_8(%arg0: i32) -> (i32, i32) {
    %c0_i32 = arith.constant 0 : i32
    %c0_i32_0 = arith.constant 0 : i32
    %c0_i32_1 = arith.constant 0 : i32
    return %c0_i32, %c0_i32_0 : i32, i32
  }
  func.func @transform_9(%arg0: i32) -> (i32, i32) {
    %c0_i32 = arith.constant 0 : i32
    %c0_i32_0 = arith.constant 0 : i32
    %c0_i32_1 = arith.constant 0 : i32
    return %c0_i32, %c0_i32_0 : i32, i32
  }
  func.func @transform_10(%arg0: i32) -> (i32, i32) {
    %c0_i32 = arith.constant 0 : i32
    %c0_i32_0 = arith.constant 0 : i32
    %c0_i32_1 = arith.constant 0 : i32
    return %c0_i32, %c0_i32_0 : i32, i32
  }
  func.func @transform_11(%arg0: i32) -> (i32, i32) {
    %c0_i32 = arith.constant 0 : i32
    %c0_i32_0 = arith.constant 0 : i32
    %c0_i32_1 = arith.constant 0 : i32
    return %c0_i32, %c0_i32_0 : i32, i32
  }
  func.func @transform_12(%arg0: i32) -> (i32, i32) {
    %c0_i32 = arith.constant 0 : i32
    %c0_i32_0 = arith.constant 0 : i32
    %c0_i32_1 = arith.constant 0 : i32
    return %c0_i32, %c0_i32_0 : i32, i32
  }
  func.func @transform_13(%arg0: i32) -> (i32, i32) {
    %c0_i32 = arith.constant 0 : i32
    %c0_i32_0 = arith.constant 0 : i32
    %c0_i32_1 = arith.constant 0 : i32
    return %c0_i32, %c0_i32_0 : i32, i32
  }
  func.func @transform_14(%arg0: i32) -> (i32, i32) {
    %c0_i32 = arith.constant 0 : i32
    %c0_i32_0 = arith.constant 0 : i32
    %c0_i32_1 = arith.constant 0 : i32
    return %c0_i32, %c0_i32_0 : i32, i32
  }
  func.func @transform_15(%arg0: i32) -> (i32, i32) {
    %c0_i32 = arith.constant 0 : i32
    %c0_i32_0 = arith.constant 0 : i32
    %c0_i32_1 = arith.constant 0 : i32
    return %c0_i32, %c0_i32_0 : i32, i32
  }
  func.func @transform_16(%arg0: i32) -> (i32, i32) {
    %c0_i32 = arith.constant 0 : i32
    %c0_i32_0 = arith.constant 0 : i32
    %c0_i32_1 = arith.constant 0 : i32
    return %c0_i32, %c0_i32_0 : i32, i32
  }
}

</mosaic_0001>

<llo_original>
// kernel: _lambda_.1
$region0: #{_lambda_.1}
  #allocation0 [shape = 'u32[]', space=smem, size = 0x4, offset = 0x4, fixed_abs, tag = 'smem constant byte address 0x4 - core index']
  #allocation1 [shape = 'u32[144,128]{1,0:T(1,128)}', space=vmem, size = 0x12000, scoped, tag = 'internal scratch']
  #allocation2 [shape = 'f32[1]{0:T(128)S(6)}', space=smem, size = 0x200, scoped, tag = 'scoped memory for _lambda_.1']
  %s0 = inlined_call_operand.<no memory space> [shape: f32[1], index: 0, kind: input, shape index: {}]
  %s1 = inlined_call_operand.vmem [shape: f32[2], index: 1, kind: input, shape index: {}]
  %s2 = inlined_call_operand.vmem [shape: f32[4], index: 2, kind: input, shape index: {}]
  %s3 = inlined_call_operand.vmem [shape: f32[512,16], index: 3, kind: input, shape index: {}]
  %s4 = inlined_call_operand.vmem [shape: bf16[512,512], index: 4, kind: input, shape index: {}]
  %s5 = inlined_call_operand.vmem [shape: f32[16,32], index: 5, kind: input, shape index: {}]
  %s6 = inlined_call_operand.vmem [shape: f32[1,32], index: 6, kind: input, shape index: {}]
  %s7 = inlined_call_operand.vmem [shape: f32[32,32], index: 7, kind: input, shape index: {}]
  %s8 = inlined_call_operand.vmem [shape: f32[1,32], index: 8, kind: input, shape index: {}]
  %s9 = inlined_call_operand.vmem [shape: f32[32,32], index: 9, kind: input, shape index: {}]
  %s10 = inlined_call_operand.vmem [shape: f32[32,32], index: 10, kind: input, shape index: {}]
  %s11 = inlined_call_operand.vmem [shape: f32[32,32], index: 11, kind: input, shape index: {}]
  %s12 = inlined_call_operand.vmem [shape: f32[96,32], index: 12, kind: input, shape index: {}]
  %s13 = inlined_call_operand.vmem [shape: f32[1,32], index: 13, kind: input, shape index: {}]
  %s14 = inlined_call_operand.vmem [shape: f32[32,128], index: 14, kind: input, shape index: {}]
  %s15 = inlined_call_operand.vmem [shape: f32[1,128], index: 15, kind: input, shape index: {}]
  %s16 = inlined_call_operand.vmem [shape: f32[512,128], index: 16, kind: output, shape index: {}]
  %s17 = sld [smem:[#allocation0]]
  $region82: #{_lambda_.1} parent=0
    _
  %s19 = ssub.s32 1, %s17
  %s20 = scalar_select 0, %s19, %s17
  %21 = sst [smem:[#allocation2]] %s0
  $region1: #{_lambda_.1} parent=0
    #allocation3 [shape = 'u8[512]{0}', space=smem, size = 0x200, scoped, tag = 'input window, operand 1, single buffered']
    #allocation4 [shape = 's32[1]{0}', space=sflag, size = 0x4, scoped, tag = 'scoped memory for _lambda_.1']
    #allocation5 [shape = 'u8[512]{0}', space=smem, size = 0x200, scoped, tag = 'input window, operand 2, single buffered']
    #allocation6 [shape = 's32[1]{0}', space=sflag, size = 0x4, scoped, tag = 'scoped memory for _lambda_.1']
    %22 = vsyncpa [#allocation4], 0
    %23 = vsyncpa [#allocation6], 0
    // Predicated region
    $region2: #{_lambda_.1} parent=1 // pred_check
      _
    $region3: #{_lambda_.1} parent=1 // pred_check_branch
      %25 = sbr.rel (0) target = $region5
    $region4: #{_lambda_.1} parent=1 // pred_region
      _
    $region5: #{_lambda_.1} parent=1 // pred_fallthru
      _
    // Predicated region
    $region6: #{_lambda_.1} parent=1 // pred_check
      _
    $region7: #{_lambda_.1} parent=1 // pred_check_branch
      %27 = sbr.rel (0) target = $region9
    $region8: #{_lambda_.1} parent=1 // pred_region
      %s29 = ssub.s32 16, 16
      %30 = vsyncadd [#allocation4], %s29
      %s32 = sshll.u32 %s1, 4
      %s33 = int_to_ptr.vmem [resolvable:$true] %s32
      %35 = dma.vmem_to_smem %s33, 16, [#allocation3], [#allocation4]
    $region9: #{_lambda_.1} parent=1 // pred_fallthru
      _
    // Predicated region
    $region10: #{_lambda_.1} parent=1 // pred_check
      _
    $region11: #{_lambda_.1} parent=1 // pred_check_branch
      %37 = sbr.rel (0) target = $region13
    $region12: #{_lambda_.1} parent=1 // pred_region
      %s39 = ssub.s32 16, 16
      %40 = vsyncadd [#allocation6], %s39
      %s42 = sshll.u32 %s2, 4
      %s43 = int_to_ptr.vmem [resolvable:$true] %s42
      %45 = dma.vmem_to_smem %s43, 16, [#allocation5], [#allocation6]
    $region13: #{_lambda_.1} parent=1 // pred_fallthru
      _
    // Predicated region
    $region14: #{_lambda_.1} parent=1 // pred_check
      _
    $region15: #{_lambda_.1} parent=1 // pred_check_branch
      %47 = sbr.rel (0) target = $region17
    $region16: #{_lambda_.1} parent=1 // pred_region
      _
    $region17: #{_lambda_.1} parent=1 // pred_fallthru
      _
    // Predicated region
    $region18: #{_lambda_.1} parent=1 // pred_check
      _
    $region19: #{_lambda_.1} parent=1 // pred_check_branch
      %49 = sbr.rel (0) target = $region21
    $region20: #{_lambda_.1} parent=1 // pred_region
      _
    $region21: #{_lambda_.1} parent=1 // pred_fallthru
      _
    // Predicated region
    $region22: #{_lambda_.1} parent=1 // pred_check
      _
    $region23: #{_lambda_.1} parent=1 // pred_check_branch
      %51 = sbr.rel (0) target = $region25
    $region24: #{_lambda_.1} parent=1 // pred_region
      _
    $region25: #{_lambda_.1} parent=1 // pred_fallthru
      _
    // Predicated region
    $region26: #{_lambda_.1} parent=1 // pred_check
      _
    $region27: #{_lambda_.1} parent=1 // pred_check_branch
      %53 = sbr.rel (0) target = $region29
    $region28: #{_lambda_.1} parent=1 // pred_region
      _
    $region29: #{_lambda_.1} parent=1 // pred_fallthru
      _
    // Predicated region
    $region30: #{_lambda_.1} parent=1 // pred_check
      _
    $region31: #{_lambda_.1} parent=1 // pred_check_branch
      %55 = sbr.rel (0) target = $region33
    $region32: #{_lambda_.1} parent=1 // pred_region
      _
    $region33: #{_lambda_.1} parent=1 // pred_fallthru
      _
    // Predicated region
    $region34: #{_lambda_.1} parent=1 // pred_check
      _
    $region35: #{_lambda_.1} parent=1 // pred_check_branch
      %57 = sbr.rel (0) target = $region37
    $region36: #{_lambda_.1} parent=1 // pred_region
      _
    $region37: #{_lambda_.1} parent=1 // pred_fallthru
      _
    // Predicated region
    $region38: #{_lambda_.1} parent=1 // pred_check
      _
    $region39: #{_lambda_.1} parent=1 // pred_check_branch
      %59 = sbr.rel (0) target = $region41
    $region40: #{_lambda_.1} parent=1 // pred_region
      _
    $region41: #{_lambda_.1} parent=1 // pred_fallthru
      _
    // Predicated region
    $region42: #{_lambda_.1} parent=1 // pred_check
      _
    $region43: #{_lambda_.1} parent=1 // pred_check_branch
      %61 = sbr.rel (0) target = $region45
    $region44: #{_lambda_.1} parent=1 // pred_region
      _
    $region45: #{_lambda_.1} parent=1 // pred_fallthru
      _
    // Predicated region
    $region46: #{_lambda_.1} parent=1 // pred_check
      _
    $region47: #{_lambda_.1} parent=1 // pred_check_branch
      %63 = sbr.rel (0) target = $region49
    $region48: #{_lambda_.1} parent=1 // pred_region
      _
    $region49: #{_lambda_.1} parent=1 // pred_fallthru
      _
    // Predicated region
    $region50: #{_lambda_.1} parent=1 // pred_check
      _
    $region51: #{_lambda_.1} parent=1 // pred_check_branch
      %65 = sbr.rel (0) target = $region53
    $region52: #{_lambda_.1} parent=1 // pred_region
      _
    $region53: #{_lambda_.1} parent=1 // pred_fallthru
      _
    // Predicated region
    $region54: #{_lambda_.1} parent=1 // pred_check
      _
    $region55: #{_lambda_.1} parent=1 // pred_check_branch
      %67 = sbr.rel (0) target = $region57
    $region56: #{_lambda_.1} parent=1 // pred_region
      _
    $region57: #{_lambda_.1} parent=1 // pred_fallthru
      _
    // Predicated region
    $region58: #{_lambda_.1} parent=1 // pred_check
      _
    $region59: #{_lambda_.1} parent=1 // pred_check_branch
      %69 = sbr.rel (0) target = $region61
    $region60: #{_lambda_.1} parent=1 // pred_region
      _
    $region61: #{_lambda_.1} parent=1 // pred_fallthru
      _
    // Predicated region
    $region62: #{_lambda_.1} parent=1 // pred_check
      _
    $region63: #{_lambda_.1} parent=1 // pred_check_branch
      %71 = sbr.rel (0) target = $region65
    $region64: #{_lambda_.1} parent=1 // pred_region
      _
    $region65: #{_lambda_.1} parent=1 // pred_fallthru
      _
    // Predicated region
    $region66: #{_lambda_.1} parent=1 // pred_check
      _
    $region67: #{_lambda_.1} parent=1 // pred_check_branch
      %73 = sbr.rel (0) target = $region69
    $region68: #{_lambda_.1} parent=1 // pred_region
      %74 = dma.done [#allocation4], 16
    $region69: #{_lambda_.1} parent=1 // pred_fallthru
      _
    // Predicated region
    $region70: #{_lambda_.1} parent=1 // pred_check
      _
    $region71: #{_lambda_.1} parent=1 // pred_check_branch
      %76 = sbr.rel (0) target = $region73
    $region72: #{_lambda_.1} parent=1 // pred_region
      %77 = dma.done [#allocation6], 16
    $region73: #{_lambda_.1} parent=1 // pred_fallthru
      _
    %78 = sfence
    %v80 = vld [vmem:[%s3] sm:$0xff]
    %v81 = vld [vmem:[%s3 + $0x8] sm:$0xff]
    %v82 = vld [vmem:[%s3 + $0x10] sm:$0xff]
    %v83 = vld [vmem:[%s3 + $0x18] sm:$0xff]
    %v84 = vld [vmem:[%s3 + $0x20] sm:$0xff]
    %v85 = vld [vmem:[%s3 + $0x28] sm:$0xff]
    %v86 = vld [vmem:[%s3 + $0x30] sm:$0xff]
    %v87 = vld [vmem:[%s3 + $0x38] sm:$0xff]
    %v88 = vld [vmem:[%s3 + $0x40] sm:$0xff]
    %v89 = vld [vmem:[%s3 + $0x48] sm:$0xff]
    %v90 = vld [vmem:[%s3 + $0x50] sm:$0xff]
    %v91 = vld [vmem:[%s3 + $0x58] sm:$0xff]
    %v92 = vld [vmem:[%s3 + $0x60] sm:$0xff]
    %v93 = vld [vmem:[%s3 + $0x68] sm:$0xff]
    %v94 = vld [vmem:[%s3 + $0x70] sm:$0xff]
    %v95 = vld [vmem:[%s3 + $0x78] sm:$0xff]
    %v96 = vld [vmem:[%s3 + $0x80] sm:$0xff]
    %v97 = vld [vmem:[%s3 + $0x88] sm:$0xff]
    %v98 = vld [vmem:[%s3 + $0x90] sm:$0xff]
    %v99 = vld [vmem:[%s3 + $0x98] sm:$0xff]
    %v100 = vld [vmem:[%s3 + $0xa0] sm:$0xff]
    %v101 = vld [vmem:[%s3 + $0xa8] sm:$0xff]
    %v102 = vld [vmem:[%s3 + $0xb0] sm:$0xff]
    %v103 = vld [vmem:[%s3 + $0xb8] sm:$0xff]
    %v104 = vld [vmem:[%s3 + $0xc0] sm:$0xff]
    %v105 = vld [vmem:[%s3 + $0xc8] sm:$0xff]
    %v106 = vld [vmem:[%s3 + $0xd0] sm:$0xff]
    %v107 = vld [vmem:[%s3 + $0xd8] sm:$0xff]
    %v108 = vld [vmem:[%s3 + $0xe0] sm:$0xff]
    %v109 = vld [vmem:[%s3 + $0xe8] sm:$0xff]
    %v110 = vld [vmem:[%s3 + $0xf0] sm:$0xff]
    %v111 = vld [vmem:[%s3 + $0xf8] sm:$0xff]
    %v112 = vld [vmem:[%s3 + $0x100] sm:$0xff]
    %v113 = vld [vmem:[%s3 + $0x108] sm:$0xff]
    %v114 = vld [vmem:[%s3 + $0x110] sm:$0xff]
    %v115 = vld [vmem:[%s3 + $0x118] sm:$0xff]
    %v116 = vld [vmem:[%s3 + $0x120] sm:$0xff]
    %v117 = vld [vmem:[%s3 + $0x128] sm:$0xff]
    %v118 = vld [vmem:[%s3 + $0x130] sm:$0xff]
    %v119 = vld [vmem:[%s3 + $0x138] sm:$0xff]
    %v120 = vld [vmem:[%s3 + $0x140] sm:$0xff]
    %v121 = vld [vmem:[%s3 + $0x148] sm:$0xff]
    %v122 = vld [vmem:[%s3 + $0x150] sm:$0xff]
    %v123 = vld [vmem:[%s3 + $0x158] sm:$0xff]
    %v124 = vld [vmem:[%s3 + $0x160] sm:$0xff]
    %v125 = vld [vmem:[%s3 + $0x168] sm:$0xff]
    %v126 = vld [vmem:[%s3 + $0x170] sm:$0xff]
    %v127 = vld [vmem:[%s3 + $0x178] sm:$0xff]
    %v128 = vld [vmem:[%s3 + $0x180] sm:$0xff]
    %v129 = vld [vmem:[%s3 + $0x188] sm:$0xff]
    %v130 = vld [vmem:[%s3 + $0x190] sm:$0xff]
    %v131 = vld [vmem:[%s3 + $0x198] sm:$0xff]
    %v132 = vld [vmem:[%s3 + $0x1a0] sm:$0xff]
    %v133 = vld [vmem:[%s3 + $0x1a8] sm:$0xff]
    %v134 = vld [vmem:[%s3 + $0x1b0] sm:$0xff]
    %v135 = vld [vmem:[%s3 + $0x1b8] sm:$0xff]
    %v136 = vld [vmem:[%s3 + $0x1c0] sm:$0xff]
    %v137 = vld [vmem:[%s3 + $0x1c8] sm:$0xff]
    %v138 = vld [vmem:[%s3 + $0x1d0] sm:$0xff]
    %v139 = vld [vmem:[%s3 + $0x1d8] sm:$0xff]
    %v140 = vld [vmem:[%s3 + $0x1e0] sm:$0xff]
    %v141 = vld [vmem:[%s3 + $0x1e8] sm:$0xff]
    %v142 = vld [vmem:[%s3 + $0x1f0] sm:$0xff]
    %v143 = vld [vmem:[%s3 + $0x1f8] sm:$0xff]
    %v144 = vld [vmem:[%s5] sm:$0xff]
    %v145 = vld [vmem:[%s5 + $0x8] sm:$0xff]
    %v146 = vld [vmem:[%s6] sm:$0x1]
    %v148 = vlaneseq
    %v149 = vshrl.u32 %v148, 7
    %v150 = vsub.s32 0, %v149
    %v151 = vrot.slane %v146, %v150
    %vm153 = vcmask 130048
    %v155 = vsel %vm153, %v80, 0
    %v158 = vsel %vm153, %v81, 0
    %v161 = vsel %vm153, %v82, 0
    %v164 = vsel %vm153, %v83, 0
    %v167 = vsel %vm153, %v84, 0
    %v170 = vsel %vm153, %v85, 0
    %v173 = vsel %vm153, %v86, 0
    %v176 = vsel %vm153, %v87, 0
    %v179 = vsel %vm153, %v88, 0
    %v182 = vsel %vm153, %v89, 0
    %v185 = vsel %vm153, %v90, 0
    %v188 = vsel %vm153, %v91, 0
    %v191 = vsel %vm153, %v92, 0
    %v194 = vsel %vm153, %v93, 0
    %v197 = vsel %vm153, %v94, 0
    %v200 = vsel %vm153, %v95, 0
    %v203 = vsel %vm153, %v96, 0
    %v206 = vsel %vm153, %v97, 0
    %v209 = vsel %vm153, %v98, 0
    %v212 = vsel %vm153, %v99, 0
    %v215 = vsel %vm153, %v100, 0
    %v218 = vsel %vm153, %v101, 0
    %v221 = vsel %vm153, %v102, 0
    %v224 = vsel %vm153, %v103, 0
    %v227 = vsel %vm153, %v104, 0
    %v230 = vsel %vm153, %v105, 0
    %v233 = vsel %vm153, %v106, 0
    %v236 = vsel %vm153, %v107, 0
    %v239 = vsel %vm153, %v108, 0
    %v242 = vsel %vm153, %v109, 0
    %v245 = vsel %vm153, %v110, 0
    %v248 = vsel %vm153, %v111, 0
    %v251 = vsel %vm153, %v112, 0
    %v254 = vsel %vm153, %v113, 0
    %v257 = vsel %vm153, %v114, 0
    %v260 = vsel %vm153, %v115, 0
    %v263 = vsel %vm153, %v116, 0
    %v266 = vsel %vm153, %v117, 0
    %v269 = vsel %vm153, %v118, 0
    %v272 = vsel %vm153, %v119, 0
    %v275 = vsel %vm153, %v120, 0
    %v278 = vsel %vm153, %v121, 0
    %v281 = vsel %vm153, %v122, 0
    %v284 = vsel %vm153, %v123, 0
    %v287 = vsel %vm153, %v124, 0
    %v290 = vsel %vm153, %v125, 0
    %v293 = vsel %vm153, %v126, 0
    %v296 = vsel %vm153, %v127, 0
    %v299 = vsel %vm153, %v128, 0
    %v302 = vsel %vm153, %v129, 0
    %v305 = vsel %vm153, %v130, 0
    %v308 = vsel %vm153, %v131, 0
    %v311 = vsel %vm153, %v132, 0
    %v314 = vsel %vm153, %v133, 0
    %v317 = vsel %vm153, %v134, 0
    %v320 = vsel %vm153, %v135, 0
    %v323 = vsel %vm153, %v136, 0
    %v326 = vsel %vm153, %v137, 0
    %v329 = vsel %vm153, %v138, 0
    %v332 = vsel %vm153, %v139, 0
    %v335 = vsel %vm153, %v140, 0
    %v338 = vsel %vm153, %v141, 0
    %v341 = vsel %vm153, %v142, 0
    %v344 = vsel %vm153, %v143, 0
    %346 = vmatprep.subr.mxu0 0.0
    %347 = vmatpush1.msra.mxu0 0.0
    %348 = vmatprep.subr.mxu0 0.0
    %349 = vmatpush1.msra.mxu0 0.0
    %350 = vmatprep.subr.mxu0 0.0
    %351 = vmatpush1.msra.mxu0 0.0
    %352 = vmatprep.subr.mxu0 0.0
    %353 = vmatpush1.msra.mxu0 0.0
    %354 = vmatprep.subr.mxu0 0.0
    %355 = vmatpush1.msra.mxu0 0.0
    %356 = vmatprep.subr.mxu0 0.0
    %357 = vmatpush1.msra.mxu0 0.0
    %358 = vmatprep.subr.mxu0 0.0
    %359 = vmatpush1.msra.mxu0 0.0
    %360 = vmatprep.subr.mxu0 0.0
    %361 = vmatpush1.msra.mxu0 0.0
    %362 = vmatprep.subr.mxu0 0.0
    %363 = vmatpush1.msra.mxu0 0.0
    %364 = vmatprep.subr.mxu0 0.0
    %365 = vmatpush1.msra.mxu0 0.0
    %366 = vmatprep.subr.mxu0 0.0
    %367 = vmatpush1.msra.mxu0 0.0
    %368 = vmatprep.subr.mxu0 0.0
    %369 = vmatpush1.msra.mxu0 0.0
    %370 = vmatprep.subr.mxu0 0.0
    %371 = vmatpush1.msra.mxu0 0.0
    %372 = vmatprep.subr.mxu0 0.0
    %373 = vmatpush1.msra.mxu0 0.0
    %374 = vmatprep.subr.mxu0 0.0
    %375 = vmatpush1.msra.mxu0 %v145
    %376 = vmatprep.subr.mxu0 0.0
    %377 = vmatpush1.msra.mxu0 %v144
    %378 = vmatprep.subr.mxu0 0.0
    %379 = vmatpush2.msra.mxu0 0.0
    %380 = vmatprep.subr.mxu0 0.0
    %381 = vmatpush2.msra.mxu0 0.0
    %382 = vmatprep.subr.mxu0 0.0
    %383 = vmatpush2.msra.mxu0 0.0
    %384 = vmatprep.subr.mxu0 0.0
    %385 = vmatpush2.msra.mxu0 0.0
    %386 = vmatprep.subr.mxu0 0.0
    %387 = vmatpush2.msra.mxu0 0.0
    %388 = vmatprep.subr.mxu0 0.0
    %389 = vmatpush2.msra.mxu0 0.0
    %390 = vmatprep.subr.mxu0 0.0
    %391 = vmatpush2.msra.mxu0 0.0
    %392 = vmatprep.subr.mxu0 0.0
    %393 = vmatpush2.msra.mxu0 0.0
    %394 = vmatprep.subr.mxu0 0.0
    %395 = vmatpush2.msra.mxu0 0.0
    %396 = vmatprep.subr.mxu0 0.0
    %397 = vmatpush2.msra.mxu0 0.0
    %398 = vmatprep.subr.mxu0 0.0
    %399 = vmatpush2.msra.mxu0 0.0
    %400 = vmatprep.subr.mxu0 0.0
    %401 = vmatpush2.msra.mxu0 0.0
    %402 = vmatprep.subr.mxu0 0.0
    %403 = vmatpush2.msra.mxu0 0.0
    %404 = vmatprep.subr.mxu0 0.0
    %405 = vmatpush2.msra.mxu0 0.0
    %406 = vmatprep.subr.mxu0 0.0
    %407 = vmatpush2.msra.mxu0 0.0
    %408 = vmatprep.subr.mxu0 0.0
    %409 = vmatpush2.msra.mxu0 0.0
    %410 = vmatprep.mubr.f32.mxu0 0.0
    %411 = vmatmul.mubr.f32.gmra.mxu0 %v155
    %v412 = vpop.f32.mrf.mxu0
    %v413 = vadd.f32 %v151, %v412
    %v414 = vpop.f32.mrf.mxu0
    %415 = vmatprep.mubr.f32.mxu0 0.0
    %416 = vmatmul.mubr.f32.gmra.mxu0 %v158
    %v417 = vpop.f32.mrf.mxu0
    %v418 = vadd.f32 %v151, %v417
    %v419 = vpop.f32.mrf.mxu0
    %420 = vmatprep.mubr.f32.mxu0 0.0
    %421 = vmatmul.mubr.f32.gmra.mxu0 %v161
    %v422 = vpop.f32.mrf.mxu0
    %v423 = vadd.f32 %v151, %v422
    %v424 = vpop.f32.mrf.mxu0
    %425 = vmatprep.mubr.f32.mxu0 0.0
    %426 = vmatmul.mubr.f32.gmra.mxu0 %v164
    %v427 = vpop.f32.mrf.mxu0
    %v428 = vadd.f32 %v151, %v427
    %v429 = vpop.f32.mrf.mxu0
    %430 = vmatprep.mubr.f32.mxu0 0.0
    %431 = vmatmul.mubr.f32.gmra.mxu0 %v167
    %v432 = vpop.f32.mrf.mxu0
    %v433 = vadd.f32 %v151, %v432
    %v434 = vpop.f32.mrf.mxu0
    %435 = vmatprep.mubr.f32.mxu0 0.0
    %436 = vmatmul.mubr.f32.gmra.mxu0 %v170
    %v437 = vpop.f32.mrf.mxu0
    %v438 = vadd.f32 %v151, %v437
    %v439 = vpop.f32.mrf.mxu0
    %440 = vmatprep.mubr.f32.mxu0 0.0
    %441 = vmatmul.mubr.f32.gmra.mxu0 %v173
    %v442 = vpop.f32.mrf.mxu0
    %v443 = vadd.f32 %v151, %v442
    %v444 = vpop.f32.mrf.mxu0
    %445 = vmatprep.mubr.f32.mxu0 0.0
    %446 = vmatmul.mubr.f32.gmra.mxu0 %v176
    %v447 = vpop.f32.mrf.mxu0
    %v448 = vadd.f32 %v151, %v447
    %v449 = vpop.f32.mrf.mxu0
    %450 = vmatprep.mubr.f32.mxu0 0.0
    %451 = vmatmul.mubr.f32.gmra.mxu0 %v179
    %v452 = vpop.f32.mrf.mxu0
    %v453 = vadd.f32 %v151, %v452
    %v454 = vpop.f32.mrf.mxu0
    %455 = vmatprep.mubr.f32.mxu0 0.0
    %456 = vmatmul.mubr.f32.gmra.mxu0 %v182
    %v457 = vpop.f32.mrf.mxu0
    %v458 = vadd.f32 %v151, %v457
    %v459 = vpop.f32.mrf.mxu0
    %460 = vmatprep.mubr.f32.mxu0 0.0
    %461 = vmatmul.mubr.f32.gmra.mxu0 %v185
    %v462 = vpop.f32.mrf.mxu0
    %v463 = vadd.f32 %v151, %v462
    %v464 = vpop.f32.mrf.mxu0
    %465 = vmatprep.mubr.f32.mxu0 0.0
    %466 = vmatmul.mubr.f32.gmra.mxu0 %v188
    %v467 = vpop.f32.mrf.mxu0
    %v468 = vadd.f32 %v151, %v467
    %v469 = vpop.f32.mrf.mxu0
    %470 = vmatprep.mubr.f32.mxu0 0.0
    %471 = vmatmul.mubr.f32.gmra.mxu0 %v191
    %v472 = vpop.f32.mrf.mxu0
    %v473 = vadd.f32 %v151, %v472
    %v474 = vpop.f32.mrf.mxu0
    %475 = vmatprep.mubr.f32.mxu0 0.0
    %476 = vmatmul.mubr.f32.gmra.mxu0 %v194
    %v477 = vpop.f32.mrf.mxu0
    %v478 = vadd.f32 %v151, %v477
    %v479 = vpop.f32.mrf.mxu0
    %480 = vmatprep.mubr.f32.mxu0 0.0
    %481 = vmatmul.mubr.f32.gmra.mxu0 %v197
    %v482 = vpop.f32.mrf.mxu0
    %v483 = vadd.f32 %v151, %v482
    %v484 = vpop.f32.mrf.mxu0
    %485 = vmatprep.mubr.f32.mxu0 0.0
    %486 = vmatmul.mubr.f32.gmra.mxu0 %v200
    %v487 = vpop.f32.mrf.mxu0
    %v488 = vadd.f32 %v151, %v487
    %v489 = vpop.f32.mrf.mxu0
    %490 = vmatprep.mubr.f32.mxu0 0.0
    %491 = vmatmul.mubr.f32.gmra.mxu0 %v203
    %v492 = vpop.f32.mrf.mxu0
    %v493 = vadd.f32 %v151, %v492
    %v494 = vpop.f32.mrf.mxu0
    %495 = vmatprep.mubr.f32.mxu0 0.0
    %496 = vmatmul.mubr.f32.gmra.mxu0 %v206
    %v497 = vpop.f32.mrf.mxu0
    %v498 = vadd.f32 %v151, %v497
    %v499 = vpop.f32.mrf.mxu0
    %500 = vmatprep.mubr.f32.mxu0 0.0
    %501 = vmatmul.mubr.f32.gmra.mxu0 %v209
    %v502 = vpop.f32.mrf.mxu0
    %v503 = vadd.f32 %v151, %v502
    %v504 = vpop.f32.mrf.mxu0
    %505 = vmatprep.mubr.f32.mxu0 0.0
    %506 = vmatmul.mubr.f32.gmra.mxu0 %v212
    %v507 = vpop.f32.mrf.mxu0
    %v508 = vadd.f32 %v151, %v507
    %v509 = vpop.f32.mrf.mxu0
    %510 = vmatprep.mubr.f32.mxu0 0.0
    %511 = vmatmul.mubr.f32.gmra.mxu0 %v215
    %v512 = vpop.f32.mrf.mxu0
    %v513 = vadd.f32 %v151, %v512
    %v514 = vpop.f32.mrf.mxu0
    %515 = vmatprep.mubr.f32.mxu0 0.0
    %516 = vmatmul.mubr.f32.gmra.mxu0 %v218
    %v517 = vpop.f32.mrf.mxu0
    %v518 = vadd.f32 %v151, %v517
    %v519 = vpop.f32.mrf.mxu0
    %520 = vmatprep.mubr.f32.mxu0 0.0
    %521 = vmatmul.mubr.f32.gmra.mxu0 %v221
    %v522 = vpop.f32.mrf.mxu0
    %v523 = vadd.f32 %v151, %v522
    %v524 = vpop.f32.mrf.mxu0
    %525 = vmatprep.mubr.f32.mxu0 0.0
    %526 = vmatmul.mubr.f32.gmra.mxu0 %v224
    %v527 = vpop.f32.mrf.mxu0
    %v528 = vadd.f32 %v151, %v527
    %v529 = vpop.f32.mrf.mxu0
    %530 = vmatprep.mubr.f32.mxu0 0.0
    %531 = vmatmul.mubr.f32.gmra.mxu0 %v227
    %v532 = vpop.f32.mrf.mxu0
    %v533 = vadd.f32 %v151, %v532
    %v534 = vpop.f32.mrf.mxu0
    %535 = vmatprep.mubr.f32.mxu0 0.0
    %536 = vmatmul.mubr.f32.gmra.mxu0 %v230
    %v537 = vpop.f32.mrf.mxu0
    %v538 = vadd.f32 %v151, %v537
    %v539 = vpop.f32.mrf.mxu0
    %540 = vmatprep.mubr.f32.mxu0 0.0
    %541 = vmatmul.mubr.f32.gmra.mxu0 %v233
    %v542 = vpop.f32.mrf.mxu0
    %v543 = vadd.f32 %v151, %v542
    %v544 = vpop.f32.mrf.mxu0
    %545 = vmatprep.mubr.f32.mxu0 0.0
    %546 = vmatmul.mubr.f32.gmra.mxu0 %v236
    %v547 = vpop.f32.mrf.mxu0
    %v548 = vadd.f32 %v151, %v547
    %v549 = vpop.f32.mrf.mxu0
    %550 = vmatprep.mubr.f32.mxu0 0.0
    %551 = vmatmul.mubr.f32.gmra.mxu0 %v239
    %v552 = vpop.f32.mrf.mxu0
    %v553 = vadd.f32 %v151, %v552
    %v554 = vpop.f32.mrf.mxu0
    %555 = vmatprep.mubr.f32.mxu0 0.0
    %556 = vmatmul.mubr.f32.gmra.mxu0 %v242
    %v557 = vpop.f32.mrf.mxu0
    %v558 = vadd.f32 %v151, %v557
    %v559 = vpop.f32.mrf.mxu0
    %560 = vmatprep.mubr.f32.mxu0 0.0
    %561 = vmatmul.mubr.f32.gmra.mxu0 %v245
    %v562 = vpop.f32.mrf.mxu0
    %v563 = vadd.f32 %v151, %v562
    %v564 = vpop.f32.mrf.mxu0
    %565 = vmatprep.mubr.f32.mxu0 0.0
    %566 = vmatmul.mubr.f32.gmra.mxu0 %v248
    %v567 = vpop.f32.mrf.mxu0
    %v568 = vadd.f32 %v151, %v567
    %v569 = vpop.f32.mrf.mxu0
    %570 = vmatprep.mubr.f32.mxu0 0.0
    %571 = vmatmul.mubr.f32.gmra.mxu0 %v251
    %v572 = vpop.f32.mrf.mxu0
    %v573 = vadd.f32 %v151, %v572
    %v574 = vpop.f32.mrf.mxu0
    %575 = vmatprep.mubr.f32.mxu0 0.0
    %576 = vmatmul.mubr.f32.gmra.mxu0 %v254
    %v577 = vpop.f32.mrf.mxu0
    %v578 = vadd.f32 %v151, %v577
    %v579 = vpop.f32.mrf.mxu0
    %580 = vmatprep.mubr.f32.mxu0 0.0
    %581 = vmatmul.mubr.f32.gmra.mxu0 %v257
    %v582 = vpop.f32.mrf.mxu0
    %v583 = vadd.f32 %v151, %v582
    %v584 = vpop.f32.mrf.mxu0
    %585 = vmatprep.mubr.f32.mxu0 0.0
    %586 = vmatmul.mubr.f32.gmra.mxu0 %v260
    %v587 = vpop.f32.mrf.mxu0
    %v588 = vadd.f32 %v151, %v587
    %v589 = vpop.f32.mrf.mxu0
    %590 = vmatprep.mubr.f32.mxu0 0.0
    %591 = vmatmul.mubr.f32.gmra.mxu0 %v263
    %v592 = vpop.f32.mrf.mxu0
    %v593 = vadd.f32 %v151, %v592
    %v594 = vpop.f32.mrf.mxu0
    %595 = vmatprep.mubr.f32.mxu0 0.0
    %596 = vmatmul.mubr.f32.gmra.mxu0 %v266
    %v597 = vpop.f32.mrf.mxu0
    %v598 = vadd.f32 %v151, %v597
    %v599 = vpop.f32.mrf.mxu0
    %600 = vmatprep.mubr.f32.mxu0 0.0
    %601 = vmatmul.mubr.f32.gmra.mxu0 %v269
    %v602 = vpop.f32.mrf.mxu0
    %v603 = vadd.f32 %v151, %v602
    %v604 = vpop.f32.mrf.mxu0
    %605 = vmatprep.mubr.f32.mxu0 0.0
    %606 = vmatmul.mubr.f32.gmra.mxu0 %v272
    %v607 = vpop.f32.mrf.mxu0
    %v608 = vadd.f32 %v151, %v607
    %v609 = vpop.f32.mrf.mxu0
    %610 = vmatprep.mubr.f32.mxu0 0.0
    %611 = vmatmul.mubr.f32.gmra.mxu0 %v275
    %v612 = vpop.f32.mrf.mxu0
    %v613 = vadd.f32 %v151, %v612
    %v614 = vpop.f32.mrf.mxu0
    %615 = vmatprep.mubr.f32.mxu0 0.0
    %616 = vmatmul.mubr.f32.gmra.mxu0 %v278
    %v617 = vpop.f32.mrf.mxu0
    %v618 = vadd.f32 %v151, %v617
    %v619 = vpop.f32.mrf.mxu0
    %620 = vmatprep.mubr.f32.mxu0 0.0
    %621 = vmatmul.mubr.f32.gmra.mxu0 %v281
    %v622 = vpop.f32.mrf.mxu0
    %v623 = vadd.f32 %v151, %v622
    %v624 = vpop.f32.mrf.mxu0
    %625 = vmatprep.mubr.f32.mxu0 0.0
    %626 = vmatmul.mubr.f32.gmra.mxu0 %v284
    %v627 = vpop.f32.mrf.mxu0
    %v628 = vadd.f32 %v151, %v627
    %v629 = vpop.f32.mrf.mxu0
    %630 = vmatprep.mubr.f32.mxu0 0.0
    %631 = vmatmul.mubr.f32.gmra.mxu0 %v287
    %v632 = vpop.f32.mrf.mxu0
    %v633 = vadd.f32 %v151, %v632
    %v634 = vpop.f32.mrf.mxu0
    %635 = vmatprep.mubr.f32.mxu0 0.0
    %636 = vmatmul.mubr.f32.gmra.mxu0 %v290
    %v637 = vpop.f32.mrf.mxu0
    %v638 = vadd.f32 %v151, %v637
    %v639 = vpop.f32.mrf.mxu0
    %640 = vmatprep.mubr.f32.mxu0 0.0
    %641 = vmatmul.mubr.f32.gmra.mxu0 %v293
    %v642 = vpop.f32.mrf.mxu0
    %v643 = vadd.f32 %v151, %v642
    %v644 = vpop.f32.mrf.mxu0
    %645 = vmatprep.mubr.f32.mxu0 0.0
    %646 = vmatmul.mubr.f32.gmra.mxu0 %v296
    %v647 = vpop.f32.mrf.mxu0
    %v648 = vadd.f32 %v151, %v647
    %v649 = vpop.f32.mrf.mxu0
    %650 = vmatprep.mubr.f32.mxu0 0.0
    %651 = vmatmul.mubr.f32.gmra.mxu0 %v299
    %v652 = vpop.f32.mrf.mxu0
    %v653 = vadd.f32 %v151, %v652
    %v654 = vpop.f32.mrf.mxu0
    %655 = vmatprep.mubr.f32.mxu0 0.0
    %656 = vmatmul.mubr.f32.gmra.mxu0 %v302
    %v657 = vpop.f32.mrf.mxu0
    %v658 = vadd.f32 %v151, %v657
    %v659 = vpop.f32.mrf.mxu0
    %660 = vmatprep.mubr.f32.mxu0 0.0
    %661 = vmatmul.mubr.f32.gmra.mxu0 %v305
    %v662 = vpop.f32.mrf.mxu0
    %v663 = vadd.f32 %v151, %v662
    %v664 = vpop.f32.mrf.mxu0
    %665 = vmatprep.mubr.f32.mxu0 0.0
    %666 = vmatmul.mubr.f32.gmra.mxu0 %v308
    %v667 = vpop.f32.mrf.mxu0
    %v668 = vadd.f32 %v151, %v667
    %v669 = vpop.f32.mrf.mxu0
    %670 = vmatprep.mubr.f32.mxu0 0.0
    %671 = vmatmul.mubr.f32.gmra.mxu0 %v311
    %v672 = vpop.f32.mrf.mxu0
    %v673 = vadd.f32 %v151, %v672
    %v674 = vpop.f32.mrf.mxu0
    %675 = vmatprep.mubr.f32.mxu0 0.0
    %676 = vmatmul.mubr.f32.gmra.mxu0 %v314
    %v677 = vpop.f32.mrf.mxu0
    %v678 = vadd.f32 %v151, %v677
    %v679 = vpop.f32.mrf.mxu0
    %680 = vmatprep.mubr.f32.mxu0 0.0
    %681 = vmatmul.mubr.f32.gmra.mxu0 %v317
    %v682 = vpop.f32.mrf.mxu0
    %v683 = vadd.f32 %v151, %v682
    %v684 = vpop.f32.mrf.mxu0
    %685 = vmatprep.mubr.f32.mxu0 0.0
    %686 = vmatmul.mubr.f32.gmra.mxu0 %v320
    %v687 = vpop.f32.mrf.mxu0
    %v688 = vadd.f32 %v151, %v687
    %v689 = vpop.f32.mrf.mxu0
    %690 = vmatprep.mubr.f32.mxu0 0.0
    %691 = vmatmul.mubr.f32.gmra.mxu0 %v323
    %v692 = vpop.f32.mrf.mxu0
    %v693 = vadd.f32 %v151, %v692
    %v694 = vpop.f32.mrf.mxu0
    %695 = vmatprep.mubr.f32.mxu0 0.0
    %696 = vmatmul.mubr.f32.gmra.mxu0 %v326
    %v697 = vpop.f32.mrf.mxu0
    %v698 = vadd.f32 %v151, %v697
    %v699 = vpop.f32.mrf.mxu0
    %700 = vmatprep.mubr.f32.mxu0 0.0
    %701 = vmatmul.mubr.f32.gmra.mxu0 %v329
    %v702 = vpop.f32.mrf.mxu0
    %v703 = vadd.f32 %v151, %v702
    %v704 = vpop.f32.mrf.mxu0
    %705 = vmatprep.mubr.f32.mxu0 0.0
    %706 = vmatmul.mubr.f32.gmra.mxu0 %v332
    %v707 = vpop.f32.mrf.mxu0
    %v708 = vadd.f32 %v151, %v707
    %v709 = vpop.f32.mrf.mxu0
    %710 = vmatprep.mubr.f32.mxu0 0.0
    %711 = vmatmul.mubr.f32.gmra.mxu0 %v335
    %v712 = vpop.f32.mrf.mxu0
    %v713 = vadd.f32 %v151, %v712
    %v714 = vpop.f32.mrf.mxu0
    %715 = vmatprep.mubr.f32.mxu0 0.0
    %716 = vmatmul.mubr.f32.gmra.mxu0 %v338
    %v717 = vpop.f32.mrf.mxu0
    %v718 = vadd.f32 %v151, %v717
    %v719 = vpop.f32.mrf.mxu0
    %720 = vmatprep.mubr.f32.mxu0 0.0
    %721 = vmatmul.mubr.f32.gmra.mxu0 %v341
    %v722 = vpop.f32.mrf.mxu0
    %v723 = vadd.f32 %v151, %v722
    %v724 = vpop.f32.mrf.mxu0
    %725 = vmatprep.mubr.f32.mxu0 0.0
    %726 = vmatmul.mubr.f32.gmra.mxu0 %v344
    %v727 = vpop.f32.mrf.mxu0
    %v728 = vadd.f32 %v151, %v727
    %v729 = vpop.f32.mrf.mxu0
    %730 = vdwg.mxu0
    %v731 = vmax.f32 %v413, 0.0
    %v732 = vmax.f32 %v418, 0.0
    %v733 = vmax.f32 %v423, 0.0
    %v734 = vmax.f32 %v428, 0.0
    %v735 = vmax.f32 %v433, 0.0
    %v736 = vmax.f32 %v438, 0.0
    %v737 = vmax.f32 %v443, 0.0
    %v738 = vmax.f32 %v448, 0.0
    %v739 = vmax.f32 %v453, 0.0
    %v740 = vmax.f32 %v458, 0.0
    %v741 = vmax.f32 %v463, 0.0
    %v742 = vmax.f32 %v468, 0.0
    %v743 = vmax.f32 %v473, 0.0
    %v744 = vmax.f32 %v478, 0.0
    %v745 = vmax.f32 %v483, 0.0
    %v746 = vmax.f32 %v488, 0.0
    %v747 = vmax.f32 %v493, 0.0
    %v748 = vmax.f32 %v498, 0.0
    %v749 = vmax.f32 %v503, 0.0
    %v750 = vmax.f32 %v508, 0.0
    %v751 = vmax.f32 %v513, 0.0
    %v752 = vmax.f32 %v518, 0.0
    %v753 = vmax.f32 %v523, 0.0
    %v754 = vmax.f32 %v528, 0.0
    %v755 = vmax.f32 %v533, 0.0
    %v756 = vmax.f32 %v538, 0.0
    %v757 = vmax.f32 %v543, 0.0
    %v758 = vmax.f32 %v548, 0.0
    %v759 = vmax.f32 %v553, 0.0
    %v760 = vmax.f32 %v558, 0.0
    %v761 = vmax.f32 %v563, 0.0
    %v762 = vmax.f32 %v568, 0.0
    %v763 = vmax.f32 %v573, 0.0
    %v764 = vmax.f32 %v578, 0.0
    %v765 = vmax.f32 %v583, 0.0
    %v766 = vmax.f32 %v588, 0.0
    %v767 = vmax.f32 %v593, 0.0
    %v768 = vmax.f32 %v598, 0.0
    %v769 = vmax.f32 %v603, 0.0
    %v770 = vmax.f32 %v608, 0.0
    %v771 = vmax.f32 %v613, 0.0
    %v772 = vmax.f32 %v618, 0.0
    %v773 = vmax.f32 %v623, 0.0
    %v774 = vmax.f32 %v628, 0.0
    %v775 = vmax.f32 %v633, 0.0
    %v776 = vmax.f32 %v638, 0.0
    %v777 = vmax.f32 %v643, 0.0
    %v778 = vmax.f32 %v648, 0.0
    %v779 = vmax.f32 %v653, 0.0
    %v780 = vmax.f32 %v658, 0.0
    %v781 = vmax.f32 %v663, 0.0
    %v782 = vmax.f32 %v668, 0.0
    %v783 = vmax.f32 %v673, 0.0
    %v784 = vmax.f32 %v678, 0.0
    %v785 = vmax.f32 %v683, 0.0
    %v786 = vmax.f32 %v688, 0.0
    %v787 = vmax.f32 %v693, 0.0
    %v788 = vmax.f32 %v698, 0.0
    %v789 = vmax.f32 %v703, 0.0
    %v790 = vmax.f32 %v708, 0.0
    %v791 = vmax.f32 %v713, 0.0
    %v792 = vmax.f32 %v718, 0.0
    %v793 = vmax.f32 %v723, 0.0
    %v794 = vmax.f32 %v728, 0.0
    %v795 = vld [vmem:[%s7] sm:$0xff]
    %v796 = vld [vmem:[%s7 + $0x8] sm:$0xff]
    %v797 = vld [vmem:[%s7 + $0x10] sm:$0xff]
    %v798 = vld [vmem:[%s7 + $0x18] sm:$0xff]
    %v799 = vld [vmem:[%s8] sm:$0x1]
    %v801 = vlaneseq
    %v802 = vshrl.u32 %v801, 7
    %v803 = vsub.s32 0, %v802
    %v804 = vrot.slane %v799, %v803
    %vm806 = vcmask 261120
    %v808 = vsel %vm806, %v731, 0
    %v811 = vsel %vm806, %v732, 0
    %v814 = vsel %vm806, %v733, 0
    %v817 = vsel %vm806, %v734, 0
    %v820 = vsel %vm806, %v735, 0
    %v823 = vsel %vm806, %v736, 0
    %v826 = vsel %vm806, %v737, 0
    %v829 = vsel %vm806, %v738, 0
    %v832 = vsel %vm806, %v739, 0
    %v835 = vsel %vm806, %v740, 0
    %v838 = vsel %vm806, %v741, 0
    %v841 = vsel %vm806, %v742, 0
    %v844 = vsel %vm806, %v743, 0
    %v847 = vsel %vm806, %v744, 0
    %v850 = vsel %vm806, %v745, 0
    %v853 = vsel %vm806, %v746, 0
    %v856 = vsel %vm806, %v747, 0
    %v859 = vsel %vm806, %v748, 0
    %v862 = vsel %vm806, %v749, 0
    %v865 = vsel %vm806, %v750, 0
    %v868 = vsel %vm806, %v751, 0
    %v871 = vsel %vm806, %v752, 0
    %v874 = vsel %vm806, %v753, 0
    %v877 = vsel %vm806, %v754, 0
    %v880 = vsel %vm806, %v755, 0
    %v883 = vsel %vm806, %v756, 0
    %v886 = vsel %vm806, %v757, 0
    %v889 = vsel %vm806, %v758, 0
    %v892 = vsel %vm806, %v759, 0
    %v895 = vsel %vm806, %v760, 0
    %v898 = vsel %vm806, %v761, 0
    %v901 = vsel %vm806, %v762, 0
    %v904 = vsel %vm806, %v763, 0
    %v907 = vsel %vm806, %v764, 0
    %v910 = vsel %vm806, %v765, 0
    %v913 = vsel %vm806, %v766, 0
    %v916 = vsel %vm806, %v767, 0
    %v919 = vsel %vm806, %v768, 0
    %v922 = vsel %vm806, %v769, 0
    %v925 = vsel %vm806, %v770, 0
    %v928 = vsel %vm806, %v771, 0
    %v931 = vsel %vm806, %v772, 0
    %v934 = vsel %vm806, %v773, 0
    %v937 = vsel %vm806, %v774, 0
    %v940 = vsel %vm806, %v775, 0
    %v943 = vsel %vm806, %v776, 0
    %v946 = vsel %vm806, %v777, 0
    %v949 = vsel %vm806, %v778, 0
    %v952 = vsel %vm806, %v779, 0
    %v955 = vsel %vm806, %v780, 0
    %v958 = vsel %vm806, %v781, 0
    %v961 = vsel %vm806, %v782, 0
    %v964 = vsel %vm806, %v783, 0
    %v967 = vsel %vm806, %v784, 0
    %v970 = vsel %vm806, %v785, 0
    %v973 = vsel %vm806, %v786, 0
    %v976 = vsel %vm806, %v787, 0
    %v979 = vsel %vm806, %v788, 0
    %v982 = vsel %vm806, %v789, 0
    %v985 = vsel %vm806, %v790, 0
    %v988 = vsel %vm806, %v791, 0
    %v991 = vsel %vm806, %v792, 0
    %v994 = vsel %vm806, %v793, 0
    %v997 = vsel %vm806, %v794, 0
    %999 = vmatprep.subr.mxu0 0.0
    %1000 = vmatpush1.msra.mxu0 0.0
    %1001 = vmatprep.subr.mxu0 0.0
    %1002 = vmatpush1.msra.mxu0 0.0
    %1003 = vmatprep.subr.mxu0 0.0
    %1004 = vmatpush1.msra.mxu0 0.0
    %1005 = vmatprep.subr.mxu0 0.0
    %1006 = vmatpush1.msra.mxu0 0.0
    %1007 = vmatprep.subr.mxu0 0.0
    %1008 = vmatpush1.msra.mxu0 0.0
    %1009 = vmatprep.subr.mxu0 0.0
    %1010 = vmatpush1.msra.mxu0 0.0
    %1011 = vmatprep.subr.mxu0 0.0
    %1012 = vmatpush1.msra.mxu0 0.0
    %1013 = vmatprep.subr.mxu0 0.0
    %1014 = vmatpush1.msra.mxu0 0.0
    %1015 = vmatprep.subr.mxu0 0.0
    %1016 = vmatpush1.msra.mxu0 0.0
    %1017 = vmatprep.subr.mxu0 0.0
    %1018 = vmatpush1.msra.mxu0 0.0
    %1019 = vmatprep.subr.mxu0 0.0
    %1020 = vmatpush1.msra.mxu0 0.0
    %1021 = vmatprep.subr.mxu0 0.0
    %1022 = vmatpush1.msra.mxu0 0.0
    %1023 = vmatprep.subr.mxu0 0.0
    %1024 = vmatpush1.msra.mxu0 %v798
    %1025 = vmatprep.subr.mxu0 0.0
    %1026 = vmatpush1.msra.mxu0 %v797
    %1027 = vmatprep.subr.mxu0 0.0
    %1028 = vmatpush1.msra.mxu0 %v796
    %1029 = vmatprep.subr.mxu0 0.0
    %1030 = vmatpush1.msra.mxu0 %v795
    %1031 = vmatprep.subr.mxu0 0.0
    %1032 = vmatpush2.msra.mxu0 0.0
    %1033 = vmatprep.subr.mxu0 0.0
    %1034 = vmatpush2.msra.mxu0 0.0
    %1035 = vmatprep.subr.mxu0 0.0
    %1036 = vmatpush2.msra.mxu0 0.0
    %1037 = vmatprep.subr.mxu0 0.0
    %1038 = vmatpush2.msra.mxu0 0.0
    %1039 = vmatprep.subr.mxu0 0.0
    %1040 = vmatpush2.msra.mxu0 0.0
    %1041 = vmatprep.subr.mxu0 0.0
    %1042 = vmatpush2.msra.mxu0 0.0
    %1043 = vmatprep.subr.mxu0 0.0
    %1044 = vmatpush2.msra.mxu0 0.0
    %1045 = vmatprep.subr.mxu0 0.0
    %1046 = vmatpush2.msra.mxu0 0.0
    %1047 = vmatprep.subr.mxu0 0.0
    %1048 = vmatpush2.msra.mxu0 0.0
    %1049 = vmatprep.subr.mxu0 0.0
    %1050 = vmatpush2.msra.mxu0 0.0
    %1051 = vmatprep.subr.mxu0 0.0
    %1052 = vmatpush2.msra.mxu0 0.0
    %1053 = vmatprep.subr.mxu0 0.0
    %1054 = vmatpush2.msra.mxu0 0.0
    %1055 = vmatprep.subr.mxu0 0.0
    %1056 = vmatpush2.msra.mxu0 0.0
    %1057 = vmatprep.subr.mxu0 0.0
    %1058 = vmatpush2.msra.mxu0 0.0
    %1059 = vmatprep.subr.mxu0 0.0
    %1060 = vmatpush2.msra.mxu0 0.0
    %1061 = vmatprep.subr.mxu0 0.0
    %1062 = vmatpush2.msra.mxu0 0.0
    %1063 = vmatprep.mubr.f32.mxu0 0.0
    %1064 = vmatmul.mubr.f32.gmra.mxu0 %v808
    %v1065 = vpop.f32.mrf.mxu0
    %v1066 = vadd.f32 %v804, %v1065
    %v1067 = vpop.f32.mrf.mxu0
    %1068 = vmatprep.mubr.f32.mxu0 0.0
    %1069 = vmatmul.mubr.f32.gmra.mxu0 %v811
    %v1070 = vpop.f32.mrf.mxu0
    %v1071 = vadd.f32 %v804, %v1070
    %v1072 = vpop.f32.mrf.mxu0
    %1073 = vmatprep.mubr.f32.mxu0 0.0
    %1074 = vmatmul.mubr.f32.gmra.mxu0 %v814
    %v1075 = vpop.f32.mrf.mxu0
    %v1076 = vadd.f32 %v804, %v1075
    %v1077 = vpop.f32.mrf.mxu0
    %1078 = vmatprep.mubr.f32.mxu0 0.0
    %1079 = vmatmul.mubr.f32.gmra.mxu0 %v817
    %v1080 = vpop.f32.mrf.mxu0
    %v1081 = vadd.f32 %v804, %v1080
    %v1082 = vpop.f32.mrf.mxu0
    %1083 = vmatprep.mubr.f32.mxu0 0.0
    %1084 = vmatmul.mubr.f32.gmra.mxu0 %v820
    %v1085 = vpop.f32.mrf.mxu0
    %v1086 = vadd.f32 %v804, %v1085
    %v1087 = vpop.f32.mrf.mxu0
    %1088 = vmatprep.mubr.f32.mxu0 0.0
    %1089 = vmatmul.mubr.f32.gmra.mxu0 %v823
    %v1090 = vpop.f32.mrf.mxu0
    %v1091 = vadd.f32 %v804, %v1090
    %v1092 = vpop.f32.mrf.mxu0
    %1093 = vmatprep.mubr.f32.mxu0 0.0
    %1094 = vmatmul.mubr.f32.gmra.mxu0 %v826
    %v1095 = vpop.f32.mrf.mxu0
    %v1096 = vadd.f32 %v804, %v1095
    %v1097 = vpop.f32.mrf.mxu0
    %1098 = vmatprep.mubr.f32.mxu0 0.0
    %1099 = vmatmul.mubr.f32.gmra.mxu0 %v829
    %v1100 = vpop.f32.mrf.mxu0
    %v1101 = vadd.f32 %v804, %v1100
    %v1102 = vpop.f32.mrf.mxu0
    %1103 = vmatprep.mubr.f32.mxu0 0.0
    %1104 = vmatmul.mubr.f32.gmra.mxu0 %v832
    %v1105 = vpop.f32.mrf.mxu0
    %v1106 = vadd.f32 %v804, %v1105
    %v1107 = vpop.f32.mrf.mxu0
    %1108 = vmatprep.mubr.f32.mxu0 0.0
    %1109 = vmatmul.mubr.f32.gmra.mxu0 %v835
    %v1110 = vpop.f32.mrf.mxu0
    %v1111 = vadd.f32 %v804, %v1110
    %v1112 = vpop.f32.mrf.mxu0
    %1113 = vmatprep.mubr.f32.mxu0 0.0
    %1114 = vmatmul.mubr.f32.gmra.mxu0 %v838
    %v1115 = vpop.f32.mrf.mxu0
    %v1116 = vadd.f32 %v804, %v1115
    %v1117 = vpop.f32.mrf.mxu0
    %1118 = vmatprep.mubr.f32.mxu0 0.0
    %1119 = vmatmul.mubr.f32.gmra.mxu0 %v841
    %v1120 = vpop.f32.mrf.mxu0
    %v1121 = vadd.f32 %v804, %v1120
    %v1122 = vpop.f32.mrf.mxu0
    %1123 = vmatprep.mubr.f32.mxu0 0.0
    %1124 = vmatmul.mubr.f32.gmra.mxu0 %v844
    %v1125 = vpop.f32.mrf.mxu0
    %v1126 = vadd.f32 %v804, %v1125
    %v1127 = vpop.f32.mrf.mxu0
    %1128 = vmatprep.mubr.f32.mxu0 0.0
    %1129 = vmatmul.mubr.f32.gmra.mxu0 %v847
    %v1130 = vpop.f32.mrf.mxu0
    %v1131 = vadd.f32 %v804, %v1130
    %v1132 = vpop.f32.mrf.mxu0
    %1133 = vmatprep.mubr.f32.mxu0 0.0
    %1134 = vmatmul.mubr.f32.gmra.mxu0 %v850
    %v1135 = vpop.f32.mrf.mxu0
    %v1136 = vadd.f32 %v804, %v1135
    %v1137 = vpop.f32.mrf.mxu0
    %1138 = vmatprep.mubr.f32.mxu0 0.0
    %1139 = vmatmul.mubr.f32.gmra.mxu0 %v853
    %v1140 = vpop.f32.mrf.mxu0
    %v1141 = vadd.f32 %v804, %v1140
    %v1142 = vpop.f32.mrf.mxu0
    %1143 = vmatprep.mubr.f32.mxu0 0.0
    %1144 = vmatmul.mubr.f32.gmra.mxu0 %v856
    %v1145 = vpop.f32.mrf.mxu0
    %v1146 = vadd.f32 %v804, %v1145
    %v1147 = vpop.f32.mrf.mxu0
    %1148 = vmatprep.mubr.f32.mxu0 0.0
    %1149 = vmatmul.mubr.f32.gmra.mxu0 %v859
    %v1150 = vpop.f32.mrf.mxu0
    %v1151 = vadd.f32 %v804, %v1150
    %v1152 = vpop.f32.mrf.mxu0
    %1153 = vmatprep.mubr.f32.mxu0 0.0
    %1154 = vmatmul.mubr.f32.gmra.mxu0 %v862
    %v1155 = vpop.f32.mrf.mxu0
    %v1156 = vadd.f32 %v804, %v1155
    %v1157 = vpop.f32.mrf.mxu0
    %1158 = vmatprep.mubr.f32.mxu0 0.0
    %1159 = vmatmul.mubr.f32.gmra.mxu0 %v865
    %v1160 = vpop.f32.mrf.mxu0
    %v1161 = vadd.f32 %v804, %v1160
    %v1162 = vpop.f32.mrf.mxu0
    %1163 = vmatprep.mubr.f32.mxu0 0.0
    %1164 = vmatmul.mubr.f32.gmra.mxu0 %v868
    %v1165 = vpop.f32.mrf.mxu0
    %v1166 = vadd.f32 %v804, %v1165
    %v1167 = vpop.f32.mrf.mxu0
    %1168 = vmatprep.mubr.f32.mxu0 0.0
    %1169 = vmatmul.mubr.f32.gmra.mxu0 %v871
    %v1170 = vpop.f32.mrf.mxu0
    %v1171 = vadd.f32 %v804, %v1170
    %v1172 = vpop.f32.mrf.mxu0
    %1173 = vmatprep.mubr.f32.mxu0 0.0
    %1174 = vmatmul.mubr.f32.gmra.mxu0 %v874
    %v1175 = vpop.f32.mrf.mxu0
    %v1176 = vadd.f32 %v804, %v1175
    %v1177 = vpop.f32.mrf.mxu0
    %1178 = vmatprep.mubr.f32.mxu0 0.0
    %1179 = vmatmul.mubr.f32.gmra.mxu0 %v877
    %v1180 = vpop.f32.mrf.mxu0
    %v1181 = vadd.f32 %v804, %v1180
    %v1182 = vpop.f32.mrf.mxu0
    %1183 = vmatprep.mubr.f32.mxu0 0.0
    %1184 = vmatmul.mubr.f32.gmra.mxu0 %v880
    %v1185 = vpop.f32.mrf.mxu0
    %v1186 = vadd.f32 %v804, %v1185
    %v1187 = vpop.f32.mrf.mxu0
    %1188 = vmatprep.mubr.f32.mxu0 0.0
    %1189 = vmatmul.mubr.f32.gmra.mxu0 %v883
    %v1190 = vpop.f32.mrf.mxu0
    %v1191 = vadd.f32 %v804, %v1190
    %v1192 = vpop.f32.mrf.mxu0
    %1193 = vmatprep.mubr.f32.mxu0 0.0
    %1194 = vmatmul.mubr.f32.gmra.mxu0 %v886
    %v1195 = vpop.f32.mrf.mxu0
    %v1196 = vadd.f32 %v804, %v1195
    %v1197 = vpop.f32.mrf.mxu0
    %1198 = vmatprep.mubr.f32.mxu0 0.0
    %1199 = vmatmul.mubr.f32.gmra.mxu0 %v889
    %v1200 = vpop.f32.mrf.mxu0
    %v1201 = vadd.f32 %v804, %v1200
    %v1202 = vpop.f32.mrf.mxu0
    %1203 = vmatprep.mubr.f32.mxu0 0.0
    %1204 = vmatmul.mubr.f32.gmra.mxu0 %v892
    %v1205 = vpop.f32.mrf.mxu0
    %v1206 = vadd.f32 %v804, %v1205
    %v1207 = vpop.f32.mrf.mxu0
    %1208 = vmatprep.mubr.f32.mxu0 0.0
    %1209 = vmatmul.mubr.f32.gmra.mxu0 %v895
    %v1210 = vpop.f32.mrf.mxu0
    %v1211 = vadd.f32 %v804, %v1210
    %v1212 = vpop.f32.mrf.mxu0
    %1213 = vmatprep.mubr.f32.mxu0 0.0
    %1214 = vmatmul.mubr.f32.gmra.mxu0 %v898
    %v1215 = vpop.f32.mrf.mxu0
    %v1216 = vadd.f32 %v804, %v1215
    %v1217 = vpop.f32.mrf.mxu0
    %1218 = vmatprep.mubr.f32.mxu0 0.0
    %1219 = vmatmul.mubr.f32.gmra.mxu0 %v901
    %v1220 = vpop.f32.mrf.mxu0
    %v1221 = vadd.f32 %v804, %v1220
    %v1222 = vpop.f32.mrf.mxu0
    %1223 = vmatprep.mubr.f32.mxu0 0.0
    %1224 = vmatmul.mubr.f32.gmra.mxu0 %v904
    %v1225 = vpop.f32.mrf.mxu0
    %v1226 = vadd.f32 %v804, %v1225
    %v1227 = vpop.f32.mrf.mxu0
    %1228 = vmatprep.mubr.f32.mxu0 0.0
    %1229 = vmatmul.mubr.f32.gmra.mxu0 %v907
    %v1230 = vpop.f32.mrf.mxu0
    %v1231 = vadd.f32 %v804, %v1230
    %v1232 = vpop.f32.mrf.mxu0
    %1233 = vmatprep.mubr.f32.mxu0 0.0
    %1234 = vmatmul.mubr.f32.gmra.mxu0 %v910
    %v1235 = vpop.f32.mrf.mxu0
    %v1236 = vadd.f32 %v804, %v1235
    %v1237 = vpop.f32.mrf.mxu0
    %1238 = vmatprep.mubr.f32.mxu0 0.0
    %1239 = vmatmul.mubr.f32.gmra.mxu0 %v913
    %v1240 = vpop.f32.mrf.mxu0
    %v1241 = vadd.f32 %v804, %v1240
    %v1242 = vpop.f32.mrf.mxu0
    %1243 = vmatprep.mubr.f32.mxu0 0.0
    %1244 = vmatmul.mubr.f32.gmra.mxu0 %v916
    %v1245 = vpop.f32.mrf.mxu0
    %v1246 = vadd.f32 %v804, %v1245
    %v1247 = vpop.f32.mrf.mxu0
    %1248 = vmatprep.mubr.f32.mxu0 0.0
    %1249 = vmatmul.mubr.f32.gmra.mxu0 %v919
    %v1250 = vpop.f32.mrf.mxu0
    %v1251 = vadd.f32 %v804, %v1250
    %v1252 = vpop.f32.mrf.mxu0
    %1253 = vmatprep.mubr.f32.mxu0 0.0
    %1254 = vmatmul.mubr.f32.gmra.mxu0 %v922
    %v1255 = vpop.f32.mrf.mxu0
    %v1256 = vadd.f32 %v804, %v1255
    %v1257 = vpop.f32.mrf.mxu0
    %1258 = vmatprep.mubr.f32.mxu0 0.0
    %1259 = vmatmul.mubr.f32.gmra.mxu0 %v925
    %v1260 = vpop.f32.mrf.mxu0
    %v1261 = vadd.f32 %v804, %v1260
    %v1262 = vpop.f32.mrf.mxu0
    %1263 = vmatprep.mubr.f32.mxu0 0.0
    %1264 = vmatmul.mubr.f32.gmra.mxu0 %v928
    %v1265 = vpop.f32.mrf.mxu0
    %v1266 = vadd.f32 %v804, %v1265
    %v1267 = vpop.f32.mrf.mxu0
    %1268 = vmatprep.mubr.f32.mxu0 0.0
    %1269 = vmatmul.mubr.f32.gmra.mxu0 %v931
    %v1270 = vpop.f32.mrf.mxu0
    %v1271 = vadd.f32 %v804, %v1270
    %v1272 = vpop.f32.mrf.mxu0
    %1273 = vmatprep.mubr.f32.mxu0 0.0
    %1274 = vmatmul.mubr.f32.gmra.mxu0 %v934
    %v1275 = vpop.f32.mrf.mxu0
    %v1276 = vadd.f32 %v804, %v1275
    %v1277 = vpop.f32.mrf.mxu0
    %1278 = vmatprep.mubr.f32.mxu0 0.0
    %1279 = vmatmul.mubr.f32.gmra.mxu0 %v937
    %v1280 = vpop.f32.mrf.mxu0
    %v1281 = vadd.f32 %v804, %v1280
    %v1282 = vpop.f32.mrf.mxu0
    %1283 = vmatprep.mubr.f32.mxu0 0.0
    %1284 = vmatmul.mubr.f32.gmra.mxu0 %v940
    %v1285 = vpop.f32.mrf.mxu0
    %v1286 = vadd.f32 %v804, %v1285
    %v1287 = vpop.f32.mrf.mxu0
    %1288 = vmatprep.mubr.f32.mxu0 0.0
    %1289 = vmatmul.mubr.f32.gmra.mxu0 %v943
    %v1290 = vpop.f32.mrf.mxu0
    %v1291 = vadd.f32 %v804, %v1290
    %v1292 = vpop.f32.mrf.mxu0
    %1293 = vmatprep.mubr.f32.mxu0 0.0
    %1294 = vmatmul.mubr.f32.gmra.mxu0 %v946
    %v1295 = vpop.f32.mrf.mxu0
    %v1296 = vadd.f32 %v804, %v1295
    %v1297 = vpop.f32.mrf.mxu0
    %1298 = vmatprep.mubr.f32.mxu0 0.0
    %1299 = vmatmul.mubr.f32.gmra.mxu0 %v949
    %v1300 = vpop.f32.mrf.mxu0
    %v1301 = vadd.f32 %v804, %v1300
    %v1302 = vpop.f32.mrf.mxu0
    %1303 = vmatprep.mubr.f32.mxu0 0.0
    %1304 = vmatmul.mubr.f32.gmra.mxu0 %v952
    %v1305 = vpop.f32.mrf.mxu0
    %v1306 = vadd.f32 %v804, %v1305
    %v1307 = vpop.f32.mrf.mxu0
    %1308 = vmatprep.mubr.f32.mxu0 0.0
    %1309 = vmatmul.mubr.f32.gmra.mxu0 %v955
    %v1310 = vpop.f32.mrf.mxu0
    %v1311 = vadd.f32 %v804, %v1310
    %v1312 = vpop.f32.mrf.mxu0
    %1313 = vmatprep.mubr.f32.mxu0 0.0
    %1314 = vmatmul.mubr.f32.gmra.mxu0 %v958
    %v1315 = vpop.f32.mrf.mxu0
    %v1316 = vadd.f32 %v804, %v1315
    %v1317 = vpop.f32.mrf.mxu0
    %1318 = vmatprep.mubr.f32.mxu0 0.0
    %1319 = vmatmul.mubr.f32.gmra.mxu0 %v961
    %v1320 = vpop.f32.mrf.mxu0
    %v1321 = vadd.f32 %v804, %v1320
    %v1322 = vpop.f32.mrf.mxu0
    %1323 = vmatprep.mubr.f32.mxu0 0.0
    %1324 = vmatmul.mubr.f32.gmra.mxu0 %v964
    %v1325 = vpop.f32.mrf.mxu0
    %v1326 = vadd.f32 %v804, %v1325
    %v1327 = vpop.f32.mrf.mxu0
    %1328 = vmatprep.mubr.f32.mxu0 0.0
    %1329 = vmatmul.mubr.f32.gmra.mxu0 %v967
    %v1330 = vpop.f32.mrf.mxu0
    %v1331 = vadd.f32 %v804, %v1330
    %v1332 = vpop.f32.mrf.mxu0
    %1333 = vmatprep.mubr.f32.mxu0 0.0
    %1334 = vmatmul.mubr.f32.gmra.mxu0 %v970
    %v1335 = vpop.f32.mrf.mxu0
    %v1336 = vadd.f32 %v804, %v1335
    %v1337 = vpop.f32.mrf.mxu0
    %1338 = vmatprep.mubr.f32.mxu0 0.0
    %1339 = vmatmul.mubr.f32.gmra.mxu0 %v973
    %v1340 = vpop.f32.mrf.mxu0
    %v1341 = vadd.f32 %v804, %v1340
    %v1342 = vpop.f32.mrf.mxu0
    %1343 = vmatprep.mubr.f32.mxu0 0.0
    %1344 = vmatmul.mubr.f32.gmra.mxu0 %v976
    %v1345 = vpop.f32.mrf.mxu0
    %v1346 = vadd.f32 %v804, %v1345
    %v1347 = vpop.f32.mrf.mxu0
    %1348 = vmatprep.mubr.f32.mxu0 0.0
    %1349 = vmatmul.mubr.f32.gmra.mxu0 %v979
    %v1350 = vpop.f32.mrf.mxu0
    %v1351 = vadd.f32 %v804, %v1350
    %v1352 = vpop.f32.mrf.mxu0
    %1353 = vmatprep.mubr.f32.mxu0 0.0
    %1354 = vmatmul.mubr.f32.gmra.mxu0 %v982
    %v1355 = vpop.f32.mrf.mxu0
    %v1356 = vadd.f32 %v804, %v1355
    %v1357 = vpop.f32.mrf.mxu0
    %1358 = vmatprep.mubr.f32.mxu0 0.0
    %1359 = vmatmul.mubr.f32.gmra.mxu0 %v985
    %v1360 = vpop.f32.mrf.mxu0
    %v1361 = vadd.f32 %v804, %v1360
    %v1362 = vpop.f32.mrf.mxu0
    %1363 = vmatprep.mubr.f32.mxu0 0.0
    %1364 = vmatmul.mubr.f32.gmra.mxu0 %v988
    %v1365 = vpop.f32.mrf.mxu0
    %v1366 = vadd.f32 %v804, %v1365
    %v1367 = vpop.f32.mrf.mxu0
    %1368 = vmatprep.mubr.f32.mxu0 0.0
    %1369 = vmatmul.mubr.f32.gmra.mxu0 %v991
    %v1370 = vpop.f32.mrf.mxu0
    %v1371 = vadd.f32 %v804, %v1370
    %v1372 = vpop.f32.mrf.mxu0
    %1373 = vmatprep.mubr.f32.mxu0 0.0
    %1374 = vmatmul.mubr.f32.gmra.mxu0 %v994
    %v1375 = vpop.f32.mrf.mxu0
    %v1376 = vadd.f32 %v804, %v1375
    %v1377 = vpop.f32.mrf.mxu0
    %1378 = vmatprep.mubr.f32.mxu0 0.0
    %1379 = vmatmul.mubr.f32.gmra.mxu0 %v997
    %v1380 = vpop.f32.mrf.mxu0
    %v1381 = vadd.f32 %v804, %v1380
    %v1382 = vpop.f32.mrf.mxu0
    %1383 = vdwg.mxu0
    %v1384 = vmax.f32 %v1066, 0.0
    %v1385 = vmax.f32 %v1071, 0.0
    %v1386 = vmax.f32 %v1076, 0.0
    %v1387 = vmax.f32 %v1081, 0.0
    %v1388 = vmax.f32 %v1086, 0.0
    %v1389 = vmax.f32 %v1091, 0.0
    %v1390 = vmax.f32 %v1096, 0.0
    %v1391 = vmax.f32 %v1101, 0.0
    %v1392 = vmax.f32 %v1106, 0.0
    %v1393 = vmax.f32 %v1111, 0.0
    %v1394 = vmax.f32 %v1116, 0.0
    %v1395 = vmax.f32 %v1121, 0.0
    %v1396 = vmax.f32 %v1126, 0.0
    %v1397 = vmax.f32 %v1131, 0.0
    %v1398 = vmax.f32 %v1136, 0.0
    %v1399 = vmax.f32 %v1141, 0.0
    %v1400 = vmax.f32 %v1146, 0.0
    %v1401 = vmax.f32 %v1151, 0.0
    %v1402 = vmax.f32 %v1156, 0.0
    %v1403 = vmax.f32 %v1161, 0.0
    %v1404 = vmax.f32 %v1166, 0.0
    %v1405 = vmax.f32 %v1171, 0.0
    %v1406 = vmax.f32 %v1176, 0.0
    %v1407 = vmax.f32 %v1181, 0.0
    %v1408 = vmax.f32 %v1186, 0.0
    %v1409 = vmax.f32 %v1191, 0.0
    %v1410 = vmax.f32 %v1196, 0.0
    %v1411 = vmax.f32 %v1201, 0.0
    %v1412 = vmax.f32 %v1206, 0.0
    %v1413 = vmax.f32 %v1211, 0.0
    %v1414 = vmax.f32 %v1216, 0.0
    %v1415 = vmax.f32 %v1221, 0.0
    %v1416 = vmax.f32 %v1226, 0.0
    %v1417 = vmax.f32 %v1231, 0.0
    %v1418 = vmax.f32 %v1236, 0.0
    %v1419 = vmax.f32 %v1241, 0.0
    %v1420 = vmax.f32 %v1246, 0.0
    %v1421 = vmax.f32 %v1251, 0.0
    %v1422 = vmax.f32 %v1256, 0.0
    %v1423 = vmax.f32 %v1261, 0.0
    %v1424 = vmax.f32 %v1266, 0.0
    %v1425 = vmax.f32 %v1271, 0.0
    %v1426 = vmax.f32 %v1276, 0.0
    %v1427 = vmax.f32 %v1281, 0.0
    %v1428 = vmax.f32 %v1286, 0.0
    %v1429 = vmax.f32 %v1291, 0.0
    %v1430 = vmax.f32 %v1296, 0.0
    %v1431 = vmax.f32 %v1301, 0.0
    %v1432 = vmax.f32 %v1306, 0.0
    %v1433 = vmax.f32 %v1311, 0.0
    %v1434 = vmax.f32 %v1316, 0.0
    %v1435 = vmax.f32 %v1321, 0.0
    %v1436 = vmax.f32 %v1326, 0.0
    %v1437 = vmax.f32 %v1331, 0.0
    %v1438 = vmax.f32 %v1336, 0.0
    %v1439 = vmax.f32 %v1341, 0.0
    %v1440 = vmax.f32 %v1346, 0.0
    %v1441 = vmax.f32 %v1351, 0.0
    %v1442 = vmax.f32 %v1356, 0.0
    %v1443 = vmax.f32 %v1361, 0.0
    %v1444 = vmax.f32 %v1366, 0.0
    %v1445 = vmax.f32 %v1371, 0.0
    %v1446 = vmax.f32 %v1376, 0.0
    %v1447 = vmax.f32 %v1381, 0.0
    %v1448 = vld [vmem:[%s4] sm:$0xff]
    %v1449 = vld [vmem:[%s4 + $0x8] sm:$0xff]
    %v1450 = vld [vmem:[%s4 + $0x10] sm:$0xff]
    %v1451 = vld [vmem:[%s4 + $0x18] sm:$0xff]
    %v1452 = vld [vmem:[%s4 + $0x20] sm:$0xff]
    %v1453 = vld [vmem:[%s4 + $0x28] sm:$0xff]
    %v1454 = vld [vmem:[%s4 + $0x30] sm:$0xff]
    %v1455 = vld [vmem:[%s4 + $0x38] sm:$0xff]
    %v1456 = vld [vmem:[%s4 + $0x40] sm:$0xff]
    %v1457 = vld [vmem:[%s4 + $0x48] sm:$0xff]
    %v1458 = vld [vmem:[%s4 + $0x50] sm:$0xff]
    %v1459 = vld [vmem:[%s4 + $0x58] sm:$0xff]
    %v1460 = vld [vmem:[%s4 + $0x60] sm:$0xff]
    %v1461 = vld [vmem:[%s4 + $0x68] sm:$0xff]
    %v1462 = vld [vmem:[%s4 + $0x70] sm:$0xff]
    %v1463 = vld [vmem:[%s4 + $0x78] sm:$0xff]
    %v1464 = vld [vmem:[%s4 + $0x80] sm:$0xff]
    %v1465 = vld [vmem:[%s4 + $0x88] sm:$0xff]
    %v1466 = vld [vmem:[%s4 + $0x90] sm:$0xff]
    %v1467 = vld [vmem:[%s4 + $0x98] sm:$0xff]
    %v1468 = vld [vmem:[%s4 + $0xa0] sm:$0xff]
    %v1469 = vld [vmem:[%s4 + $0xa8] sm:$0xff]
    %v1470 = vld [vmem:[%s4 + $0xb0] sm:$0xff]
    %v1471 = vld [vmem:[%s4 + $0xb8] sm:$0xff]
    %v1472 = vld [vmem:[%s4 + $0xc0] sm:$0xff]
    %v1473 = vld [vmem:[%s4 + $0xc8] sm:$0xff]
    %v1474 = vld [vmem:[%s4 + $0xd0] sm:$0xff]
    %v1475 = vld [vmem:[%s4 + $0xd8] sm:$0xff]
    %v1476 = vld [vmem:[%s4 + $0xe0] sm:$0xff]
    %v1477 = vld [vmem:[%s4 + $0xe8] sm:$0xff]
    %v1478 = vld [vmem:[%s4 + $0xf0] sm:$0xff]
    %v1479 = vld [vmem:[%s4 + $0xf8] sm:$0xff]
    %v1480 = vld [vmem:[%s4 + $0x100] sm:$0xff]
    %v1481 = vld [vmem:[%s4 + $0x108] sm:$0xff]
    %v1482 = vld [vmem:[%s4 + $0x110] sm:$0xff]
    %v1483 = vld [vmem:[%s4 + $0x118] sm:$0xff]
    %v1484 = vld [vmem:[%s4 + $0x120] sm:$0xff]
    %v1485 = vld [vmem:[%s4 + $0x128] sm:$0xff]
    %v1486 = vld [vmem:[%s4 + $0x130] sm:$0xff]
    %v1487 = vld [vmem:[%s4 + $0x138] sm:$0xff]
    %v1488 = vld [vmem:[%s4 + $0x140] sm:$0xff]
    %v1489 = vld [vmem:[%s4 + $0x148] sm:$0xff]
    %v1490 = vld [vmem:[%s4 + $0x150] sm:$0xff]
    %v1491 = vld [vmem:[%s4 + $0x158] sm:$0xff]
    %v1492 = vld [vmem:[%s4 + $0x160] sm:$0xff]
    %v1493 = vld [vmem:[%s4 + $0x168] sm:$0xff]
    %v1494 = vld [vmem:[%s4 + $0x170] sm:$0xff]
    %v1495 = vld [vmem:[%s4 + $0x178] sm:$0xff]
    %v1496 = vld [vmem:[%s4 + $0x180] sm:$0xff]
    %v1497 = vld [vmem:[%s4 + $0x188] sm:$0xff]
    %v1498 = vld [vmem:[%s4 + $0x190] sm:$0xff]
    %v1499 = vld [vmem:[%s4 + $0x198] sm:$0xff]
    %v1500 = vld [vmem:[%s4 + $0x1a0] sm:$0xff]
    %v1501 = vld [vmem:[%s4 + $0x1a8] sm:$0xff]
    %v1502 = vld [vmem:[%s4 + $0x1b0] sm:$0xff]
    %v1503 = vld [vmem:[%s4 + $0x1b8] sm:$0xff]
    %v1504 = vld [vmem:[%s4 + $0x1c0] sm:$0xff]
    %v1505 = vld [vmem:[%s4 + $0x1c8] sm:$0xff]
    %v1506 = vld [vmem:[%s4 + $0x1d0] sm:$0xff]
    %v1507 = vld [vmem:[%s4 + $0x1d8] sm:$0xff]
    %v1508 = vld [vmem:[%s4 + $0x1e0] sm:$0xff]
    %v1509 = vld [vmem:[%s4 + $0x1e8] sm:$0xff]
    %v1510 = vld [vmem:[%s4 + $0x1f0] sm:$0xff]
    %v1511 = vld [vmem:[%s4 + $0x1f8] sm:$0xff]
    %v1512 = vld [vmem:[%s4 + $0x200] sm:$0xff]
    %v1513 = vld [vmem:[%s4 + $0x208] sm:$0xff]
    %v1514 = vld [vmem:[%s4 + $0x210] sm:$0xff]
    %v1515 = vld [vmem:[%s4 + $0x218] sm:$0xff]
    %v1516 = vld [vmem:[%s4 + $0x220] sm:$0xff]
    %v1517 = vld [vmem:[%s4 + $0x228] sm:$0xff]
    %v1518 = vld [vmem:[%s4 + $0x230] sm:$0xff]
    %v1519 = vld [vmem:[%s4 + $0x238] sm:$0xff]
    %v1520 = vld [vmem:[%s4 + $0x240] sm:$0xff]
    %v1521 = vld [vmem:[%s4 + $0x248] sm:$0xff]
    %v1522 = vld [vmem:[%s4 + $0x250] sm:$0xff]
    %v1523 = vld [vmem:[%s4 + $0x258] sm:$0xff]
    %v1524 = vld [vmem:[%s4 + $0x260] sm:$0xff]
    %v1525 = vld [vmem:[%s4 + $0x268] sm:$0xff]
    %v1526 = vld [vmem:[%s4 + $0x270] sm:$0xff]
    %v1527 = vld [vmem:[%s4 + $0x278] sm:$0xff]
    %v1528 = vld [vmem:[%s4 + $0x280] sm:$0xff]
    %v1529 = vld [vmem:[%s4 + $0x288] sm:$0xff]
    %v1530 = vld [vmem:[%s4 + $0x290] sm:$0xff]
    %v1531 = vld [vmem:[%s4 + $0x298] sm:$0xff]
    %v1532 = vld [vmem:[%s4 + $0x2a0] sm:$0xff]
    %v1533 = vld [vmem:[%s4 + $0x2a8] sm:$0xff]
    %v1534 = vld [vmem:[%s4 + $0x2b0] sm:$0xff]
    %v1535 = vld [vmem:[%s4 + $0x2b8] sm:$0xff]
    %v1536 = vld [vmem:[%s4 + $0x2c0] sm:$0xff]
    %v1537 = vld [vmem:[%s4 + $0x2c8] sm:$0xff]
    %v1538 = vld [vmem:[%s4 + $0x2d0] sm:$0xff]
    %v1539 = vld [vmem:[%s4 + $0x2d8] sm:$0xff]
    %v1540 = vld [vmem:[%s4 + $0x2e0] sm:$0xff]
    %v1541 = vld [vmem:[%s4 + $0x2e8] sm:$0xff]
    %v1542 = vld [vmem:[%s4 + $0x2f0] sm:$0xff]
    %v1543 = vld [vmem:[%s4 + $0x2f8] sm:$0xff]
    %v1544 = vld [vmem:[%s4 + $0x300] sm:$0xff]
    %v1545 = vld [vmem:[%s4 + $0x308] sm:$0xff]
    %v1546 = vld [vmem:[%s4 + $0x310] sm:$0xff]
    %v1547 = vld [vmem:[%s4 + $0x318] sm:$0xff]
    %v1548 = vld [vmem:[%s4 + $0x320] sm:$0xff]
    %v1549 = vld [vmem:[%s4 + $0x328] sm:$0xff]
    %v1550 = vld [vmem:[%s4 + $0x330] sm:$0xff]
    %v1551 = vld [vmem:[%s4 + $0x338] sm:$0xff]
    %v1552 = vld [vmem:[%s4 + $0x340] sm:$0xff]
    %v1553 = vld [vmem:[%s4 + $0x348] sm:$0xff]
    %v1554 = vld [vmem:[%s4 + $0x350] sm:$0xff]
    %v1555 = vld [vmem:[%s4 + $0x358] sm:$0xff]
    %v1556 = vld [vmem:[%s4 + $0x360] sm:$0xff]
    %v1557 = vld [vmem:[%s4 + $0x368] sm:$0xff]
    %v1558 = vld [vmem:[%s4 + $0x370] sm:$0xff]
    %v1559 = vld [vmem:[%s4 + $0x378] sm:$0xff]
    %v1560 = vld [vmem:[%s4 + $0x380] sm:$0xff]
    %v1561 = vld [vmem:[%s4 + $0x388] sm:$0xff]
    %v1562 = vld [vmem:[%s4 + $0x390] sm:$0xff]
    %v1563 = vld [vmem:[%s4 + $0x398] sm:$0xff]
    %v1564 = vld [vmem:[%s4 + $0x3a0] sm:$0xff]
    %v1565 = vld [vmem:[%s4 + $0x3a8] sm:$0xff]
    %v1566 = vld [vmem:[%s4 + $0x3b0] sm:$0xff]
    %v1567 = vld [vmem:[%s4 + $0x3b8] sm:$0xff]
    %v1568 = vld [vmem:[%s4 + $0x3c0] sm:$0xff]
    %v1569 = vld [vmem:[%s4 + $0x3c8] sm:$0xff]
    %v1570 = vld [vmem:[%s4 + $0x3d0] sm:$0xff]
    %v1571 = vld [vmem:[%s4 + $0x3d8] sm:$0xff]
    %v1572 = vld [vmem:[%s4 + $0x3e0] sm:$0xff]
    %v1573 = vld [vmem:[%s4 + $0x3e8] sm:$0xff]
    %v1574 = vld [vmem:[%s4 + $0x3f0] sm:$0xff]
    %v1575 = vld [vmem:[%s4 + $0x3f8] sm:$0xff]
    %v1576 = vpack.c.bf16 %v1385, %v1384
    %v1577 = vpack.c.bf16 %v1387, %v1386
    %v1578 = vpack.c.bf16 %v1389, %v1388
    %v1579 = vpack.c.bf16 %v1391, %v1390
    %v1580 = vpack.c.bf16 %v1393, %v1392
    %v1581 = vpack.c.bf16 %v1395, %v1394
    %v1582 = vpack.c.bf16 %v1397, %v1396
    %v1583 = vpack.c.bf16 %v1399, %v1398
    %v1584 = vpack.c.bf16 %v1401, %v1400
    %v1585 = vpack.c.bf16 %v1403, %v1402
    %v1586 = vpack.c.bf16 %v1405, %v1404
    %v1587 = vpack.c.bf16 %v1407, %v1406
    %v1588 = vpack.c.bf16 %v1409, %v1408
    %v1589 = vpack.c.bf16 %v1411, %v1410
    %v1590 = vpack.c.bf16 %v1413, %v1412
    %v1591 = vpack.c.bf16 %v1415, %v1414
    %v1592 = vpack.c.bf16 %v1417, %v1416
    %v1593 = vpack.c.bf16 %v1419, %v1418
    %v1594 = vpack.c.bf16 %v1421, %v1420
    %v1595 = vpack.c.bf16 %v1423, %v1422
    %v1596 = vpack.c.bf16 %v1425, %v1424
    %v1597 = vpack.c.bf16 %v1427, %v1426
    %v1598 = vpack.c.bf16 %v1429, %v1428
    %v1599 = vpack.c.bf16 %v1431, %v1430
    %v1600 = vpack.c.bf16 %v1433, %v1432
    %v1601 = vpack.c.bf16 %v1435, %v1434
    %v1602 = vpack.c.bf16 %v1437, %v1436
    %v1603 = vpack.c.bf16 %v1439, %v1438
    %v1604 = vpack.c.bf16 %v1441, %v1440
    %v1605 = vpack.c.bf16 %v1443, %v1442
    %v1606 = vpack.c.bf16 %v1445, %v1444
    %v1607 = vpack.c.bf16 %v1447, %v1446
    %v1736 = vunpack.c.l.b16 %v1448
    %v1737 = vunpack.c.h.b16 %v1448
    %v1738 = vunpack.c.l.b16 %v1449
    %v1739 = vunpack.c.h.b16 %v1449
    %v1740 = vunpack.c.l.b16 %v1450
    %v1741 = vunpack.c.h.b16 %v1450
    %v1742 = vunpack.c.l.b16 %v1451
    %v1743 = vunpack.c.h.b16 %v1451
    %v1744 = vunpack.c.l.b16 %v1452
    %v1745 = vunpack.c.h.b16 %v1452
    %v1746 = vunpack.c.l.b16 %v1453
    %v1747 = vunpack.c.h.b16 %v1453
    %v1748 = vunpack.c.l.b16 %v1454
    %v1749 = vunpack.c.h.b16 %v1454
    %v1750 = vunpack.c.l.b16 %v1455
    %v1751 = vunpack.c.h.b16 %v1455
    %v1752 = vunpack.c.l.b16 %v1456
    %v1753 = vunpack.c.h.b16 %v1456
    %v1754 = vunpack.c.l.b16 %v1457
    %v1755 = vunpack.c.h.b16 %v1457
    %v1756 = vunpack.c.l.b16 %v1458
    %v1757 = vunpack.c.h.b16 %v1458
    %v1758 = vunpack.c.l.b16 %v1459
    %v1759 = vunpack.c.h.b16 %v1459
    %v1760 = vunpack.c.l.b16 %v1460
    %v1761 = vunpack.c.h.b16 %v1460
    %v1762 = vunpack.c.l.b16 %v1461
    %v1763 = vunpack.c.h.b16 %v1461
    %v1764 = vunpack.c.l.b16 %v1462
    %v1765 = vunpack.c.h.b16 %v1462
    %v1766 = vunpack.c.l.b16 %v1463
    %v1767 = vunpack.c.h.b16 %v1463
    %v1768 = vunpack.c.l.b16 %v1464
    %v1769 = vunpack.c.h.b16 %v1464
    %v1770 = vunpack.c.l.b16 %v1465
    %v1771 = vunpack.c.h.b16 %v1465
    %v1772 = vunpack.c.l.b16 %v1466
    %v1773 = vunpack.c.h.b16 %v1466
    %v1774 = vunpack.c.l.b16 %v1467
    %v1775 = vunpack.c.h.b16 %v1467
    %v1776 = vunpack.c.l.b16 %v1468
    %v1777 = vunpack.c.h.b16 %v1468
    %v1778 = vunpack.c.l.b16 %v1469
    %v1779 = vunpack.c.h.b16 %v1469
    %v1780 = vunpack.c.l.b16 %v1470
    %v1781 = vunpack.c.h.b16 %v1470
    %v1782 = vunpack.c.l.b16 %v1471
    %v1783 = vunpack.c.h.b16 %v1471
    %v1784 = vunpack.c.l.b16 %v1472
    %v1785 = vunpack.c.h.b16 %v1472
    %v1786 = vunpack.c.l.b16 %v1473
    %v1787 = vunpack.c.h.b16 %v1473
    %v1788 = vunpack.c.l.b16 %v1474
    %v1789 = vunpack.c.h.b16 %v1474
    %v1790 = vunpack.c.l.b16 %v1475
    %v1791 = vunpack.c.h.b16 %v1475
    %v1792 = vunpack.c.l.b16 %v1476
    %v1793 = vunpack.c.h.b16 %v1476
    %v1794 = vunpack.c.l.b16 %v1477
    %v1795 = vunpack.c.h.b16 %v1477
    %v1796 = vunpack.c.l.b16 %v1478
    %v1797 = vunpack.c.h.b16 %v1478
    %v1798 = vunpack.c.l.b16 %v1479
    %v1799 = vunpack.c.h.b16 %v1479
    %v1800 = vunpack.c.l.b16 %v1480
    %v1801 = vunpack.c.h.b16 %v1480
    %v1802 = vunpack.c.l.b16 %v1481
    %v1803 = vunpack.c.h.b16 %v1481
    %v1804 = vunpack.c.l.b16 %v1482
    %v1805 = vunpack.c.h.b16 %v1482
    %v1806 = vunpack.c.l.b16 %v1483
    %v1807 = vunpack.c.h.b16 %v1483
    %v1808 = vunpack.c.l.b16 %v1484
    %v1809 = vunpack.c.h.b16 %v1484
    %v1810 = vunpack.c.l.b16 %v1485
    %v1811 = vunpack.c.h.b16 %v1485
    %v1812 = vunpack.c.l.b16 %v1486
    %v1813 = vunpack.c.h.b16 %v1486
    %v1814 = vunpack.c.l.b16 %v1487
    %v1815 = vunpack.c.h.b16 %v1487
    %v1816 = vunpack.c.l.b16 %v1488
    %v1817 = vunpack.c.h.b16 %v1488
    %v1818 = vunpack.c.l.b16 %v1489
    %v1819 = vunpack.c.h.b16 %v1489
    %v1820 = vunpack.c.l.b16 %v1490
    %v1821 = vunpack.c.h.b16 %v1490
    %v1822 = vunpack.c.l.b16 %v1491
    %v1823 = vunpack.c.h.b16 %v1491
    %v1824 = vunpack.c.l.b16 %v1492
    %v1825 = vunpack.c.h.b16 %v1492
    %v1826 = vunpack.c.l.b16 %v1493
    %v1827 = vunpack.c.h.b16 %v1493
    %v1828 = vunpack.c.l.b16 %v1494
    %v1829 = vunpack.c.h.b16 %v1494
    %v1830 = vunpack.c.l.b16 %v1495
    %v1831 = vunpack.c.h.b16 %v1495
    %v1832 = vunpack.c.l.b16 %v1496
    %v1833 = vunpack.c.h.b16 %v1496
    %v1834 = vunpack.c.l.b16 %v1497
    %v1835 = vunpack.c.h.b16 %v1497
    %v1836 = vunpack.c.l.b16 %v1498
    %v1837 = vunpack.c.h.b16 %v1498
    %v1838 = vunpack.c.l.b16 %v1499
    %v1839 = vunpack.c.h.b16 %v1499
    %v1840 = vunpack.c.l.b16 %v1500
    %v1841 = vunpack.c.h.b16 %v1500
    %v1842 = vunpack.c.l.b16 %v1501
    %v1843 = vunpack.c.h.b16 %v1501
    %v1844 = vunpack.c.l.b16 %v1502
    %v1845 = vunpack.c.h.b16 %v1502
    %v1846 = vunpack.c.l.b16 %v1503
    %v1847 = vunpack.c.h.b16 %v1503
    %v1848 = vunpack.c.l.b16 %v1504
    %v1849 = vunpack.c.h.b16 %v1504
    %v1850 = vunpack.c.l.b16 %v1505
    %v1851 = vunpack.c.h.b16 %v1505
    %v1852 = vunpack.c.l.b16 %v1506
    %v1853 = vunpack.c.h.b16 %v1506
    %v1854 = vunpack.c.l.b16 %v1507
    %v1855 = vunpack.c.h.b16 %v1507
    %v1856 = vunpack.c.l.b16 %v1508
    %v1857 = vunpack.c.h.b16 %v1508
    %v1858 = vunpack.c.l.b16 %v1509
    %v1859 = vunpack.c.h.b16 %v1509
    %v1860 = vunpack.c.l.b16 %v1510
    %v1861 = vunpack.c.h.b16 %v1510
    %v1862 = vunpack.c.l.b16 %v1511
    %v1863 = vunpack.c.h.b16 %v1511
    %v1864 = vunpack.c.l.b16 %v1512
    %v1865 = vunpack.c.h.b16 %v1512
    %v1866 = vunpack.c.l.b16 %v1513
    %v1867 = vunpack.c.h.b16 %v1513
    %v1868 = vunpack.c.l.b16 %v1514
    %v1869 = vunpack.c.h.b16 %v1514
    %v1870 = vunpack.c.l.b16 %v1515
    %v1871 = vunpack.c.h.b16 %v1515
    %v1872 = vunpack.c.l.b16 %v1516
    %v1873 = vunpack.c.h.b16 %v1516
    %v1874 = vunpack.c.l.b16 %v1517
    %v1875 = vunpack.c.h.b16 %v1517
    %v1876 = vunpack.c.l.b16 %v1518
    %v1877 = vunpack.c.h.b16 %v1518
    %v1878 = vunpack.c.l.b16 %v1519
    %v1879 = vunpack.c.h.b16 %v1519
    %v1880 = vunpack.c.l.b16 %v1520
    %v1881 = vunpack.c.h.b16 %v1520
    %v1882 = vunpack.c.l.b16 %v1521
    %v1883 = vunpack.c.h.b16 %v1521
    %v1884 = vunpack.c.l.b16 %v1522
    %v1885 = vunpack.c.h.b16 %v1522
    %v1886 = vunpack.c.l.b16 %v1523
    %v1887 = vunpack.c.h.b16 %v1523
    %v1888 = vunpack.c.l.b16 %v1524
    %v1889 = vunpack.c.h.b16 %v1524
    %v1890 = vunpack.c.l.b16 %v1525
    %v1891 = vunpack.c.h.b16 %v1525
    %v1892 = vunpack.c.l.b16 %v1526
    %v1893 = vunpack.c.h.b16 %v1526
    %v1894 = vunpack.c.l.b16 %v1527
    %v1895 = vunpack.c.h.b16 %v1527
    %v1896 = vunpack.c.l.b16 %v1528
    %v1897 = vunpack.c.h.b16 %v1528
    %v1898 = vunpack.c.l.b16 %v1529
    %v1899 = vunpack.c.h.b16 %v1529
    %v1900 = vunpack.c.l.b16 %v1530
    %v1901 = vunpack.c.h.b16 %v1530
    %v1902 = vunpack.c.l.b16 %v1531
    %v1903 = vunpack.c.h.b16 %v1531
    %v1904 = vunpack.c.l.b16 %v1532
    %v1905 = vunpack.c.h.b16 %v1532
    %v1906 = vunpack.c.l.b16 %v1533
    %v1907 = vunpack.c.h.b16 %v1533
    %v1908 = vunpack.c.l.b16 %v1534
    %v1909 = vunpack.c.h.b16 %v1534
    %v1910 = vunpack.c.l.b16 %v1535
    %v1911 = vunpack.c.h.b16 %v1535
    %v1912 = vunpack.c.l.b16 %v1536
    %v1913 = vunpack.c.h.b16 %v1536
    %v1914 = vunpack.c.l.b16 %v1537
    %v1915 = vunpack.c.h.b16 %v1537
    %v1916 = vunpack.c.l.b16 %v1538
    %v1917 = vunpack.c.h.b16 %v1538
    %v1918 = vunpack.c.l.b16 %v1539
    %v1919 = vunpack.c.h.b16 %v1539
    %v1920 = vunpack.c.l.b16 %v1540
    %v1921 = vunpack.c.h.b16 %v1540
    %v1922 = vunpack.c.l.b16 %v1541
    %v1923 = vunpack.c.h.b16 %v1541
    %v1924 = vunpack.c.l.b16 %v1542
    %v1925 = vunpack.c.h.b16 %v1542
    %v1926 = vunpack.c.l.b16 %v1543
    %v1927 = vunpack.c.h.b16 %v1543
    %v1928 = vunpack.c.l.b16 %v1544
    %v1929 = vunpack.c.h.b16 %v1544
    %v1930 = vunpack.c.l.b16 %v1545
    %v1931 = vunpack.c.h.b16 %v1545
    %v1932 = vunpack.c.l.b16 %v1546
    %v1933 = vunpack.c.h.b16 %v1546
    %v1934 = vunpack.c.l.b16 %v1547
    %v1935 = vunpack.c.h.b16 %v1547
    %v1936 = vunpack.c.l.b16 %v1548
    %v1937 = vunpack.c.h.b16 %v1548
    %v1938 = vunpack.c.l.b16 %v1549
    %v1939 = vunpack.c.h.b16 %v1549
    %v1940 = vunpack.c.l.b16 %v1550
    %v1941 = vunpack.c.h.b16 %v1550
    %v1942 = vunpack.c.l.b16 %v1551
    %v1943 = vunpack.c.h.b16 %v1551
    %v1944 = vunpack.c.l.b16 %v1552
    %v1945 = vunpack.c.h.b16 %v1552
    %v1946 = vunpack.c.l.b16 %v1553
    %v1947 = vunpack.c.h.b16 %v1553
    %v1948 = vunpack.c.l.b16 %v1554
    %v1949 = vunpack.c.h.b16 %v1554
    %v1950 = vunpack.c.l.b16 %v1555
    %v1951 = vunpack.c.h.b16 %v1555
    %v1952 = vunpack.c.l.b16 %v1556
    %v1953 = vunpack.c.h.b16 %v1556
    %v1954 = vunpack.c.l.b16 %v1557
    %v1955 = vunpack.c.h.b16 %v1557
    %v1956 = vunpack.c.l.b16 %v1558
    %v1957 = vunpack.c.h.b16 %v1558
    %v1958 = vunpack.c.l.b16 %v1559
    %v1959 = vunpack.c.h.b16 %v1559
    %v1960 = vunpack.c.l.b16 %v1560
    %v1961 = vunpack.c.h.b16 %v1560
    %v1962 = vunpack.c.l.b16 %v1561
    %v1963 = vunpack.c.h.b16 %v1561
    %v1964 = vunpack.c.l.b16 %v1562
    %v1965 = vunpack.c.h.b16 %v1562
    %v1966 = vunpack.c.l.b16 %v1563
    %v1967 = vunpack.c.h.b16 %v1563
    %v1968 = vunpack.c.l.b16 %v1564
    %v1969 = vunpack.c.h.b16 %v1564
    %v1970 = vunpack.c.l.b16 %v1565
    %v1971 = vunpack.c.h.b16 %v1565
    %v1972 = vunpack.c.l.b16 %v1566
    %v1973 = vunpack.c.h.b16 %v1566
    %v1974 = vunpack.c.l.b16 %v1567
    %v1975 = vunpack.c.h.b16 %v1567
    %v1976 = vunpack.c.l.b16 %v1568
    %v1977 = vunpack.c.h.b16 %v1568
    %v1978 = vunpack.c.l.b16 %v1569
    %v1979 = vunpack.c.h.b16 %v1569
    %v1980 = vunpack.c.l.b16 %v1570
    %v1981 = vunpack.c.h.b16 %v1570
    %v1982 = vunpack.c.l.b16 %v1571
    %v1983 = vunpack.c.h.b16 %v1571
    %v1984 = vunpack.c.l.b16 %v1572
    %v1985 = vunpack.c.h.b16 %v1572
    %v1986 = vunpack.c.l.b16 %v1573
    %v1987 = vunpack.c.h.b16 %v1573
    %v1988 = vunpack.c.l.b16 %v1574
    %v1989 = vunpack.c.h.b16 %v1574
    %v1990 = vunpack.c.l.b16 %v1575
    %v1991 = vunpack.c.h.b16 %v1575
    %v1992 = vpack.c.b16 %v1740, %v1736
    %v1993 = vpack.c.b16 %v1741, %v1737
    %v1994 = vpack.c.b16 %v1742, %v1738
    %v1995 = vpack.c.b16 %v1743, %v1739
    %v1996 = vpack.c.b16 %v1748, %v1744
    %v1997 = vpack.c.b16 %v1749, %v1745
    %v1998 = vpack.c.b16 %v1750, %v1746
    %v1999 = vpack.c.b16 %v1751, %v1747
    %v2000 = vpack.c.b16 %v1756, %v1752
    %v2001 = vpack.c.b16 %v1757, %v1753
    %v2002 = vpack.c.b16 %v1758, %v1754
    %v2003 = vpack.c.b16 %v1759, %v1755
    %v2004 = vpack.c.b16 %v1764, %v1760
    %v2005 = vpack.c.b16 %v1765, %v1761
    %v2006 = vpack.c.b16 %v1766, %v1762
    %v2007 = vpack.c.b16 %v1767, %v1763
    %v2008 = vpack.c.b16 %v1772, %v1768
    %v2009 = vpack.c.b16 %v1773, %v1769
    %v2010 = vpack.c.b16 %v1774, %v1770
    %v2011 = vpack.c.b16 %v1775, %v1771
    %v2012 = vpack.c.b16 %v1780, %v1776
    %v2013 = vpack.c.b16 %v1781, %v1777
    %v2014 = vpack.c.b16 %v1782, %v1778
    %v2015 = vpack.c.b16 %v1783, %v1779
    %v2016 = vpack.c.b16 %v1788, %v1784
    %v2017 = vpack.c.b16 %v1789, %v1785
    %v2018 = vpack.c.b16 %v1790, %v1786
    %v2019 = vpack.c.b16 %v1791, %v1787
    %v2020 = vpack.c.b16 %v1796, %v1792
    %v2021 = vpack.c.b16 %v1797, %v1793
    %v2022 = vpack.c.b16 %v1798, %v1794
    %v2023 = vpack.c.b16 %v1799, %v1795
    %v2024 = vpack.c.b16 %v1804, %v1800
    %v2025 = vpack.c.b16 %v1805, %v1801
    %v2026 = vpack.c.b16 %v1806, %v1802
    %v2027 = vpack.c.b16 %v1807, %v1803
    %v2028 = vpack.c.b16 %v1812, %v1808
    %v2029 = vpack.c.b16 %v1813, %v1809
    %v2030 = vpack.c.b16 %v1814, %v1810
    %v2031 = vpack.c.b16 %v1815, %v1811
    %v2032 = vpack.c.b16 %v1820, %v1816
    %v2033 = vpack.c.b16 %v1821, %v1817
    %v2034 = vpack.c.b16 %v1822, %v1818
    %v2035 = vpack.c.b16 %v1823, %v1819
    %v2036 = vpack.c.b16 %v1828, %v1824
    %v2037 = vpack.c.b16 %v1829, %v1825
    %v2038 = vpack.c.b16 %v1830, %v1826
    %v2039 = vpack.c.b16 %v1831, %v1827
    %v2040 = vpack.c.b16 %v1836, %v1832
    %v2041 = vpack.c.b16 %v1837, %v1833
    %v2042 = vpack.c.b16 %v1838, %v1834
    %v2043 = vpack.c.b16 %v1839, %v1835
    %v2044 = vpack.c.b16 %v1844, %v1840
    %v2045 = vpack.c.b16 %v1845, %v1841
    %v2046 = vpack.c.b16 %v1846, %v1842
    %v2047 = vpack.c.b16 %v1847, %v1843
    %v2048 = vpack.c.b16 %v1852, %v1848
    %v2049 = vpack.c.b16 %v1853, %v1849
    %v2050 = vpack.c.b16 %v1854, %v1850
    %v2051 = vpack.c.b16 %v1855, %v1851
    %v2052 = vpack.c.b16 %v1860, %v1856
    %v2053 = vpack.c.b16 %v1861, %v1857
    %v2054 = vpack.c.b16 %v1862, %v1858
    %v2055 = vpack.c.b16 %v1863, %v1859
    %v2056 = vpack.c.b16 %v1868, %v1864
    %v2057 = vpack.c.b16 %v1869, %v1865
    %v2058 = vpack.c.b16 %v1870, %v1866
    %v2059 = vpack.c.b16 %v1871, %v1867
    %v2060 = vpack.c.b16 %v1876, %v1872
    %v2061 = vpack.c.b16 %v1877, %v1873
    %v2062 = vpack.c.b16 %v1878, %v1874
    %v2063 = vpack.c.b16 %v1879, %v1875
    %v2064 = vpack.c.b16 %v1884, %v1880
    %v2065 = vpack.c.b16 %v1885, %v1881
    %v2066 = vpack.c.b16 %v1886, %v1882
    %v2067 = vpack.c.b16 %v1887, %v1883
    %v2068 = vpack.c.b16 %v1892, %v1888
    %v2069 = vpack.c.b16 %v1893, %v1889
    %v2070 = vpack.c.b16 %v1894, %v1890
    %v2071 = vpack.c.b16 %v1895, %v1891
    %v2072 = vpack.c.b16 %v1900, %v1896
    %v2073 = vpack.c.b16 %v1901, %v1897
    %v2074 = vpack.c.b16 %v1902, %v1898
    %v2075 = vpack.c.b16 %v1903, %v1899
    %v2076 = vpack.c.b16 %v1908, %v1904
    %v2077 = vpack.c.b16 %v1909, %v1905
    %v2078 = vpack.c.b16 %v1910, %v1906
    %v2079 = vpack.c.b16 %v1911, %v1907
    %v2080 = vpack.c.b16 %v1916, %v1912
    %v2081 = vpack.c.b16 %v1917, %v1913
    %v2082 = vpack.c.b16 %v1918, %v1914
    %v2083 = vpack.c.b16 %v1919, %v1915
    %v2084 = vpack.c.b16 %v1924, %v1920
    %v2085 = vpack.c.b16 %v1925, %v1921
    %v2086 = vpack.c.b16 %v1926, %v1922
    %v2087 = vpack.c.b16 %v1927, %v1923
    %v2088 = vpack.c.b16 %v1932, %v1928
    %v2089 = vpack.c.b16 %v1933, %v1929
    %v2090 = vpack.c.b16 %v1934, %v1930
    %v2091 = vpack.c.b16 %v1935, %v1931
    %v2092 = vpack.c.b16 %v1940, %v1936
    %v2093 = vpack.c.b16 %v1941, %v1937
    %v2094 = vpack.c.b16 %v1942, %v1938
    %v2095 = vpack.c.b16 %v1943, %v1939
    %v2096 = vpack.c.b16 %v1948, %v1944
    %v2097 = vpack.c.b16 %v1949, %v1945
    %v2098 = vpack.c.b16 %v1950, %v1946
    %v2099 = vpack.c.b16 %v1951, %v1947
    %v2100 = vpack.c.b16 %v1956, %v1952
    %v2101 = vpack.c.b16 %v1957, %v1953
    %v2102 = vpack.c.b16 %v1958, %v1954
    %v2103 = vpack.c.b16 %v1959, %v1955
    %v2104 = vpack.c.b16 %v1964, %v1960
    %v2105 = vpack.c.b16 %v1965, %v1961
    %v2106 = vpack.c.b16 %v1966, %v1962
    %v2107 = vpack.c.b16 %v1967, %v1963
    %v2108 = vpack.c.b16 %v1972, %v1968
    %v2109 = vpack.c.b16 %v1973, %v1969
    %v2110 = vpack.c.b16 %v1974, %v1970
    %v2111 = vpack.c.b16 %v1975, %v1971
    %v2112 = vpack.c.b16 %v1980, %v1976
    %v2113 = vpack.c.b16 %v1981, %v1977
    %v2114 = vpack.c.b16 %v1982, %v1978
    %v2115 = vpack.c.b16 %v1983, %v1979
    %v2116 = vpack.c.b16 %v1988, %v1984
    %v2117 = vpack.c.b16 %v1989, %v1985
    %v2118 = vpack.c.b16 %v1990, %v1986
    %v2119 = vpack.c.b16 %v1991, %v1987
    %2248 = vmatprep.subr.bf16.mxu0 0
    %2249 = vmatpush1.bf16.msra.mxu0 %v1583
    %2250 = vmatprep.subr.bf16.mxu0 0
    %2251 = vmatpush1.bf16.msra.mxu0 %v1582
    %2252 = vmatprep.subr.bf16.mxu0 0
    %2253 = vmatpush1.bf16.msra.mxu0 %v1581
    %2254 = vmatprep.subr.bf16.mxu0 0
    %2255 = vmatpush1.bf16.msra.mxu0 %v1580
    %2256 = vmatprep.subr.bf16.mxu0 0
    %2257 = vmatpush1.bf16.msra.mxu0 %v1579
    %2258 = vmatprep.subr.bf16.mxu0 0
    %2259 = vmatpush1.bf16.msra.mxu0 %v1578
    %2260 = vmatprep.subr.bf16.mxu0 0
    %2261 = vmatpush1.bf16.msra.mxu0 %v1577
    %2262 = vmatprep.subr.bf16.mxu0 0
    %2263 = vmatpush1.bf16.msra.mxu0 %v1576
    %2264 = vmatprep.subr.bf16.mxu0 0
    %2265 = vmatpush2.bf16.msra.mxu0 %v1591
    %2266 = vmatprep.subr.bf16.mxu0 0
    %2267 = vmatpush2.bf16.msra.mxu0 %v1590
    %2268 = vmatprep.subr.bf16.mxu0 0
    %2269 = vmatpush2.bf16.msra.mxu0 %v1589
    %2270 = vmatprep.subr.bf16.mxu0 0
    %2271 = vmatpush2.bf16.msra.mxu0 %v1588
    %2272 = vmatprep.subr.bf16.mxu0 0
    %2273 = vmatpush2.bf16.msra.mxu0 %v1587
    %2274 = vmatprep.subr.bf16.mxu0 0
    %2275 = vmatpush2.bf16.msra.mxu0 %v1586
    %2276 = vmatprep.subr.bf16.mxu0 0
    %2277 = vmatpush2.bf16.msra.mxu0 %v1585
    %2278 = vmatprep.subr.bf16.mxu0 0
    %2279 = vmatpush2.bf16.msra.mxu0 %v1584
    %2280 = vmatprep.mubr.bf16.mxu0 %v1993
    %2281 = vmatmul.mubr.bf16.gmra.mxu0 %v1992
    %v2282 = vpop.f32.mrf.mxu0
    %v2283 = vadd.f32 0.0, %v2282
    %v2284 = vpop.f32.mrf.mxu0
    %v2285 = vpop.f32.mrf.mxu0
    %v2286 = vadd.f32 0.0, %v2285
    %v2287 = vpop.f32.mrf.mxu0
    %2288 = vmatprep.mubr.bf16.mxu0 %v1997
    %2289 = vmatmul.mubr.bf16.gmra.mxu0 %v1996
    %v2290 = vpop.f32.mrf.mxu0
    %v2291 = vadd.f32 0.0, %v2290
    %v2292 = vpop.f32.mrf.mxu0
    %v2293 = vpop.f32.mrf.mxu0
    %v2294 = vadd.f32 0.0, %v2293
    %v2295 = vpop.f32.mrf.mxu0
    %2296 = vmatprep.mubr.bf16.mxu0 %v2001
    %2297 = vmatmul.mubr.bf16.gmra.mxu0 %v2000
    %v2298 = vpop.f32.mrf.mxu0
    %v2299 = vadd.f32 0.0, %v2298
    %v2300 = vpop.f32.mrf.mxu0
    %v2301 = vpop.f32.mrf.mxu0
    %v2302 = vadd.f32 0.0, %v2301
    %v2303 = vpop.f32.mrf.mxu0
    %2304 = vmatprep.mubr.bf16.mxu0 %v2005
    %2305 = vmatmul.mubr.bf16.gmra.mxu0 %v2004
    %v2306 = vpop.f32.mrf.mxu0
    %v2307 = vadd.f32 0.0, %v2306
    %v2308 = vpop.f32.mrf.mxu0
    %v2309 = vpop.f32.mrf.mxu0
    %v2310 = vadd.f32 0.0, %v2309
    %v2311 = vpop.f32.mrf.mxu0
    %2312 = vmatprep.mubr.bf16.mxu0 %v2009
    %2313 = vmatmul.mubr.bf16.gmra.mxu0 %v2008
    %v2314 = vpop.f32.mrf.mxu0
    %v2315 = vadd.f32 0.0, %v2314
    %v2316 = vpop.f32.mrf.mxu0
    %v2317 = vpop.f32.mrf.mxu0
    %v2318 = vadd.f32 0.0, %v2317
    %v2319 = vpop.f32.mrf.mxu0
    %2320 = vmatprep.mubr.bf16.mxu0 %v2013
    %2321 = vmatmul.mubr.bf16.gmra.mxu0 %v2012
    %v2322 = vpop.f32.mrf.mxu0
    %v2323 = vadd.f32 0.0, %v2322
    %v2324 = vpop.f32.mrf.mxu0
    %v2325 = vpop.f32.mrf.mxu0
    %v2326 = vadd.f32 0.0, %v2325
    %v2327 = vpop.f32.mrf.mxu0
    %2328 = vmatprep.mubr.bf16.mxu0 %v2017
    %2329 = vmatmul.mubr.bf16.gmra.mxu0 %v2016
    %v2330 = vpop.f32.mrf.mxu0
    %v2331 = vadd.f32 0.0, %v2330
    %v2332 = vpop.f32.mrf.mxu0
    %v2333 = vpop.f32.mrf.mxu0
    %v2334 = vadd.f32 0.0, %v2333
    %v2335 = vpop.f32.mrf.mxu0
    %2336 = vmatprep.mubr.bf16.mxu0 %v2021
    %2337 = vmatmul.mubr.bf16.gmra.mxu0 %v2020
    %v2338 = vpop.f32.mrf.mxu0
    %v2339 = vadd.f32 0.0, %v2338
    %v2340 = vpop.f32.mrf.mxu0
    %v2341 = vpop.f32.mrf.mxu0
    %v2342 = vadd.f32 0.0, %v2341
    %v2343 = vpop.f32.mrf.mxu0
    %2344 = vmatprep.mubr.bf16.mxu0 %v2025
    %2345 = vmatmul.mubr.bf16.gmra.mxu0 %v2024
    %v2346 = vpop.f32.mrf.mxu0
    %v2347 = vadd.f32 0.0, %v2346
    %v2348 = vpop.f32.mrf.mxu0
    %v2349 = vpop.f32.mrf.mxu0
    %v2350 = vadd.f32 0.0, %v2349
    %v2351 = vpop.f32.mrf.mxu0
    %2352 = vmatprep.mubr.bf16.mxu0 %v2029
    %2353 = vmatmul.mubr.bf16.gmra.mxu0 %v2028
    %v2354 = vpop.f32.mrf.mxu0
    %v2355 = vadd.f32 0.0, %v2354
    %v2356 = vpop.f32.mrf.mxu0
    %v2357 = vpop.f32.mrf.mxu0
    %v2358 = vadd.f32 0.0, %v2357
    %v2359 = vpop.f32.mrf.mxu0
    %2360 = vmatprep.mubr.bf16.mxu0 %v2033
    %2361 = vmatmul.mubr.bf16.gmra.mxu0 %v2032
    %v2362 = vpop.f32.mrf.mxu0
    %v2363 = vadd.f32 0.0, %v2362
    %v2364 = vpop.f32.mrf.mxu0
    %v2365 = vpop.f32.mrf.mxu0
    %v2366 = vadd.f32 0.0, %v2365
    %v2367 = vpop.f32.mrf.mxu0
    %2368 = vmatprep.mubr.bf16.mxu0 %v2037
    %2369 = vmatmul.mubr.bf16.gmra.mxu0 %v2036
    %v2370 = vpop.f32.mrf.mxu0
    %v2371 = vadd.f32 0.0, %v2370
    %v2372 = vpop.f32.mrf.mxu0
    %v2373 = vpop.f32.mrf.mxu0
    %v2374 = vadd.f32 0.0, %v2373
    %v2375 = vpop.f32.mrf.mxu0
    %2376 = vmatprep.mubr.bf16.mxu0 %v2041
    %2377 = vmatmul.mubr.bf16.gmra.mxu0 %v2040
    %v2378 = vpop.f32.mrf.mxu0
    %v2379 = vadd.f32 0.0, %v2378
    %v2380 = vpop.f32.mrf.mxu0
    %v2381 = vpop.f32.mrf.mxu0
    %v2382 = vadd.f32 0.0, %v2381
    %v2383 = vpop.f32.mrf.mxu0
    %2384 = vmatprep.mubr.bf16.mxu0 %v2045
    %2385 = vmatmul.mubr.bf16.gmra.mxu0 %v2044
    %v2386 = vpop.f32.mrf.mxu0
    %v2387 = vadd.f32 0.0, %v2386
    %v2388 = vpop.f32.mrf.mxu0
    %v2389 = vpop.f32.mrf.mxu0
    %v2390 = vadd.f32 0.0, %v2389
    %v2391 = vpop.f32.mrf.mxu0
    %2392 = vmatprep.mubr.bf16.mxu0 %v2049
    %2393 = vmatmul.mubr.bf16.gmra.mxu0 %v2048
    %v2394 = vpop.f32.mrf.mxu0
    %v2395 = vadd.f32 0.0, %v2394
    %v2396 = vpop.f32.mrf.mxu0
    %v2397 = vpop.f32.mrf.mxu0
    %v2398 = vadd.f32 0.0, %v2397
    %v2399 = vpop.f32.mrf.mxu0
    %2400 = vmatprep.mubr.bf16.mxu0 %v2053
    %2401 = vmatmul.mubr.bf16.gmra.mxu0 %v2052
    %v2402 = vpop.f32.mrf.mxu0
    %v2403 = vadd.f32 0.0, %v2402
    %v2404 = vpop.f32.mrf.mxu0
    %v2405 = vpop.f32.mrf.mxu0
    %v2406 = vadd.f32 0.0, %v2405
    %v2407 = vpop.f32.mrf.mxu0
    %2408 = vmatprep.mubr.bf16.mxu0 %v2057
    %2409 = vmatmul.mubr.bf16.gmra.mxu0 %v2056
    %v2410 = vpop.f32.mrf.mxu0
    %v2411 = vadd.f32 0.0, %v2410
    %v2412 = vpop.f32.mrf.mxu0
    %v2413 = vpop.f32.mrf.mxu0
    %v2414 = vadd.f32 0.0, %v2413
    %v2415 = vpop.f32.mrf.mxu0
    %2416 = vmatprep.mubr.bf16.mxu0 %v2061
    %2417 = vmatmul.mubr.bf16.gmra.mxu0 %v2060
    %v2418 = vpop.f32.mrf.mxu0
    %v2419 = vadd.f32 0.0, %v2418
    %v2420 = vpop.f32.mrf.mxu0
    %v2421 = vpop.f32.mrf.mxu0
    %v2422 = vadd.f32 0.0, %v2421
    %v2423 = vpop.f32.mrf.mxu0
    %2424 = vmatprep.mubr.bf16.mxu0 %v2065
    %2425 = vmatmul.mubr.bf16.gmra.mxu0 %v2064
    %v2426 = vpop.f32.mrf.mxu0
    %v2427 = vadd.f32 0.0, %v2426
    %v2428 = vpop.f32.mrf.mxu0
    %v2429 = vpop.f32.mrf.mxu0
    %v2430 = vadd.f32 0.0, %v2429
    %v2431 = vpop.f32.mrf.mxu0
    %2432 = vmatprep.mubr.bf16.mxu0 %v2069
    %2433 = vmatmul.mubr.bf16.gmra.mxu0 %v2068
    %v2434 = vpop.f32.mrf.mxu0
    %v2435 = vadd.f32 0.0, %v2434
    %v2436 = vpop.f32.mrf.mxu0
    %v2437 = vpop.f32.mrf.mxu0
    %v2438 = vadd.f32 0.0, %v2437
    %v2439 = vpop.f32.mrf.mxu0
    %2440 = vmatprep.mubr.bf16.mxu0 %v2073
    %2441 = vmatmul.mubr.bf16.gmra.mxu0 %v2072
    %v2442 = vpop.f32.mrf.mxu0
    %v2443 = vadd.f32 0.0, %v2442
    %v2444 = vpop.f32.mrf.mxu0
    %v2445 = vpop.f32.mrf.mxu0
    %v2446 = vadd.f32 0.0, %v2445
    %v2447 = vpop.f32.mrf.mxu0
    %2448 = vmatprep.mubr.bf16.mxu0 %v2077
    %2449 = vmatmul.mubr.bf16.gmra.mxu0 %v2076
    %v2450 = vpop.f32.mrf.mxu0
    %v2451 = vadd.f32 0.0, %v2450
    %v2452 = vpop.f32.mrf.mxu0
    %v2453 = vpop.f32.mrf.mxu0
    %v2454 = vadd.f32 0.0, %v2453
    %v2455 = vpop.f32.mrf.mxu0
    %2456 = vmatprep.mubr.bf16.mxu0 %v2081
    %2457 = vmatmul.mubr.bf16.gmra.mxu0 %v2080
    %v2458 = vpop.f32.mrf.mxu0
    %v2459 = vadd.f32 0.0, %v2458
    %v2460 = vpop.f32.mrf.mxu0
    %v2461 = vpop.f32.mrf.mxu0
    %v2462 = vadd.f32 0.0, %v2461
    %v2463 = vpop.f32.mrf.mxu0
    %2464 = vmatprep.mubr.bf16.mxu0 %v2085
    %2465 = vmatmul.mubr.bf16.gmra.mxu0 %v2084
    %v2466 = vpop.f32.mrf.mxu0
    %v2467 = vadd.f32 0.0, %v2466
    %v2468 = vpop.f32.mrf.mxu0
    %v2469 = vpop.f32.mrf.mxu0
    %v2470 = vadd.f32 0.0, %v2469
    %v2471 = vpop.f32.mrf.mxu0
    %2472 = vmatprep.mubr.bf16.mxu0 %v2089
    %2473 = vmatmul.mubr.bf16.gmra.mxu0 %v2088
    %v2474 = vpop.f32.mrf.mxu0
    %v2475 = vadd.f32 0.0, %v2474
    %v2476 = vpop.f32.mrf.mxu0
    %v2477 = vpop.f32.mrf.mxu0
    %v2478 = vadd.f32 0.0, %v2477
    %v2479 = vpop.f32.mrf.mxu0
    %2480 = vmatprep.mubr.bf16.mxu0 %v2093
    %2481 = vmatmul.mubr.bf16.gmra.mxu0 %v2092
    %v2482 = vpop.f32.mrf.mxu0
    %v2483 = vadd.f32 0.0, %v2482
    %v2484 = vpop.f32.mrf.mxu0
    %v2485 = vpop.f32.mrf.mxu0
    %v2486 = vadd.f32 0.0, %v2485
    %v2487 = vpop.f32.mrf.mxu0
    %2488 = vmatprep.mubr.bf16.mxu0 %v2097
    %2489 = vmatmul.mubr.bf16.gmra.mxu0 %v2096
    %v2490 = vpop.f32.mrf.mxu0
    %v2491 = vadd.f32 0.0, %v2490
    %v2492 = vpop.f32.mrf.mxu0
    %v2493 = vpop.f32.mrf.mxu0
    %v2494 = vadd.f32 0.0, %v2493
    %v2495 = vpop.f32.mrf.mxu0
    %2496 = vmatprep.mubr.bf16.mxu0 %v2101
    %2497 = vmatmul.mubr.bf16.gmra.mxu0 %v2100
    %v2498 = vpop.f32.mrf.mxu0
    %v2499 = vadd.f32 0.0, %v2498
    %v2500 = vpop.f32.mrf.mxu0
    %v2501 = vpop.f32.mrf.mxu0
    %v2502 = vadd.f32 0.0, %v2501
    %v2503 = vpop.f32.mrf.mxu0
    %2504 = vmatprep.mubr.bf16.mxu0 %v2105
    %2505 = vmatmul.mubr.bf16.gmra.mxu0 %v2104
    %v2506 = vpop.f32.mrf.mxu0
    %v2507 = vadd.f32 0.0, %v2506
    %v2508 = vpop.f32.mrf.mxu0
    %v2509 = vpop.f32.mrf.mxu0
    %v2510 = vadd.f32 0.0, %v2509
    %v2511 = vpop.f32.mrf.mxu0
    %2512 = vmatprep.mubr.bf16.mxu0 %v2109
    %2513 = vmatmul.mubr.bf16.gmra.mxu0 %v2108
    %v2514 = vpop.f32.mrf.mxu0
    %v2515 = vadd.f32 0.0, %v2514
    %v2516 = vpop.f32.mrf.mxu0
    %v2517 = vpop.f32.mrf.mxu0
    %v2518 = vadd.f32 0.0, %v2517
    %v2519 = vpop.f32.mrf.mxu0
    %2520 = vmatprep.mubr.bf16.mxu0 %v2113
    %2521 = vmatmul.mubr.bf16.gmra.mxu0 %v2112
    %v2522 = vpop.f32.mrf.mxu0
    %v2523 = vadd.f32 0.0, %v2522
    %v2524 = vpop.f32.mrf.mxu0
    %v2525 = vpop.f32.mrf.mxu0
    %v2526 = vadd.f32 0.0, %v2525
    %v2527 = vpop.f32.mrf.mxu0
    %2528 = vmatprep.mubr.bf16.mxu0 %v2117
    %2529 = vmatmul.mubr.bf16.gmra.mxu0 %v2116
    %v2530 = vpop.f32.mrf.mxu0
    %v2531 = vadd.f32 0.0, %v2530
    %v2532 = vpop.f32.mrf.mxu0
    %v2533 = vpop.f32.mrf.mxu0
    %v2534 = vadd.f32 0.0, %v2533
    %v2535 = vpop.f32.mrf.mxu0
    %2536 = vdwg.mxu0
    %2537 = vmatprep.subr.bf16.mxu0 0
    %2538 = vmatpush1.bf16.msra.mxu0 %v1599
    %2539 = vmatprep.subr.bf16.mxu0 0
    %2540 = vmatpush1.bf16.msra.mxu0 %v1598
    %2541 = vmatprep.subr.bf16.mxu0 0
    %2542 = vmatpush1.bf16.msra.mxu0 %v1597
    %2543 = vmatprep.subr.bf16.mxu0 0
    %2544 = vmatpush1.bf16.msra.mxu0 %v1596
    %2545 = vmatprep.subr.bf16.mxu0 0
    %2546 = vmatpush1.bf16.msra.mxu0 %v1595
    %2547 = vmatprep.subr.bf16.mxu0 0
    %2548 = vmatpush1.bf16.msra.mxu0 %v1594
    %2549 = vmatprep.subr.bf16.mxu0 0
    %2550 = vmatpush1.bf16.msra.mxu0 %v1593
    %2551 = vmatprep.subr.bf16.mxu0 0
    %2552 = vmatpush1.bf16.msra.mxu0 %v1592
    %2553 = vmatprep.subr.bf16.mxu0 0
    %2554 = vmatpush2.bf16.msra.mxu0 %v1607
    %2555 = vmatprep.subr.bf16.mxu0 0
    %2556 = vmatpush2.bf16.msra.mxu0 %v1606
    %2557 = vmatprep.subr.bf16.mxu0 0
    %2558 = vmatpush2.bf16.msra.mxu0 %v1605
    %2559 = vmatprep.subr.bf16.mxu0 0
    %2560 = vmatpush2.bf16.msra.mxu0 %v1604
    %2561 = vmatprep.subr.bf16.mxu0 0
    %2562 = vmatpush2.bf16.msra.mxu0 %v1603
    %2563 = vmatprep.subr.bf16.mxu0 0
    %2564 = vmatpush2.bf16.msra.mxu0 %v1602
    %2565 = vmatprep.subr.bf16.mxu0 0
    %2566 = vmatpush2.bf16.msra.mxu0 %v1601
    %2567 = vmatprep.subr.bf16.mxu0 0
    %2568 = vmatpush2.bf16.msra.mxu0 %v1600
    %2569 = vmatprep.mubr.bf16.mxu0 %v1995
    %2570 = vmatmul.mubr.bf16.gmra.mxu0 %v1994
    %v2571 = vpop.f32.mrf.mxu0
    %v2572 = vadd.f32 %v2283, %v2571
    %v2573 = vpop.f32.mrf.mxu0
    %v2574 = vpop.f32.mrf.mxu0
    %v2575 = vadd.f32 %v2286, %v2574
    %v2576 = vpop.f32.mrf.mxu0
    %2577 = vmatprep.mubr.bf16.mxu0 %v1999
    %2578 = vmatmul.mubr.bf16.gmra.mxu0 %v1998
    %v2579 = vpop.f32.mrf.mxu0
    %v2580 = vadd.f32 %v2291, %v2579
    %v2581 = vpop.f32.mrf.mxu0
    %v2582 = vpop.f32.mrf.mxu0
    %v2583 = vadd.f32 %v2294, %v2582
    %v2584 = vpop.f32.mrf.mxu0
    %2585 = vmatprep.mubr.bf16.mxu0 %v2003
    %2586 = vmatmul.mubr.bf16.gmra.mxu0 %v2002
    %v2587 = vpop.f32.mrf.mxu0
    %v2588 = vadd.f32 %v2299, %v2587
    %v2589 = vpop.f32.mrf.mxu0
    %v2590 = vpop.f32.mrf.mxu0
    %v2591 = vadd.f32 %v2302, %v2590
    %v2592 = vpop.f32.mrf.mxu0
    %2593 = vmatprep.mubr.bf16.mxu0 %v2007
    %2594 = vmatmul.mubr.bf16.gmra.mxu0 %v2006
    %v2595 = vpop.f32.mrf.mxu0
    %v2596 = vadd.f32 %v2307, %v2595
    %v2597 = vpop.f32.mrf.mxu0
    %v2598 = vpop.f32.mrf.mxu0
    %v2599 = vadd.f32 %v2310, %v2598
    %v2600 = vpop.f32.mrf.mxu0
    %2601 = vmatprep.mubr.bf16.mxu0 %v2011
    %2602 = vmatmul.mubr.bf16.gmra.mxu0 %v2010
    %v2603 = vpop.f32.mrf.mxu0
    %v2604 = vadd.f32 %v2315, %v2603
    %v2605 = vpop.f32.mrf.mxu0
    %v2606 = vpop.f32.mrf.mxu0
    %v2607 = vadd.f32 %v2318, %v2606
    %v2608 = vpop.f32.mrf.mxu0
    %2609 = vmatprep.mubr.bf16.mxu0 %v2015
    %2610 = vmatmul.mubr.bf16.gmra.mxu0 %v2014
    %v2611 = vpop.f32.mrf.mxu0
    %v2612 = vadd.f32 %v2323, %v2611
    %v2613 = vpop.f32.mrf.mxu0
    %v2614 = vpop.f32.mrf.mxu0
    %v2615 = vadd.f32 %v2326, %v2614
    %v2616 = vpop.f32.mrf.mxu0
    %2617 = vmatprep.mubr.bf16.mxu0 %v2019
    %2618 = vmatmul.mubr.bf16.gmra.mxu0 %v2018
    %v2619 = vpop.f32.mrf.mxu0
    %v2620 = vadd.f32 %v2331, %v2619
    %v2621 = vpop.f32.mrf.mxu0
    %v2622 = vpop.f32.mrf.mxu0
    %v2623 = vadd.f32 %v2334, %v2622
    %v2624 = vpop.f32.mrf.mxu0
    %2625 = vmatprep.mubr.bf16.mxu0 %v2023
    %2626 = vmatmul.mubr.bf16.gmra.mxu0 %v2022
    %v2627 = vpop.f32.mrf.mxu0
    %v2628 = vadd.f32 %v2339, %v2627
    %v2629 = vpop.f32.mrf.mxu0
    %v2630 = vpop.f32.mrf.mxu0
    %v2631 = vadd.f32 %v2342, %v2630
    %v2632 = vpop.f32.mrf.mxu0
    %2633 = vmatprep.mubr.bf16.mxu0 %v2027
    %2634 = vmatmul.mubr.bf16.gmra.mxu0 %v2026
    %v2635 = vpop.f32.mrf.mxu0
    %v2636 = vadd.f32 %v2347, %v2635
    %v2637 = vpop.f32.mrf.mxu0
    %v2638 = vpop.f32.mrf.mxu0
    %v2639 = vadd.f32 %v2350, %v2638
    %v2640 = vpop.f32.mrf.mxu0
    %2641 = vmatprep.mubr.bf16.mxu0 %v2031
    %2642 = vmatmul.mubr.bf16.gmra.mxu0 %v2030
    %v2643 = vpop.f32.mrf.mxu0
    %v2644 = vadd.f32 %v2355, %v2643
    %v2645 = vpop.f32.mrf.mxu0
    %v2646 = vpop.f32.mrf.mxu0
    %v2647 = vadd.f32 %v2358, %v2646
    %v2648 = vpop.f32.mrf.mxu0
    %2649 = vmatprep.mubr.bf16.mxu0 %v2035
    %2650 = vmatmul.mubr.bf16.gmra.mxu0 %v2034
    %v2651 = vpop.f32.mrf.mxu0
    %v2652 = vadd.f32 %v2363, %v2651
    %v2653 = vpop.f32.mrf.mxu0
    %v2654 = vpop.f32.mrf.mxu0
    %v2655 = vadd.f32 %v2366, %v2654
    %v2656 = vpop.f32.mrf.mxu0
    %2657 = vmatprep.mubr.bf16.mxu0 %v2039
    %2658 = vmatmul.mubr.bf16.gmra.mxu0 %v2038
    %v2659 = vpop.f32.mrf.mxu0
    %v2660 = vadd.f32 %v2371, %v2659
    %v2661 = vpop.f32.mrf.mxu0
    %v2662 = vpop.f32.mrf.mxu0
    %v2663 = vadd.f32 %v2374, %v2662
    %v2664 = vpop.f32.mrf.mxu0
    %2665 = vmatprep.mubr.bf16.mxu0 %v2043
    %2666 = vmatmul.mubr.bf16.gmra.mxu0 %v2042
    %v2667 = vpop.f32.mrf.mxu0
    %v2668 = vadd.f32 %v2379, %v2667
    %v2669 = vpop.f32.mrf.mxu0
    %v2670 = vpop.f32.mrf.mxu0
    %v2671 = vadd.f32 %v2382, %v2670
    %v2672 = vpop.f32.mrf.mxu0
    %2673 = vmatprep.mubr.bf16.mxu0 %v2047
    %2674 = vmatmul.mubr.bf16.gmra.mxu0 %v2046
    %v2675 = vpop.f32.mrf.mxu0
    %v2676 = vadd.f32 %v2387, %v2675
    %v2677 = vpop.f32.mrf.mxu0
    %v2678 = vpop.f32.mrf.mxu0
    %v2679 = vadd.f32 %v2390, %v2678
    %v2680 = vpop.f32.mrf.mxu0
    %2681 = vmatprep.mubr.bf16.mxu0 %v2051
    %2682 = vmatmul.mubr.bf16.gmra.mxu0 %v2050
    %v2683 = vpop.f32.mrf.mxu0
    %v2684 = vadd.f32 %v2395, %v2683
    %v2685 = vpop.f32.mrf.mxu0
    %v2686 = vpop.f32.mrf.mxu0
    %v2687 = vadd.f32 %v2398, %v2686
    %v2688 = vpop.f32.mrf.mxu0
    %2689 = vmatprep.mubr.bf16.mxu0 %v2055
    %2690 = vmatmul.mubr.bf16.gmra.mxu0 %v2054
    %v2691 = vpop.f32.mrf.mxu0
    %v2692 = vadd.f32 %v2403, %v2691
    %v2693 = vpop.f32.mrf.mxu0
    %v2694 = vpop.f32.mrf.mxu0
    %v2695 = vadd.f32 %v2406, %v2694
    %v2696 = vpop.f32.mrf.mxu0
    %2697 = vmatprep.mubr.bf16.mxu0 %v2059
    %2698 = vmatmul.mubr.bf16.gmra.mxu0 %v2058
    %v2699 = vpop.f32.mrf.mxu0
    %v2700 = vadd.f32 %v2411, %v2699
    %v2701 = vpop.f32.mrf.mxu0
    %v2702 = vpop.f32.mrf.mxu0
    %v2703 = vadd.f32 %v2414, %v2702
    %v2704 = vpop.f32.mrf.mxu0
    %2705 = vmatprep.mubr.bf16.mxu0 %v2063
    %2706 = vmatmul.mubr.bf16.gmra.mxu0 %v2062
    %v2707 = vpop.f32.mrf.mxu0
    %v2708 = vadd.f32 %v2419, %v2707
    %v2709 = vpop.f32.mrf.mxu0
    %v2710 = vpop.f32.mrf.mxu0
    %v2711 = vadd.f32 %v2422, %v2710
    %v2712 = vpop.f32.mrf.mxu0
    %2713 = vmatprep.mubr.bf16.mxu0 %v2067
    %2714 = vmatmul.mubr.bf16.gmra.mxu0 %v2066
    %v2715 = vpop.f32.mrf.mxu0
    %v2716 = vadd.f32 %v2427, %v2715
    %v2717 = vpop.f32.mrf.mxu0
    %v2718 = vpop.f32.mrf.mxu0
    %v2719 = vadd.f32 %v2430, %v2718
    %v2720 = vpop.f32.mrf.mxu0
    %2721 = vmatprep.mubr.bf16.mxu0 %v2071
    %2722 = vmatmul.mubr.bf16.gmra.mxu0 %v2070
    %v2723 = vpop.f32.mrf.mxu0
    %v2724 = vadd.f32 %v2435, %v2723
    %v2725 = vpop.f32.mrf.mxu0
    %v2726 = vpop.f32.mrf.mxu0
    %v2727 = vadd.f32 %v2438, %v2726
    %v2728 = vpop.f32.mrf.mxu0
    %2729 = vmatprep.mubr.bf16.mxu0 %v2075
    %2730 = vmatmul.mubr.bf16.gmra.mxu0 %v2074
    %v2731 = vpop.f32.mrf.mxu0
    %v2732 = vadd.f32 %v2443, %v2731
    %v2733 = vpop.f32.mrf.mxu0
    %v2734 = vpop.f32.mrf.mxu0
    %v2735 = vadd.f32 %v2446, %v2734
    %v2736 = vpop.f32.mrf.mxu0
    %2737 = vmatprep.mubr.bf16.mxu0 %v2079
    %2738 = vmatmul.mubr.bf16.gmra.mxu0 %v2078
    %v2739 = vpop.f32.mrf.mxu0
    %v2740 = vadd.f32 %v2451, %v2739
    %v2741 = vpop.f32.mrf.mxu0
    %v2742 = vpop.f32.mrf.mxu0
    %v2743 = vadd.f32 %v2454, %v2742
    %v2744 = vpop.f32.mrf.mxu0
    %2745 = vmatprep.mubr.bf16.mxu0 %v2083
    %2746 = vmatmul.mubr.bf16.gmra.mxu0 %v2082
    %v2747 = vpop.f32.mrf.mxu0
    %v2748 = vadd.f32 %v2459, %v2747
    %v2749 = vpop.f32.mrf.mxu0
    %v2750 = vpop.f32.mrf.mxu0
    %v2751 = vadd.f32 %v2462, %v2750
    %v2752 = vpop.f32.mrf.mxu0
    %2753 = vmatprep.mubr.bf16.mxu0 %v2087
    %2754 = vmatmul.mubr.bf16.gmra.mxu0 %v2086
    %v2755 = vpop.f32.mrf.mxu0
    %v2756 = vadd.f32 %v2467, %v2755
    %v2757 = vpop.f32.mrf.mxu0
    %v2758 = vpop.f32.mrf.mxu0
    %v2759 = vadd.f32 %v2470, %v2758
    %v2760 = vpop.f32.mrf.mxu0
    %2761 = vmatprep.mubr.bf16.mxu0 %v2091
    %2762 = vmatmul.mubr.bf16.gmra.mxu0 %v2090
    %v2763 = vpop.f32.mrf.mxu0
    %v2764 = vadd.f32 %v2475, %v2763
    %v2765 = vpop.f32.mrf.mxu0
    %v2766 = vpop.f32.mrf.mxu0
    %v2767 = vadd.f32 %v2478, %v2766
    %v2768 = vpop.f32.mrf.mxu0
    %2769 = vmatprep.mubr.bf16.mxu0 %v2095
    %2770 = vmatmul.mubr.bf16.gmra.mxu0 %v2094
    %v2771 = vpop.f32.mrf.mxu0
    %v2772 = vadd.f32 %v2483, %v2771
    %v2773 = vpop.f32.mrf.mxu0
    %v2774 = vpop.f32.mrf.mxu0
    %v2775 = vadd.f32 %v2486, %v2774
    %v2776 = vpop.f32.mrf.mxu0
    %2777 = vmatprep.mubr.bf16.mxu0 %v2099
    %2778 = vmatmul.mubr.bf16.gmra.mxu0 %v2098
    %v2779 = vpop.f32.mrf.mxu0
    %v2780 = vadd.f32 %v2491, %v2779
    %v2781 = vpop.f32.mrf.mxu0
    %v2782 = vpop.f32.mrf.mxu0
    %v2783 = vadd.f32 %v2494, %v2782
    %v2784 = vpop.f32.mrf.mxu0
    %2785 = vmatprep.mubr.bf16.mxu0 %v2103
    %2786 = vmatmul.mubr.bf16.gmra.mxu0 %v2102
    %v2787 = vpop.f32.mrf.mxu0
    %v2788 = vadd.f32 %v2499, %v2787
    %v2789 = vpop.f32.mrf.mxu0
    %v2790 = vpop.f32.mrf.mxu0
    %v2791 = vadd.f32 %v2502, %v2790
    %v2792 = vpop.f32.mrf.mxu0
    %2793 = vmatprep.mubr.bf16.mxu0 %v2107
    %2794 = vmatmul.mubr.bf16.gmra.mxu0 %v2106
    %v2795 = vpop.f32.mrf.mxu0
    %v2796 = vadd.f32 %v2507, %v2795
    %v2797 = vpop.f32.mrf.mxu0
    %v2798 = vpop.f32.mrf.mxu0
    %v2799 = vadd.f32 %v2510, %v2798
    %v2800 = vpop.f32.mrf.mxu0
    %2801 = vmatprep.mubr.bf16.mxu0 %v2111
    %2802 = vmatmul.mubr.bf16.gmra.mxu0 %v2110
    %v2803 = vpop.f32.mrf.mxu0
    %v2804 = vadd.f32 %v2515, %v2803
    %v2805 = vpop.f32.mrf.mxu0
    %v2806 = vpop.f32.mrf.mxu0
    %v2807 = vadd.f32 %v2518, %v2806
    %v2808 = vpop.f32.mrf.mxu0
    %2809 = vmatprep.mubr.bf16.mxu0 %v2115
    %2810 = vmatmul.mubr.bf16.gmra.mxu0 %v2114
    %v2811 = vpop.f32.mrf.mxu0
    %v2812 = vadd.f32 %v2523, %v2811
    %v2813 = vpop.f32.mrf.mxu0
    %v2814 = vpop.f32.mrf.mxu0
    %v2815 = vadd.f32 %v2526, %v2814
    %v2816 = vpop.f32.mrf.mxu0
    %2817 = vmatprep.mubr.bf16.mxu0 %v2119
    %2818 = vmatmul.mubr.bf16.gmra.mxu0 %v2118
    %v2819 = vpop.f32.mrf.mxu0
    %v2820 = vadd.f32 %v2531, %v2819
    %v2821 = vpop.f32.mrf.mxu0
    %v2822 = vpop.f32.mrf.mxu0
    %v2823 = vadd.f32 %v2534, %v2822
    %v2824 = vpop.f32.mrf.mxu0
    %2825 = vdwg.mxu0
    %v2826 = vpack.c.bf16 %v2575, %v2572
    %v2827 = vpack.c.bf16 %v2583, %v2580
    %v2828 = vpack.c.bf16 %v2591, %v2588
    %v2829 = vpack.c.bf16 %v2599, %v2596
    %v2830 = vpack.c.bf16 %v2607, %v2604
    %v2831 = vpack.c.bf16 %v2615, %v2612
    %v2832 = vpack.c.bf16 %v2623, %v2620
    %v2833 = vpack.c.bf16 %v2631, %v2628
    %v2834 = vpack.c.bf16 %v2639, %v2636
    %v2835 = vpack.c.bf16 %v2647, %v2644
    %v2836 = vpack.c.bf16 %v2655, %v2652
    %v2837 = vpack.c.bf16 %v2663, %v2660
    %v2838 = vpack.c.bf16 %v2671, %v2668
    %v2839 = vpack.c.bf16 %v2679, %v2676
    %v2840 = vpack.c.bf16 %v2687, %v2684
    %v2841 = vpack.c.bf16 %v2695, %v2692
    %v2842 = vpack.c.bf16 %v2703, %v2700
    %v2843 = vpack.c.bf16 %v2711, %v2708
    %v2844 = vpack.c.bf16 %v2719, %v2716
    %v2845 = vpack.c.bf16 %v2727, %v2724
    %v2846 = vpack.c.bf16 %v2735, %v2732
    %v2847 = vpack.c.bf16 %v2743, %v2740
    %v2848 = vpack.c.bf16 %v2751, %v2748
    %v2849 = vpack.c.bf16 %v2759, %v2756
    %v2850 = vpack.c.bf16 %v2767, %v2764
    %v2851 = vpack.c.bf16 %v2775, %v2772
    %v2852 = vpack.c.bf16 %v2783, %v2780
    %v2853 = vpack.c.bf16 %v2791, %v2788
    %v2854 = vpack.c.bf16 %v2799, %v2796
    %v2855 = vpack.c.bf16 %v2807, %v2804
    %v2856 = vpack.c.bf16 %v2815, %v2812
    %v2857 = vpack.c.bf16 %v2823, %v2820
    %2858 = vmatprep.subr.bf16.mxu0 0
    %2859 = vmatpush1.bf16.msra.mxu0 %v2833
    %2860 = vmatprep.subr.bf16.mxu0 0
    %2861 = vmatpush1.bf16.msra.mxu0 %v2832
    %2862 = vmatprep.subr.bf16.mxu0 0
    %2863 = vmatpush1.bf16.msra.mxu0 %v2831
    %2864 = vmatprep.subr.bf16.mxu0 0
    %2865 = vmatpush1.bf16.msra.mxu0 %v2830
    %2866 = vmatprep.subr.bf16.mxu0 0
    %2867 = vmatpush1.bf16.msra.mxu0 %v2829
    %2868 = vmatprep.subr.bf16.mxu0 0
    %2869 = vmatpush1.bf16.msra.mxu0 %v2828
    %2870 = vmatprep.subr.bf16.mxu0 0
    %2871 = vmatpush1.bf16.msra.mxu0 %v2827
    %2872 = vmatprep.subr.bf16.mxu0 0
    %2873 = vmatpush1.bf16.msra.mxu0 %v2826
    %2874 = vmatprep.subr.bf16.mxu0 0
    %2875 = vmatpush2.bf16.msra.mxu0 %v2841
    %2876 = vmatprep.subr.bf16.mxu0 0
    %2877 = vmatpush2.bf16.msra.mxu0 %v2840
    %2878 = vmatprep.subr.bf16.mxu0 0
    %2879 = vmatpush2.bf16.msra.mxu0 %v2839
    %2880 = vmatprep.subr.bf16.mxu0 0
    %2881 = vmatpush2.bf16.msra.mxu0 %v2838
    %2882 = vmatprep.subr.bf16.mxu0 0
    %2883 = vmatpush2.bf16.msra.mxu0 %v2837
    %2884 = vmatprep.subr.bf16.mxu0 0
    %2885 = vmatpush2.bf16.msra.mxu0 %v2836
    %2886 = vmatprep.subr.bf16.mxu0 0
    %2887 = vmatpush2.bf16.msra.mxu0 %v2835
    %2888 = vmatprep.subr.bf16.mxu0 0
    %2889 = vmatpush2.bf16.msra.mxu0 %v2834
    %2890 = vmatprep.mubr.bf16.mxu0 %v1993
    %2891 = vmatmul.mubr.bf16.gmra.mxu0 %v1992
    %v2892 = vpop.f32.mrf.mxu0
    %v2893 = vadd.f32 0.0, %v2892
    %v2894 = vpop.f32.mrf.mxu0
    %v2895 = vpop.f32.mrf.mxu0
    %v2896 = vadd.f32 0.0, %v2895
    %v2897 = vpop.f32.mrf.mxu0
    %2898 = vmatprep.mubr.bf16.mxu0 %v1997
    %2899 = vmatmul.mubr.bf16.gmra.mxu0 %v1996
    %v2900 = vpop.f32.mrf.mxu0
    %v2901 = vadd.f32 0.0, %v2900
    %v2902 = vpop.f32.mrf.mxu0
    %v2903 = vpop.f32.mrf.mxu0
    %v2904 = vadd.f32 0.0, %v2903
    %v2905 = vpop.f32.mrf.mxu0
    %2906 = vmatprep.mubr.bf16.mxu0 %v2001
    %2907 = vmatmul.mubr.bf16.gmra.mxu0 %v2000
    %v2908 = vpop.f32.mrf.mxu0
    %v2909 = vadd.f32 0.0, %v2908
    %v2910 = vpop.f32.mrf.mxu0
    %v2911 = vpop.f32.mrf.mxu0
    %v2912 = vadd.f32 0.0, %v2911
    %v2913 = vpop.f32.mrf.mxu0
    %2914 = vmatprep.mubr.bf16.mxu0 %v2005
    %2915 = vmatmul.mubr.bf16.gmra.mxu0 %v2004
    %v2916 = vpop.f32.mrf.mxu0
    %v2917 = vadd.f32 0.0, %v2916
    %v2918 = vpop.f32.mrf.mxu0
    %v2919 = vpop.f32.mrf.mxu0
    %v2920 = vadd.f32 0.0, %v2919
    %v2921 = vpop.f32.mrf.mxu0
    %2922 = vmatprep.mubr.bf16.mxu0 %v2009
    %2923 = vmatmul.mubr.bf16.gmra.mxu0 %v2008
    %v2924 = vpop.f32.mrf.mxu0
    %v2925 = vadd.f32 0.0, %v2924
    %v2926 = vpop.f32.mrf.mxu0
    %v2927 = vpop.f32.mrf.mxu0
    %v2928 = vadd.f32 0.0, %v2927
    %v2929 = vpop.f32.mrf.mxu0
    %2930 = vmatprep.mubr.bf16.mxu0 %v2013
    %2931 = vmatmul.mubr.bf16.gmra.mxu0 %v2012
    %v2932 = vpop.f32.mrf.mxu0
    %v2933 = vadd.f32 0.0, %v2932
    %v2934 = vpop.f32.mrf.mxu0
    %v2935 = vpop.f32.mrf.mxu0
    %v2936 = vadd.f32 0.0, %v2935
    %v2937 = vpop.f32.mrf.mxu0
    %2938 = vmatprep.mubr.bf16.mxu0 %v2017
    %2939 = vmatmul.mubr.bf16.gmra.mxu0 %v2016
    %v2940 = vpop.f32.mrf.mxu0
    %v2941 = vadd.f32 0.0, %v2940
    %v2942 = vpop.f32.mrf.mxu0
    %v2943 = vpop.f32.mrf.mxu0
    %v2944 = vadd.f32 0.0, %v2943
    %v2945 = vpop.f32.mrf.mxu0
    %2946 = vmatprep.mubr.bf16.mxu0 %v2021
    %2947 = vmatmul.mubr.bf16.gmra.mxu0 %v2020
    %v2948 = vpop.f32.mrf.mxu0
    %v2949 = vadd.f32 0.0, %v2948
    %v2950 = vpop.f32.mrf.mxu0
    %v2951 = vpop.f32.mrf.mxu0
    %v2952 = vadd.f32 0.0, %v2951
    %v2953 = vpop.f32.mrf.mxu0
    %2954 = vmatprep.mubr.bf16.mxu0 %v2025
    %2955 = vmatmul.mubr.bf16.gmra.mxu0 %v2024
    %v2956 = vpop.f32.mrf.mxu0
    %v2957 = vadd.f32 0.0, %v2956
    %v2958 = vpop.f32.mrf.mxu0
    %v2959 = vpop.f32.mrf.mxu0
    %v2960 = vadd.f32 0.0, %v2959
    %v2961 = vpop.f32.mrf.mxu0
    %2962 = vmatprep.mubr.bf16.mxu0 %v2029
    %2963 = vmatmul.mubr.bf16.gmra.mxu0 %v2028
    %v2964 = vpop.f32.mrf.mxu0
    %v2965 = vadd.f32 0.0, %v2964
    %v2966 = vpop.f32.mrf.mxu0
    %v2967 = vpop.f32.mrf.mxu0
    %v2968 = vadd.f32 0.0, %v2967
    %v2969 = vpop.f32.mrf.mxu0
    %2970 = vmatprep.mubr.bf16.mxu0 %v2033
    %2971 = vmatmul.mubr.bf16.gmra.mxu0 %v2032
    %v2972 = vpop.f32.mrf.mxu0
    %v2973 = vadd.f32 0.0, %v2972
    %v2974 = vpop.f32.mrf.mxu0
    %v2975 = vpop.f32.mrf.mxu0
    %v2976 = vadd.f32 0.0, %v2975
    %v2977 = vpop.f32.mrf.mxu0
    %2978 = vmatprep.mubr.bf16.mxu0 %v2037
    %2979 = vmatmul.mubr.bf16.gmra.mxu0 %v2036
    %v2980 = vpop.f32.mrf.mxu0
    %v2981 = vadd.f32 0.0, %v2980
    %v2982 = vpop.f32.mrf.mxu0
    %v2983 = vpop.f32.mrf.mxu0
    %v2984 = vadd.f32 0.0, %v2983
    %v2985 = vpop.f32.mrf.mxu0
    %2986 = vmatprep.mubr.bf16.mxu0 %v2041
    %2987 = vmatmul.mubr.bf16.gmra.mxu0 %v2040
    %v2988 = vpop.f32.mrf.mxu0
    %v2989 = vadd.f32 0.0, %v2988
    %v2990 = vpop.f32.mrf.mxu0
    %v2991 = vpop.f32.mrf.mxu0
    %v2992 = vadd.f32 0.0, %v2991
    %v2993 = vpop.f32.mrf.mxu0
    %2994 = vmatprep.mubr.bf16.mxu0 %v2045
    %2995 = vmatmul.mubr.bf16.gmra.mxu0 %v2044
    %v2996 = vpop.f32.mrf.mxu0
    %v2997 = vadd.f32 0.0, %v2996
    %v2998 = vpop.f32.mrf.mxu0
    %v2999 = vpop.f32.mrf.mxu0
    %v3000 = vadd.f32 0.0, %v2999
    %v3001 = vpop.f32.mrf.mxu0
    %3002 = vmatprep.mubr.bf16.mxu0 %v2049
    %3003 = vmatmul.mubr.bf16.gmra.mxu0 %v2048
    %v3004 = vpop.f32.mrf.mxu0
    %v3005 = vadd.f32 0.0, %v3004
    %v3006 = vpop.f32.mrf.mxu0
    %v3007 = vpop.f32.mrf.mxu0
    %v3008 = vadd.f32 0.0, %v3007
    %v3009 = vpop.f32.mrf.mxu0
    %3010 = vmatprep.mubr.bf16.mxu0 %v2053
    %3011 = vmatmul.mubr.bf16.gmra.mxu0 %v2052
    %v3012 = vpop.f32.mrf.mxu0
    %v3013 = vadd.f32 0.0, %v3012
    %v3014 = vpop.f32.mrf.mxu0
    %v3015 = vpop.f32.mrf.mxu0
    %v3016 = vadd.f32 0.0, %v3015
    %v3017 = vpop.f32.mrf.mxu0
    %3018 = vmatprep.mubr.bf16.mxu0 %v2057
    %3019 = vmatmul.mubr.bf16.gmra.mxu0 %v2056
    %v3020 = vpop.f32.mrf.mxu0
    %v3021 = vadd.f32 0.0, %v3020
    %v3022 = vpop.f32.mrf.mxu0
    %v3023 = vpop.f32.mrf.mxu0
    %v3024 = vadd.f32 0.0, %v3023
    %v3025 = vpop.f32.mrf.mxu0
    %3026 = vmatprep.mubr.bf16.mxu0 %v2061
    %3027 = vmatmul.mubr.bf16.gmra.mxu0 %v2060
    %v3028 = vpop.f32.mrf.mxu0
    %v3029 = vadd.f32 0.0, %v3028
    %v3030 = vpop.f32.mrf.mxu0
    %v3031 = vpop.f32.mrf.mxu0
    %v3032 = vadd.f32 0.0, %v3031
    %v3033 = vpop.f32.mrf.mxu0
    %3034 = vmatprep.mubr.bf16.mxu0 %v2065
    %3035 = vmatmul.mubr.bf16.gmra.mxu0 %v2064
    %v3036 = vpop.f32.mrf.mxu0
    %v3037 = vadd.f32 0.0, %v3036
    %v3038 = vpop.f32.mrf.mxu0
    %v3039 = vpop.f32.mrf.mxu0
    %v3040 = vadd.f32 0.0, %v3039
    %v3041 = vpop.f32.mrf.mxu0
    %3042 = vmatprep.mubr.bf16.mxu0 %v2069
    %3043 = vmatmul.mubr.bf16.gmra.mxu0 %v2068
    %v3044 = vpop.f32.mrf.mxu0
    %v3045 = vadd.f32 0.0, %v3044
    %v3046 = vpop.f32.mrf.mxu0
    %v3047 = vpop.f32.mrf.mxu0
    %v3048 = vadd.f32 0.0, %v3047
    %v3049 = vpop.f32.mrf.mxu0
    %3050 = vmatprep.mubr.bf16.mxu0 %v2073
    %3051 = vmatmul.mubr.bf16.gmra.mxu0 %v2072
    %v3052 = vpop.f32.mrf.mxu0
    %v3053 = vadd.f32 0.0, %v3052
    %v3054 = vpop.f32.mrf.mxu0
    %v3055 = vpop.f32.mrf.mxu0
    %v3056 = vadd.f32 0.0, %v3055
    %v3057 = vpop.f32.mrf.mxu0
    %3058 = vmatprep.mubr.bf16.mxu0 %v2077
    %3059 = vmatmul.mubr.bf16.gmra.mxu0 %v2076
    %v3060 = vpop.f32.mrf.mxu0
    %v3061 = vadd.f32 0.0, %v3060
    %v3062 = vpop.f32.mrf.mxu0
    %v3063 = vpop.f32.mrf.mxu0
    %v3064 = vadd.f32 0.0, %v3063
    %v3065 = vpop.f32.mrf.mxu0
    %3066 = vmatprep.mubr.bf16.mxu0 %v2081
    %3067 = vmatmul.mubr.bf16.gmra.mxu0 %v2080
    %v3068 = vpop.f32.mrf.mxu0
    %v3069 = vadd.f32 0.0, %v3068
    %v3070 = vpop.f32.mrf.mxu0
    %v3071 = vpop.f32.mrf.mxu0
    %v3072 = vadd.f32 0.0, %v3071
    %v3073 = vpop.f32.mrf.mxu0
    %3074 = vmatprep.mubr.bf16.mxu0 %v2085
    %3075 = vmatmul.mubr.bf16.gmra.mxu0 %v2084
    %v3076 = vpop.f32.mrf.mxu0
    %v3077 = vadd.f32 0.0, %v3076
    %v3078 = vpop.f32.mrf.mxu0
    %v3079 = vpop.f32.mrf.mxu0
    %v3080 = vadd.f32 0.0, %v3079
    %v3081 = vpop.f32.mrf.mxu0
    %3082 = vmatprep.mubr.bf16.mxu0 %v2089
    %3083 = vmatmul.mubr.bf16.gmra.mxu0 %v2088
    %v3084 = vpop.f32.mrf.mxu0
    %v3085 = vadd.f32 0.0, %v3084
    %v3086 = vpop.f32.mrf.mxu0
    %v3087 = vpop.f32.mrf.mxu0
    %v3088 = vadd.f32 0.0, %v3087
    %v3089 = vpop.f32.mrf.mxu0
    %3090 = vmatprep.mubr.bf16.mxu0 %v2093
    %3091 = vmatmul.mubr.bf16.gmra.mxu0 %v2092
    %v3092 = vpop.f32.mrf.mxu0
    %v3093 = vadd.f32 0.0, %v3092
    %v3094 = vpop.f32.mrf.mxu0
    %v3095 = vpop.f32.mrf.mxu0
    %v3096 = vadd.f32 0.0, %v3095
    %v3097 = vpop.f32.mrf.mxu0
    %3098 = vmatprep.mubr.bf16.mxu0 %v2097
    %3099 = vmatmul.mubr.bf16.gmra.mxu0 %v2096
    %v3100 = vpop.f32.mrf.mxu0
    %v3101 = vadd.f32 0.0, %v3100
    %v3102 = vpop.f32.mrf.mxu0
    %v3103 = vpop.f32.mrf.mxu0
    %v3104 = vadd.f32 0.0, %v3103
    %v3105 = vpop.f32.mrf.mxu0
    %3106 = vmatprep.mubr.bf16.mxu0 %v2101
    %3107 = vmatmul.mubr.bf16.gmra.mxu0 %v2100
    %v3108 = vpop.f32.mrf.mxu0
    %v3109 = vadd.f32 0.0, %v3108
    %v3110 = vpop.f32.mrf.mxu0
    %v3111 = vpop.f32.mrf.mxu0
    %v3112 = vadd.f32 0.0, %v3111
    %v3113 = vpop.f32.mrf.mxu0
    %3114 = vmatprep.mubr.bf16.mxu0 %v2105
    %3115 = vmatmul.mubr.bf16.gmra.mxu0 %v2104
    %v3116 = vpop.f32.mrf.mxu0
    %v3117 = vadd.f32 0.0, %v3116
    %v3118 = vpop.f32.mrf.mxu0
    %v3119 = vpop.f32.mrf.mxu0
    %v3120 = vadd.f32 0.0, %v3119
    %v3121 = vpop.f32.mrf.mxu0
    %3122 = vmatprep.mubr.bf16.mxu0 %v2109
    %3123 = vmatmul.mubr.bf16.gmra.mxu0 %v2108
    %v3124 = vpop.f32.mrf.mxu0
    %v3125 = vadd.f32 0.0, %v3124
    %v3126 = vpop.f32.mrf.mxu0
    %v3127 = vpop.f32.mrf.mxu0
    %v3128 = vadd.f32 0.0, %v3127
    %v3129 = vpop.f32.mrf.mxu0
    %3130 = vmatprep.mubr.bf16.mxu0 %v2113
    %3131 = vmatmul.mubr.bf16.gmra.mxu0 %v2112
    %v3132 = vpop.f32.mrf.mxu0
    %v3133 = vadd.f32 0.0, %v3132
    %v3134 = vpop.f32.mrf.mxu0
    %v3135 = vpop.f32.mrf.mxu0
    %v3136 = vadd.f32 0.0, %v3135
    %v3137 = vpop.f32.mrf.mxu0
    %3138 = vmatprep.mubr.bf16.mxu0 %v2117
    %3139 = vmatmul.mubr.bf16.gmra.mxu0 %v2116
    %v3140 = vpop.f32.mrf.mxu0
    %v3141 = vadd.f32 0.0, %v3140
    %v3142 = vpop.f32.mrf.mxu0
    %v3143 = vpop.f32.mrf.mxu0
    %v3144 = vadd.f32 0.0, %v3143
    %v3145 = vpop.f32.mrf.mxu0
    %3146 = vdwg.mxu0
    %3147 = vmatprep.subr.bf16.mxu0 0
    %3148 = vmatpush1.bf16.msra.mxu0 %v2849
    %3149 = vmatprep.subr.bf16.mxu0 0
    %3150 = vmatpush1.bf16.msra.mxu0 %v2848
    %3151 = vmatprep.subr.bf16.mxu0 0
    %3152 = vmatpush1.bf16.msra.mxu0 %v2847
    %3153 = vmatprep.subr.bf16.mxu0 0
    %3154 = vmatpush1.bf16.msra.mxu0 %v2846
    %3155 = vmatprep.subr.bf16.mxu0 0
    %3156 = vmatpush1.bf16.msra.mxu0 %v2845
    %3157 = vmatprep.subr.bf16.mxu0 0
    %3158 = vmatpush1.bf16.msra.mxu0 %v2844
    %3159 = vmatprep.subr.bf16.mxu0 0
    %3160 = vmatpush1.bf16.msra.mxu0 %v2843
    %3161 = vmatprep.subr.bf16.mxu0 0
    %3162 = vmatpush1.bf16.msra.mxu0 %v2842
    %3163 = vmatprep.subr.bf16.mxu0 0
    %3164 = vmatpush2.bf16.msra.mxu0 %v2857
    %3165 = vmatprep.subr.bf16.mxu0 0
    %3166 = vmatpush2.bf16.msra.mxu0 %v2856
    %3167 = vmatprep.subr.bf16.mxu0 0
    %3168 = vmatpush2.bf16.msra.mxu0 %v2855
    %3169 = vmatprep.subr.bf16.mxu0 0
    %3170 = vmatpush2.bf16.msra.mxu0 %v2854
    %3171 = vmatprep.subr.bf16.mxu0 0
    %3172 = vmatpush2.bf16.msra.mxu0 %v2853
    %3173 = vmatprep.subr.bf16.mxu0 0
    %3174 = vmatpush2.bf16.msra.mxu0 %v2852
    %3175 = vmatprep.subr.bf16.mxu0 0
    %3176 = vmatpush2.bf16.msra.mxu0 %v2851
    %3177 = vmatprep.subr.bf16.mxu0 0
    %3178 = vmatpush2.bf16.msra.mxu0 %v2850
    %3179 = vmatprep.mubr.bf16.mxu0 %v1995
    %3180 = vmatmul.mubr.bf16.gmra.mxu0 %v1994
    %v3181 = vpop.f32.mrf.mxu0
    %v3182 = vadd.f32 %v2893, %v3181
    %v3183 = vpop.f32.mrf.mxu0
    %v3184 = vpop.f32.mrf.mxu0
    %v3185 = vadd.f32 %v2896, %v3184
    %v3186 = vpop.f32.mrf.mxu0
    %3187 = vmatprep.mubr.bf16.mxu0 %v1999
    %3188 = vmatmul.mubr.bf16.gmra.mxu0 %v1998
    %v3189 = vpop.f32.mrf.mxu0
    %v3190 = vadd.f32 %v2901, %v3189
    %v3191 = vpop.f32.mrf.mxu0
    %v3192 = vpop.f32.mrf.mxu0
    %v3193 = vadd.f32 %v2904, %v3192
    %v3194 = vpop.f32.mrf.mxu0
    %3195 = vmatprep.mubr.bf16.mxu0 %v2003
    %3196 = vmatmul.mubr.bf16.gmra.mxu0 %v2002
    %v3197 = vpop.f32.mrf.mxu0
    %v3198 = vadd.f32 %v2909, %v3197
    %v3199 = vpop.f32.mrf.mxu0
    %v3200 = vpop.f32.mrf.mxu0
    %v3201 = vadd.f32 %v2912, %v3200
    %v3202 = vpop.f32.mrf.mxu0
    %3203 = vmatprep.mubr.bf16.mxu0 %v2007
    %3204 = vmatmul.mubr.bf16.gmra.mxu0 %v2006
    %v3205 = vpop.f32.mrf.mxu0
    %v3206 = vadd.f32 %v2917, %v3205
    %v3207 = vpop.f32.mrf.mxu0
    %v3208 = vpop.f32.mrf.mxu0
    %v3209 = vadd.f32 %v2920, %v3208
    %v3210 = vpop.f32.mrf.mxu0
    %3211 = vmatprep.mubr.bf16.mxu0 %v2011
    %3212 = vmatmul.mubr.bf16.gmra.mxu0 %v2010
    %v3213 = vpop.f32.mrf.mxu0
    %v3214 = vadd.f32 %v2925, %v3213
    %v3215 = vpop.f32.mrf.mxu0
    %v3216 = vpop.f32.mrf.mxu0
    %v3217 = vadd.f32 %v2928, %v3216
    %v3218 = vpop.f32.mrf.mxu0
    %3219 = vmatprep.mubr.bf16.mxu0 %v2015
    %3220 = vmatmul.mubr.bf16.gmra.mxu0 %v2014
    %v3221 = vpop.f32.mrf.mxu0
    %v3222 = vadd.f32 %v2933, %v3221
    %v3223 = vpop.f32.mrf.mxu0
    %v3224 = vpop.f32.mrf.mxu0
    %v3225 = vadd.f32 %v2936, %v3224
    %v3226 = vpop.f32.mrf.mxu0
    %3227 = vmatprep.mubr.bf16.mxu0 %v2019
    %3228 = vmatmul.mubr.bf16.gmra.mxu0 %v2018
    %v3229 = vpop.f32.mrf.mxu0
    %v3230 = vadd.f32 %v2941, %v3229
    %v3231 = vpop.f32.mrf.mxu0
    %v3232 = vpop.f32.mrf.mxu0
    %v3233 = vadd.f32 %v2944, %v3232
    %v3234 = vpop.f32.mrf.mxu0
    %3235 = vmatprep.mubr.bf16.mxu0 %v2023
    %3236 = vmatmul.mubr.bf16.gmra.mxu0 %v2022
    %v3237 = vpop.f32.mrf.mxu0
    %v3238 = vadd.f32 %v2949, %v3237
    %v3239 = vpop.f32.mrf.mxu0
    %v3240 = vpop.f32.mrf.mxu0
    %v3241 = vadd.f32 %v2952, %v3240
    %v3242 = vpop.f32.mrf.mxu0
    %3243 = vmatprep.mubr.bf16.mxu0 %v2027
    %3244 = vmatmul.mubr.bf16.gmra.mxu0 %v2026
    %v3245 = vpop.f32.mrf.mxu0
    %v3246 = vadd.f32 %v2957, %v3245
    %v3247 = vpop.f32.mrf.mxu0
    %v3248 = vpop.f32.mrf.mxu0
    %v3249 = vadd.f32 %v2960, %v3248
    %v3250 = vpop.f32.mrf.mxu0
    %3251 = vmatprep.mubr.bf16.mxu0 %v2031
    %3252 = vmatmul.mubr.bf16.gmra.mxu0 %v2030
    %v3253 = vpop.f32.mrf.mxu0
    %v3254 = vadd.f32 %v2965, %v3253
    %v3255 = vpop.f32.mrf.mxu0
    %v3256 = vpop.f32.mrf.mxu0
    %v3257 = vadd.f32 %v2968, %v3256
    %v3258 = vpop.f32.mrf.mxu0
    %3259 = vmatprep.mubr.bf16.mxu0 %v2035
    %3260 = vmatmul.mubr.bf16.gmra.mxu0 %v2034
    %v3261 = vpop.f32.mrf.mxu0
    %v3262 = vadd.f32 %v2973, %v3261
    %v3263 = vpop.f32.mrf.mxu0
    %v3264 = vpop.f32.mrf.mxu0
    %v3265 = vadd.f32 %v2976, %v3264
    %v3266 = vpop.f32.mrf.mxu0
    %3267 = vmatprep.mubr.bf16.mxu0 %v2039
    %3268 = vmatmul.mubr.bf16.gmra.mxu0 %v2038
    %v3269 = vpop.f32.mrf.mxu0
    %v3270 = vadd.f32 %v2981, %v3269
    %v3271 = vpop.f32.mrf.mxu0
    %v3272 = vpop.f32.mrf.mxu0
    %v3273 = vadd.f32 %v2984, %v3272
    %v3274 = vpop.f32.mrf.mxu0
    %3275 = vmatprep.mubr.bf16.mxu0 %v2043
    %3276 = vmatmul.mubr.bf16.gmra.mxu0 %v2042
    %v3277 = vpop.f32.mrf.mxu0
    %v3278 = vadd.f32 %v2989, %v3277
    %v3279 = vpop.f32.mrf.mxu0
    %v3280 = vpop.f32.mrf.mxu0
    %v3281 = vadd.f32 %v2992, %v3280
    %v3282 = vpop.f32.mrf.mxu0
    %3283 = vmatprep.mubr.bf16.mxu0 %v2047
    %3284 = vmatmul.mubr.bf16.gmra.mxu0 %v2046
    %v3285 = vpop.f32.mrf.mxu0
    %v3286 = vadd.f32 %v2997, %v3285
    %v3287 = vpop.f32.mrf.mxu0
    %v3288 = vpop.f32.mrf.mxu0
    %v3289 = vadd.f32 %v3000, %v3288
    %v3290 = vpop.f32.mrf.mxu0
    %3291 = vmatprep.mubr.bf16.mxu0 %v2051
    %3292 = vmatmul.mubr.bf16.gmra.mxu0 %v2050
    %v3293 = vpop.f32.mrf.mxu0
    %v3294 = vadd.f32 %v3005, %v3293
    %v3295 = vpop.f32.mrf.mxu0
    %v3296 = vpop.f32.mrf.mxu0
    %v3297 = vadd.f32 %v3008, %v3296
    %v3298 = vpop.f32.mrf.mxu0
    %3299 = vmatprep.mubr.bf16.mxu0 %v2055
    %3300 = vmatmul.mubr.bf16.gmra.mxu0 %v2054
    %v3301 = vpop.f32.mrf.mxu0
    %v3302 = vadd.f32 %v3013, %v3301
    %v3303 = vpop.f32.mrf.mxu0
    %v3304 = vpop.f32.mrf.mxu0
    %v3305 = vadd.f32 %v3016, %v3304
    %v3306 = vpop.f32.mrf.mxu0
    %3307 = vmatprep.mubr.bf16.mxu0 %v2059
    %3308 = vmatmul.mubr.bf16.gmra.mxu0 %v2058
    %v3309 = vpop.f32.mrf.mxu0
    %v3310 = vadd.f32 %v3021, %v3309
    %v3311 = vpop.f32.mrf.mxu0
    %v3312 = vpop.f32.mrf.mxu0
    %v3313 = vadd.f32 %v3024, %v3312
    %v3314 = vpop.f32.mrf.mxu0
    %3315 = vmatprep.mubr.bf16.mxu0 %v2063
    %3316 = vmatmul.mubr.bf16.gmra.mxu0 %v2062
    %v3317 = vpop.f32.mrf.mxu0
    %v3318 = vadd.f32 %v3029, %v3317
    %v3319 = vpop.f32.mrf.mxu0
    %v3320 = vpop.f32.mrf.mxu0
    %v3321 = vadd.f32 %v3032, %v3320
    %v3322 = vpop.f32.mrf.mxu0
    %3323 = vmatprep.mubr.bf16.mxu0 %v2067
    %3324 = vmatmul.mubr.bf16.gmra.mxu0 %v2066
    %v3325 = vpop.f32.mrf.mxu0
    %v3326 = vadd.f32 %v3037, %v3325
    %v3327 = vpop.f32.mrf.mxu0
    %v3328 = vpop.f32.mrf.mxu0
    %v3329 = vadd.f32 %v3040, %v3328
    %v3330 = vpop.f32.mrf.mxu0
    %3331 = vmatprep.mubr.bf16.mxu0 %v2071
    %3332 = vmatmul.mubr.bf16.gmra.mxu0 %v2070
    %v3333 = vpop.f32.mrf.mxu0
    %v3334 = vadd.f32 %v3045, %v3333
    %v3335 = vpop.f32.mrf.mxu0
    %v3336 = vpop.f32.mrf.mxu0
    %v3337 = vadd.f32 %v3048, %v3336
    %v3338 = vpop.f32.mrf.mxu0
    %3339 = vmatprep.mubr.bf16.mxu0 %v2075
    %3340 = vmatmul.mubr.bf16.gmra.mxu0 %v2074
    %v3341 = vpop.f32.mrf.mxu0
    %v3342 = vadd.f32 %v3053, %v3341
    %v3343 = vpop.f32.mrf.mxu0
    %v3344 = vpop.f32.mrf.mxu0
    %v3345 = vadd.f32 %v3056, %v3344
    %v3346 = vpop.f32.mrf.mxu0
    %3347 = vmatprep.mubr.bf16.mxu0 %v2079
    %3348 = vmatmul.mubr.bf16.gmra.mxu0 %v2078
    %v3349 = vpop.f32.mrf.mxu0
    %v3350 = vadd.f32 %v3061, %v3349
    %v3351 = vpop.f32.mrf.mxu0
    %v3352 = vpop.f32.mrf.mxu0
    %v3353 = vadd.f32 %v3064, %v3352
    %v3354 = vpop.f32.mrf.mxu0
    %3355 = vmatprep.mubr.bf16.mxu0 %v2083
    %3356 = vmatmul.mubr.bf16.gmra.mxu0 %v2082
    %v3357 = vpop.f32.mrf.mxu0
    %v3358 = vadd.f32 %v3069, %v3357
    %v3359 = vpop.f32.mrf.mxu0
    %v3360 = vpop.f32.mrf.mxu0
    %v3361 = vadd.f32 %v3072, %v3360
    %v3362 = vpop.f32.mrf.mxu0
    %3363 = vmatprep.mubr.bf16.mxu0 %v2087
    %3364 = vmatmul.mubr.bf16.gmra.mxu0 %v2086
    %v3365 = vpop.f32.mrf.mxu0
    %v3366 = vadd.f32 %v3077, %v3365
    %v3367 = vpop.f32.mrf.mxu0
    %v3368 = vpop.f32.mrf.mxu0
    %v3369 = vadd.f32 %v3080, %v3368
    %v3370 = vpop.f32.mrf.mxu0
    %3371 = vmatprep.mubr.bf16.mxu0 %v2091
    %3372 = vmatmul.mubr.bf16.gmra.mxu0 %v2090
    %v3373 = vpop.f32.mrf.mxu0
    %v3374 = vadd.f32 %v3085, %v3373
    %v3375 = vpop.f32.mrf.mxu0
    %v3376 = vpop.f32.mrf.mxu0
    %v3377 = vadd.f32 %v3088, %v3376
    %v3378 = vpop.f32.mrf.mxu0
    %3379 = vmatprep.mubr.bf16.mxu0 %v2095
    %3380 = vmatmul.mubr.bf16.gmra.mxu0 %v2094
    %v3381 = vpop.f32.mrf.mxu0
    %v3382 = vadd.f32 %v3093, %v3381
    %v3383 = vpop.f32.mrf.mxu0
    %v3384 = vpop.f32.mrf.mxu0
    %v3385 = vadd.f32 %v3096, %v3384
    %v3386 = vpop.f32.mrf.mxu0
    %3387 = vmatprep.mubr.bf16.mxu0 %v2099
    %3388 = vmatmul.mubr.bf16.gmra.mxu0 %v2098
    %v3389 = vpop.f32.mrf.mxu0
    %v3390 = vadd.f32 %v3101, %v3389
    %v3391 = vpop.f32.mrf.mxu0
    %v3392 = vpop.f32.mrf.mxu0
    %v3393 = vadd.f32 %v3104, %v3392
    %v3394 = vpop.f32.mrf.mxu0
    %3395 = vmatprep.mubr.bf16.mxu0 %v2103
    %3396 = vmatmul.mubr.bf16.gmra.mxu0 %v2102
    %v3397 = vpop.f32.mrf.mxu0
    %v3398 = vadd.f32 %v3109, %v3397
    %v3399 = vpop.f32.mrf.mxu0
    %v3400 = vpop.f32.mrf.mxu0
    %v3401 = vadd.f32 %v3112, %v3400
    %v3402 = vpop.f32.mrf.mxu0
    %3403 = vmatprep.mubr.bf16.mxu0 %v2107
    %3404 = vmatmul.mubr.bf16.gmra.mxu0 %v2106
    %v3405 = vpop.f32.mrf.mxu0
    %v3406 = vadd.f32 %v3117, %v3405
    %v3407 = vpop.f32.mrf.mxu0
    %v3408 = vpop.f32.mrf.mxu0
    %v3409 = vadd.f32 %v3120, %v3408
    %v3410 = vpop.f32.mrf.mxu0
    %3411 = vmatprep.mubr.bf16.mxu0 %v2111
    %3412 = vmatmul.mubr.bf16.gmra.mxu0 %v2110
    %v3413 = vpop.f32.mrf.mxu0
    %v3414 = vadd.f32 %v3125, %v3413
    %v3415 = vpop.f32.mrf.mxu0
    %v3416 = vpop.f32.mrf.mxu0
    %v3417 = vadd.f32 %v3128, %v3416
    %v3418 = vpop.f32.mrf.mxu0
    %3419 = vmatprep.mubr.bf16.mxu0 %v2115
    %3420 = vmatmul.mubr.bf16.gmra.mxu0 %v2114
    %v3421 = vpop.f32.mrf.mxu0
    %v3422 = vadd.f32 %v3133, %v3421
    %v3423 = vpop.f32.mrf.mxu0
    %v3424 = vpop.f32.mrf.mxu0
    %v3425 = vadd.f32 %v3136, %v3424
    %v3426 = vpop.f32.mrf.mxu0
    %3427 = vmatprep.mubr.bf16.mxu0 %v2119
    %3428 = vmatmul.mubr.bf16.gmra.mxu0 %v2118
    %v3429 = vpop.f32.mrf.mxu0
    %v3430 = vadd.f32 %v3141, %v3429
    %v3431 = vpop.f32.mrf.mxu0
    %v3432 = vpop.f32.mrf.mxu0
    %v3433 = vadd.f32 %v3144, %v3432
    %v3434 = vpop.f32.mrf.mxu0
    %3435 = vdwg.mxu0
    %v3436 = vmul.f32 %v3182, 2.0
    %v3437 = vmul.f32 %v3185, 2.0
    %v3438 = vmul.f32 %v3190, 2.0
    %v3439 = vmul.f32 %v3193, 2.0
    %v3440 = vmul.f32 %v3198, 2.0
    %v3441 = vmul.f32 %v3201, 2.0
    %v3442 = vmul.f32 %v3206, 2.0
    %v3443 = vmul.f32 %v3209, 2.0
    %v3444 = vmul.f32 %v3214, 2.0
    %v3445 = vmul.f32 %v3217, 2.0
    %v3446 = vmul.f32 %v3222, 2.0
    %v3447 = vmul.f32 %v3225, 2.0
    %v3448 = vmul.f32 %v3230, 2.0
    %v3449 = vmul.f32 %v3233, 2.0
    %v3450 = vmul.f32 %v3238, 2.0
    %v3451 = vmul.f32 %v3241, 2.0
    %v3452 = vmul.f32 %v3246, 2.0
    %v3453 = vmul.f32 %v3249, 2.0
    %v3454 = vmul.f32 %v3254, 2.0
    %v3455 = vmul.f32 %v3257, 2.0
    %v3456 = vmul.f32 %v3262, 2.0
    %v3457 = vmul.f32 %v3265, 2.0
    %v3458 = vmul.f32 %v3270, 2.0
    %v3459 = vmul.f32 %v3273, 2.0
    %v3460 = vmul.f32 %v3278, 2.0
    %v3461 = vmul.f32 %v3281, 2.0
    %v3462 = vmul.f32 %v3286, 2.0
    %v3463 = vmul.f32 %v3289, 2.0
    %v3464 = vmul.f32 %v3294, 2.0
    %v3465 = vmul.f32 %v3297, 2.0
    %v3466 = vmul.f32 %v3302, 2.0
    %v3467 = vmul.f32 %v3305, 2.0
    %v3468 = vmul.f32 %v3310, 2.0
    %v3469 = vmul.f32 %v3313, 2.0
    %v3470 = vmul.f32 %v3318, 2.0
    %v3471 = vmul.f32 %v3321, 2.0
    %v3472 = vmul.f32 %v3326, 2.0
    %v3473 = vmul.f32 %v3329, 2.0
    %v3474 = vmul.f32 %v3334, 2.0
    %v3475 = vmul.f32 %v3337, 2.0
    %v3476 = vmul.f32 %v3342, 2.0
    %v3477 = vmul.f32 %v3345, 2.0
    %v3478 = vmul.f32 %v3350, 2.0
    %v3479 = vmul.f32 %v3353, 2.0
    %v3480 = vmul.f32 %v3358, 2.0
    %v3481 = vmul.f32 %v3361, 2.0
    %v3482 = vmul.f32 %v3366, 2.0
    %v3483 = vmul.f32 %v3369, 2.0
    %v3484 = vmul.f32 %v3374, 2.0
    %v3485 = vmul.f32 %v3377, 2.0
    %v3486 = vmul.f32 %v3382, 2.0
    %v3487 = vmul.f32 %v3385, 2.0
    %v3488 = vmul.f32 %v3390, 2.0
    %v3489 = vmul.f32 %v3393, 2.0
    %v3490 = vmul.f32 %v3398, 2.0
    %v3491 = vmul.f32 %v3401, 2.0
    %v3492 = vmul.f32 %v3406, 2.0
    %v3493 = vmul.f32 %v3409, 2.0
    %v3494 = vmul.f32 %v3414, 2.0
    %v3495 = vmul.f32 %v3417, 2.0
    %v3496 = vmul.f32 %v3422, 2.0
    %v3497 = vmul.f32 %v3425, 2.0
    %v3498 = vmul.f32 %v3430, 2.0
    %v3499 = vmul.f32 %v3433, 2.0
    %v3500 = vsub.f32 %v3436, %v1384
    %v3501 = vsub.f32 %v3437, %v1385
    %v3502 = vsub.f32 %v3438, %v1386
    %v3503 = vsub.f32 %v3439, %v1387
    %v3504 = vsub.f32 %v3440, %v1388
    %v3505 = vsub.f32 %v3441, %v1389
    %v3506 = vsub.f32 %v3442, %v1390
    %v3507 = vsub.f32 %v3443, %v1391
    %v3508 = vsub.f32 %v3444, %v1392
    %v3509 = vsub.f32 %v3445, %v1393
    %v3510 = vsub.f32 %v3446, %v1394
    %v3511 = vsub.f32 %v3447, %v1395
    %v3512 = vsub.f32 %v3448, %v1396
    %v3513 = vsub.f32 %v3449, %v1397
    %v3514 = vsub.f32 %v3450, %v1398
    %v3515 = vsub.f32 %v3451, %v1399
    %v3516 = vsub.f32 %v3452, %v1400
    %v3517 = vsub.f32 %v3453, %v1401
    %v3518 = vsub.f32 %v3454, %v1402
    %v3519 = vsub.f32 %v3455, %v1403
    %v3520 = vsub.f32 %v3456, %v1404
    %v3521 = vsub.f32 %v3457, %v1405
    %v3522 = vsub.f32 %v3458, %v1406
    %v3523 = vsub.f32 %v3459, %v1407
    %v3524 = vsub.f32 %v3460, %v1408
    %v3525 = vsub.f32 %v3461, %v1409
    %v3526 = vsub.f32 %v3462, %v1410
    %v3527 = vsub.f32 %v3463, %v1411
    %v3528 = vsub.f32 %v3464, %v1412
    %v3529 = vsub.f32 %v3465, %v1413
    %v3530 = vsub.f32 %v3466, %v1414
    %v3531 = vsub.f32 %v3467, %v1415
    %v3532 = vsub.f32 %v3468, %v1416
    %v3533 = vsub.f32 %v3469, %v1417
    %v3534 = vsub.f32 %v3470, %v1418
    %v3535 = vsub.f32 %v3471, %v1419
    %v3536 = vsub.f32 %v3472, %v1420
    %v3537 = vsub.f32 %v3473, %v1421
    %v3538 = vsub.f32 %v3474, %v1422
    %v3539 = vsub.f32 %v3475, %v1423
    %v3540 = vsub.f32 %v3476, %v1424
    %v3541 = vsub.f32 %v3477, %v1425
    %v3542 = vsub.f32 %v3478, %v1426
    %v3543 = vsub.f32 %v3479, %v1427
    %v3544 = vsub.f32 %v3480, %v1428
    %v3545 = vsub.f32 %v3481, %v1429
    %v3546 = vsub.f32 %v3482, %v1430
    %v3547 = vsub.f32 %v3483, %v1431
    %v3548 = vsub.f32 %v3484, %v1432
    %v3549 = vsub.f32 %v3485, %v1433
    %v3550 = vsub.f32 %v3486, %v1434
    %v3551 = vsub.f32 %v3487, %v1435
    %v3552 = vsub.f32 %v3488, %v1436
    %v3553 = vsub.f32 %v3489, %v1437
    %v3554 = vsub.f32 %v3490, %v1438
    %v3555 = vsub.f32 %v3491, %v1439
    %v3556 = vsub.f32 %v3492, %v1440
    %v3557 = vsub.f32 %v3493, %v1441
    %v3558 = vsub.f32 %v3494, %v1442
    %v3559 = vsub.f32 %v3495, %v1443
    %v3560 = vsub.f32 %v3496, %v1444
    %v3561 = vsub.f32 %v3497, %v1445
    %v3562 = vsub.f32 %v3498, %v1446
    %v3563 = vsub.f32 %v3499, %v1447
    %v3564 = vpack.c.bf16 %v3501, %v3500
    %v3565 = vpack.c.bf16 %v3503, %v3502
    %v3566 = vpack.c.bf16 %v3505, %v3504
    %v3567 = vpack.c.bf16 %v3507, %v3506
    %v3568 = vpack.c.bf16 %v3509, %v3508
    %v3569 = vpack.c.bf16 %v3511, %v3510
    %v3570 = vpack.c.bf16 %v3513, %v3512
    %v3571 = vpack.c.bf16 %v3515, %v3514
    %v3572 = vpack.c.bf16 %v3517, %v3516
    %v3573 = vpack.c.bf16 %v3519, %v3518
    %v3574 = vpack.c.bf16 %v3521, %v3520
    %v3575 = vpack.c.bf16 %v3523, %v3522
    %v3576 = vpack.c.bf16 %v3525, %v3524
    %v3577 = vpack.c.bf16 %v3527, %v3526
    %v3578 = vpack.c.bf16 %v3529, %v3528
    %v3579 = vpack.c.bf16 %v3531, %v3530
    %v3580 = vpack.c.bf16 %v3533, %v3532
    %v3581 = vpack.c.bf16 %v3535, %v3534
    %v3582 = vpack.c.bf16 %v3537, %v3536
    %v3583 = vpack.c.bf16 %v3539, %v3538
    %v3584 = vpack.c.bf16 %v3541, %v3540
    %v3585 = vpack.c.bf16 %v3543, %v3542
    %v3586 = vpack.c.bf16 %v3545, %v3544
    %v3587 = vpack.c.bf16 %v3547, %v3546
    %v3588 = vpack.c.bf16 %v3549, %v3548
    %v3589 = vpack.c.bf16 %v3551, %v3550
    %v3590 = vpack.c.bf16 %v3553, %v3552
    %v3591 = vpack.c.bf16 %v3555, %v3554
    %v3592 = vpack.c.bf16 %v3557, %v3556
    %v3593 = vpack.c.bf16 %v3559, %v3558
    %v3594 = vpack.c.bf16 %v3561, %v3560
    %v3595 = vpack.c.bf16 %v3563, %v3562
    %3596 = vmatprep.subr.bf16.mxu0 0
    %3597 = vmatpush1.bf16.msra.mxu0 %v3571
    %3598 = vmatprep.subr.bf16.mxu0 0
    %3599 = vmatpush1.bf16.msra.mxu0 %v3570
    %3600 = vmatprep.subr.bf16.mxu0 0
    %3601 = vmatpush1.bf16.msra.mxu0 %v3569
    %3602 = vmatprep.subr.bf16.mxu0 0
    %3603 = vmatpush1.bf16.msra.mxu0 %v3568
    %3604 = vmatprep.subr.bf16.mxu0 0
    %3605 = vmatpush1.bf16.msra.mxu0 %v3567
    %3606 = vmatprep.subr.bf16.mxu0 0
    %3607 = vmatpush1.bf16.msra.mxu0 %v3566
    %3608 = vmatprep.subr.bf16.mxu0 0
    %3609 = vmatpush1.bf16.msra.mxu0 %v3565
    %3610 = vmatprep.subr.bf16.mxu0 0
    %3611 = vmatpush1.bf16.msra.mxu0 %v3564
    %3612 = vmatprep.subr.bf16.mxu0 0
    %3613 = vmatpush2.bf16.msra.mxu0 %v3579
    %3614 = vmatprep.subr.bf16.mxu0 0
    %3615 = vmatpush2.bf16.msra.mxu0 %v3578
    %3616 = vmatprep.subr.bf16.mxu0 0
    %3617 = vmatpush2.bf16.msra.mxu0 %v3577
    %3618 = vmatprep.subr.bf16.mxu0 0
    %3619 = vmatpush2.bf16.msra.mxu0 %v3576
    %3620 = vmatprep.subr.bf16.mxu0 0
    %3621 = vmatpush2.bf16.msra.mxu0 %v3575
    %3622 = vmatprep.subr.bf16.mxu0 0
    %3623 = vmatpush2.bf16.msra.mxu0 %v3574
    %3624 = vmatprep.subr.bf16.mxu0 0
    %3625 = vmatpush2.bf16.msra.mxu0 %v3573
    %3626 = vmatprep.subr.bf16.mxu0 0
    %3627 = vmatpush2.bf16.msra.mxu0 %v3572
    %3628 = vmatprep.mubr.bf16.mxu0 %v1993
    %3629 = vmatmul.mubr.bf16.gmra.mxu0 %v1992
    %v3630 = vpop.f32.mrf.mxu0
    %v3631 = vadd.f32 0.0, %v3630
    %v3632 = vpop.f32.mrf.mxu0
    %v3633 = vpop.f32.mrf.mxu0
    %v3634 = vadd.f32 0.0, %v3633
    %v3635 = vpop.f32.mrf.mxu0
    %3636 = vmatprep.mubr.bf16.mxu0 %v1997
    %3637 = vmatmul.mubr.bf16.gmra.mxu0 %v1996
    %v3638 = vpop.f32.mrf.mxu0
    %v3639 = vadd.f32 0.0, %v3638
    %v3640 = vpop.f32.mrf.mxu0
    %v3641 = vpop.f32.mrf.mxu0
    %v3642 = vadd.f32 0.0, %v3641
    %v3643 = vpop.f32.mrf.mxu0
    %3644 = vmatprep.mubr.bf16.mxu0 %v2001
    %3645 = vmatmul.mubr.bf16.gmra.mxu0 %v2000
    %v3646 = vpop.f32.mrf.mxu0
    %v3647 = vadd.f32 0.0, %v3646
    %v3648 = vpop.f32.mrf.mxu0
    %v3649 = vpop.f32.mrf.mxu0
    %v3650 = vadd.f32 0.0, %v3649
    %v3651 = vpop.f32.mrf.mxu0
    %3652 = vmatprep.mubr.bf16.mxu0 %v2005
    %3653 = vmatmul.mubr.bf16.gmra.mxu0 %v2004
    %v3654 = vpop.f32.mrf.mxu0
    %v3655 = vadd.f32 0.0, %v3654
    %v3656 = vpop.f32.mrf.mxu0
    %v3657 = vpop.f32.mrf.mxu0
    %v3658 = vadd.f32 0.0, %v3657
    %v3659 = vpop.f32.mrf.mxu0
    %3660 = vmatprep.mubr.bf16.mxu0 %v2009
    %3661 = vmatmul.mubr.bf16.gmra.mxu0 %v2008
    %v3662 = vpop.f32.mrf.mxu0
    %v3663 = vadd.f32 0.0, %v3662
    %v3664 = vpop.f32.mrf.mxu0
    %v3665 = vpop.f32.mrf.mxu0
    %v3666 = vadd.f32 0.0, %v3665
    %v3667 = vpop.f32.mrf.mxu0
    %3668 = vmatprep.mubr.bf16.mxu0 %v2013
    %3669 = vmatmul.mubr.bf16.gmra.mxu0 %v2012
    %v3670 = vpop.f32.mrf.mxu0
    %v3671 = vadd.f32 0.0, %v3670
    %v3672 = vpop.f32.mrf.mxu0
    %v3673 = vpop.f32.mrf.mxu0
    %v3674 = vadd.f32 0.0, %v3673
    %v3675 = vpop.f32.mrf.mxu0
    %3676 = vmatprep.mubr.bf16.mxu0 %v2017
    %3677 = vmatmul.mubr.bf16.gmra.mxu0 %v2016
    %v3678 = vpop.f32.mrf.mxu0
    %v3679 = vadd.f32 0.0, %v3678
    %v3680 = vpop.f32.mrf.mxu0
    %v3681 = vpop.f32.mrf.mxu0
    %v3682 = vadd.f32 0.0, %v3681
    %v3683 = vpop.f32.mrf.mxu0
    %3684 = vmatprep.mubr.bf16.mxu0 %v2021
    %3685 = vmatmul.mubr.bf16.gmra.mxu0 %v2020
    %v3686 = vpop.f32.mrf.mxu0
    %v3687 = vadd.f32 0.0, %v3686
    %v3688 = vpop.f32.mrf.mxu0
    %v3689 = vpop.f32.mrf.mxu0
    %v3690 = vadd.f32 0.0, %v3689
    %v3691 = vpop.f32.mrf.mxu0
    %3692 = vmatprep.mubr.bf16.mxu0 %v2025
    %3693 = vmatmul.mubr.bf16.gmra.mxu0 %v2024
    %v3694 = vpop.f32.mrf.mxu0
    %v3695 = vadd.f32 0.0, %v3694
    %v3696 = vpop.f32.mrf.mxu0
    %v3697 = vpop.f32.mrf.mxu0
    %v3698 = vadd.f32 0.0, %v3697
    %v3699 = vpop.f32.mrf.mxu0
    %3700 = vmatprep.mubr.bf16.mxu0 %v2029
    %3701 = vmatmul.mubr.bf16.gmra.mxu0 %v2028
    %v3702 = vpop.f32.mrf.mxu0
    %v3703 = vadd.f32 0.0, %v3702
    %v3704 = vpop.f32.mrf.mxu0
    %v3705 = vpop.f32.mrf.mxu0
    %v3706 = vadd.f32 0.0, %v3705
    %v3707 = vpop.f32.mrf.mxu0
    %3708 = vmatprep.mubr.bf16.mxu0 %v2033
    %3709 = vmatmul.mubr.bf16.gmra.mxu0 %v2032
    %v3710 = vpop.f32.mrf.mxu0
    %v3711 = vadd.f32 0.0, %v3710
    %v3712 = vpop.f32.mrf.mxu0
    %v3713 = vpop.f32.mrf.mxu0
    %v3714 = vadd.f32 0.0, %v3713
    %v3715 = vpop.f32.mrf.mxu0
    %3716 = vmatprep.mubr.bf16.mxu0 %v2037
    %3717 = vmatmul.mubr.bf16.gmra.mxu0 %v2036
    %v3718 = vpop.f32.mrf.mxu0
    %v3719 = vadd.f32 0.0, %v3718
    %v3720 = vpop.f32.mrf.mxu0
    %v3721 = vpop.f32.mrf.mxu0
    %v3722 = vadd.f32 0.0, %v3721
    %v3723 = vpop.f32.mrf.mxu0
    %3724 = vmatprep.mubr.bf16.mxu0 %v2041
    %3725 = vmatmul.mubr.bf16.gmra.mxu0 %v2040
    %v3726 = vpop.f32.mrf.mxu0
    %v3727 = vadd.f32 0.0, %v3726
    %v3728 = vpop.f32.mrf.mxu0
    %v3729 = vpop.f32.mrf.mxu0
    %v3730 = vadd.f32 0.0, %v3729
    %v3731 = vpop.f32.mrf.mxu0
    %3732 = vmatprep.mubr.bf16.mxu0 %v2045
    %3733 = vmatmul.mubr.bf16.gmra.mxu0 %v2044
    %v3734 = vpop.f32.mrf.mxu0
    %v3735 = vadd.f32 0.0, %v3734
    %v3736 = vpop.f32.mrf.mxu0
    %v3737 = vpop.f32.mrf.mxu0
    %v3738 = vadd.f32 0.0, %v3737
    %v3739 = vpop.f32.mrf.mxu0
    %3740 = vmatprep.mubr.bf16.mxu0 %v2049
    %3741 = vmatmul.mubr.bf16.gmra.mxu0 %v2048
    %v3742 = vpop.f32.mrf.mxu0
    %v3743 = vadd.f32 0.0, %v3742
    %v3744 = vpop.f32.mrf.mxu0
    %v3745 = vpop.f32.mrf.mxu0
    %v3746 = vadd.f32 0.0, %v3745
    %v3747 = vpop.f32.mrf.mxu0
    %3748 = vmatprep.mubr.bf16.mxu0 %v2053
    %3749 = vmatmul.mubr.bf16.gmra.mxu0 %v2052
    %v3750 = vpop.f32.mrf.mxu0
    %v3751 = vadd.f32 0.0, %v3750
    %v3752 = vpop.f32.mrf.mxu0
    %v3753 = vpop.f32.mrf.mxu0
    %v3754 = vadd.f32 0.0, %v3753
    %v3755 = vpop.f32.mrf.mxu0
    %3756 = vmatprep.mubr.bf16.mxu0 %v2057
    %3757 = vmatmul.mubr.bf16.gmra.mxu0 %v2056
    %v3758 = vpop.f32.mrf.mxu0
    %v3759 = vadd.f32 0.0, %v3758
    %v3760 = vpop.f32.mrf.mxu0
    %v3761 = vpop.f32.mrf.mxu0
    %v3762 = vadd.f32 0.0, %v3761
    %v3763 = vpop.f32.mrf.mxu0
    %3764 = vmatprep.mubr.bf16.mxu0 %v2061
    %3765 = vmatmul.mubr.bf16.gmra.mxu0 %v2060
    %v3766 = vpop.f32.mrf.mxu0
    %v3767 = vadd.f32 0.0, %v3766
    %v3768 = vpop.f32.mrf.mxu0
    %v3769 = vpop.f32.mrf.mxu0
    %v3770 = vadd.f32 0.0, %v3769
    %v3771 = vpop.f32.mrf.mxu0
    %3772 = vmatprep.mubr.bf16.mxu0 %v2065
    %3773 = vmatmul.mubr.bf16.gmra.mxu0 %v2064
    %v3774 = vpop.f32.mrf.mxu0
    %v3775 = vadd.f32 0.0, %v3774
    %v3776 = vpop.f32.mrf.mxu0
    %v3777 = vpop.f32.mrf.mxu0
    %v3778 = vadd.f32 0.0, %v3777
    %v3779 = vpop.f32.mrf.mxu0
    %3780 = vmatprep.mubr.bf16.mxu0 %v2069
    %3781 = vmatmul.mubr.bf16.gmra.mxu0 %v2068
    %v3782 = vpop.f32.mrf.mxu0
    %v3783 = vadd.f32 0.0, %v3782
    %v3784 = vpop.f32.mrf.mxu0
    %v3785 = vpop.f32.mrf.mxu0
    %v3786 = vadd.f32 0.0, %v3785
    %v3787 = vpop.f32.mrf.mxu0
    %3788 = vmatprep.mubr.bf16.mxu0 %v2073
    %3789 = vmatmul.mubr.bf16.gmra.mxu0 %v2072
    %v3790 = vpop.f32.mrf.mxu0
    %v3791 = vadd.f32 0.0, %v3790
    %v3792 = vpop.f32.mrf.mxu0
    %v3793 = vpop.f32.mrf.mxu0
    %v3794 = vadd.f32 0.0, %v3793
    %v3795 = vpop.f32.mrf.mxu0
    %3796 = vmatprep.mubr.bf16.mxu0 %v2077
    %3797 = vmatmul.mubr.bf16.gmra.mxu0 %v2076
    %v3798 = vpop.f32.mrf.mxu0
    %v3799 = vadd.f32 0.0, %v3798
    %v3800 = vpop.f32.mrf.mxu0
    %v3801 = vpop.f32.mrf.mxu0
    %v3802 = vadd.f32 0.0, %v3801
    %v3803 = vpop.f32.mrf.mxu0
    %3804 = vmatprep.mubr.bf16.mxu0 %v2081
    %3805 = vmatmul.mubr.bf16.gmra.mxu0 %v2080
    %v3806 = vpop.f32.mrf.mxu0
    %v3807 = vadd.f32 0.0, %v3806
    %v3808 = vpop.f32.mrf.mxu0
    %v3809 = vpop.f32.mrf.mxu0
    %v3810 = vadd.f32 0.0, %v3809
    %v3811 = vpop.f32.mrf.mxu0
    %3812 = vmatprep.mubr.bf16.mxu0 %v2085
    %3813 = vmatmul.mubr.bf16.gmra.mxu0 %v2084
    %v3814 = vpop.f32.mrf.mxu0
    %v3815 = vadd.f32 0.0, %v3814
    %v3816 = vpop.f32.mrf.mxu0
    %v3817 = vpop.f32.mrf.mxu0
    %v3818 = vadd.f32 0.0, %v3817
    %v3819 = vpop.f32.mrf.mxu0
    %3820 = vmatprep.mubr.bf16.mxu0 %v2089
    %3821 = vmatmul.mubr.bf16.gmra.mxu0 %v2088
    %v3822 = vpop.f32.mrf.mxu0
    %v3823 = vadd.f32 0.0, %v3822
    %v3824 = vpop.f32.mrf.mxu0
    %v3825 = vpop.f32.mrf.mxu0
    %v3826 = vadd.f32 0.0, %v3825
    %v3827 = vpop.f32.mrf.mxu0
    %3828 = vmatprep.mubr.bf16.mxu0 %v2093
    %3829 = vmatmul.mubr.bf16.gmra.mxu0 %v2092
    %v3830 = vpop.f32.mrf.mxu0
    %v3831 = vadd.f32 0.0, %v3830
    %v3832 = vpop.f32.mrf.mxu0
    %v3833 = vpop.f32.mrf.mxu0
    %v3834 = vadd.f32 0.0, %v3833
    %v3835 = vpop.f32.mrf.mxu0
    %3836 = vmatprep.mubr.bf16.mxu0 %v2097
    %3837 = vmatmul.mubr.bf16.gmra.mxu0 %v2096
    %v3838 = vpop.f32.mrf.mxu0
    %v3839 = vadd.f32 0.0, %v3838
    %v3840 = vpop.f32.mrf.mxu0
    %v3841 = vpop.f32.mrf.mxu0
    %v3842 = vadd.f32 0.0, %v3841
    %v3843 = vpop.f32.mrf.mxu0
    %3844 = vmatprep.mubr.bf16.mxu0 %v2101
    %3845 = vmatmul.mubr.bf16.gmra.mxu0 %v2100
    %v3846 = vpop.f32.mrf.mxu0
    %v3847 = vadd.f32 0.0, %v3846
    %v3848 = vpop.f32.mrf.mxu0
    %v3849 = vpop.f32.mrf.mxu0
    %v3850 = vadd.f32 0.0, %v3849
    %v3851 = vpop.f32.mrf.mxu0
    %3852 = vmatprep.mubr.bf16.mxu0 %v2105
    %3853 = vmatmul.mubr.bf16.gmra.mxu0 %v2104
    %v3854 = vpop.f32.mrf.mxu0
    %v3855 = vadd.f32 0.0, %v3854
    %v3856 = vpop.f32.mrf.mxu0
    %v3857 = vpop.f32.mrf.mxu0
    %v3858 = vadd.f32 0.0, %v3857
    %v3859 = vpop.f32.mrf.mxu0
    %3860 = vmatprep.mubr.bf16.mxu0 %v2109
    %3861 = vmatmul.mubr.bf16.gmra.mxu0 %v2108
    %v3862 = vpop.f32.mrf.mxu0
    %v3863 = vadd.f32 0.0, %v3862
    %v3864 = vpop.f32.mrf.mxu0
    %v3865 = vpop.f32.mrf.mxu0
    %v3866 = vadd.f32 0.0, %v3865
    %v3867 = vpop.f32.mrf.mxu0
    %3868 = vmatprep.mubr.bf16.mxu0 %v2113
    %3869 = vmatmul.mubr.bf16.gmra.mxu0 %v2112
    %v3870 = vpop.f32.mrf.mxu0
    %v3871 = vadd.f32 0.0, %v3870
    %v3872 = vpop.f32.mrf.mxu0
    %v3873 = vpop.f32.mrf.mxu0
    %v3874 = vadd.f32 0.0, %v3873
    %v3875 = vpop.f32.mrf.mxu0
    %3876 = vmatprep.mubr.bf16.mxu0 %v2117
    %3877 = vmatmul.mubr.bf16.gmra.mxu0 %v2116
    %v3878 = vpop.f32.mrf.mxu0
    %v3879 = vadd.f32 0.0, %v3878
    %v3880 = vpop.f32.mrf.mxu0
    %v3881 = vpop.f32.mrf.mxu0
    %v3882 = vadd.f32 0.0, %v3881
    %v3883 = vpop.f32.mrf.mxu0
    %3884 = vdwg.mxu0
    %3885 = vmatprep.subr.bf16.mxu0 0
    %3886 = vmatpush1.bf16.msra.mxu0 %v3587
    %3887 = vmatprep.subr.bf16.mxu0 0
    %3888 = vmatpush1.bf16.msra.mxu0 %v3586
    %3889 = vmatprep.subr.bf16.mxu0 0
    %3890 = vmatpush1.bf16.msra.mxu0 %v3585
    %3891 = vmatprep.subr.bf16.mxu0 0
    %3892 = vmatpush1.bf16.msra.mxu0 %v3584
    %3893 = vmatprep.subr.bf16.mxu0 0
    %3894 = vmatpush1.bf16.msra.mxu0 %v3583
    %3895 = vmatprep.subr.bf16.mxu0 0
    %3896 = vmatpush1.bf16.msra.mxu0 %v3582
    %3897 = vmatprep.subr.bf16.mxu0 0
    %3898 = vmatpush1.bf16.msra.mxu0 %v3581
    %3899 = vmatprep.subr.bf16.mxu0 0
    %3900 = vmatpush1.bf16.msra.mxu0 %v3580
    %3901 = vmatprep.subr.bf16.mxu0 0
    %3902 = vmatpush2.bf16.msra.mxu0 %v3595
    %3903 = vmatprep.subr.bf16.mxu0 0
    %3904 = vmatpush2.bf16.msra.mxu0 %v3594
    %3905 = vmatprep.subr.bf16.mxu0 0
    %3906 = vmatpush2.bf16.msra.mxu0 %v3593
    %3907 = vmatprep.subr.bf16.mxu0 0
    %3908 = vmatpush2.bf16.msra.mxu0 %v3592
    %3909 = vmatprep.subr.bf16.mxu0 0
    %3910 = vmatpush2.bf16.msra.mxu0 %v3591
    %3911 = vmatprep.subr.bf16.mxu0 0
    %3912 = vmatpush2.bf16.msra.mxu0 %v3590
    %3913 = vmatprep.subr.bf16.mxu0 0
    %3914 = vmatpush2.bf16.msra.mxu0 %v3589
    %3915 = vmatprep.subr.bf16.mxu0 0
    %3916 = vmatpush2.bf16.msra.mxu0 %v3588
    %3917 = vmatprep.mubr.bf16.mxu0 %v1995
    %3918 = vmatmul.mubr.bf16.gmra.mxu0 %v1994
    %v3919 = vpop.f32.mrf.mxu0
    %v3920 = vadd.f32 %v3631, %v3919
    %v3921 = vpop.f32.mrf.mxu0
    %v3922 = vpop.f32.mrf.mxu0
    %v3923 = vadd.f32 %v3634, %v3922
    %v3924 = vpop.f32.mrf.mxu0
    %3925 = vmatprep.mubr.bf16.mxu0 %v1999
    %3926 = vmatmul.mubr.bf16.gmra.mxu0 %v1998
    %v3927 = vpop.f32.mrf.mxu0
    %v3928 = vadd.f32 %v3639, %v3927
    %v3929 = vpop.f32.mrf.mxu0
    %v3930 = vpop.f32.mrf.mxu0
    %v3931 = vadd.f32 %v3642, %v3930
    %v3932 = vpop.f32.mrf.mxu0
    %3933 = vmatprep.mubr.bf16.mxu0 %v2003
    %3934 = vmatmul.mubr.bf16.gmra.mxu0 %v2002
    %v3935 = vpop.f32.mrf.mxu0
    %v3936 = vadd.f32 %v3647, %v3935
    %v3937 = vpop.f32.mrf.mxu0
    %v3938 = vpop.f32.mrf.mxu0
    %v3939 = vadd.f32 %v3650, %v3938
    %v3940 = vpop.f32.mrf.mxu0
    %3941 = vmatprep.mubr.bf16.mxu0 %v2007
    %3942 = vmatmul.mubr.bf16.gmra.mxu0 %v2006
    %v3943 = vpop.f32.mrf.mxu0
    %v3944 = vadd.f32 %v3655, %v3943
    %v3945 = vpop.f32.mrf.mxu0
    %v3946 = vpop.f32.mrf.mxu0
    %v3947 = vadd.f32 %v3658, %v3946
    %v3948 = vpop.f32.mrf.mxu0
    %3949 = vmatprep.mubr.bf16.mxu0 %v2011
    %3950 = vmatmul.mubr.bf16.gmra.mxu0 %v2010
    %v3951 = vpop.f32.mrf.mxu0
    %v3952 = vadd.f32 %v3663, %v3951
    %v3953 = vpop.f32.mrf.mxu0
    %v3954 = vpop.f32.mrf.mxu0
    %v3955 = vadd.f32 %v3666, %v3954
    %v3956 = vpop.f32.mrf.mxu0
    %3957 = vmatprep.mubr.bf16.mxu0 %v2015
    %3958 = vmatmul.mubr.bf16.gmra.mxu0 %v2014
    %v3959 = vpop.f32.mrf.mxu0
    %v3960 = vadd.f32 %v3671, %v3959
    %v3961 = vpop.f32.mrf.mxu0
    %v3962 = vpop.f32.mrf.mxu0
    %v3963 = vadd.f32 %v3674, %v3962
    %v3964 = vpop.f32.mrf.mxu0
    %3965 = vmatprep.mubr.bf16.mxu0 %v2019
    %3966 = vmatmul.mubr.bf16.gmra.mxu0 %v2018
    %v3967 = vpop.f32.mrf.mxu0
    %v3968 = vadd.f32 %v3679, %v3967
    %v3969 = vpop.f32.mrf.mxu0
    %v3970 = vpop.f32.mrf.mxu0
    %v3971 = vadd.f32 %v3682, %v3970
    %v3972 = vpop.f32.mrf.mxu0
    %3973 = vmatprep.mubr.bf16.mxu0 %v2023
    %3974 = vmatmul.mubr.bf16.gmra.mxu0 %v2022
    %v3975 = vpop.f32.mrf.mxu0
    %v3976 = vadd.f32 %v3687, %v3975
    %v3977 = vpop.f32.mrf.mxu0
    %v3978 = vpop.f32.mrf.mxu0
    %v3979 = vadd.f32 %v3690, %v3978
    %v3980 = vpop.f32.mrf.mxu0
    %3981 = vmatprep.mubr.bf16.mxu0 %v2027
    %3982 = vmatmul.mubr.bf16.gmra.mxu0 %v2026
    %v3983 = vpop.f32.mrf.mxu0
    %v3984 = vadd.f32 %v3695, %v3983
    %v3985 = vpop.f32.mrf.mxu0
    %v3986 = vpop.f32.mrf.mxu0
    %v3987 = vadd.f32 %v3698, %v3986
    %v3988 = vpop.f32.mrf.mxu0
    %3989 = vmatprep.mubr.bf16.mxu0 %v2031
    %3990 = vmatmul.mubr.bf16.gmra.mxu0 %v2030
    %v3991 = vpop.f32.mrf.mxu0
    %v3992 = vadd.f32 %v3703, %v3991
    %v3993 = vpop.f32.mrf.mxu0
    %v3994 = vpop.f32.mrf.mxu0
    %v3995 = vadd.f32 %v3706, %v3994
    %v3996 = vpop.f32.mrf.mxu0
    %3997 = vmatprep.mubr.bf16.mxu0 %v2035
    %3998 = vmatmul.mubr.bf16.gmra.mxu0 %v2034
    %v3999 = vpop.f32.mrf.mxu0
    %v4000 = vadd.f32 %v3711, %v3999
    %v4001 = vpop.f32.mrf.mxu0
    %v4002 = vpop.f32.mrf.mxu0
    %v4003 = vadd.f32 %v3714, %v4002
    %v4004 = vpop.f32.mrf.mxu0
    %4005 = vmatprep.mubr.bf16.mxu0 %v2039
    %4006 = vmatmul.mubr.bf16.gmra.mxu0 %v2038
    %v4007 = vpop.f32.mrf.mxu0
    %v4008 = vadd.f32 %v3719, %v4007
    %v4009 = vpop.f32.mrf.mxu0
    %v4010 = vpop.f32.mrf.mxu0
    %v4011 = vadd.f32 %v3722, %v4010
    %v4012 = vpop.f32.mrf.mxu0
    %4013 = vmatprep.mubr.bf16.mxu0 %v2043
    %4014 = vmatmul.mubr.bf16.gmra.mxu0 %v2042
    %v4015 = vpop.f32.mrf.mxu0
    %v4016 = vadd.f32 %v3727, %v4015
    %v4017 = vpop.f32.mrf.mxu0
    %v4018 = vpop.f32.mrf.mxu0
    %v4019 = vadd.f32 %v3730, %v4018
    %v4020 = vpop.f32.mrf.mxu0
    %4021 = vmatprep.mubr.bf16.mxu0 %v2047
    %4022 = vmatmul.mubr.bf16.gmra.mxu0 %v2046
    %v4023 = vpop.f32.mrf.mxu0
    %v4024 = vadd.f32 %v3735, %v4023
    %v4025 = vpop.f32.mrf.mxu0
    %v4026 = vpop.f32.mrf.mxu0
    %v4027 = vadd.f32 %v3738, %v4026
    %v4028 = vpop.f32.mrf.mxu0
    %4029 = vmatprep.mubr.bf16.mxu0 %v2051
    %4030 = vmatmul.mubr.bf16.gmra.mxu0 %v2050
    %v4031 = vpop.f32.mrf.mxu0
    %v4032 = vadd.f32 %v3743, %v4031
    %v4033 = vpop.f32.mrf.mxu0
    %v4034 = vpop.f32.mrf.mxu0
    %v4035 = vadd.f32 %v3746, %v4034
    %v4036 = vpop.f32.mrf.mxu0
    %4037 = vmatprep.mubr.bf16.mxu0 %v2055
    %4038 = vmatmul.mubr.bf16.gmra.mxu0 %v2054
    %v4039 = vpop.f32.mrf.mxu0
    %v4040 = vadd.f32 %v3751, %v4039
    %v4041 = vpop.f32.mrf.mxu0
    %v4042 = vpop.f32.mrf.mxu0
    %v4043 = vadd.f32 %v3754, %v4042
    %v4044 = vpop.f32.mrf.mxu0
    %4045 = vmatprep.mubr.bf16.mxu0 %v2059
    %4046 = vmatmul.mubr.bf16.gmra.mxu0 %v2058
    %v4047 = vpop.f32.mrf.mxu0
    %v4048 = vadd.f32 %v3759, %v4047
    %v4049 = vpop.f32.mrf.mxu0
    %v4050 = vpop.f32.mrf.mxu0
    %v4051 = vadd.f32 %v3762, %v4050
    %v4052 = vpop.f32.mrf.mxu0
    %4053 = vmatprep.mubr.bf16.mxu0 %v2063
    %4054 = vmatmul.mubr.bf16.gmra.mxu0 %v2062
    %v4055 = vpop.f32.mrf.mxu0
    %v4056 = vadd.f32 %v3767, %v4055
    %v4057 = vpop.f32.mrf.mxu0
    %v4058 = vpop.f32.mrf.mxu0
    %v4059 = vadd.f32 %v3770, %v4058
    %v4060 = vpop.f32.mrf.mxu0
    %4061 = vmatprep.mubr.bf16.mxu0 %v2067
    %4062 = vmatmul.mubr.bf16.gmra.mxu0 %v2066
    %v4063 = vpop.f32.mrf.mxu0
    %v4064 = vadd.f32 %v3775, %v4063
    %v4065 = vpop.f32.mrf.mxu0
    %v4066 = vpop.f32.mrf.mxu0
    %v4067 = vadd.f32 %v3778, %v4066
    %v4068 = vpop.f32.mrf.mxu0
    %4069 = vmatprep.mubr.bf16.mxu0 %v2071
    %4070 = vmatmul.mubr.bf16.gmra.mxu0 %v2070
    %v4071 = vpop.f32.mrf.mxu0
    %v4072 = vadd.f32 %v3783, %v4071
    %v4073 = vpop.f32.mrf.mxu0
    %v4074 = vpop.f32.mrf.mxu0
    %v4075 = vadd.f32 %v3786, %v4074
    %v4076 = vpop.f32.mrf.mxu0
    %4077 = vmatprep.mubr.bf16.mxu0 %v2075
    %4078 = vmatmul.mubr.bf16.gmra.mxu0 %v2074
    %v4079 = vpop.f32.mrf.mxu0
    %v4080 = vadd.f32 %v3791, %v4079
    %v4081 = vpop.f32.mrf.mxu0
    %v4082 = vpop.f32.mrf.mxu0
    %v4083 = vadd.f32 %v3794, %v4082
    %v4084 = vpop.f32.mrf.mxu0
    %4085 = vmatprep.mubr.bf16.mxu0 %v2079
    %4086 = vmatmul.mubr.bf16.gmra.mxu0 %v2078
    %v4087 = vpop.f32.mrf.mxu0
    %v4088 = vadd.f32 %v3799, %v4087
    %v4089 = vpop.f32.mrf.mxu0
    %v4090 = vpop.f32.mrf.mxu0
    %v4091 = vadd.f32 %v3802, %v4090
    %v4092 = vpop.f32.mrf.mxu0
    %4093 = vmatprep.mubr.bf16.mxu0 %v2083
    %4094 = vmatmul.mubr.bf16.gmra.mxu0 %v2082
    %v4095 = vpop.f32.mrf.mxu0
    %v4096 = vadd.f32 %v3807, %v4095
    %v4097 = vpop.f32.mrf.mxu0
    %v4098 = vpop.f32.mrf.mxu0
    %v4099 = vadd.f32 %v3810, %v4098
    %v4100 = vpop.f32.mrf.mxu0
    %4101 = vmatprep.mubr.bf16.mxu0 %v2087
    %4102 = vmatmul.mubr.bf16.gmra.mxu0 %v2086
    %v4103 = vpop.f32.mrf.mxu0
    %v4104 = vadd.f32 %v3815, %v4103
    %v4105 = vpop.f32.mrf.mxu0
    %v4106 = vpop.f32.mrf.mxu0
    %v4107 = vadd.f32 %v3818, %v4106
    %v4108 = vpop.f32.mrf.mxu0
    %4109 = vmatprep.mubr.bf16.mxu0 %v2091
    %4110 = vmatmul.mubr.bf16.gmra.mxu0 %v2090
    %v4111 = vpop.f32.mrf.mxu0
    %v4112 = vadd.f32 %v3823, %v4111
    %v4113 = vpop.f32.mrf.mxu0
    %v4114 = vpop.f32.mrf.mxu0
    %v4115 = vadd.f32 %v3826, %v4114
    %v4116 = vpop.f32.mrf.mxu0
    %4117 = vmatprep.mubr.bf16.mxu0 %v2095
    %4118 = vmatmul.mubr.bf16.gmra.mxu0 %v2094
    %v4119 = vpop.f32.mrf.mxu0
    %v4120 = vadd.f32 %v3831, %v4119
    %v4121 = vpop.f32.mrf.mxu0
    %v4122 = vpop.f32.mrf.mxu0
    %v4123 = vadd.f32 %v3834, %v4122
    %v4124 = vpop.f32.mrf.mxu0
    %4125 = vmatprep.mubr.bf16.mxu0 %v2099
    %4126 = vmatmul.mubr.bf16.gmra.mxu0 %v2098
    %v4127 = vpop.f32.mrf.mxu0
    %v4128 = vadd.f32 %v3839, %v4127
    %v4129 = vpop.f32.mrf.mxu0
    %v4130 = vpop.f32.mrf.mxu0
    %v4131 = vadd.f32 %v3842, %v4130
    %v4132 = vpop.f32.mrf.mxu0
    %4133 = vmatprep.mubr.bf16.mxu0 %v2103
    %4134 = vmatmul.mubr.bf16.gmra.mxu0 %v2102
    %v4135 = vpop.f32.mrf.mxu0
    %v4136 = vadd.f32 %v3847, %v4135
    %v4137 = vpop.f32.mrf.mxu0
    %v4138 = vpop.f32.mrf.mxu0
    %v4139 = vadd.f32 %v3850, %v4138
    %v4140 = vpop.f32.mrf.mxu0
    %4141 = vmatprep.mubr.bf16.mxu0 %v2107
    %4142 = vmatmul.mubr.bf16.gmra.mxu0 %v2106
    %v4143 = vpop.f32.mrf.mxu0
    %v4144 = vadd.f32 %v3855, %v4143
    %v4145 = vpop.f32.mrf.mxu0
    %v4146 = vpop.f32.mrf.mxu0
    %v4147 = vadd.f32 %v3858, %v4146
    %v4148 = vpop.f32.mrf.mxu0
    %4149 = vmatprep.mubr.bf16.mxu0 %v2111
    %4150 = vmatmul.mubr.bf16.gmra.mxu0 %v2110
    %v4151 = vpop.f32.mrf.mxu0
    %v4152 = vadd.f32 %v3863, %v4151
    %v4153 = vpop.f32.mrf.mxu0
    %v4154 = vpop.f32.mrf.mxu0
    %v4155 = vadd.f32 %v3866, %v4154
    %v4156 = vpop.f32.mrf.mxu0
    %4157 = vmatprep.mubr.bf16.mxu0 %v2115
    %4158 = vmatmul.mubr.bf16.gmra.mxu0 %v2114
    %v4159 = vpop.f32.mrf.mxu0
    %v4160 = vadd.f32 %v3871, %v4159
    %v4161 = vpop.f32.mrf.mxu0
    %v4162 = vpop.f32.mrf.mxu0
    %v4163 = vadd.f32 %v3874, %v4162
    %v4164 = vpop.f32.mrf.mxu0
    %4165 = vmatprep.mubr.bf16.mxu0 %v2119
    %4166 = vmatmul.mubr.bf16.gmra.mxu0 %v2118
    %v4167 = vpop.f32.mrf.mxu0
    %v4168 = vadd.f32 %v3879, %v4167
    %v4169 = vpop.f32.mrf.mxu0
    %v4170 = vpop.f32.mrf.mxu0
    %v4171 = vadd.f32 %v3882, %v4170
    %v4172 = vpop.f32.mrf.mxu0
    %4173 = vdwg.mxu0
    %v4174 = vmul.f32 %v3920, 2.0
    %v4175 = vmul.f32 %v3923, 2.0
    %v4176 = vmul.f32 %v3928, 2.0
    %v4177 = vmul.f32 %v3931, 2.0
    %v4178 = vmul.f32 %v3936, 2.0
    %v4179 = vmul.f32 %v3939, 2.0
    %v4180 = vmul.f32 %v3944, 2.0
    %v4181 = vmul.f32 %v3947, 2.0
    %v4182 = vmul.f32 %v3952, 2.0
    %v4183 = vmul.f32 %v3955, 2.0
    %v4184 = vmul.f32 %v3960, 2.0
    %v4185 = vmul.f32 %v3963, 2.0
    %v4186 = vmul.f32 %v3968, 2.0
    %v4187 = vmul.f32 %v3971, 2.0
    %v4188 = vmul.f32 %v3976, 2.0
    %v4189 = vmul.f32 %v3979, 2.0
    %v4190 = vmul.f32 %v3984, 2.0
    %v4191 = vmul.f32 %v3987, 2.0
    %v4192 = vmul.f32 %v3992, 2.0
    %v4193 = vmul.f32 %v3995, 2.0
    %v4194 = vmul.f32 %v4000, 2.0
    %v4195 = vmul.f32 %v4003, 2.0
    %v4196 = vmul.f32 %v4008, 2.0
    %v4197 = vmul.f32 %v4011, 2.0
    %v4198 = vmul.f32 %v4016, 2.0
    %v4199 = vmul.f32 %v4019, 2.0
    %v4200 = vmul.f32 %v4024, 2.0
    %v4201 = vmul.f32 %v4027, 2.0
    %v4202 = vmul.f32 %v4032, 2.0
    %v4203 = vmul.f32 %v4035, 2.0
    %v4204 = vmul.f32 %v4040, 2.0
    %v4205 = vmul.f32 %v4043, 2.0
    %v4206 = vmul.f32 %v4048, 2.0
    %v4207 = vmul.f32 %v4051, 2.0
    %v4208 = vmul.f32 %v4056, 2.0
    %v4209 = vmul.f32 %v4059, 2.0
    %v4210 = vmul.f32 %v4064, 2.0
    %v4211 = vmul.f32 %v4067, 2.0
    %v4212 = vmul.f32 %v4072, 2.0
    %v4213 = vmul.f32 %v4075, 2.0
    %v4214 = vmul.f32 %v4080, 2.0
    %v4215 = vmul.f32 %v4083, 2.0
    %v4216 = vmul.f32 %v4088, 2.0
    %v4217 = vmul.f32 %v4091, 2.0
    %v4218 = vmul.f32 %v4096, 2.0
    %v4219 = vmul.f32 %v4099, 2.0
    %v4220 = vmul.f32 %v4104, 2.0
    %v4221 = vmul.f32 %v4107, 2.0
    %v4222 = vmul.f32 %v4112, 2.0
    %v4223 = vmul.f32 %v4115, 2.0
    %v4224 = vmul.f32 %v4120, 2.0
    %v4225 = vmul.f32 %v4123, 2.0
    %v4226 = vmul.f32 %v4128, 2.0
    %v4227 = vmul.f32 %v4131, 2.0
    %v4228 = vmul.f32 %v4136, 2.0
    %v4229 = vmul.f32 %v4139, 2.0
    %v4230 = vmul.f32 %v4144, 2.0
    %v4231 = vmul.f32 %v4147, 2.0
    %v4232 = vmul.f32 %v4152, 2.0
    %v4233 = vmul.f32 %v4155, 2.0
    %v4234 = vmul.f32 %v4160, 2.0
    %v4235 = vmul.f32 %v4163, 2.0
    %v4236 = vmul.f32 %v4168, 2.0
    %v4237 = vmul.f32 %v4171, 2.0
    %v4238 = vsub.f32 %v4174, %v2572
    %v4239 = vsub.f32 %v4175, %v2575
    %v4240 = vsub.f32 %v4176, %v2580
    %v4241 = vsub.f32 %v4177, %v2583
    %v4242 = vsub.f32 %v4178, %v2588
    %v4243 = vsub.f32 %v4179, %v2591
    %v4244 = vsub.f32 %v4180, %v2596
    %v4245 = vsub.f32 %v4181, %v2599
    %v4246 = vsub.f32 %v4182, %v2604
    %v4247 = vsub.f32 %v4183, %v2607
    %v4248 = vsub.f32 %v4184, %v2612
    %v4249 = vsub.f32 %v4185, %v2615
    %v4250 = vsub.f32 %v4186, %v2620
    %v4251 = vsub.f32 %v4187, %v2623
    %v4252 = vsub.f32 %v4188, %v2628
    %v4253 = vsub.f32 %v4189, %v2631
    %v4254 = vsub.f32 %v4190, %v2636
    %v4255 = vsub.f32 %v4191, %v2639
    %v4256 = vsub.f32 %v4192, %v2644
    %v4257 = vsub.f32 %v4193, %v2647
    %v4258 = vsub.f32 %v4194, %v2652
    %v4259 = vsub.f32 %v4195, %v2655
    %v4260 = vsub.f32 %v4196, %v2660
    %v4261 = vsub.f32 %v4197, %v2663
    %v4262 = vsub.f32 %v4198, %v2668
    %v4263 = vsub.f32 %v4199, %v2671
    %v4264 = vsub.f32 %v4200, %v2676
    %v4265 = vsub.f32 %v4201, %v2679
    %v4266 = vsub.f32 %v4202, %v2684
    %v4267 = vsub.f32 %v4203, %v2687
    %v4268 = vsub.f32 %v4204, %v2692
    %v4269 = vsub.f32 %v4205, %v2695
    %v4270 = vsub.f32 %v4206, %v2700
    %v4271 = vsub.f32 %v4207, %v2703
    %v4272 = vsub.f32 %v4208, %v2708
    %v4273 = vsub.f32 %v4209, %v2711
    %v4274 = vsub.f32 %v4210, %v2716
    %v4275 = vsub.f32 %v4211, %v2719
    %v4276 = vsub.f32 %v4212, %v2724
    %v4277 = vsub.f32 %v4213, %v2727
    %v4278 = vsub.f32 %v4214, %v2732
    %v4279 = vsub.f32 %v4215, %v2735
    %v4280 = vsub.f32 %v4216, %v2740
    %v4281 = vsub.f32 %v4217, %v2743
    %v4282 = vsub.f32 %v4218, %v2748
    %v4283 = vsub.f32 %v4219, %v2751
    %v4284 = vsub.f32 %v4220, %v2756
    %v4285 = vsub.f32 %v4221, %v2759
    %v4286 = vsub.f32 %v4222, %v2764
    %v4287 = vsub.f32 %v4223, %v2767
    %v4288 = vsub.f32 %v4224, %v2772
    %v4289 = vsub.f32 %v4225, %v2775
    %v4290 = vsub.f32 %v4226, %v2780
    %v4291 = vsub.f32 %v4227, %v2783
    %v4292 = vsub.f32 %v4228, %v2788
    %v4293 = vsub.f32 %v4229, %v2791
    %v4294 = vsub.f32 %v4230, %v2796
    %v4295 = vsub.f32 %v4231, %v2799
    %v4296 = vsub.f32 %v4232, %v2804
    %v4297 = vsub.f32 %v4233, %v2807
    %v4298 = vsub.f32 %v4234, %v2812
    %v4299 = vsub.f32 %v4235, %v2815
    %v4300 = vsub.f32 %v4236, %v2820
    %v4301 = vsub.f32 %v4237, %v2823
    %s4302 = sld [smem:[#allocation3 + $0x1]]
    %s4303 = smul.f32 %s4302, 0.5
    %s4304 = sld [smem:[#allocation5 + $0x1]]
    %s4305 = smul.f32 %s4304, 0.5
    %s4306 = sld [smem:[#allocation5 + $0x2]]
    %s4307 = smul.f32 %s4306, 0.5
    %s4308 = sld [smem:[#allocation5 + $0x3]]
    %s4309 = smul.f32 %s4308, 0.5
    %s4310 = sld [smem:[#allocation2]]
    %v4311 = vstv %s4310
    %v4312 = vmul.f32 %v4311, %v1384
    %v4313 = vmul.f32 %v4311, %v1385
    %v4314 = vmul.f32 %v4311, %v1386
    %v4315 = vmul.f32 %v4311, %v1387
    %v4316 = vmul.f32 %v4311, %v1388
    %v4317 = vmul.f32 %v4311, %v1389
    %v4318 = vmul.f32 %v4311, %v1390
    %v4319 = vmul.f32 %v4311, %v1391
    %v4320 = vmul.f32 %v4311, %v1392
    %v4321 = vmul.f32 %v4311, %v1393
    %v4322 = vmul.f32 %v4311, %v1394
    %v4323 = vmul.f32 %v4311, %v1395
    %v4324 = vmul.f32 %v4311, %v1396
    %v4325 = vmul.f32 %v4311, %v1397
    %v4326 = vmul.f32 %v4311, %v1398
    %v4327 = vmul.f32 %v4311, %v1399
    %v4328 = vmul.f32 %v4311, %v1400
    %v4329 = vmul.f32 %v4311, %v1401
    %v4330 = vmul.f32 %v4311, %v1402
    %v4331 = vmul.f32 %v4311, %v1403
    %v4332 = vmul.f32 %v4311, %v1404
    %v4333 = vmul.f32 %v4311, %v1405
    %v4334 = vmul.f32 %v4311, %v1406
    %v4335 = vmul.f32 %v4311, %v1407
    %v4336 = vmul.f32 %v4311, %v1408
    %v4337 = vmul.f32 %v4311, %v1409
    %v4338 = vmul.f32 %v4311, %v1410
    %v4339 = vmul.f32 %v4311, %v1411
    %v4340 = vmul.f32 %v4311, %v1412
    %v4341 = vmul.f32 %v4311, %v1413
    %v4342 = vmul.f32 %v4311, %v1414
    %v4343 = vmul.f32 %v4311, %v1415
    %v4344 = vmul.f32 %v4311, %v1416
    %v4345 = vmul.f32 %v4311, %v1417
    %v4346 = vmul.f32 %v4311, %v1418
    %v4347 = vmul.f32 %v4311, %v1419
    %v4348 = vmul.f32 %v4311, %v1420
    %v4349 = vmul.f32 %v4311, %v1421
    %v4350 = vmul.f32 %v4311, %v1422
    %v4351 = vmul.f32 %v4311, %v1423
    %v4352 = vmul.f32 %v4311, %v1424
    %v4353 = vmul.f32 %v4311, %v1425
    %v4354 = vmul.f32 %v4311, %v1426
    %v4355 = vmul.f32 %v4311, %v1427
    %v4356 = vmul.f32 %v4311, %v1428
    %v4357 = vmul.f32 %v4311, %v1429
    %v4358 = vmul.f32 %v4311, %v1430
    %v4359 = vmul.f32 %v4311, %v1431
    %v4360 = vmul.f32 %v4311, %v1432
    %v4361 = vmul.f32 %v4311, %v1433
    %v4362 = vmul.f32 %v4311, %v1434
    %v4363 = vmul.f32 %v4311, %v1435
    %v4364 = vmul.f32 %v4311, %v1436
    %v4365 = vmul.f32 %v4311, %v1437
    %v4366 = vmul.f32 %v4311, %v1438
    %v4367 = vmul.f32 %v4311, %v1439
    %v4368 = vmul.f32 %v4311, %v1440
    %v4369 = vmul.f32 %v4311, %v1441
    %v4370 = vmul.f32 %v4311, %v1442
    %v4371 = vmul.f32 %v4311, %v1443
    %v4372 = vmul.f32 %v4311, %v1444
    %v4373 = vmul.f32 %v4311, %v1445
    %v4374 = vmul.f32 %v4311, %v1446
    %v4375 = vmul.f32 %v4311, %v1447
    %s4376 = sld [smem:[#allocation3]]
    %v4377 = vstv %s4376
    %v4378 = vmul.f32 %v4377, %v1384
    %v4379 = vmul.f32 %v4377, %v1385
    %v4380 = vmul.f32 %v4377, %v1386
    %v4381 = vmul.f32 %v4377, %v1387
    %v4382 = vmul.f32 %v4377, %v1388
    %v4383 = vmul.f32 %v4377, %v1389
    %v4384 = vmul.f32 %v4377, %v1390
    %v4385 = vmul.f32 %v4377, %v1391
    %v4386 = vmul.f32 %v4377, %v1392
    %v4387 = vmul.f32 %v4377, %v1393
    %v4388 = vmul.f32 %v4377, %v1394
    %v4389 = vmul.f32 %v4377, %v1395
    %v4390 = vmul.f32 %v4377, %v1396
    %v4391 = vmul.f32 %v4377, %v1397
    %v4392 = vmul.f32 %v4377, %v1398
    %v4393 = vmul.f32 %v4377, %v1399
    %v4394 = vmul.f32 %v4377, %v1400
    %v4395 = vmul.f32 %v4377, %v1401
    %v4396 = vmul.f32 %v4377, %v1402
    %v4397 = vmul.f32 %v4377, %v1403
    %v4398 = vmul.f32 %v4377, %v1404
    %v4399 = vmul.f32 %v4377, %v1405
    %v4400 = vmul.f32 %v4377, %v1406
    %v4401 = vmul.f32 %v4377, %v1407
    %v4402 = vmul.f32 %v4377, %v1408
    %v4403 = vmul.f32 %v4377, %v1409
    %v4404 = vmul.f32 %v4377, %v1410
    %v4405 = vmul.f32 %v4377, %v1411
    %v4406 = vmul.f32 %v4377, %v1412
    %v4407 = vmul.f32 %v4377, %v1413
    %v4408 = vmul.f32 %v4377, %v1414
    %v4409 = vmul.f32 %v4377, %v1415
    %v4410 = vmul.f32 %v4377, %v1416
    %v4411 = vmul.f32 %v4377, %v1417
    %v4412 = vmul.f32 %v4377, %v1418
    %v4413 = vmul.f32 %v4377, %v1419
    %v4414 = vmul.f32 %v4377, %v1420
    %v4415 = vmul.f32 %v4377, %v1421
    %v4416 = vmul.f32 %v4377, %v1422
    %v4417 = vmul.f32 %v4377, %v1423
    %v4418 = vmul.f32 %v4377, %v1424
    %v4419 = vmul.f32 %v4377, %v1425
    %v4420 = vmul.f32 %v4377, %v1426
    %v4421 = vmul.f32 %v4377, %v1427
    %v4422 = vmul.f32 %v4377, %v1428
    %v4423 = vmul.f32 %v4377, %v1429
    %v4424 = vmul.f32 %v4377, %v1430
    %v4425 = vmul.f32 %v4377, %v1431
    %v4426 = vmul.f32 %v4377, %v1432
    %v4427 = vmul.f32 %v4377, %v1433
    %v4428 = vmul.f32 %v4377, %v1434
    %v4429 = vmul.f32 %v4377, %v1435
    %v4430 = vmul.f32 %v4377, %v1436
    %v4431 = vmul.f32 %v4377, %v1437
    %v4432 = vmul.f32 %v4377, %v1438
    %v4433 = vmul.f32 %v4377, %v1439
    %v4434 = vmul.f32 %v4377, %v1440
    %v4435 = vmul.f32 %v4377, %v1441
    %v4436 = vmul.f32 %v4377, %v1442
    %v4437 = vmul.f32 %v4377, %v1443
    %v4438 = vmul.f32 %v4377, %v1444
    %v4439 = vmul.f32 %v4377, %v1445
    %v4440 = vmul.f32 %v4377, %v1446
    %v4441 = vmul.f32 %v4377, %v1447
    %v4442 = vstv %s4303
    %v4443 = vmul.f32 %v4442, %v2572
    %v4444 = vmul.f32 %v4442, %v2575
    %v4445 = vmul.f32 %v4442, %v2580
    %v4446 = vmul.f32 %v4442, %v2583
    %v4447 = vmul.f32 %v4442, %v2588
    %v4448 = vmul.f32 %v4442, %v2591
    %v4449 = vmul.f32 %v4442, %v2596
    %v4450 = vmul.f32 %v4442, %v2599
    %v4451 = vmul.f32 %v4442, %v2604
    %v4452 = vmul.f32 %v4442, %v2607
    %v4453 = vmul.f32 %v4442, %v2612
    %v4454 = vmul.f32 %v4442, %v2615
    %v4455 = vmul.f32 %v4442, %v2620
    %v4456 = vmul.f32 %v4442, %v2623
    %v4457 = vmul.f32 %v4442, %v2628
    %v4458 = vmul.f32 %v4442, %v2631
    %v4459 = vmul.f32 %v4442, %v2636
    %v4460 = vmul.f32 %v4442, %v2639
    %v4461 = vmul.f32 %v4442, %v2644
    %v4462 = vmul.f32 %v4442, %v2647
    %v4463 = vmul.f32 %v4442, %v2652
    %v4464 = vmul.f32 %v4442, %v2655
    %v4465 = vmul.f32 %v4442, %v2660
    %v4466 = vmul.f32 %v4442, %v2663
    %v4467 = vmul.f32 %v4442, %v2668
    %v4468 = vmul.f32 %v4442, %v2671
    %v4469 = vmul.f32 %v4442, %v2676
    %v4470 = vmul.f32 %v4442, %v2679
    %v4471 = vmul.f32 %v4442, %v2684
    %v4472 = vmul.f32 %v4442, %v2687
    %v4473 = vmul.f32 %v4442, %v2692
    %v4474 = vmul.f32 %v4442, %v2695
    %v4475 = vmul.f32 %v4442, %v2700
    %v4476 = vmul.f32 %v4442, %v2703
    %v4477 = vmul.f32 %v4442, %v2708
    %v4478 = vmul.f32 %v4442, %v2711
    %v4479 = vmul.f32 %v4442, %v2716
    %v4480 = vmul.f32 %v4442, %v2719
    %v4481 = vmul.f32 %v4442, %v2724
    %v4482 = vmul.f32 %v4442, %v2727
    %v4483 = vmul.f32 %v4442, %v2732
    %v4484 = vmul.f32 %v4442, %v2735
    %v4485 = vmul.f32 %v4442, %v2740
    %v4486 = vmul.f32 %v4442, %v2743
    %v4487 = vmul.f32 %v4442, %v2748
    %v4488 = vmul.f32 %v4442, %v2751
    %v4489 = vmul.f32 %v4442, %v2756
    %v4490 = vmul.f32 %v4442, %v2759
    %v4491 = vmul.f32 %v4442, %v2764
    %v4492 = vmul.f32 %v4442, %v2767
    %v4493 = vmul.f32 %v4442, %v2772
    %v4494 = vmul.f32 %v4442, %v2775
    %v4495 = vmul.f32 %v4442, %v2780
    %v4496 = vmul.f32 %v4442, %v2783
    %v4497 = vmul.f32 %v4442, %v2788
    %v4498 = vmul.f32 %v4442, %v2791
    %v4499 = vmul.f32 %v4442, %v2796
    %v4500 = vmul.f32 %v4442, %v2799
    %v4501 = vmul.f32 %v4442, %v2804
    %v4502 = vmul.f32 %v4442, %v2807
    %v4503 = vmul.f32 %v4442, %v2812
    %v4504 = vmul.f32 %v4442, %v2815
    %v4505 = vmul.f32 %v4442, %v2820
    %v4506 = vmul.f32 %v4442, %v2823
    %v4507 = vadd.f32 %v4378, %v4443
    %v4508 = vadd.f32 %v4379, %v4444
    %v4509 = vadd.f32 %v4380, %v4445
    %v4510 = vadd.f32 %v4381, %v4446
    %v4511 = vadd.f32 %v4382, %v4447
    %v4512 = vadd.f32 %v4383, %v4448
    %v4513 = vadd.f32 %v4384, %v4449
    %v4514 = vadd.f32 %v4385, %v4450
    %v4515 = vadd.f32 %v4386, %v4451
    %v4516 = vadd.f32 %v4387, %v4452
    %v4517 = vadd.f32 %v4388, %v4453
    %v4518 = vadd.f32 %v4389, %v4454
    %v4519 = vadd.f32 %v4390, %v4455
    %v4520 = vadd.f32 %v4391, %v4456
    %v4521 = vadd.f32 %v4392, %v4457
    %v4522 = vadd.f32 %v4393, %v4458
    %v4523 = vadd.f32 %v4394, %v4459
    %v4524 = vadd.f32 %v4395, %v4460
    %v4525 = vadd.f32 %v4396, %v4461
    %v4526 = vadd.f32 %v4397, %v4462
    %v4527 = vadd.f32 %v4398, %v4463
    %v4528 = vadd.f32 %v4399, %v4464
    %v4529 = vadd.f32 %v4400, %v4465
    %v4530 = vadd.f32 %v4401, %v4466
    %v4531 = vadd.f32 %v4402, %v4467
    %v4532 = vadd.f32 %v4403, %v4468
    %v4533 = vadd.f32 %v4404, %v4469
    %v4534 = vadd.f32 %v4405, %v4470
    %v4535 = vadd.f32 %v4406, %v4471
    %v4536 = vadd.f32 %v4407, %v4472
    %v4537 = vadd.f32 %v4408, %v4473
    %v4538 = vadd.f32 %v4409, %v4474
    %v4539 = vadd.f32 %v4410, %v4475
    %v4540 = vadd.f32 %v4411, %v4476
    %v4541 = vadd.f32 %v4412, %v4477
    %v4542 = vadd.f32 %v4413, %v4478
    %v4543 = vadd.f32 %v4414, %v4479
    %v4544 = vadd.f32 %v4415, %v4480
    %v4545 = vadd.f32 %v4416, %v4481
    %v4546 = vadd.f32 %v4417, %v4482
    %v4547 = vadd.f32 %v4418, %v4483
    %v4548 = vadd.f32 %v4419, %v4484
    %v4549 = vadd.f32 %v4420, %v4485
    %v4550 = vadd.f32 %v4421, %v4486
    %v4551 = vadd.f32 %v4422, %v4487
    %v4552 = vadd.f32 %v4423, %v4488
    %v4553 = vadd.f32 %v4424, %v4489
    %v4554 = vadd.f32 %v4425, %v4490
    %v4555 = vadd.f32 %v4426, %v4491
    %v4556 = vadd.f32 %v4427, %v4492
    %v4557 = vadd.f32 %v4428, %v4493
    %v4558 = vadd.f32 %v4429, %v4494
    %v4559 = vadd.f32 %v4430, %v4495
    %v4560 = vadd.f32 %v4431, %v4496
    %v4561 = vadd.f32 %v4432, %v4497
    %v4562 = vadd.f32 %v4433, %v4498
    %v4563 = vadd.f32 %v4434, %v4499
    %v4564 = vadd.f32 %v4435, %v4500
    %v4565 = vadd.f32 %v4436, %v4501
    %v4566 = vadd.f32 %v4437, %v4502
    %v4567 = vadd.f32 %v4438, %v4503
    %v4568 = vadd.f32 %v4439, %v4504
    %v4569 = vadd.f32 %v4440, %v4505
    %v4570 = vadd.f32 %v4441, %v4506
    %v4571 = vadd.f32 %v4507, %v4442
    %v4572 = vadd.f32 %v4508, %v4442
    %v4573 = vadd.f32 %v4509, %v4442
    %v4574 = vadd.f32 %v4510, %v4442
    %v4575 = vadd.f32 %v4511, %v4442
    %v4576 = vadd.f32 %v4512, %v4442
    %v4577 = vadd.f32 %v4513, %v4442
    %v4578 = vadd.f32 %v4514, %v4442
    %v4579 = vadd.f32 %v4515, %v4442
    %v4580 = vadd.f32 %v4516, %v4442
    %v4581 = vadd.f32 %v4517, %v4442
    %v4582 = vadd.f32 %v4518, %v4442
    %v4583 = vadd.f32 %v4519, %v4442
    %v4584 = vadd.f32 %v4520, %v4442
    %v4585 = vadd.f32 %v4521, %v4442
    %v4586 = vadd.f32 %v4522, %v4442
    %v4587 = vadd.f32 %v4523, %v4442
    %v4588 = vadd.f32 %v4524, %v4442
    %v4589 = vadd.f32 %v4525, %v4442
    %v4590 = vadd.f32 %v4526, %v4442
    %v4591 = vadd.f32 %v4527, %v4442
    %v4592 = vadd.f32 %v4528, %v4442
    %v4593 = vadd.f32 %v4529, %v4442
    %v4594 = vadd.f32 %v4530, %v4442
    %v4595 = vadd.f32 %v4531, %v4442
    %v4596 = vadd.f32 %v4532, %v4442
    %v4597 = vadd.f32 %v4533, %v4442
    %v4598 = vadd.f32 %v4534, %v4442
    %v4599 = vadd.f32 %v4535, %v4442
    %v4600 = vadd.f32 %v4536, %v4442
    %v4601 = vadd.f32 %v4537, %v4442
    %v4602 = vadd.f32 %v4538, %v4442
    %v4603 = vadd.f32 %v4539, %v4442
    %v4604 = vadd.f32 %v4540, %v4442
    %v4605 = vadd.f32 %v4541, %v4442
    %v4606 = vadd.f32 %v4542, %v4442
    %v4607 = vadd.f32 %v4543, %v4442
    %v4608 = vadd.f32 %v4544, %v4442
    %v4609 = vadd.f32 %v4545, %v4442
    %v4610 = vadd.f32 %v4546, %v4442
    %v4611 = vadd.f32 %v4547, %v4442
    %v4612 = vadd.f32 %v4548, %v4442
    %v4613 = vadd.f32 %v4549, %v4442
    %v4614 = vadd.f32 %v4550, %v4442
    %v4615 = vadd.f32 %v4551, %v4442
    %v4616 = vadd.f32 %v4552, %v4442
    %v4617 = vadd.f32 %v4553, %v4442
    %v4618 = vadd.f32 %v4554, %v4442
    %v4619 = vadd.f32 %v4555, %v4442
    %v4620 = vadd.f32 %v4556, %v4442
    %v4621 = vadd.f32 %v4557, %v4442
    %v4622 = vadd.f32 %v4558, %v4442
    %v4623 = vadd.f32 %v4559, %v4442
    %v4624 = vadd.f32 %v4560, %v4442
    %v4625 = vadd.f32 %v4561, %v4442
    %v4626 = vadd.f32 %v4562, %v4442
    %v4627 = vadd.f32 %v4563, %v4442
    %v4628 = vadd.f32 %v4564, %v4442
    %v4629 = vadd.f32 %v4565, %v4442
    %v4630 = vadd.f32 %v4566, %v4442
    %v4631 = vadd.f32 %v4567, %v4442
    %v4632 = vadd.f32 %v4568, %v4442
    %v4633 = vadd.f32 %v4569, %v4442
    %v4634 = vadd.f32 %v4570, %v4442
    %s4635 = sld [smem:[#allocation5]]
    %v4636 = vstv %s4635
    %v4637 = vmul.f32 %v4636, %v1384
    %v4638 = vmul.f32 %v4636, %v1385
    %v4639 = vmul.f32 %v4636, %v1386
    %v4640 = vmul.f32 %v4636, %v1387
    %v4641 = vmul.f32 %v4636, %v1388
    %v4642 = vmul.f32 %v4636, %v1389
    %v4643 = vmul.f32 %v4636, %v1390
    %v4644 = vmul.f32 %v4636, %v1391
    %v4645 = vmul.f32 %v4636, %v1392
    %v4646 = vmul.f32 %v4636, %v1393
    %v4647 = vmul.f32 %v4636, %v1394
    %v4648 = vmul.f32 %v4636, %v1395
    %v4649 = vmul.f32 %v4636, %v1396
    %v4650 = vmul.f32 %v4636, %v1397
    %v4651 = vmul.f32 %v4636, %v1398
    %v4652 = vmul.f32 %v4636, %v1399
    %v4653 = vmul.f32 %v4636, %v1400
    %v4654 = vmul.f32 %v4636, %v1401
    %v4655 = vmul.f32 %v4636, %v1402
    %v4656 = vmul.f32 %v4636, %v1403
    %v4657 = vmul.f32 %v4636, %v1404
    %v4658 = vmul.f32 %v4636, %v1405
    %v4659 = vmul.f32 %v4636, %v1406
    %v4660 = vmul.f32 %v4636, %v1407
    %v4661 = vmul.f32 %v4636, %v1408
    %v4662 = vmul.f32 %v4636, %v1409
    %v4663 = vmul.f32 %v4636, %v1410
    %v4664 = vmul.f32 %v4636, %v1411
    %v4665 = vmul.f32 %v4636, %v1412
    %v4666 = vmul.f32 %v4636, %v1413
    %v4667 = vmul.f32 %v4636, %v1414
    %v4668 = vmul.f32 %v4636, %v1415
    %v4669 = vmul.f32 %v4636, %v1416
    %v4670 = vmul.f32 %v4636, %v1417
    %v4671 = vmul.f32 %v4636, %v1418
    %v4672 = vmul.f32 %v4636, %v1419
    %v4673 = vmul.f32 %v4636, %v1420
    %v4674 = vmul.f32 %v4636, %v1421
    %v4675 = vmul.f32 %v4636, %v1422
    %v4676 = vmul.f32 %v4636, %v1423
    %v4677 = vmul.f32 %v4636, %v1424
    %v4678 = vmul.f32 %v4636, %v1425
    %v4679 = vmul.f32 %v4636, %v1426
    %v4680 = vmul.f32 %v4636, %v1427
    %v4681 = vmul.f32 %v4636, %v1428
    %v4682 = vmul.f32 %v4636, %v1429
    %v4683 = vmul.f32 %v4636, %v1430
    %v4684 = vmul.f32 %v4636, %v1431
    %v4685 = vmul.f32 %v4636, %v1432
    %v4686 = vmul.f32 %v4636, %v1433
    %v4687 = vmul.f32 %v4636, %v1434
    %v4688 = vmul.f32 %v4636, %v1435
    %v4689 = vmul.f32 %v4636, %v1436
    %v4690 = vmul.f32 %v4636, %v1437
    %v4691 = vmul.f32 %v4636, %v1438
    %v4692 = vmul.f32 %v4636, %v1439
    %v4693 = vmul.f32 %v4636, %v1440
    %v4694 = vmul.f32 %v4636, %v1441
    %v4695 = vmul.f32 %v4636, %v1442
    %v4696 = vmul.f32 %v4636, %v1443
    %v4697 = vmul.f32 %v4636, %v1444
    %v4698 = vmul.f32 %v4636, %v1445
    %v4699 = vmul.f32 %v4636, %v1446
    %v4700 = vmul.f32 %v4636, %v1447
    %v4701 = vstv %s4305
    %v4702 = vmul.f32 %v4701, %v2572
    %v4703 = vmul.f32 %v4701, %v2575
    %v4704 = vmul.f32 %v4701, %v2580
    %v4705 = vmul.f32 %v4701, %v2583
    %v4706 = vmul.f32 %v4701, %v2588
    %v4707 = vmul.f32 %v4701, %v2591
    %v4708 = vmul.f32 %v4701, %v2596
    %v4709 = vmul.f32 %v4701, %v2599
    %v4710 = vmul.f32 %v4701, %v2604
    %v4711 = vmul.f32 %v4701, %v2607
    %v4712 = vmul.f32 %v4701, %v2612
    %v4713 = vmul.f32 %v4701, %v2615
    %v4714 = vmul.f32 %v4701, %v2620
    %v4715 = vmul.f32 %v4701, %v2623
    %v4716 = vmul.f32 %v4701, %v2628
    %v4717 = vmul.f32 %v4701, %v2631
    %v4718 = vmul.f32 %v4701, %v2636
    %v4719 = vmul.f32 %v4701, %v2639
    %v4720 = vmul.f32 %v4701, %v2644
    %v4721 = vmul.f32 %v4701, %v2647
    %v4722 = vmul.f32 %v4701, %v2652
    %v4723 = vmul.f32 %v4701, %v2655
    %v4724 = vmul.f32 %v4701, %v2660
    %v4725 = vmul.f32 %v4701, %v2663
    %v4726 = vmul.f32 %v4701, %v2668
    %v4727 = vmul.f32 %v4701, %v2671
    %v4728 = vmul.f32 %v4701, %v2676
    %v4729 = vmul.f32 %v4701, %v2679
    %v4730 = vmul.f32 %v4701, %v2684
    %v4731 = vmul.f32 %v4701, %v2687
    %v4732 = vmul.f32 %v4701, %v2692
    %v4733 = vmul.f32 %v4701, %v2695
    %v4734 = vmul.f32 %v4701, %v2700
    %v4735 = vmul.f32 %v4701, %v2703
    %v4736 = vmul.f32 %v4701, %v2708
    %v4737 = vmul.f32 %v4701, %v2711
    %v4738 = vmul.f32 %v4701, %v2716
    %v4739 = vmul.f32 %v4701, %v2719
    %v4740 = vmul.f32 %v4701, %v2724
    %v4741 = vmul.f32 %v4701, %v2727
    %v4742 = vmul.f32 %v4701, %v2732
    %v4743 = vmul.f32 %v4701, %v2735
    %v4744 = vmul.f32 %v4701, %v2740
    %v4745 = vmul.f32 %v4701, %v2743
    %v4746 = vmul.f32 %v4701, %v2748
    %v4747 = vmul.f32 %v4701, %v2751
    %v4748 = vmul.f32 %v4701, %v2756
    %v4749 = vmul.f32 %v4701, %v2759
    %v4750 = vmul.f32 %v4701, %v2764
    %v4751 = vmul.f32 %v4701, %v2767
    %v4752 = vmul.f32 %v4701, %v2772
    %v4753 = vmul.f32 %v4701, %v2775
    %v4754 = vmul.f32 %v4701, %v2780
    %v4755 = vmul.f32 %v4701, %v2783
    %v4756 = vmul.f32 %v4701, %v2788
    %v4757 = vmul.f32 %v4701, %v2791
    %v4758 = vmul.f32 %v4701, %v2796
    %v4759 = vmul.f32 %v4701, %v2799
    %v4760 = vmul.f32 %v4701, %v2804
    %v4761 = vmul.f32 %v4701, %v2807
    %v4762 = vmul.f32 %v4701, %v2812
    %v4763 = vmul.f32 %v4701, %v2815
    %v4764 = vmul.f32 %v4701, %v2820
    %v4765 = vmul.f32 %v4701, %v2823
    %v4766 = vstv %s4307
    %v4767 = vmul.f32 %v4766, %v3500
    %v4768 = vmul.f32 %v4766, %v3501
    %v4769 = vmul.f32 %v4766, %v3502
    %v4770 = vmul.f32 %v4766, %v3503
    %v4771 = vmul.f32 %v4766, %v3504
    %v4772 = vmul.f32 %v4766, %v3505
    %v4773 = vmul.f32 %v4766, %v3506
    %v4774 = vmul.f32 %v4766, %v3507
    %v4775 = vmul.f32 %v4766, %v3508
    %v4776 = vmul.f32 %v4766, %v3509
    %v4777 = vmul.f32 %v4766, %v3510
    %v4778 = vmul.f32 %v4766, %v3511
    %v4779 = vmul.f32 %v4766, %v3512
    %v4780 = vmul.f32 %v4766, %v3513
    %v4781 = vmul.f32 %v4766, %v3514
    %v4782 = vmul.f32 %v4766, %v3515
    %v4783 = vmul.f32 %v4766, %v3516
    %v4784 = vmul.f32 %v4766, %v3517
    %v4785 = vmul.f32 %v4766, %v3518
    %v4786 = vmul.f32 %v4766, %v3519
    %v4787 = vmul.f32 %v4766, %v3520
    %v4788 = vmul.f32 %v4766, %v3521
    %v4789 = vmul.f32 %v4766, %v3522
    %v4790 = vmul.f32 %v4766, %v3523
    %v4791 = vmul.f32 %v4766, %v3524
    %v4792 = vmul.f32 %v4766, %v3525
    %v4793 = vmul.f32 %v4766, %v3526
    %v4794 = vmul.f32 %v4766, %v3527
    %v4795 = vmul.f32 %v4766, %v3528
    %v4796 = vmul.f32 %v4766, %v3529
    %v4797 = vmul.f32 %v4766, %v3530
    %v4798 = vmul.f32 %v4766, %v3531
    %v4799 = vmul.f32 %v4766, %v3532
    %v4800 = vmul.f32 %v4766, %v3533
    %v4801 = vmul.f32 %v4766, %v3534
    %v4802 = vmul.f32 %v4766, %v3535
    %v4803 = vmul.f32 %v4766, %v3536
    %v4804 = vmul.f32 %v4766, %v3537
    %v4805 = vmul.f32 %v4766, %v3538
    %v4806 = vmul.f32 %v4766, %v3539
    %v4807 = vmul.f32 %v4766, %v3540
    %v4808 = vmul.f32 %v4766, %v3541
    %v4809 = vmul.f32 %v4766, %v3542
    %v4810 = vmul.f32 %v4766, %v3543
    %v4811 = vmul.f32 %v4766, %v3544
    %v4812 = vmul.f32 %v4766, %v3545
    %v4813 = vmul.f32 %v4766, %v3546
    %v4814 = vmul.f32 %v4766, %v3547
    %v4815 = vmul.f32 %v4766, %v3548
    %v4816 = vmul.f32 %v4766, %v3549
    %v4817 = vmul.f32 %v4766, %v3550
    %v4818 = vmul.f32 %v4766, %v3551
    %v4819 = vmul.f32 %v4766, %v3552
    %v4820 = vmul.f32 %v4766, %v3553
    %v4821 = vmul.f32 %v4766, %v3554
    %v4822 = vmul.f32 %v4766, %v3555
    %v4823 = vmul.f32 %v4766, %v3556
    %v4824 = vmul.f32 %v4766, %v3557
    %v4825 = vmul.f32 %v4766, %v3558
    %v4826 = vmul.f32 %v4766, %v3559
    %v4827 = vmul.f32 %v4766, %v3560
    %v4828 = vmul.f32 %v4766, %v3561
    %v4829 = vmul.f32 %v4766, %v3562
    %v4830 = vmul.f32 %v4766, %v3563
    %v4831 = vadd.f32 %v4702, %v4767
    %v4832 = vadd.f32 %v4703, %v4768
    %v4833 = vadd.f32 %v4704, %v4769
    %v4834 = vadd.f32 %v4705, %v4770
    %v4835 = vadd.f32 %v4706, %v4771
    %v4836 = vadd.f32 %v4707, %v4772
    %v4837 = vadd.f32 %v4708, %v4773
    %v4838 = vadd.f32 %v4709, %v4774
    %v4839 = vadd.f32 %v4710, %v4775
    %v4840 = vadd.f32 %v4711, %v4776
    %v4841 = vadd.f32 %v4712, %v4777
    %v4842 = vadd.f32 %v4713, %v4778
    %v4843 = vadd.f32 %v4714, %v4779
    %v4844 = vadd.f32 %v4715, %v4780
    %v4845 = vadd.f32 %v4716, %v4781
    %v4846 = vadd.f32 %v4717, %v4782
    %v4847 = vadd.f32 %v4718, %v4783
    %v4848 = vadd.f32 %v4719, %v4784
    %v4849 = vadd.f32 %v4720, %v4785
    %v4850 = vadd.f32 %v4721, %v4786
    %v4851 = vadd.f32 %v4722, %v4787
    %v4852 = vadd.f32 %v4723, %v4788
    %v4853 = vadd.f32 %v4724, %v4789
    %v4854 = vadd.f32 %v4725, %v4790
    %v4855 = vadd.f32 %v4726, %v4791
    %v4856 = vadd.f32 %v4727, %v4792
    %v4857 = vadd.f32 %v4728, %v4793
    %v4858 = vadd.f32 %v4729, %v4794
    %v4859 = vadd.f32 %v4730, %v4795
    %v4860 = vadd.f32 %v4731, %v4796
    %v4861 = vadd.f32 %v4732, %v4797
    %v4862 = vadd.f32 %v4733, %v4798
    %v4863 = vadd.f32 %v4734, %v4799
    %v4864 = vadd.f32 %v4735, %v4800
    %v4865 = vadd.f32 %v4736, %v4801
    %v4866 = vadd.f32 %v4737, %v4802
    %v4867 = vadd.f32 %v4738, %v4803
    %v4868 = vadd.f32 %v4739, %v4804
    %v4869 = vadd.f32 %v4740, %v4805
    %v4870 = vadd.f32 %v4741, %v4806
    %v4871 = vadd.f32 %v4742, %v4807
    %v4872 = vadd.f32 %v4743, %v4808
    %v4873 = vadd.f32 %v4744, %v4809
    %v4874 = vadd.f32 %v4745, %v4810
    %v4875 = vadd.f32 %v4746, %v4811
    %v4876 = vadd.f32 %v4747, %v4812
    %v4877 = vadd.f32 %v4748, %v4813
    %v4878 = vadd.f32 %v4749, %v4814
    %v4879 = vadd.f32 %v4750, %v4815
    %v4880 = vadd.f32 %v4751, %v4816
    %v4881 = vadd.f32 %v4752, %v4817
    %v4882 = vadd.f32 %v4753, %v4818
    %v4883 = vadd.f32 %v4754, %v4819
    %v4884 = vadd.f32 %v4755, %v4820
    %v4885 = vadd.f32 %v4756, %v4821
    %v4886 = vadd.f32 %v4757, %v4822
    %v4887 = vadd.f32 %v4758, %v4823
    %v4888 = vadd.f32 %v4759, %v4824
    %v4889 = vadd.f32 %v4760, %v4825
    %v4890 = vadd.f32 %v4761, %v4826
    %v4891 = vadd.f32 %v4762, %v4827
    %v4892 = vadd.f32 %v4763, %v4828
    %v4893 = vadd.f32 %v4764, %v4829
    %v4894 = vadd.f32 %v4765, %v4830
    %v4895 = vstv %s4309
    %v4896 = vmul.f32 %v4895, %v4238
    %v4897 = vmul.f32 %v4895, %v4239
    %v4898 = vmul.f32 %v4895, %v4240
    %v4899 = vmul.f32 %v4895, %v4241
    %v4900 = vmul.f32 %v4895, %v4242
    %v4901 = vmul.f32 %v4895, %v4243
    %v4902 = vmul.f32 %v4895, %v4244
    %v4903 = vmul.f32 %v4895, %v4245
    %v4904 = vmul.f32 %v4895, %v4246
    %v4905 = vmul.f32 %v4895, %v4247
    %v4906 = vmul.f32 %v4895, %v4248
    %v4907 = vmul.f32 %v4895, %v4249
    %v4908 = vmul.f32 %v4895, %v4250
    %v4909 = vmul.f32 %v4895, %v4251
    %v4910 = vmul.f32 %v4895, %v4252
    %v4911 = vmul.f32 %v4895, %v4253
    %v4912 = vmul.f32 %v4895, %v4254
    %v4913 = vmul.f32 %v4895, %v4255
    %v4914 = vmul.f32 %v4895, %v4256
    %v4915 = vmul.f32 %v4895, %v4257
    %v4916 = vmul.f32 %v4895, %v4258
    %v4917 = vmul.f32 %v4895, %v4259
    %v4918 = vmul.f32 %v4895, %v4260
    %v4919 = vmul.f32 %v4895, %v4261
    %v4920 = vmul.f32 %v4895, %v4262
    %v4921 = vmul.f32 %v4895, %v4263
    %v4922 = vmul.f32 %v4895, %v4264
    %v4923 = vmul.f32 %v4895, %v4265
    %v4924 = vmul.f32 %v4895, %v4266
    %v4925 = vmul.f32 %v4895, %v4267
    %v4926 = vmul.f32 %v4895, %v4268
    %v4927 = vmul.f32 %v4895, %v4269
    %v4928 = vmul.f32 %v4895, %v4270
    %v4929 = vmul.f32 %v4895, %v4271
    %v4930 = vmul.f32 %v4895, %v4272
    %v4931 = vmul.f32 %v4895, %v4273
    %v4932 = vmul.f32 %v4895, %v4274
    %v4933 = vmul.f32 %v4895, %v4275
    %v4934 = vmul.f32 %v4895, %v4276
    %v4935 = vmul.f32 %v4895, %v4277
    %v4936 = vmul.f32 %v4895, %v4278
    %v4937 = vmul.f32 %v4895, %v4279
    %v4938 = vmul.f32 %v4895, %v4280
    %v4939 = vmul.f32 %v4895, %v4281
    %v4940 = vmul.f32 %v4895, %v4282
    %v4941 = vmul.f32 %v4895, %v4283
    %v4942 = vmul.f32 %v4895, %v4284
    %v4943 = vmul.f32 %v4895, %v4285
    %v4944 = vmul.f32 %v4895, %v4286
    %v4945 = vmul.f32 %v4895, %v4287
    %v4946 = vmul.f32 %v4895, %v4288
    %v4947 = vmul.f32 %v4895, %v4289
    %v4948 = vmul.f32 %v4895, %v4290
    %v4949 = vmul.f32 %v4895, %v4291
    %v4950 = vmul.f32 %v4895, %v4292
    %v4951 = vmul.f32 %v4895, %v4293
    %v4952 = vmul.f32 %v4895, %v4294
    %v4953 = vmul.f32 %v4895, %v4295
    %v4954 = vmul.f32 %v4895, %v4296
    %v4955 = vmul.f32 %v4895, %v4297
    %v4956 = vmul.f32 %v4895, %v4298
    %v4957 = vmul.f32 %v4895, %v4299
    %v4958 = vmul.f32 %v4895, %v4300
    %v4959 = vmul.f32 %v4895, %v4301
    %v4960 = vadd.f32 %v4831, %v4896
    %v4961 = vadd.f32 %v4832, %v4897
    %v4962 = vadd.f32 %v4833, %v4898
    %v4963 = vadd.f32 %v4834, %v4899
    %v4964 = vadd.f32 %v4835, %v4900
    %v4965 = vadd.f32 %v4836, %v4901
    %v4966 = vadd.f32 %v4837, %v4902
    %v4967 = vadd.f32 %v4838, %v4903
    %v4968 = vadd.f32 %v4839, %v4904
    %v4969 = vadd.f32 %v4840, %v4905
    %v4970 = vadd.f32 %v4841, %v4906
    %v4971 = vadd.f32 %v4842, %v4907
    %v4972 = vadd.f32 %v4843, %v4908
    %v4973 = vadd.f32 %v4844, %v4909
    %v4974 = vadd.f32 %v4845, %v4910
    %v4975 = vadd.f32 %v4846, %v4911
    %v4976 = vadd.f32 %v4847, %v4912
    %v4977 = vadd.f32 %v4848, %v4913
    %v4978 = vadd.f32 %v4849, %v4914
    %v4979 = vadd.f32 %v4850, %v4915
    %v4980 = vadd.f32 %v4851, %v4916
    %v4981 = vadd.f32 %v4852, %v4917
    %v4982 = vadd.f32 %v4853, %v4918
    %v4983 = vadd.f32 %v4854, %v4919
    %v4984 = vadd.f32 %v4855, %v4920
    %v4985 = vadd.f32 %v4856, %v4921
    %v4986 = vadd.f32 %v4857, %v4922
    %v4987 = vadd.f32 %v4858, %v4923
    %v4988 = vadd.f32 %v4859, %v4924
    %v4989 = vadd.f32 %v4860, %v4925
    %v4990 = vadd.f32 %v4861, %v4926
    %v4991 = vadd.f32 %v4862, %v4927
    %v4992 = vadd.f32 %v4863, %v4928
    %v4993 = vadd.f32 %v4864, %v4929
    %v4994 = vadd.f32 %v4865, %v4930
    %v4995 = vadd.f32 %v4866, %v4931
    %v4996 = vadd.f32 %v4867, %v4932
    %v4997 = vadd.f32 %v4868, %v4933
    %v4998 = vadd.f32 %v4869, %v4934
    %v4999 = vadd.f32 %v4870, %v4935
    %v5000 = vadd.f32 %v4871, %v4936
    %v5001 = vadd.f32 %v4872, %v4937
    %v5002 = vadd.f32 %v4873, %v4938
    %v5003 = vadd.f32 %v4874, %v4939
    %v5004 = vadd.f32 %v4875, %v4940
    %v5005 = vadd.f32 %v4876, %v4941
    %v5006 = vadd.f32 %v4877, %v4942
    %v5007 = vadd.f32 %v4878, %v4943
    %v5008 = vadd.f32 %v4879, %v4944
    %v5009 = vadd.f32 %v4880, %v4945
    %v5010 = vadd.f32 %v4881, %v4946
    %v5011 = vadd.f32 %v4882, %v4947
    %v5012 = vadd.f32 %v4883, %v4948
    %v5013 = vadd.f32 %v4884, %v4949
    %v5014 = vadd.f32 %v4885, %v4950
    %v5015 = vadd.f32 %v4886, %v4951
    %v5016 = vadd.f32 %v4887, %v4952
    %v5017 = vadd.f32 %v4888, %v4953
    %v5018 = vadd.f32 %v4889, %v4954
    %v5019 = vadd.f32 %v4890, %v4955
    %v5020 = vadd.f32 %v4891, %v4956
    %v5021 = vadd.f32 %v4892, %v4957
    %v5022 = vadd.f32 %v4893, %v4958
    %v5023 = vadd.f32 %v4894, %v4959
    %v5024 = vadd.f32 %v4637, %v4960
    %v5025 = vadd.f32 %v4638, %v4961
    %v5026 = vadd.f32 %v4639, %v4962
    %v5027 = vadd.f32 %v4640, %v4963
    %v5028 = vadd.f32 %v4641, %v4964
    %v5029 = vadd.f32 %v4642, %v4965
    %v5030 = vadd.f32 %v4643, %v4966
    %v5031 = vadd.f32 %v4644, %v4967
    %v5032 = vadd.f32 %v4645, %v4968
    %v5033 = vadd.f32 %v4646, %v4969
    %v5034 = vadd.f32 %v4647, %v4970
    %v5035 = vadd.f32 %v4648, %v4971
    %v5036 = vadd.f32 %v4649, %v4972
    %v5037 = vadd.f32 %v4650, %v4973
    %v5038 = vadd.f32 %v4651, %v4974
    %v5039 = vadd.f32 %v4652, %v4975
    %v5040 = vadd.f32 %v4653, %v4976
    %v5041 = vadd.f32 %v4654, %v4977
    %v5042 = vadd.f32 %v4655, %v4978
    %v5043 = vadd.f32 %v4656, %v4979
    %v5044 = vadd.f32 %v4657, %v4980
    %v5045 = vadd.f32 %v4658, %v4981
    %v5046 = vadd.f32 %v4659, %v4982
    %v5047 = vadd.f32 %v4660, %v4983
    %v5048 = vadd.f32 %v4661, %v4984
    %v5049 = vadd.f32 %v4662, %v4985
    %v5050 = vadd.f32 %v4663, %v4986
    %v5051 = vadd.f32 %v4664, %v4987
    %v5052 = vadd.f32 %v4665, %v4988
    %v5053 = vadd.f32 %v4666, %v4989
    %v5054 = vadd.f32 %v4667, %v4990
    %v5055 = vadd.f32 %v4668, %v4991
    %v5056 = vadd.f32 %v4669, %v4992
    %v5057 = vadd.f32 %v4670, %v4993
    %v5058 = vadd.f32 %v4671, %v4994
    %v5059 = vadd.f32 %v4672, %v4995
    %v5060 = vadd.f32 %v4673, %v4996
    %v5061 = vadd.f32 %v4674, %v4997
    %v5062 = vadd.f32 %v4675, %v4998
    %v5063 = vadd.f32 %v4676, %v4999
    %v5064 = vadd.f32 %v4677, %v5000
    %v5065 = vadd.f32 %v4678, %v5001
    %v5066 = vadd.f32 %v4679, %v5002
    %v5067 = vadd.f32 %v4680, %v5003
    %v5068 = vadd.f32 %v4681, %v5004
    %v5069 = vadd.f32 %v4682, %v5005
    %v5070 = vadd.f32 %v4683, %v5006
    %v5071 = vadd.f32 %v4684, %v5007
    %v5072 = vadd.f32 %v4685, %v5008
    %v5073 = vadd.f32 %v4686, %v5009
    %v5074 = vadd.f32 %v4687, %v5010
    %v5075 = vadd.f32 %v4688, %v5011
    %v5076 = vadd.f32 %v4689, %v5012
    %v5077 = vadd.f32 %v4690, %v5013
    %v5078 = vadd.f32 %v4691, %v5014
    %v5079 = vadd.f32 %v4692, %v5015
    %v5080 = vadd.f32 %v4693, %v5016
    %v5081 = vadd.f32 %v4694, %v5017
    %v5082 = vadd.f32 %v4695, %v5018
    %v5083 = vadd.f32 %v4696, %v5019
    %v5084 = vadd.f32 %v4697, %v5020
    %v5085 = vadd.f32 %v4698, %v5021
    %v5086 = vadd.f32 %v4699, %v5022
    %v5087 = vadd.f32 %v4700, %v5023
    %s5088 = sadd.f32 %s4305, %s4307
    %s5089 = sadd.f32 %s5088, %s4309
    %v5090 = vstv %s5089
    %v5091 = vadd.f32 %v5024, %v5090
    %v5092 = vadd.f32 %v5025, %v5090
    %v5093 = vadd.f32 %v5026, %v5090
    %v5094 = vadd.f32 %v5027, %v5090
    %v5095 = vadd.f32 %v5028, %v5090
    %v5096 = vadd.f32 %v5029, %v5090
    %v5097 = vadd.f32 %v5030, %v5090
    %v5098 = vadd.f32 %v5031, %v5090
    %v5099 = vadd.f32 %v5032, %v5090
    %v5100 = vadd.f32 %v5033, %v5090
    %v5101 = vadd.f32 %v5034, %v5090
    %v5102 = vadd.f32 %v5035, %v5090
    %v5103 = vadd.f32 %v5036, %v5090
    %v5104 = vadd.f32 %v5037, %v5090
    %v5105 = vadd.f32 %v5038, %v5090
    %v5106 = vadd.f32 %v5039, %v5090
    %v5107 = vadd.f32 %v5040, %v5090
    %v5108 = vadd.f32 %v5041, %v5090
    %v5109 = vadd.f32 %v5042, %v5090
    %v5110 = vadd.f32 %v5043, %v5090
    %v5111 = vadd.f32 %v5044, %v5090
    %v5112 = vadd.f32 %v5045, %v5090
    %v5113 = vadd.f32 %v5046, %v5090
    %v5114 = vadd.f32 %v5047, %v5090
    %v5115 = vadd.f32 %v5048, %v5090
    %v5116 = vadd.f32 %v5049, %v5090
    %v5117 = vadd.f32 %v5050, %v5090
    %v5118 = vadd.f32 %v5051, %v5090
    %v5119 = vadd.f32 %v5052, %v5090
    %v5120 = vadd.f32 %v5053, %v5090
    %v5121 = vadd.f32 %v5054, %v5090
    %v5122 = vadd.f32 %v5055, %v5090
    %v5123 = vadd.f32 %v5056, %v5090
    %v5124 = vadd.f32 %v5057, %v5090
    %v5125 = vadd.f32 %v5058, %v5090
    %v5126 = vadd.f32 %v5059, %v5090
    %v5127 = vadd.f32 %v5060, %v5090
    %v5128 = vadd.f32 %v5061, %v5090
    %v5129 = vadd.f32 %v5062, %v5090
    %v5130 = vadd.f32 %v5063, %v5090
    %v5131 = vadd.f32 %v5064, %v5090
    %v5132 = vadd.f32 %v5065, %v5090
    %v5133 = vadd.f32 %v5066, %v5090
    %v5134 = vadd.f32 %v5067, %v5090
    %v5135 = vadd.f32 %v5068, %v5090
    %v5136 = vadd.f32 %v5069, %v5090
    %v5137 = vadd.f32 %v5070, %v5090
    %v5138 = vadd.f32 %v5071, %v5090
    %v5139 = vadd.f32 %v5072, %v5090
    %v5140 = vadd.f32 %v5073, %v5090
    %v5141 = vadd.f32 %v5074, %v5090
    %v5142 = vadd.f32 %v5075, %v5090
    %v5143 = vadd.f32 %v5076, %v5090
    %v5144 = vadd.f32 %v5077, %v5090
    %v5145 = vadd.f32 %v5078, %v5090
    %v5146 = vadd.f32 %v5079, %v5090
    %v5147 = vadd.f32 %v5080, %v5090
    %v5148 = vadd.f32 %v5081, %v5090
    %v5149 = vadd.f32 %v5082, %v5090
    %v5150 = vadd.f32 %v5083, %v5090
    %v5151 = vadd.f32 %v5084, %v5090
    %v5152 = vadd.f32 %v5085, %v5090
    %v5153 = vadd.f32 %v5086, %v5090
    %v5154 = vadd.f32 %v5087, %v5090
    %v5155 = vld [vmem:[%s9] sm:$0xff]
    %v5156 = vld [vmem:[%s9 + $0x8] sm:$0xff]
    %v5157 = vld [vmem:[%s9 + $0x10] sm:$0xff]
    %v5158 = vld [vmem:[%s9 + $0x18] sm:$0xff]
    %v5160 = vsel %vm806, %v4312, 0
    %v5163 = vsel %vm806, %v4313, 0
    %v5166 = vsel %vm806, %v4314, 0
    %v5169 = vsel %vm806, %v4315, 0
    %v5172 = vsel %vm806, %v4316, 0
    %v5175 = vsel %vm806, %v4317, 0
    %v5178 = vsel %vm806, %v4318, 0
    %v5181 = vsel %vm806, %v4319, 0
    %v5184 = vsel %vm806, %v4320, 0
    %v5187 = vsel %vm806, %v4321, 0
    %v5190 = vsel %vm806, %v4322, 0
    %v5193 = vsel %vm806, %v4323, 0
    %v5196 = vsel %vm806, %v4324, 0
    %v5199 = vsel %vm806, %v4325, 0
    %v5202 = vsel %vm806, %v4326, 0
    %v5205 = vsel %vm806, %v4327, 0
    %v5208 = vsel %vm806, %v4328, 0
    %v5211 = vsel %vm806, %v4329, 0
    %v5214 = vsel %vm806, %v4330, 0
    %v5217 = vsel %vm806, %v4331, 0
    %v5220 = vsel %vm806, %v4332, 0
    %v5223 = vsel %vm806, %v4333, 0
    %v5226 = vsel %vm806, %v4334, 0
    %v5229 = vsel %vm806, %v4335, 0
    %v5232 = vsel %vm806, %v4336, 0
    %v5235 = vsel %vm806, %v4337, 0
    %v5238 = vsel %vm806, %v4338, 0
    %v5241 = vsel %vm806, %v4339, 0
    %v5244 = vsel %vm806, %v4340, 0
    %v5247 = vsel %vm806, %v4341, 0
    %v5250 = vsel %vm806, %v4342, 0
    %v5253 = vsel %vm806, %v4343, 0
    %v5256 = vsel %vm806, %v4344, 0
    %v5259 = vsel %vm806, %v4345, 0
    %v5262 = vsel %vm806, %v4346, 0
    %v5265 = vsel %vm806, %v4347, 0
    %v5268 = vsel %vm806, %v4348, 0
    %v5271 = vsel %vm806, %v4349, 0
    %v5274 = vsel %vm806, %v4350, 0
    %v5277 = vsel %vm806, %v4351, 0
    %v5280 = vsel %vm806, %v4352, 0
    %v5283 = vsel %vm806, %v4353, 0
    %v5286 = vsel %vm806, %v4354, 0
    %v5289 = vsel %vm806, %v4355, 0
    %v5292 = vsel %vm806, %v4356, 0
    %v5295 = vsel %vm806, %v4357, 0
    %v5298 = vsel %vm806, %v4358, 0
    %v5301 = vsel %vm806, %v4359, 0
    %v5304 = vsel %vm806, %v4360, 0
    %v5307 = vsel %vm806, %v4361, 0
    %v5310 = vsel %vm806, %v4362, 0
    %v5313 = vsel %vm806, %v4363, 0
    %v5316 = vsel %vm806, %v4364, 0
    %v5319 = vsel %vm806, %v4365, 0
    %v5322 = vsel %vm806, %v4366, 0
    %v5325 = vsel %vm806, %v4367, 0
    %v5328 = vsel %vm806, %v4368, 0
    %v5331 = vsel %vm806, %v4369, 0
    %v5334 = vsel %vm806, %v4370, 0
    %v5337 = vsel %vm806, %v4371, 0
    %v5340 = vsel %vm806, %v4372, 0
    %v5343 = vsel %vm806, %v4373, 0
    %v5346 = vsel %vm806, %v4374, 0
    %v5349 = vsel %vm806, %v4375, 0
    %5351 = vmatprep.subr.mxu0 0.0
    %5352 = vmatpush1.msra.mxu0 0.0
    %5353 = vmatprep.subr.mxu0 0.0
    %5354 = vmatpush1.msra.mxu0 0.0
    %5355 = vmatprep.subr.mxu0 0.0
    %5356 = vmatpush1.msra.mxu0 0.0
    %5357 = vmatprep.subr.mxu0 0.0
    %5358 = vmatpush1.msra.mxu0 0.0
    %5359 = vmatprep.subr.mxu0 0.0
    %5360 = vmatpush1.msra.mxu0 0.0
    %5361 = vmatprep.subr.mxu0 0.0
    %5362 = vmatpush1.msra.mxu0 0.0
    %5363 = vmatprep.subr.mxu0 0.0
    %5364 = vmatpush1.msra.mxu0 0.0
    %5365 = vmatprep.subr.mxu0 0.0
    %5366 = vmatpush1.msra.mxu0 0.0
    %5367 = vmatprep.subr.mxu0 0.0
    %5368 = vmatpush1.msra.mxu0 0.0
    %5369 = vmatprep.subr.mxu0 0.0
    %5370 = vmatpush1.msra.mxu0 0.0
    %5371 = vmatprep.subr.mxu0 0.0
    %5372 = vmatpush1.msra.mxu0 0.0
    %5373 = vmatprep.subr.mxu0 0.0
    %5374 = vmatpush1.msra.mxu0 0.0
    %5375 = vmatprep.subr.mxu0 0.0
    %5376 = vmatpush1.msra.mxu0 %v5158
    %5377 = vmatprep.subr.mxu0 0.0
    %5378 = vmatpush1.msra.mxu0 %v5157
    %5379 = vmatprep.subr.mxu0 0.0
    %5380 = vmatpush1.msra.mxu0 %v5156
    %5381 = vmatprep.subr.mxu0 0.0
    %5382 = vmatpush1.msra.mxu0 %v5155
    %5383 = vmatprep.subr.mxu0 0.0
    %5384 = vmatpush2.msra.mxu0 0.0
    %5385 = vmatprep.subr.mxu0 0.0
    %5386 = vmatpush2.msra.mxu0 0.0
    %5387 = vmatprep.subr.mxu0 0.0
    %5388 = vmatpush2.msra.mxu0 0.0
    %5389 = vmatprep.subr.mxu0 0.0
    %5390 = vmatpush2.msra.mxu0 0.0
    %5391 = vmatprep.subr.mxu0 0.0
    %5392 = vmatpush2.msra.mxu0 0.0
    %5393 = vmatprep.subr.mxu0 0.0
    %5394 = vmatpush2.msra.mxu0 0.0
    %5395 = vmatprep.subr.mxu0 0.0
    %5396 = vmatpush2.msra.mxu0 0.0
    %5397 = vmatprep.subr.mxu0 0.0
    %5398 = vmatpush2.msra.mxu0 0.0
    %5399 = vmatprep.subr.mxu0 0.0
    %5400 = vmatpush2.msra.mxu0 0.0
    %5401 = vmatprep.subr.mxu0 0.0
    %5402 = vmatpush2.msra.mxu0 0.0
    %5403 = vmatprep.subr.mxu0 0.0
    %5404 = vmatpush2.msra.mxu0 0.0
    %5405 = vmatprep.subr.mxu0 0.0
    %5406 = vmatpush2.msra.mxu0 0.0
    %5407 = vmatprep.subr.mxu0 0.0
    %5408 = vmatpush2.msra.mxu0 0.0
    %5409 = vmatprep.subr.mxu0 0.0
    %5410 = vmatpush2.msra.mxu0 0.0
    %5411 = vmatprep.subr.mxu0 0.0
    %5412 = vmatpush2.msra.mxu0 0.0
    %5413 = vmatprep.subr.mxu0 0.0
    %5414 = vmatpush2.msra.mxu0 0.0
    %5415 = vmatprep.mubr.f32.mxu0 0.0
    %5416 = vmatmul.mubr.f32.gmra.mxu0 %v5160
    %v5417 = vpop.f32.mrf.mxu0
    %v5418 = vadd.f32 0.0, %v5417
    %v5419 = vpop.f32.mrf.mxu0
    %5420 = vmatprep.mubr.f32.mxu0 0.0
    %5421 = vmatmul.mubr.f32.gmra.mxu0 %v5163
    %v5422 = vpop.f32.mrf.mxu0
    %v5423 = vadd.f32 0.0, %v5422
    %v5424 = vpop.f32.mrf.mxu0
    %5425 = vmatprep.mubr.f32.mxu0 0.0
    %5426 = vmatmul.mubr.f32.gmra.mxu0 %v5166
    %v5427 = vpop.f32.mrf.mxu0
    %v5428 = vadd.f32 0.0, %v5427
    %v5429 = vpop.f32.mrf.mxu0
    %5430 = vmatprep.mubr.f32.mxu0 0.0
    %5431 = vmatmul.mubr.f32.gmra.mxu0 %v5169
    %v5432 = vpop.f32.mrf.mxu0
    %v5433 = vadd.f32 0.0, %v5432
    %v5434 = vpop.f32.mrf.mxu0
    %5435 = vmatprep.mubr.f32.mxu0 0.0
    %5436 = vmatmul.mubr.f32.gmra.mxu0 %v5172
    %v5437 = vpop.f32.mrf.mxu0
    %v5438 = vadd.f32 0.0, %v5437
    %v5439 = vpop.f32.mrf.mxu0
    %5440 = vmatprep.mubr.f32.mxu0 0.0
    %5441 = vmatmul.mubr.f32.gmra.mxu0 %v5175
    %v5442 = vpop.f32.mrf.mxu0
    %v5443 = vadd.f32 0.0, %v5442
    %v5444 = vpop.f32.mrf.mxu0
    %5445 = vmatprep.mubr.f32.mxu0 0.0
    %5446 = vmatmul.mubr.f32.gmra.mxu0 %v5178
    %v5447 = vpop.f32.mrf.mxu0
    %v5448 = vadd.f32 0.0, %v5447
    %v5449 = vpop.f32.mrf.mxu0
    %5450 = vmatprep.mubr.f32.mxu0 0.0
    %5451 = vmatmul.mubr.f32.gmra.mxu0 %v5181
    %v5452 = vpop.f32.mrf.mxu0
    %v5453 = vadd.f32 0.0, %v5452
    %v5454 = vpop.f32.mrf.mxu0
    %5455 = vmatprep.mubr.f32.mxu0 0.0
    %5456 = vmatmul.mubr.f32.gmra.mxu0 %v5184
    %v5457 = vpop.f32.mrf.mxu0
    %v5458 = vadd.f32 0.0, %v5457
    %v5459 = vpop.f32.mrf.mxu0
    %5460 = vmatprep.mubr.f32.mxu0 0.0
    %5461 = vmatmul.mubr.f32.gmra.mxu0 %v5187
    %v5462 = vpop.f32.mrf.mxu0
    %v5463 = vadd.f32 0.0, %v5462
    %v5464 = vpop.f32.mrf.mxu0
    %5465 = vmatprep.mubr.f32.mxu0 0.0
    %5466 = vmatmul.mubr.f32.gmra.mxu0 %v5190
    %v5467 = vpop.f32.mrf.mxu0
    %v5468 = vadd.f32 0.0, %v5467
    %v5469 = vpop.f32.mrf.mxu0
    %5470 = vmatprep.mubr.f32.mxu0 0.0
    %5471 = vmatmul.mubr.f32.gmra.mxu0 %v5193
    %v5472 = vpop.f32.mrf.mxu0
    %v5473 = vadd.f32 0.0, %v5472
    %v5474 = vpop.f32.mrf.mxu0
    %5475 = vmatprep.mubr.f32.mxu0 0.0
    %5476 = vmatmul.mubr.f32.gmra.mxu0 %v5196
    %v5477 = vpop.f32.mrf.mxu0
    %v5478 = vadd.f32 0.0, %v5477
    %v5479 = vpop.f32.mrf.mxu0
    %5480 = vmatprep.mubr.f32.mxu0 0.0
    %5481 = vmatmul.mubr.f32.gmra.mxu0 %v5199
    %v5482 = vpop.f32.mrf.mxu0
    %v5483 = vadd.f32 0.0, %v5482
    %v5484 = vpop.f32.mrf.mxu0
    %5485 = vmatprep.mubr.f32.mxu0 0.0
    %5486 = vmatmul.mubr.f32.gmra.mxu0 %v5202
    %v5487 = vpop.f32.mrf.mxu0
    %v5488 = vadd.f32 0.0, %v5487
    %v5489 = vpop.f32.mrf.mxu0
    %5490 = vmatprep.mubr.f32.mxu0 0.0
    %5491 = vmatmul.mubr.f32.gmra.mxu0 %v5205
    %v5492 = vpop.f32.mrf.mxu0
    %v5493 = vadd.f32 0.0, %v5492
    %v5494 = vpop.f32.mrf.mxu0
    %5495 = vmatprep.mubr.f32.mxu0 0.0
    %5496 = vmatmul.mubr.f32.gmra.mxu0 %v5208
    %v5497 = vpop.f32.mrf.mxu0
    %v5498 = vadd.f32 0.0, %v5497
    %v5499 = vpop.f32.mrf.mxu0
    %5500 = vmatprep.mubr.f32.mxu0 0.0
    %5501 = vmatmul.mubr.f32.gmra.mxu0 %v5211
    %v5502 = vpop.f32.mrf.mxu0
    %v5503 = vadd.f32 0.0, %v5502
    %v5504 = vpop.f32.mrf.mxu0
    %5505 = vmatprep.mubr.f32.mxu0 0.0
    %5506 = vmatmul.mubr.f32.gmra.mxu0 %v5214
    %v5507 = vpop.f32.mrf.mxu0
    %v5508 = vadd.f32 0.0, %v5507
    %v5509 = vpop.f32.mrf.mxu0
    %5510 = vmatprep.mubr.f32.mxu0 0.0
    %5511 = vmatmul.mubr.f32.gmra.mxu0 %v5217
    %v5512 = vpop.f32.mrf.mxu0
    %v5513 = vadd.f32 0.0, %v5512
    %v5514 = vpop.f32.mrf.mxu0
    %5515 = vmatprep.mubr.f32.mxu0 0.0
    %5516 = vmatmul.mubr.f32.gmra.mxu0 %v5220
    %v5517 = vpop.f32.mrf.mxu0
    %v5518 = vadd.f32 0.0, %v5517
    %v5519 = vpop.f32.mrf.mxu0
    %5520 = vmatprep.mubr.f32.mxu0 0.0
    %5521 = vmatmul.mubr.f32.gmra.mxu0 %v5223
    %v5522 = vpop.f32.mrf.mxu0
    %v5523 = vadd.f32 0.0, %v5522
    %v5524 = vpop.f32.mrf.mxu0
    %5525 = vmatprep.mubr.f32.mxu0 0.0
    %5526 = vmatmul.mubr.f32.gmra.mxu0 %v5226
    %v5527 = vpop.f32.mrf.mxu0
    %v5528 = vadd.f32 0.0, %v5527
    %v5529 = vpop.f32.mrf.mxu0
    %5530 = vmatprep.mubr.f32.mxu0 0.0
    %5531 = vmatmul.mubr.f32.gmra.mxu0 %v5229
    %v5532 = vpop.f32.mrf.mxu0
    %v5533 = vadd.f32 0.0, %v5532
    %v5534 = vpop.f32.mrf.mxu0
    %5535 = vmatprep.mubr.f32.mxu0 0.0
    %5536 = vmatmul.mubr.f32.gmra.mxu0 %v5232
    %v5537 = vpop.f32.mrf.mxu0
    %v5538 = vadd.f32 0.0, %v5537
    %v5539 = vpop.f32.mrf.mxu0
    %5540 = vmatprep.mubr.f32.mxu0 0.0
    %5541 = vmatmul.mubr.f32.gmra.mxu0 %v5235
    %v5542 = vpop.f32.mrf.mxu0
    %v5543 = vadd.f32 0.0, %v5542
    %v5544 = vpop.f32.mrf.mxu0
    %5545 = vmatprep.mubr.f32.mxu0 0.0
    %5546 = vmatmul.mubr.f32.gmra.mxu0 %v5238
    %v5547 = vpop.f32.mrf.mxu0
    %v5548 = vadd.f32 0.0, %v5547
    %v5549 = vpop.f32.mrf.mxu0
    %5550 = vmatprep.mubr.f32.mxu0 0.0
    %5551 = vmatmul.mubr.f32.gmra.mxu0 %v5241
    %v5552 = vpop.f32.mrf.mxu0
    %v5553 = vadd.f32 0.0, %v5552
    %v5554 = vpop.f32.mrf.mxu0
    %5555 = vmatprep.mubr.f32.mxu0 0.0
    %5556 = vmatmul.mubr.f32.gmra.mxu0 %v5244
    %v5557 = vpop.f32.mrf.mxu0
    %v5558 = vadd.f32 0.0, %v5557
    %v5559 = vpop.f32.mrf.mxu0
    %5560 = vmatprep.mubr.f32.mxu0 0.0
    %5561 = vmatmul.mubr.f32.gmra.mxu0 %v5247
    %v5562 = vpop.f32.mrf.mxu0
    %v5563 = vadd.f32 0.0, %v5562
    %v5564 = vpop.f32.mrf.mxu0
    %5565 = vmatprep.mubr.f32.mxu0 0.0
    %5566 = vmatmul.mubr.f32.gmra.mxu0 %v5250
    %v5567 = vpop.f32.mrf.mxu0
    %v5568 = vadd.f32 0.0, %v5567
    %v5569 = vpop.f32.mrf.mxu0
    %5570 = vmatprep.mubr.f32.mxu0 0.0
    %5571 = vmatmul.mubr.f32.gmra.mxu0 %v5253
    %v5572 = vpop.f32.mrf.mxu0
    %v5573 = vadd.f32 0.0, %v5572
    %v5574 = vpop.f32.mrf.mxu0
    %5575 = vmatprep.mubr.f32.mxu0 0.0
    %5576 = vmatmul.mubr.f32.gmra.mxu0 %v5256
    %v5577 = vpop.f32.mrf.mxu0
    %v5578 = vadd.f32 0.0, %v5577
    %v5579 = vpop.f32.mrf.mxu0
    %5580 = vmatprep.mubr.f32.mxu0 0.0
    %5581 = vmatmul.mubr.f32.gmra.mxu0 %v5259
    %v5582 = vpop.f32.mrf.mxu0
    %v5583 = vadd.f32 0.0, %v5582
    %v5584 = vpop.f32.mrf.mxu0
    %5585 = vmatprep.mubr.f32.mxu0 0.0
    %5586 = vmatmul.mubr.f32.gmra.mxu0 %v5262
    %v5587 = vpop.f32.mrf.mxu0
    %v5588 = vadd.f32 0.0, %v5587
    %v5589 = vpop.f32.mrf.mxu0
    %5590 = vmatprep.mubr.f32.mxu0 0.0
    %5591 = vmatmul.mubr.f32.gmra.mxu0 %v5265
    %v5592 = vpop.f32.mrf.mxu0
    %v5593 = vadd.f32 0.0, %v5592
    %v5594 = vpop.f32.mrf.mxu0
    %5595 = vmatprep.mubr.f32.mxu0 0.0
    %5596 = vmatmul.mubr.f32.gmra.mxu0 %v5268
    %v5597 = vpop.f32.mrf.mxu0
    %v5598 = vadd.f32 0.0, %v5597
    %v5599 = vpop.f32.mrf.mxu0
    %5600 = vmatprep.mubr.f32.mxu0 0.0
    %5601 = vmatmul.mubr.f32.gmra.mxu0 %v5271
    %v5602 = vpop.f32.mrf.mxu0
    %v5603 = vadd.f32 0.0, %v5602
    %v5604 = vpop.f32.mrf.mxu0
    %5605 = vmatprep.mubr.f32.mxu0 0.0
    %5606 = vmatmul.mubr.f32.gmra.mxu0 %v5274
    %v5607 = vpop.f32.mrf.mxu0
    %v5608 = vadd.f32 0.0, %v5607
    %v5609 = vpop.f32.mrf.mxu0
    %5610 = vmatprep.mubr.f32.mxu0 0.0
    %5611 = vmatmul.mubr.f32.gmra.mxu0 %v5277
    %v5612 = vpop.f32.mrf.mxu0
    %v5613 = vadd.f32 0.0, %v5612
    %v5614 = vpop.f32.mrf.mxu0
    %5615 = vmatprep.mubr.f32.mxu0 0.0
    %5616 = vmatmul.mubr.f32.gmra.mxu0 %v5280
    %v5617 = vpop.f32.mrf.mxu0
    %v5618 = vadd.f32 0.0, %v5617
    %v5619 = vpop.f32.mrf.mxu0
    %5620 = vmatprep.mubr.f32.mxu0 0.0
    %5621 = vmatmul.mubr.f32.gmra.mxu0 %v5283
    %v5622 = vpop.f32.mrf.mxu0
    %v5623 = vadd.f32 0.0, %v5622
    %v5624 = vpop.f32.mrf.mxu0
    %5625 = vmatprep.mubr.f32.mxu0 0.0
    %5626 = vmatmul.mubr.f32.gmra.mxu0 %v5286
    %v5627 = vpop.f32.mrf.mxu0
    %v5628 = vadd.f32 0.0, %v5627
    %v5629 = vpop.f32.mrf.mxu0
    %5630 = vmatprep.mubr.f32.mxu0 0.0
    %5631 = vmatmul.mubr.f32.gmra.mxu0 %v5289
    %v5632 = vpop.f32.mrf.mxu0
    %v5633 = vadd.f32 0.0, %v5632
    %v5634 = vpop.f32.mrf.mxu0
    %5635 = vmatprep.mubr.f32.mxu0 0.0
    %5636 = vmatmul.mubr.f32.gmra.mxu0 %v5292
    %v5637 = vpop.f32.mrf.mxu0
    %v5638 = vadd.f32 0.0, %v5637
    %v5639 = vpop.f32.mrf.mxu0
    %5640 = vmatprep.mubr.f32.mxu0 0.0
    %5641 = vmatmul.mubr.f32.gmra.mxu0 %v5295
    %v5642 = vpop.f32.mrf.mxu0
    %v5643 = vadd.f32 0.0, %v5642
    %v5644 = vpop.f32.mrf.mxu0
    %5645 = vmatprep.mubr.f32.mxu0 0.0
    %5646 = vmatmul.mubr.f32.gmra.mxu0 %v5298
    %v5647 = vpop.f32.mrf.mxu0
    %v5648 = vadd.f32 0.0, %v5647
    %v5649 = vpop.f32.mrf.mxu0
    %5650 = vmatprep.mubr.f32.mxu0 0.0
    %5651 = vmatmul.mubr.f32.gmra.mxu0 %v5301
    %v5652 = vpop.f32.mrf.mxu0
    %v5653 = vadd.f32 0.0, %v5652
    %v5654 = vpop.f32.mrf.mxu0
    %5655 = vmatprep.mubr.f32.mxu0 0.0
    %5656 = vmatmul.mubr.f32.gmra.mxu0 %v5304
    %v5657 = vpop.f32.mrf.mxu0
    %v5658 = vadd.f32 0.0, %v5657
    %v5659 = vpop.f32.mrf.mxu0
    %5660 = vmatprep.mubr.f32.mxu0 0.0
    %5661 = vmatmul.mubr.f32.gmra.mxu0 %v5307
    %v5662 = vpop.f32.mrf.mxu0
    %v5663 = vadd.f32 0.0, %v5662
    %v5664 = vpop.f32.mrf.mxu0
    %5665 = vmatprep.mubr.f32.mxu0 0.0
    %5666 = vmatmul.mubr.f32.gmra.mxu0 %v5310
    %v5667 = vpop.f32.mrf.mxu0
    %v5668 = vadd.f32 0.0, %v5667
    %v5669 = vpop.f32.mrf.mxu0
    %5670 = vmatprep.mubr.f32.mxu0 0.0
    %5671 = vmatmul.mubr.f32.gmra.mxu0 %v5313
    %v5672 = vpop.f32.mrf.mxu0
    %v5673 = vadd.f32 0.0, %v5672
    %v5674 = vpop.f32.mrf.mxu0
    %5675 = vmatprep.mubr.f32.mxu0 0.0
    %5676 = vmatmul.mubr.f32.gmra.mxu0 %v5316
    %v5677 = vpop.f32.mrf.mxu0
    %v5678 = vadd.f32 0.0, %v5677
    %v5679 = vpop.f32.mrf.mxu0
    %5680 = vmatprep.mubr.f32.mxu0 0.0
    %5681 = vmatmul.mubr.f32.gmra.mxu0 %v5319
    %v5682 = vpop.f32.mrf.mxu0
    %v5683 = vadd.f32 0.0, %v5682
    %v5684 = vpop.f32.mrf.mxu0
    %5685 = vmatprep.mubr.f32.mxu0 0.0
    %5686 = vmatmul.mubr.f32.gmra.mxu0 %v5322
    %v5687 = vpop.f32.mrf.mxu0
    %v5688 = vadd.f32 0.0, %v5687
    %v5689 = vpop.f32.mrf.mxu0
    %5690 = vmatprep.mubr.f32.mxu0 0.0
    %5691 = vmatmul.mubr.f32.gmra.mxu0 %v5325
    %v5692 = vpop.f32.mrf.mxu0
    %v5693 = vadd.f32 0.0, %v5692
    %v5694 = vpop.f32.mrf.mxu0
    %5695 = vmatprep.mubr.f32.mxu0 0.0
    %5696 = vmatmul.mubr.f32.gmra.mxu0 %v5328
    %v5697 = vpop.f32.mrf.mxu0
    %v5698 = vadd.f32 0.0, %v5697
    %v5699 = vpop.f32.mrf.mxu0
    %5700 = vmatprep.mubr.f32.mxu0 0.0
    %5701 = vmatmul.mubr.f32.gmra.mxu0 %v5331
    %v5702 = vpop.f32.mrf.mxu0
    %v5703 = vadd.f32 0.0, %v5702
    %v5704 = vpop.f32.mrf.mxu0
    %5705 = vmatprep.mubr.f32.mxu0 0.0
    %5706 = vmatmul.mubr.f32.gmra.mxu0 %v5334
    %v5707 = vpop.f32.mrf.mxu0
    %v5708 = vadd.f32 0.0, %v5707
    %v5709 = vpop.f32.mrf.mxu0
    %5710 = vmatprep.mubr.f32.mxu0 0.0
    %5711 = vmatmul.mubr.f32.gmra.mxu0 %v5337
    %v5712 = vpop.f32.mrf.mxu0
    %v5713 = vadd.f32 0.0, %v5712
    %v5714 = vpop.f32.mrf.mxu0
    %5715 = vmatprep.mubr.f32.mxu0 0.0
    %5716 = vmatmul.mubr.f32.gmra.mxu0 %v5340
    %v5717 = vpop.f32.mrf.mxu0
    %v5718 = vadd.f32 0.0, %v5717
    %v5719 = vpop.f32.mrf.mxu0
    %5720 = vmatprep.mubr.f32.mxu0 0.0
    %5721 = vmatmul.mubr.f32.gmra.mxu0 %v5343
    %v5722 = vpop.f32.mrf.mxu0
    %v5723 = vadd.f32 0.0, %v5722
    %v5724 = vpop.f32.mrf.mxu0
    %5725 = vmatprep.mubr.f32.mxu0 0.0
    %5726 = vmatmul.mubr.f32.gmra.mxu0 %v5346
    %v5727 = vpop.f32.mrf.mxu0
    %v5728 = vadd.f32 0.0, %v5727
    %v5729 = vpop.f32.mrf.mxu0
    %5730 = vmatprep.mubr.f32.mxu0 0.0
    %5731 = vmatmul.mubr.f32.gmra.mxu0 %v5349
    %v5732 = vpop.f32.mrf.mxu0
    %v5733 = vadd.f32 0.0, %v5732
    %v5734 = vpop.f32.mrf.mxu0
    %5735 = vdwg.mxu0
    %vm5736 = vcmp.gt.f32.partialorder %v5418, 0.0
    %vm5737 = vcmp.gt.f32.partialorder %v5423, 0.0
    %vm5738 = vcmp.gt.f32.partialorder %v5428, 0.0
    %vm5739 = vcmp.gt.f32.partialorder %v5433, 0.0
    %vm5740 = vcmp.gt.f32.partialorder %v5438, 0.0
    %vm5741 = vcmp.gt.f32.partialorder %v5443, 0.0
    %vm5742 = vcmp.gt.f32.partialorder %v5448, 0.0
    %vm5743 = vcmp.gt.f32.partialorder %v5453, 0.0
    %vm5744 = vcmp.gt.f32.partialorder %v5458, 0.0
    %vm5745 = vcmp.gt.f32.partialorder %v5463, 0.0
    %vm5746 = vcmp.gt.f32.partialorder %v5468, 0.0
    %vm5747 = vcmp.gt.f32.partialorder %v5473, 0.0
    %vm5748 = vcmp.gt.f32.partialorder %v5478, 0.0
    %vm5749 = vcmp.gt.f32.partialorder %v5483, 0.0
    %vm5750 = vcmp.gt.f32.partialorder %v5488, 0.0
    %vm5751 = vcmp.gt.f32.partialorder %v5493, 0.0
    %vm5752 = vcmp.gt.f32.partialorder %v5498, 0.0
    %vm5753 = vcmp.gt.f32.partialorder %v5503, 0.0
    %vm5754 = vcmp.gt.f32.partialorder %v5508, 0.0
    %vm5755 = vcmp.gt.f32.partialorder %v5513, 0.0
    %vm5756 = vcmp.gt.f32.partialorder %v5518, 0.0
    %vm5757 = vcmp.gt.f32.partialorder %v5523, 0.0
    %vm5758 = vcmp.gt.f32.partialorder %v5528, 0.0
    %vm5759 = vcmp.gt.f32.partialorder %v5533, 0.0
    %vm5760 = vcmp.gt.f32.partialorder %v5538, 0.0
    %vm5761 = vcmp.gt.f32.partialorder %v5543, 0.0
    %vm5762 = vcmp.gt.f32.partialorder %v5548, 0.0
    %vm5763 = vcmp.gt.f32.partialorder %v5553, 0.0
    %vm5764 = vcmp.gt.f32.partialorder %v5558, 0.0
    %vm5765 = vcmp.gt.f32.partialorder %v5563, 0.0
    %vm5766 = vcmp.gt.f32.partialorder %v5568, 0.0
    %vm5767 = vcmp.gt.f32.partialorder %v5573, 0.0
    %vm5768 = vcmp.gt.f32.partialorder %v5578, 0.0
    %vm5769 = vcmp.gt.f32.partialorder %v5583, 0.0
    %vm5770 = vcmp.gt.f32.partialorder %v5588, 0.0
    %vm5771 = vcmp.gt.f32.partialorder %v5593, 0.0
    %vm5772 = vcmp.gt.f32.partialorder %v5598, 0.0
    %vm5773 = vcmp.gt.f32.partialorder %v5603, 0.0
    %vm5774 = vcmp.gt.f32.partialorder %v5608, 0.0
    %vm5775 = vcmp.gt.f32.partialorder %v5613, 0.0
    %vm5776 = vcmp.gt.f32.partialorder %v5618, 0.0
    %vm5777 = vcmp.gt.f32.partialorder %v5623, 0.0
    %vm5778 = vcmp.gt.f32.partialorder %v5628, 0.0
    %vm5779 = vcmp.gt.f32.partialorder %v5633, 0.0
    %vm5780 = vcmp.gt.f32.partialorder %v5638, 0.0
    %vm5781 = vcmp.gt.f32.partialorder %v5643, 0.0
    %vm5782 = vcmp.gt.f32.partialorder %v5648, 0.0
    %vm5783 = vcmp.gt.f32.partialorder %v5653, 0.0
    %vm5784 = vcmp.gt.f32.partialorder %v5658, 0.0
    %vm5785 = vcmp.gt.f32.partialorder %v5663, 0.0
    %vm5786 = vcmp.gt.f32.partialorder %v5668, 0.0
    %vm5787 = vcmp.gt.f32.partialorder %v5673, 0.0
    %vm5788 = vcmp.gt.f32.partialorder %v5678, 0.0
    %vm5789 = vcmp.gt.f32.partialorder %v5683, 0.0
    %vm5790 = vcmp.gt.f32.partialorder %v5688, 0.0
    %vm5791 = vcmp.gt.f32.partialorder %v5693, 0.0
    %vm5792 = vcmp.gt.f32.partialorder %v5698, 0.0
    %vm5793 = vcmp.gt.f32.partialorder %v5703, 0.0
    %vm5794 = vcmp.gt.f32.partialorder %v5708, 0.0
    %vm5795 = vcmp.gt.f32.partialorder %v5713, 0.0
    %vm5796 = vcmp.gt.f32.partialorder %v5718, 0.0
    %vm5797 = vcmp.gt.f32.partialorder %v5723, 0.0
    %vm5798 = vcmp.gt.f32.partialorder %v5728, 0.0
    %vm5799 = vcmp.gt.f32.partialorder %v5733, 0.0
    %v5800 = vmul.f32 %v5418, 0.01
    %v5801 = vmul.f32 %v5423, 0.01
    %v5802 = vmul.f32 %v5428, 0.01
    %v5803 = vmul.f32 %v5433, 0.01
    %v5804 = vmul.f32 %v5438, 0.01
    %v5805 = vmul.f32 %v5443, 0.01
    %v5806 = vmul.f32 %v5448, 0.01
    %v5807 = vmul.f32 %v5453, 0.01
    %v5808 = vmul.f32 %v5458, 0.01
    %v5809 = vmul.f32 %v5463, 0.01
    %v5810 = vmul.f32 %v5468, 0.01
    %v5811 = vmul.f32 %v5473, 0.01
    %v5812 = vmul.f32 %v5478, 0.01
    %v5813 = vmul.f32 %v5483, 0.01
    %v5814 = vmul.f32 %v5488, 0.01
    %v5815 = vmul.f32 %v5493, 0.01
    %v5816 = vmul.f32 %v5498, 0.01
    %v5817 = vmul.f32 %v5503, 0.01
    %v5818 = vmul.f32 %v5508, 0.01
    %v5819 = vmul.f32 %v5513, 0.01
    %v5820 = vmul.f32 %v5518, 0.01
    %v5821 = vmul.f32 %v5523, 0.01
    %v5822 = vmul.f32 %v5528, 0.01
    %v5823 = vmul.f32 %v5533, 0.01
    %v5824 = vmul.f32 %v5538, 0.01
    %v5825 = vmul.f32 %v5543, 0.01
    %v5826 = vmul.f32 %v5548, 0.01
    %v5827 = vmul.f32 %v5553, 0.01
    %v5828 = vmul.f32 %v5558, 0.01
    %v5829 = vmul.f32 %v5563, 0.01
    %v5830 = vmul.f32 %v5568, 0.01
    %v5831 = vmul.f32 %v5573, 0.01
    %v5832 = vmul.f32 %v5578, 0.01
    %v5833 = vmul.f32 %v5583, 0.01
    %v5834 = vmul.f32 %v5588, 0.01
    %v5835 = vmul.f32 %v5593, 0.01
    %v5836 = vmul.f32 %v5598, 0.01
    %v5837 = vmul.f32 %v5603, 0.01
    %v5838 = vmul.f32 %v5608, 0.01
    %v5839 = vmul.f32 %v5613, 0.01
    %v5840 = vmul.f32 %v5618, 0.01
    %v5841 = vmul.f32 %v5623, 0.01
    %v5842 = vmul.f32 %v5628, 0.01
    %v5843 = vmul.f32 %v5633, 0.01
    %v5844 = vmul.f32 %v5638, 0.01
    %v5845 = vmul.f32 %v5643, 0.01
    %v5846 = vmul.f32 %v5648, 0.01
    %v5847 = vmul.f32 %v5653, 0.01
    %v5848 = vmul.f32 %v5658, 0.01
    %v5849 = vmul.f32 %v5663, 0.01
    %v5850 = vmul.f32 %v5668, 0.01
    %v5851 = vmul.f32 %v5673, 0.01
    %v5852 = vmul.f32 %v5678, 0.01
    %v5853 = vmul.f32 %v5683, 0.01
    %v5854 = vmul.f32 %v5688, 0.01
    %v5855 = vmul.f32 %v5693, 0.01
    %v5856 = vmul.f32 %v5698, 0.01
    %v5857 = vmul.f32 %v5703, 0.01
    %v5858 = vmul.f32 %v5708, 0.01
    %v5859 = vmul.f32 %v5713, 0.01
    %v5860 = vmul.f32 %v5718, 0.01
    %v5861 = vmul.f32 %v5723, 0.01
    %v5862 = vmul.f32 %v5728, 0.01
    %v5863 = vmul.f32 %v5733, 0.01
    %v5864 = vsel %vm5736, %v5418, %v5800
    %v5865 = vsel %vm5737, %v5423, %v5801
    %v5866 = vsel %vm5738, %v5428, %v5802
    %v5867 = vsel %vm5739, %v5433, %v5803
    %v5868 = vsel %vm5740, %v5438, %v5804
    %v5869 = vsel %vm5741, %v5443, %v5805
    %v5870 = vsel %vm5742, %v5448, %v5806
    %v5871 = vsel %vm5743, %v5453, %v5807
    %v5872 = vsel %vm5744, %v5458, %v5808
    %v5873 = vsel %vm5745, %v5463, %v5809
    %v5874 = vsel %vm5746, %v5468, %v5810
    %v5875 = vsel %vm5747, %v5473, %v5811
    %v5876 = vsel %vm5748, %v5478, %v5812
    %v5877 = vsel %vm5749, %v5483, %v5813
    %v5878 = vsel %vm5750, %v5488, %v5814
    %v5879 = vsel %vm5751, %v5493, %v5815
    %v5880 = vsel %vm5752, %v5498, %v5816
    %v5881 = vsel %vm5753, %v5503, %v5817
    %v5882 = vsel %vm5754, %v5508, %v5818
    %v5883 = vsel %vm5755, %v5513, %v5819
    %v5884 = vsel %vm5756, %v5518, %v5820
    %v5885 = vsel %vm5757, %v5523, %v5821
    %v5886 = vsel %vm5758, %v5528, %v5822
    %v5887 = vsel %vm5759, %v5533, %v5823
    %v5888 = vsel %vm5760, %v5538, %v5824
    %v5889 = vsel %vm5761, %v5543, %v5825
    %v5890 = vsel %vm5762, %v5548, %v5826
    %v5891 = vsel %vm5763, %v5553, %v5827
    %v5892 = vsel %vm5764, %v5558, %v5828
    %v5893 = vsel %vm5765, %v5563, %v5829
    %v5894 = vsel %vm5766, %v5568, %v5830
    %v5895 = vsel %vm5767, %v5573, %v5831
    %v5896 = vsel %vm5768, %v5578, %v5832
    %v5897 = vsel %vm5769, %v5583, %v5833
    %v5898 = vsel %vm5770, %v5588, %v5834
    %v5899 = vsel %vm5771, %v5593, %v5835
    %v5900 = vsel %vm5772, %v5598, %v5836
    %v5901 = vsel %vm5773, %v5603, %v5837
    %v5902 = vsel %vm5774, %v5608, %v5838
    %v5903 = vsel %vm5775, %v5613, %v5839
    %v5904 = vsel %vm5776, %v5618, %v5840
    %v5905 = vsel %vm5777, %v5623, %v5841
    %v5906 = vsel %vm5778, %v5628, %v5842
    %v5907 = vsel %vm5779, %v5633, %v5843
    %v5908 = vsel %vm5780, %v5638, %v5844
    %v5909 = vsel %vm5781, %v5643, %v5845
    %v5910 = vsel %vm5782, %v5648, %v5846
    %v5911 = vsel %vm5783, %v5653, %v5847
    %v5912 = vsel %vm5784, %v5658, %v5848
    %v5913 = vsel %vm5785, %v5663, %v5849
    %v5914 = vsel %vm5786, %v5668, %v5850
    %v5915 = vsel %vm5787, %v5673, %v5851
    %v5916 = vsel %vm5788, %v5678, %v5852
    %v5917 = vsel %vm5789, %v5683, %v5853
    %v5918 = vsel %vm5790, %v5688, %v5854
    %v5919 = vsel %vm5791, %v5693, %v5855
    %v5920 = vsel %vm5792, %v5698, %v5856
    %v5921 = vsel %vm5793, %v5703, %v5857
    %v5922 = vsel %vm5794, %v5708, %v5858
    %v5923 = vsel %vm5795, %v5713, %v5859
    %v5924 = vsel %vm5796, %v5718, %v5860
    %v5925 = vsel %vm5797, %v5723, %v5861
    %v5926 = vsel %vm5798, %v5728, %v5862
    %v5927 = vsel %vm5799, %v5733, %v5863
    %v5928 = vld [vmem:[%s10] sm:$0xff]
    %v5929 = vld [vmem:[%s10 + $0x8] sm:$0xff]
    %v5930 = vld [vmem:[%s10 + $0x10] sm:$0xff]
    %v5931 = vld [vmem:[%s10 + $0x18] sm:$0xff]
    %v5933 = vsel %vm806, %v4571, 0
    %v5936 = vsel %vm806, %v4572, 0
    %v5939 = vsel %vm806, %v4573, 0
    %v5942 = vsel %vm806, %v4574, 0
    %v5945 = vsel %vm806, %v4575, 0
    %v5948 = vsel %vm806, %v4576, 0
    %v5951 = vsel %vm806, %v4577, 0
    %v5954 = vsel %vm806, %v4578, 0
    %v5957 = vsel %vm806, %v4579, 0
    %v5960 = vsel %vm806, %v4580, 0
    %v5963 = vsel %vm806, %v4581, 0
    %v5966 = vsel %vm806, %v4582, 0
    %v5969 = vsel %vm806, %v4583, 0
    %v5972 = vsel %vm806, %v4584, 0
    %v5975 = vsel %vm806, %v4585, 0
    %v5978 = vsel %vm806, %v4586, 0
    %v5981 = vsel %vm806, %v4587, 0
    %v5984 = vsel %vm806, %v4588, 0
    %v5987 = vsel %vm806, %v4589, 0
    %v5990 = vsel %vm806, %v4590, 0
    %v5993 = vsel %vm806, %v4591, 0
    %v5996 = vsel %vm806, %v4592, 0
    %v5999 = vsel %vm806, %v4593, 0
    %v6002 = vsel %vm806, %v4594, 0
    %v6005 = vsel %vm806, %v4595, 0
    %v6008 = vsel %vm806, %v4596, 0
    %v6011 = vsel %vm806, %v4597, 0
    %v6014 = vsel %vm806, %v4598, 0
    %v6017 = vsel %vm806, %v4599, 0
    %v6020 = vsel %vm806, %v4600, 0
    %v6023 = vsel %vm806, %v4601, 0
    %v6026 = vsel %vm806, %v4602, 0
    %v6029 = vsel %vm806, %v4603, 0
    %v6032 = vsel %vm806, %v4604, 0
    %v6035 = vsel %vm806, %v4605, 0
    %v6038 = vsel %vm806, %v4606, 0
    %v6041 = vsel %vm806, %v4607, 0
    %v6044 = vsel %vm806, %v4608, 0
    %v6047 = vsel %vm806, %v4609, 0
    %v6050 = vsel %vm806, %v4610, 0
    %v6053 = vsel %vm806, %v4611, 0
    %v6056 = vsel %vm806, %v4612, 0
    %v6059 = vsel %vm806, %v4613, 0
    %v6062 = vsel %vm806, %v4614, 0
    %v6065 = vsel %vm806, %v4615, 0
    %v6068 = vsel %vm806, %v4616, 0
    %v6071 = vsel %vm806, %v4617, 0
    %v6074 = vsel %vm806, %v4618, 0
    %v6077 = vsel %vm806, %v4619, 0
    %v6080 = vsel %vm806, %v4620, 0
    %v6083 = vsel %vm806, %v4621, 0
    %v6086 = vsel %vm806, %v4622, 0
    %v6089 = vsel %vm806, %v4623, 0
    %v6092 = vsel %vm806, %v4624, 0
    %v6095 = vsel %vm806, %v4625, 0
    %v6098 = vsel %vm806, %v4626, 0
    %v6101 = vsel %vm806, %v4627, 0
    %v6104 = vsel %vm806, %v4628, 0
    %v6107 = vsel %vm806, %v4629, 0
    %v6110 = vsel %vm806, %v4630, 0
    %v6113 = vsel %vm806, %v4631, 0
    %v6116 = vsel %vm806, %v4632, 0
    %v6119 = vsel %vm806, %v4633, 0
    %v6122 = vsel %vm806, %v4634, 0
    %6124 = vmatprep.subr.mxu0 0.0
    %6125 = vmatpush1.msra.mxu0 0.0
    %6126 = vmatprep.subr.mxu0 0.0
    %6127 = vmatpush1.msra.mxu0 0.0
    %6128 = vmatprep.subr.mxu0 0.0
    %6129 = vmatpush1.msra.mxu0 0.0
    %6130 = vmatprep.subr.mxu0 0.0
    %6131 = vmatpush1.msra.mxu0 0.0
    %6132 = vmatprep.subr.mxu0 0.0
    %6133 = vmatpush1.msra.mxu0 0.0
    %6134 = vmatprep.subr.mxu0 0.0
    %6135 = vmatpush1.msra.mxu0 0.0
    %6136 = vmatprep.subr.mxu0 0.0
    %6137 = vmatpush1.msra.mxu0 0.0
    %6138 = vmatprep.subr.mxu0 0.0
    %6139 = vmatpush1.msra.mxu0 0.0
    %6140 = vmatprep.subr.mxu0 0.0
    %6141 = vmatpush1.msra.mxu0 0.0
    %6142 = vmatprep.subr.mxu0 0.0
    %6143 = vmatpush1.msra.mxu0 0.0
    %6144 = vmatprep.subr.mxu0 0.0
    %6145 = vmatpush1.msra.mxu0 0.0
    %6146 = vmatprep.subr.mxu0 0.0
    %6147 = vmatpush1.msra.mxu0 0.0
    %6148 = vmatprep.subr.mxu0 0.0
    %6149 = vmatpush1.msra.mxu0 %v5931
    %6150 = vmatprep.subr.mxu0 0.0
    %6151 = vmatpush1.msra.mxu0 %v5930
    %6152 = vmatprep.subr.mxu0 0.0
    %6153 = vmatpush1.msra.mxu0 %v5929
    %6154 = vmatprep.subr.mxu0 0.0
    %6155 = vmatpush1.msra.mxu0 %v5928
    %6156 = vmatprep.subr.mxu0 0.0
    %6157 = vmatpush2.msra.mxu0 0.0
    %6158 = vmatprep.subr.mxu0 0.0
    %6159 = vmatpush2.msra.mxu0 0.0
    %6160 = vmatprep.subr.mxu0 0.0
    %6161 = vmatpush2.msra.mxu0 0.0
    %6162 = vmatprep.subr.mxu0 0.0
    %6163 = vmatpush2.msra.mxu0 0.0
    %6164 = vmatprep.subr.mxu0 0.0
    %6165 = vmatpush2.msra.mxu0 0.0
    %6166 = vmatprep.subr.mxu0 0.0
    %6167 = vmatpush2.msra.mxu0 0.0
    %6168 = vmatprep.subr.mxu0 0.0
    %6169 = vmatpush2.msra.mxu0 0.0
    %6170 = vmatprep.subr.mxu0 0.0
    %6171 = vmatpush2.msra.mxu0 0.0
    %6172 = vmatprep.subr.mxu0 0.0
    %6173 = vmatpush2.msra.mxu0 0.0
    %6174 = vmatprep.subr.mxu0 0.0
    %6175 = vmatpush2.msra.mxu0 0.0
    %6176 = vmatprep.subr.mxu0 0.0
    %6177 = vmatpush2.msra.mxu0 0.0
    %6178 = vmatprep.subr.mxu0 0.0
    %6179 = vmatpush2.msra.mxu0 0.0
    %6180 = vmatprep.subr.mxu0 0.0
    %6181 = vmatpush2.msra.mxu0 0.0
    %6182 = vmatprep.subr.mxu0 0.0
    %6183 = vmatpush2.msra.mxu0 0.0
    %6184 = vmatprep.subr.mxu0 0.0
    %6185 = vmatpush2.msra.mxu0 0.0
    %6186 = vmatprep.subr.mxu0 0.0
    %6187 = vmatpush2.msra.mxu0 0.0
    %6188 = vmatprep.mubr.f32.mxu0 0.0
    %6189 = vmatmul.mubr.f32.gmra.mxu0 %v5933
    %v6190 = vpop.f32.mrf.mxu0
    %v6191 = vadd.f32 0.0, %v6190
    %v6192 = vpop.f32.mrf.mxu0
    %6193 = vmatprep.mubr.f32.mxu0 0.0
    %6194 = vmatmul.mubr.f32.gmra.mxu0 %v5936
    %v6195 = vpop.f32.mrf.mxu0
    %v6196 = vadd.f32 0.0, %v6195
    %v6197 = vpop.f32.mrf.mxu0
    %6198 = vmatprep.mubr.f32.mxu0 0.0
    %6199 = vmatmul.mubr.f32.gmra.mxu0 %v5939
    %v6200 = vpop.f32.mrf.mxu0
    %v6201 = vadd.f32 0.0, %v6200
    %v6202 = vpop.f32.mrf.mxu0
    %6203 = vmatprep.mubr.f32.mxu0 0.0
    %6204 = vmatmul.mubr.f32.gmra.mxu0 %v5942
    %v6205 = vpop.f32.mrf.mxu0
    %v6206 = vadd.f32 0.0, %v6205
    %v6207 = vpop.f32.mrf.mxu0
    %6208 = vmatprep.mubr.f32.mxu0 0.0
    %6209 = vmatmul.mubr.f32.gmra.mxu0 %v5945
    %v6210 = vpop.f32.mrf.mxu0
    %v6211 = vadd.f32 0.0, %v6210
    %v6212 = vpop.f32.mrf.mxu0
    %6213 = vmatprep.mubr.f32.mxu0 0.0
    %6214 = vmatmul.mubr.f32.gmra.mxu0 %v5948
    %v6215 = vpop.f32.mrf.mxu0
    %v6216 = vadd.f32 0.0, %v6215
    %v6217 = vpop.f32.mrf.mxu0
    %6218 = vmatprep.mubr.f32.mxu0 0.0
    %6219 = vmatmul.mubr.f32.gmra.mxu0 %v5951
    %v6220 = vpop.f32.mrf.mxu0
    %v6221 = vadd.f32 0.0, %v6220
    %v6222 = vpop.f32.mrf.mxu0
    %6223 = vmatprep.mubr.f32.mxu0 0.0
    %6224 = vmatmul.mubr.f32.gmra.mxu0 %v5954
    %v6225 = vpop.f32.mrf.mxu0
    %v6226 = vadd.f32 0.0, %v6225
    %v6227 = vpop.f32.mrf.mxu0
    %6228 = vmatprep.mubr.f32.mxu0 0.0
    %6229 = vmatmul.mubr.f32.gmra.mxu0 %v5957
    %v6230 = vpop.f32.mrf.mxu0
    %v6231 = vadd.f32 0.0, %v6230
    %v6232 = vpop.f32.mrf.mxu0
    %6233 = vmatprep.mubr.f32.mxu0 0.0
    %6234 = vmatmul.mubr.f32.gmra.mxu0 %v5960
    %v6235 = vpop.f32.mrf.mxu0
    %v6236 = vadd.f32 0.0, %v6235
    %v6237 = vpop.f32.mrf.mxu0
    %6238 = vmatprep.mubr.f32.mxu0 0.0
    %6239 = vmatmul.mubr.f32.gmra.mxu0 %v5963
    %v6240 = vpop.f32.mrf.mxu0
    %v6241 = vadd.f32 0.0, %v6240
    %v6242 = vpop.f32.mrf.mxu0
    %6243 = vmatprep.mubr.f32.mxu0 0.0
    %6244 = vmatmul.mubr.f32.gmra.mxu0 %v5966
    %v6245 = vpop.f32.mrf.mxu0
    %v6246 = vadd.f32 0.0, %v6245
    %v6247 = vpop.f32.mrf.mxu0
    %6248 = vmatprep.mubr.f32.mxu0 0.0
    %6249 = vmatmul.mubr.f32.gmra.mxu0 %v5969
    %v6250 = vpop.f32.mrf.mxu0
    %v6251 = vadd.f32 0.0, %v6250
    %v6252 = vpop.f32.mrf.mxu0
    %6253 = vmatprep.mubr.f32.mxu0 0.0
    %6254 = vmatmul.mubr.f32.gmra.mxu0 %v5972
    %v6255 = vpop.f32.mrf.mxu0
    %v6256 = vadd.f32 0.0, %v6255
    %v6257 = vpop.f32.mrf.mxu0
    %6258 = vmatprep.mubr.f32.mxu0 0.0
    %6259 = vmatmul.mubr.f32.gmra.mxu0 %v5975
    %v6260 = vpop.f32.mrf.mxu0
    %v6261 = vadd.f32 0.0, %v6260
    %v6262 = vpop.f32.mrf.mxu0
    %6263 = vmatprep.mubr.f32.mxu0 0.0
    %6264 = vmatmul.mubr.f32.gmra.mxu0 %v5978
    %v6265 = vpop.f32.mrf.mxu0
    %v6266 = vadd.f32 0.0, %v6265
    %v6267 = vpop.f32.mrf.mxu0
    %6268 = vmatprep.mubr.f32.mxu0 0.0
    %6269 = vmatmul.mubr.f32.gmra.mxu0 %v5981
    %v6270 = vpop.f32.mrf.mxu0
    %v6271 = vadd.f32 0.0, %v6270
    %v6272 = vpop.f32.mrf.mxu0
    %6273 = vmatprep.mubr.f32.mxu0 0.0
    %6274 = vmatmul.mubr.f32.gmra.mxu0 %v5984
    %v6275 = vpop.f32.mrf.mxu0
    %v6276 = vadd.f32 0.0, %v6275
    %v6277 = vpop.f32.mrf.mxu0
    %6278 = vmatprep.mubr.f32.mxu0 0.0
    %6279 = vmatmul.mubr.f32.gmra.mxu0 %v5987
    %v6280 = vpop.f32.mrf.mxu0
    %v6281 = vadd.f32 0.0, %v6280
    %v6282 = vpop.f32.mrf.mxu0
    %6283 = vmatprep.mubr.f32.mxu0 0.0
    %6284 = vmatmul.mubr.f32.gmra.mxu0 %v5990
    %v6285 = vpop.f32.mrf.mxu0
    %v6286 = vadd.f32 0.0, %v6285
    %v6287 = vpop.f32.mrf.mxu0
    %6288 = vmatprep.mubr.f32.mxu0 0.0
    %6289 = vmatmul.mubr.f32.gmra.mxu0 %v5993
    %v6290 = vpop.f32.mrf.mxu0
    %v6291 = vadd.f32 0.0, %v6290
    %v6292 = vpop.f32.mrf.mxu0
    %6293 = vmatprep.mubr.f32.mxu0 0.0
    %6294 = vmatmul.mubr.f32.gmra.mxu0 %v5996
    %v6295 = vpop.f32.mrf.mxu0
    %v6296 = vadd.f32 0.0, %v6295
    %v6297 = vpop.f32.mrf.mxu0
    %6298 = vmatprep.mubr.f32.mxu0 0.0
    %6299 = vmatmul.mubr.f32.gmra.mxu0 %v5999
    %v6300 = vpop.f32.mrf.mxu0
    %v6301 = vadd.f32 0.0, %v6300
    %v6302 = vpop.f32.mrf.mxu0
    %6303 = vmatprep.mubr.f32.mxu0 0.0
    %6304 = vmatmul.mubr.f32.gmra.mxu0 %v6002
    %v6305 = vpop.f32.mrf.mxu0
    %v6306 = vadd.f32 0.0, %v6305
    %v6307 = vpop.f32.mrf.mxu0
    %6308 = vmatprep.mubr.f32.mxu0 0.0
    %6309 = vmatmul.mubr.f32.gmra.mxu0 %v6005
    %v6310 = vpop.f32.mrf.mxu0
    %v6311 = vadd.f32 0.0, %v6310
    %v6312 = vpop.f32.mrf.mxu0
    %6313 = vmatprep.mubr.f32.mxu0 0.0
    %6314 = vmatmul.mubr.f32.gmra.mxu0 %v6008
    %v6315 = vpop.f32.mrf.mxu0
    %v6316 = vadd.f32 0.0, %v6315
    %v6317 = vpop.f32.mrf.mxu0
    %6318 = vmatprep.mubr.f32.mxu0 0.0
    %6319 = vmatmul.mubr.f32.gmra.mxu0 %v6011
    %v6320 = vpop.f32.mrf.mxu0
    %v6321 = vadd.f32 0.0, %v6320
    %v6322 = vpop.f32.mrf.mxu0
    %6323 = vmatprep.mubr.f32.mxu0 0.0
    %6324 = vmatmul.mubr.f32.gmra.mxu0 %v6014
    %v6325 = vpop.f32.mrf.mxu0
    %v6326 = vadd.f32 0.0, %v6325
    %v6327 = vpop.f32.mrf.mxu0
    %6328 = vmatprep.mubr.f32.mxu0 0.0
    %6329 = vmatmul.mubr.f32.gmra.mxu0 %v6017
    %v6330 = vpop.f32.mrf.mxu0
    %v6331 = vadd.f32 0.0, %v6330
    %v6332 = vpop.f32.mrf.mxu0
    %6333 = vmatprep.mubr.f32.mxu0 0.0
    %6334 = vmatmul.mubr.f32.gmra.mxu0 %v6020
    %v6335 = vpop.f32.mrf.mxu0
    %v6336 = vadd.f32 0.0, %v6335
    %v6337 = vpop.f32.mrf.mxu0
    %6338 = vmatprep.mubr.f32.mxu0 0.0
    %6339 = vmatmul.mubr.f32.gmra.mxu0 %v6023
    %v6340 = vpop.f32.mrf.mxu0
    %v6341 = vadd.f32 0.0, %v6340
    %v6342 = vpop.f32.mrf.mxu0
    %6343 = vmatprep.mubr.f32.mxu0 0.0
    %6344 = vmatmul.mubr.f32.gmra.mxu0 %v6026
    %v6345 = vpop.f32.mrf.mxu0
    %v6346 = vadd.f32 0.0, %v6345
    %v6347 = vpop.f32.mrf.mxu0
    %6348 = vmatprep.mubr.f32.mxu0 0.0
    %6349 = vmatmul.mubr.f32.gmra.mxu0 %v6029
    %v6350 = vpop.f32.mrf.mxu0
    %v6351 = vadd.f32 0.0, %v6350
    %v6352 = vpop.f32.mrf.mxu0
    %6353 = vmatprep.mubr.f32.mxu0 0.0
    %6354 = vmatmul.mubr.f32.gmra.mxu0 %v6032
    %v6355 = vpop.f32.mrf.mxu0
    %v6356 = vadd.f32 0.0, %v6355
    %v6357 = vpop.f32.mrf.mxu0
    %6358 = vmatprep.mubr.f32.mxu0 0.0
    %6359 = vmatmul.mubr.f32.gmra.mxu0 %v6035
    %v6360 = vpop.f32.mrf.mxu0
    %v6361 = vadd.f32 0.0, %v6360
    %v6362 = vpop.f32.mrf.mxu0
    %6363 = vmatprep.mubr.f32.mxu0 0.0
    %6364 = vmatmul.mubr.f32.gmra.mxu0 %v6038
    %v6365 = vpop.f32.mrf.mxu0
    %v6366 = vadd.f32 0.0, %v6365
    %v6367 = vpop.f32.mrf.mxu0
    %6368 = vmatprep.mubr.f32.mxu0 0.0
    %6369 = vmatmul.mubr.f32.gmra.mxu0 %v6041
    %v6370 = vpop.f32.mrf.mxu0
    %v6371 = vadd.f32 0.0, %v6370
    %v6372 = vpop.f32.mrf.mxu0
    %6373 = vmatprep.mubr.f32.mxu0 0.0
    %6374 = vmatmul.mubr.f32.gmra.mxu0 %v6044
    %v6375 = vpop.f32.mrf.mxu0
    %v6376 = vadd.f32 0.0, %v6375
    %v6377 = vpop.f32.mrf.mxu0
    %6378 = vmatprep.mubr.f32.mxu0 0.0
    %6379 = vmatmul.mubr.f32.gmra.mxu0 %v6047
    %v6380 = vpop.f32.mrf.mxu0
    %v6381 = vadd.f32 0.0, %v6380
    %v6382 = vpop.f32.mrf.mxu0
    %6383 = vmatprep.mubr.f32.mxu0 0.0
    %6384 = vmatmul.mubr.f32.gmra.mxu0 %v6050
    %v6385 = vpop.f32.mrf.mxu0
    %v6386 = vadd.f32 0.0, %v6385
    %v6387 = vpop.f32.mrf.mxu0
    %6388 = vmatprep.mubr.f32.mxu0 0.0
    %6389 = vmatmul.mubr.f32.gmra.mxu0 %v6053
    %v6390 = vpop.f32.mrf.mxu0
    %v6391 = vadd.f32 0.0, %v6390
    %v6392 = vpop.f32.mrf.mxu0
    %6393 = vmatprep.mubr.f32.mxu0 0.0
    %6394 = vmatmul.mubr.f32.gmra.mxu0 %v6056
    %v6395 = vpop.f32.mrf.mxu0
    %v6396 = vadd.f32 0.0, %v6395
    %v6397 = vpop.f32.mrf.mxu0
    %6398 = vmatprep.mubr.f32.mxu0 0.0
    %6399 = vmatmul.mubr.f32.gmra.mxu0 %v6059
    %v6400 = vpop.f32.mrf.mxu0
    %v6401 = vadd.f32 0.0, %v6400
    %v6402 = vpop.f32.mrf.mxu0
    %6403 = vmatprep.mubr.f32.mxu0 0.0
    %6404 = vmatmul.mubr.f32.gmra.mxu0 %v6062
    %v6405 = vpop.f32.mrf.mxu0
    %v6406 = vadd.f32 0.0, %v6405
    %v6407 = vpop.f32.mrf.mxu0
    %6408 = vmatprep.mubr.f32.mxu0 0.0
    %6409 = vmatmul.mubr.f32.gmra.mxu0 %v6065
    %v6410 = vpop.f32.mrf.mxu0
    %v6411 = vadd.f32 0.0, %v6410
    %v6412 = vpop.f32.mrf.mxu0
    %6413 = vmatprep.mubr.f32.mxu0 0.0
    %6414 = vmatmul.mubr.f32.gmra.mxu0 %v6068
    %v6415 = vpop.f32.mrf.mxu0
    %v6416 = vadd.f32 0.0, %v6415
    %v6417 = vpop.f32.mrf.mxu0
    %6418 = vmatprep.mubr.f32.mxu0 0.0
    %6419 = vmatmul.mubr.f32.gmra.mxu0 %v6071
    %v6420 = vpop.f32.mrf.mxu0
    %v6421 = vadd.f32 0.0, %v6420
    %v6422 = vpop.f32.mrf.mxu0
    %6423 = vmatprep.mubr.f32.mxu0 0.0
    %6424 = vmatmul.mubr.f32.gmra.mxu0 %v6074
    %v6425 = vpop.f32.mrf.mxu0
    %v6426 = vadd.f32 0.0, %v6425
    %v6427 = vpop.f32.mrf.mxu0
    %6428 = vmatprep.mubr.f32.mxu0 0.0
    %6429 = vmatmul.mubr.f32.gmra.mxu0 %v6077
    %v6430 = vpop.f32.mrf.mxu0
    %v6431 = vadd.f32 0.0, %v6430
    %v6432 = vpop.f32.mrf.mxu0
    %6433 = vmatprep.mubr.f32.mxu0 0.0
    %6434 = vmatmul.mubr.f32.gmra.mxu0 %v6080
    %v6435 = vpop.f32.mrf.mxu0
    %v6436 = vadd.f32 0.0, %v6435
    %v6437 = vpop.f32.mrf.mxu0
    %6438 = vmatprep.mubr.f32.mxu0 0.0
    %6439 = vmatmul.mubr.f32.gmra.mxu0 %v6083
    %v6440 = vpop.f32.mrf.mxu0
    %v6441 = vadd.f32 0.0, %v6440
    %v6442 = vpop.f32.mrf.mxu0
    %6443 = vmatprep.mubr.f32.mxu0 0.0
    %6444 = vmatmul.mubr.f32.gmra.mxu0 %v6086
    %v6445 = vpop.f32.mrf.mxu0
    %v6446 = vadd.f32 0.0, %v6445
    %v6447 = vpop.f32.mrf.mxu0
    %6448 = vmatprep.mubr.f32.mxu0 0.0
    %6449 = vmatmul.mubr.f32.gmra.mxu0 %v6089
    %v6450 = vpop.f32.mrf.mxu0
    %v6451 = vadd.f32 0.0, %v6450
    %v6452 = vpop.f32.mrf.mxu0
    %6453 = vmatprep.mubr.f32.mxu0 0.0
    %6454 = vmatmul.mubr.f32.gmra.mxu0 %v6092
    %v6455 = vpop.f32.mrf.mxu0
    %v6456 = vadd.f32 0.0, %v6455
    %v6457 = vpop.f32.mrf.mxu0
    %6458 = vmatprep.mubr.f32.mxu0 0.0
    %6459 = vmatmul.mubr.f32.gmra.mxu0 %v6095
    %v6460 = vpop.f32.mrf.mxu0
    %v6461 = vadd.f32 0.0, %v6460
    %v6462 = vpop.f32.mrf.mxu0
    %6463 = vmatprep.mubr.f32.mxu0 0.0
    %6464 = vmatmul.mubr.f32.gmra.mxu0 %v6098
    %v6465 = vpop.f32.mrf.mxu0
    %v6466 = vadd.f32 0.0, %v6465
    %v6467 = vpop.f32.mrf.mxu0
    %6468 = vmatprep.mubr.f32.mxu0 0.0
    %6469 = vmatmul.mubr.f32.gmra.mxu0 %v6101
    %v6470 = vpop.f32.mrf.mxu0
    %v6471 = vadd.f32 0.0, %v6470
    %v6472 = vpop.f32.mrf.mxu0
    %6473 = vmatprep.mubr.f32.mxu0 0.0
    %6474 = vmatmul.mubr.f32.gmra.mxu0 %v6104
    %v6475 = vpop.f32.mrf.mxu0
    %v6476 = vadd.f32 0.0, %v6475
    %v6477 = vpop.f32.mrf.mxu0
    %6478 = vmatprep.mubr.f32.mxu0 0.0
    %6479 = vmatmul.mubr.f32.gmra.mxu0 %v6107
    %v6480 = vpop.f32.mrf.mxu0
    %v6481 = vadd.f32 0.0, %v6480
    %v6482 = vpop.f32.mrf.mxu0
    %6483 = vmatprep.mubr.f32.mxu0 0.0
    %6484 = vmatmul.mubr.f32.gmra.mxu0 %v6110
    %v6485 = vpop.f32.mrf.mxu0
    %v6486 = vadd.f32 0.0, %v6485
    %v6487 = vpop.f32.mrf.mxu0
    %6488 = vmatprep.mubr.f32.mxu0 0.0
    %6489 = vmatmul.mubr.f32.gmra.mxu0 %v6113
    %v6490 = vpop.f32.mrf.mxu0
    %v6491 = vadd.f32 0.0, %v6490
    %v6492 = vpop.f32.mrf.mxu0
    %6493 = vmatprep.mubr.f32.mxu0 0.0
    %6494 = vmatmul.mubr.f32.gmra.mxu0 %v6116
    %v6495 = vpop.f32.mrf.mxu0
    %v6496 = vadd.f32 0.0, %v6495
    %v6497 = vpop.f32.mrf.mxu0
    %6498 = vmatprep.mubr.f32.mxu0 0.0
    %6499 = vmatmul.mubr.f32.gmra.mxu0 %v6119
    %v6500 = vpop.f32.mrf.mxu0
    %v6501 = vadd.f32 0.0, %v6500
    %v6502 = vpop.f32.mrf.mxu0
    %6503 = vmatprep.mubr.f32.mxu0 0.0
    %6504 = vmatmul.mubr.f32.gmra.mxu0 %v6122
    %v6505 = vpop.f32.mrf.mxu0
    %v6506 = vadd.f32 0.0, %v6505
    %v6507 = vpop.f32.mrf.mxu0
    %6508 = vdwg.mxu0
    %vm6509 = vcmp.gt.f32.partialorder %v6191, 0.0
    %vm6510 = vcmp.gt.f32.partialorder %v6196, 0.0
    %vm6511 = vcmp.gt.f32.partialorder %v6201, 0.0
    %vm6512 = vcmp.gt.f32.partialorder %v6206, 0.0
    %vm6513 = vcmp.gt.f32.partialorder %v6211, 0.0
    %vm6514 = vcmp.gt.f32.partialorder %v6216, 0.0
    %vm6515 = vcmp.gt.f32.partialorder %v6221, 0.0
    %vm6516 = vcmp.gt.f32.partialorder %v6226, 0.0
    %vm6517 = vcmp.gt.f32.partialorder %v6231, 0.0
    %vm6518 = vcmp.gt.f32.partialorder %v6236, 0.0
    %vm6519 = vcmp.gt.f32.partialorder %v6241, 0.0
    %vm6520 = vcmp.gt.f32.partialorder %v6246, 0.0
    %vm6521 = vcmp.gt.f32.partialorder %v6251, 0.0
    %vm6522 = vcmp.gt.f32.partialorder %v6256, 0.0
    %vm6523 = vcmp.gt.f32.partialorder %v6261, 0.0
    %vm6524 = vcmp.gt.f32.partialorder %v6266, 0.0
    %vm6525 = vcmp.gt.f32.partialorder %v6271, 0.0
    %vm6526 = vcmp.gt.f32.partialorder %v6276, 0.0
    %vm6527 = vcmp.gt.f32.partialorder %v6281, 0.0
    %vm6528 = vcmp.gt.f32.partialorder %v6286, 0.0
    %vm6529 = vcmp.gt.f32.partialorder %v6291, 0.0
    %vm6530 = vcmp.gt.f32.partialorder %v6296, 0.0
    %vm6531 = vcmp.gt.f32.partialorder %v6301, 0.0
    %vm6532 = vcmp.gt.f32.partialorder %v6306, 0.0
    %vm6533 = vcmp.gt.f32.partialorder %v6311, 0.0
    %vm6534 = vcmp.gt.f32.partialorder %v6316, 0.0
    %vm6535 = vcmp.gt.f32.partialorder %v6321, 0.0
    %vm6536 = vcmp.gt.f32.partialorder %v6326, 0.0
    %vm6537 = vcmp.gt.f32.partialorder %v6331, 0.0
    %vm6538 = vcmp.gt.f32.partialorder %v6336, 0.0
    %vm6539 = vcmp.gt.f32.partialorder %v6341, 0.0
    %vm6540 = vcmp.gt.f32.partialorder %v6346, 0.0
    %vm6541 = vcmp.gt.f32.partialorder %v6351, 0.0
    %vm6542 = vcmp.gt.f32.partialorder %v6356, 0.0
    %vm6543 = vcmp.gt.f32.partialorder %v6361, 0.0
    %vm6544 = vcmp.gt.f32.partialorder %v6366, 0.0
    %vm6545 = vcmp.gt.f32.partialorder %v6371, 0.0
    %vm6546 = vcmp.gt.f32.partialorder %v6376, 0.0
    %vm6547 = vcmp.gt.f32.partialorder %v6381, 0.0
    %vm6548 = vcmp.gt.f32.partialorder %v6386, 0.0
    %vm6549 = vcmp.gt.f32.partialorder %v6391, 0.0
    %vm6550 = vcmp.gt.f32.partialorder %v6396, 0.0
    %vm6551 = vcmp.gt.f32.partialorder %v6401, 0.0
    %vm6552 = vcmp.gt.f32.partialorder %v6406, 0.0
    %vm6553 = vcmp.gt.f32.partialorder %v6411, 0.0
    %vm6554 = vcmp.gt.f32.partialorder %v6416, 0.0
    %vm6555 = vcmp.gt.f32.partialorder %v6421, 0.0
    %vm6556 = vcmp.gt.f32.partialorder %v6426, 0.0
    %vm6557 = vcmp.gt.f32.partialorder %v6431, 0.0
    %vm6558 = vcmp.gt.f32.partialorder %v6436, 0.0
    %vm6559 = vcmp.gt.f32.partialorder %v6441, 0.0
    %vm6560 = vcmp.gt.f32.partialorder %v6446, 0.0
    %vm6561 = vcmp.gt.f32.partialorder %v6451, 0.0
    %vm6562 = vcmp.gt.f32.partialorder %v6456, 0.0
    %vm6563 = vcmp.gt.f32.partialorder %v6461, 0.0
    %vm6564 = vcmp.gt.f32.partialorder %v6466, 0.0
    %vm6565 = vcmp.gt.f32.partialorder %v6471, 0.0
    %vm6566 = vcmp.gt.f32.partialorder %v6476, 0.0
    %vm6567 = vcmp.gt.f32.partialorder %v6481, 0.0
    %vm6568 = vcmp.gt.f32.partialorder %v6486, 0.0
    %vm6569 = vcmp.gt.f32.partialorder %v6491, 0.0
    %vm6570 = vcmp.gt.f32.partialorder %v6496, 0.0
    %vm6571 = vcmp.gt.f32.partialorder %v6501, 0.0
    %vm6572 = vcmp.gt.f32.partialorder %v6506, 0.0
    %v6573 = vmul.f32 %v6191, 0.01
    %v6574 = vmul.f32 %v6196, 0.01
    %v6575 = vmul.f32 %v6201, 0.01
    %v6576 = vmul.f32 %v6206, 0.01
    %v6577 = vmul.f32 %v6211, 0.01
    %v6578 = vmul.f32 %v6216, 0.01
    %v6579 = vmul.f32 %v6221, 0.01
    %v6580 = vmul.f32 %v6226, 0.01
    %v6581 = vmul.f32 %v6231, 0.01
    %v6582 = vmul.f32 %v6236, 0.01
    %v6583 = vmul.f32 %v6241, 0.01
    %v6584 = vmul.f32 %v6246, 0.01
    %v6585 = vmul.f32 %v6251, 0.01
    %v6586 = vmul.f32 %v6256, 0.01
    %v6587 = vmul.f32 %v6261, 0.01
    %v6588 = vmul.f32 %v6266, 0.01
    %v6589 = vmul.f32 %v6271, 0.01
    %v6590 = vmul.f32 %v6276, 0.01
    %v6591 = vmul.f32 %v6281, 0.01
    %v6592 = vmul.f32 %v6286, 0.01
    %v6593 = vmul.f32 %v6291, 0.01
    %v6594 = vmul.f32 %v6296, 0.01
    %v6595 = vmul.f32 %v6301, 0.01
    %v6596 = vmul.f32 %v6306, 0.01
    %v6597 = vmul.f32 %v6311, 0.01
    %v6598 = vmul.f32 %v6316, 0.01
    %v6599 = vmul.f32 %v6321, 0.01
    %v6600 = vmul.f32 %v6326, 0.01
    %v6601 = vmul.f32 %v6331, 0.01
    %v6602 = vmul.f32 %v6336, 0.01
    %v6603 = vmul.f32 %v6341, 0.01
    %v6604 = vmul.f32 %v6346, 0.01
    %v6605 = vmul.f32 %v6351, 0.01
    %v6606 = vmul.f32 %v6356, 0.01
    %v6607 = vmul.f32 %v6361, 0.01
    %v6608 = vmul.f32 %v6366, 0.01
    %v6609 = vmul.f32 %v6371, 0.01
    %v6610 = vmul.f32 %v6376, 0.01
    %v6611 = vmul.f32 %v6381, 0.01
    %v6612 = vmul.f32 %v6386, 0.01
    %v6613 = vmul.f32 %v6391, 0.01
    %v6614 = vmul.f32 %v6396, 0.01
    %v6615 = vmul.f32 %v6401, 0.01
    %v6616 = vmul.f32 %v6406, 0.01
    %v6617 = vmul.f32 %v6411, 0.01
    %v6618 = vmul.f32 %v6416, 0.01
    %v6619 = vmul.f32 %v6421, 0.01
    %v6620 = vmul.f32 %v6426, 0.01
    %v6621 = vmul.f32 %v6431, 0.01
    %v6622 = vmul.f32 %v6436, 0.01
    %v6623 = vmul.f32 %v6441, 0.01
    %v6624 = vmul.f32 %v6446, 0.01
    %v6625 = vmul.f32 %v6451, 0.01
    %v6626 = vmul.f32 %v6456, 0.01
    %v6627 = vmul.f32 %v6461, 0.01
    %v6628 = vmul.f32 %v6466, 0.01
    %v6629 = vmul.f32 %v6471, 0.01
    %v6630 = vmul.f32 %v6476, 0.01
    %v6631 = vmul.f32 %v6481, 0.01
    %v6632 = vmul.f32 %v6486, 0.01
    %v6633 = vmul.f32 %v6491, 0.01
    %v6634 = vmul.f32 %v6496, 0.01
    %v6635 = vmul.f32 %v6501, 0.01
    %v6636 = vmul.f32 %v6506, 0.01
    %v6637 = vsel %vm6509, %v6191, %v6573
    %v6638 = vsel %vm6510, %v6196, %v6574
    %v6639 = vsel %vm6511, %v6201, %v6575
    %v6640 = vsel %vm6512, %v6206, %v6576
    %v6641 = vsel %vm6513, %v6211, %v6577
    %v6642 = vsel %vm6514, %v6216, %v6578
    %v6643 = vsel %vm6515, %v6221, %v6579
    %v6644 = vsel %vm6516, %v6226, %v6580
    %v6645 = vsel %vm6517, %v6231, %v6581
    %v6646 = vsel %vm6518, %v6236, %v6582
    %v6647 = vsel %vm6519, %v6241, %v6583
    %v6648 = vsel %vm6520, %v6246, %v6584
    %v6649 = vsel %vm6521, %v6251, %v6585
    %v6650 = vsel %vm6522, %v6256, %v6586
    %v6651 = vsel %vm6523, %v6261, %v6587
    %v6652 = vsel %vm6524, %v6266, %v6588
    %v6653 = vsel %vm6525, %v6271, %v6589
    %v6654 = vsel %vm6526, %v6276, %v6590
    %v6655 = vsel %vm6527, %v6281, %v6591
    %v6656 = vsel %vm6528, %v6286, %v6592
    %v6657 = vsel %vm6529, %v6291, %v6593
    %v6658 = vsel %vm6530, %v6296, %v6594
    %v6659 = vsel %vm6531, %v6301, %v6595
    %v6660 = vsel %vm6532, %v6306, %v6596
    %v6661 = vsel %vm6533, %v6311, %v6597
    %v6662 = vsel %vm6534, %v6316, %v6598
    %v6663 = vsel %vm6535, %v6321, %v6599
    %v6664 = vsel %vm6536, %v6326, %v6600
    %v6665 = vsel %vm6537, %v6331, %v6601
    %v6666 = vsel %vm6538, %v6336, %v6602
    %v6667 = vsel %vm6539, %v6341, %v6603
    %v6668 = vsel %vm6540, %v6346, %v6604
    %v6669 = vsel %vm6541, %v6351, %v6605
    %v6670 = vsel %vm6542, %v6356, %v6606
    %v6671 = vsel %vm6543, %v6361, %v6607
    %v6672 = vsel %vm6544, %v6366, %v6608
    %v6673 = vsel %vm6545, %v6371, %v6609
    %v6674 = vsel %vm6546, %v6376, %v6610
    %v6675 = vsel %vm6547, %v6381, %v6611
    %v6676 = vsel %vm6548, %v6386, %v6612
    %v6677 = vsel %vm6549, %v6391, %v6613
    %v6678 = vsel %vm6550, %v6396, %v6614
    %v6679 = vsel %vm6551, %v6401, %v6615
    %v6680 = vsel %vm6552, %v6406, %v6616
    %v6681 = vsel %vm6553, %v6411, %v6617
    %v6682 = vsel %vm6554, %v6416, %v6618
    %v6683 = vsel %vm6555, %v6421, %v6619
    %v6684 = vsel %vm6556, %v6426, %v6620
    %v6685 = vsel %vm6557, %v6431, %v6621
    %v6686 = vsel %vm6558, %v6436, %v6622
    %v6687 = vsel %vm6559, %v6441, %v6623
    %v6688 = vsel %vm6560, %v6446, %v6624
    %v6689 = vsel %vm6561, %v6451, %v6625
    %v6690 = vsel %vm6562, %v6456, %v6626
    %v6691 = vsel %vm6563, %v6461, %v6627
    %v6692 = vsel %vm6564, %v6466, %v6628
    %v6693 = vsel %vm6565, %v6471, %v6629
    %v6694 = vsel %vm6566, %v6476, %v6630
    %v6695 = vsel %vm6567, %v6481, %v6631
    %v6696 = vsel %vm6568, %v6486, %v6632
    %v6697 = vsel %vm6569, %v6491, %v6633
    %v6698 = vsel %vm6570, %v6496, %v6634
    %v6699 = vsel %vm6571, %v6501, %v6635
    %v6700 = vsel %vm6572, %v6506, %v6636
    %v6701 = vld [vmem:[%s11] sm:$0xff]
    %v6702 = vld [vmem:[%s11 + $0x8] sm:$0xff]
    %v6703 = vld [vmem:[%s11 + $0x10] sm:$0xff]
    %v6704 = vld [vmem:[%s11 + $0x18] sm:$0xff]
    %v6706 = vsel %vm806, %v5091, 0
    %v6709 = vsel %vm806, %v5092, 0
    %v6712 = vsel %vm806, %v5093, 0
    %v6715 = vsel %vm806, %v5094, 0
    %v6718 = vsel %vm806, %v5095, 0
    %v6721 = vsel %vm806, %v5096, 0
    %v6724 = vsel %vm806, %v5097, 0
    %v6727 = vsel %vm806, %v5098, 0
    %v6730 = vsel %vm806, %v5099, 0
    %v6733 = vsel %vm806, %v5100, 0
    %v6736 = vsel %vm806, %v5101, 0
    %v6739 = vsel %vm806, %v5102, 0
    %v6742 = vsel %vm806, %v5103, 0
    %v6745 = vsel %vm806, %v5104, 0
    %v6748 = vsel %vm806, %v5105, 0
    %v6751 = vsel %vm806, %v5106, 0
    %v6754 = vsel %vm806, %v5107, 0
    %v6757 = vsel %vm806, %v5108, 0
    %v6760 = vsel %vm806, %v5109, 0
    %v6763 = vsel %vm806, %v5110, 0
    %v6766 = vsel %vm806, %v5111, 0
    %v6769 = vsel %vm806, %v5112, 0
    %v6772 = vsel %vm806, %v5113, 0
    %v6775 = vsel %vm806, %v5114, 0
    %v6778 = vsel %vm806, %v5115, 0
    %v6781 = vsel %vm806, %v5116, 0
    %v6784 = vsel %vm806, %v5117, 0
    %v6787 = vsel %vm806, %v5118, 0
    %v6790 = vsel %vm806, %v5119, 0
    %v6793 = vsel %vm806, %v5120, 0
    %v6796 = vsel %vm806, %v5121, 0
    %v6799 = vsel %vm806, %v5122, 0
    %v6802 = vsel %vm806, %v5123, 0
    %v6805 = vsel %vm806, %v5124, 0
    %v6808 = vsel %vm806, %v5125, 0
    %v6811 = vsel %vm806, %v5126, 0
    %v6814 = vsel %vm806, %v5127, 0
    %v6817 = vsel %vm806, %v5128, 0
    %v6820 = vsel %vm806, %v5129, 0
    %v6823 = vsel %vm806, %v5130, 0
    %v6826 = vsel %vm806, %v5131, 0
    %v6829 = vsel %vm806, %v5132, 0
    %v6832 = vsel %vm806, %v5133, 0
    %v6835 = vsel %vm806, %v5134, 0
    %v6838 = vsel %vm806, %v5135, 0
    %v6841 = vsel %vm806, %v5136, 0
    %v6844 = vsel %vm806, %v5137, 0
    %v6847 = vsel %vm806, %v5138, 0
    %v6850 = vsel %vm806, %v5139, 0
    %v6853 = vsel %vm806, %v5140, 0
    %v6856 = vsel %vm806, %v5141, 0
    %v6859 = vsel %vm806, %v5142, 0
    %v6862 = vsel %vm806, %v5143, 0
    %v6865 = vsel %vm806, %v5144, 0
    %v6868 = vsel %vm806, %v5145, 0
    %v6871 = vsel %vm806, %v5146, 0
    %v6874 = vsel %vm806, %v5147, 0
    %v6877 = vsel %vm806, %v5148, 0
    %v6880 = vsel %vm806, %v5149, 0
    %v6883 = vsel %vm806, %v5150, 0
    %v6886 = vsel %vm806, %v5151, 0
    %v6889 = vsel %vm806, %v5152, 0
    %v6892 = vsel %vm806, %v5153, 0
    %v6895 = vsel %vm806, %v5154, 0
    %6897 = vmatprep.subr.mxu0 0.0
    %6898 = vmatpush1.msra.mxu0 0.0
    %6899 = vmatprep.subr.mxu0 0.0
    %6900 = vmatpush1.msra.mxu0 0.0
    %6901 = vmatprep.subr.mxu0 0.0
    %6902 = vmatpush1.msra.mxu0 0.0
    %6903 = vmatprep.subr.mxu0 0.0
    %6904 = vmatpush1.msra.mxu0 0.0
    %6905 = vmatprep.subr.mxu0 0.0
    %6906 = vmatpush1.msra.mxu0 0.0
    %6907 = vmatprep.subr.mxu0 0.0
    %6908 = vmatpush1.msra.mxu0 0.0
    %6909 = vmatprep.subr.mxu0 0.0
    %6910 = vmatpush1.msra.mxu0 0.0
    %6911 = vmatprep.subr.mxu0 0.0
    %6912 = vmatpush1.msra.mxu0 0.0
    %6913 = vmatprep.subr.mxu0 0.0
    %6914 = vmatpush1.msra.mxu0 0.0
    %6915 = vmatprep.subr.mxu0 0.0
    %6916 = vmatpush1.msra.mxu0 0.0
    %6917 = vmatprep.subr.mxu0 0.0
    %6918 = vmatpush1.msra.mxu0 0.0
    %6919 = vmatprep.subr.mxu0 0.0
    %6920 = vmatpush1.msra.mxu0 0.0
    %6921 = vmatprep.subr.mxu0 0.0
    %6922 = vmatpush1.msra.mxu0 %v6704
    %6923 = vmatprep.subr.mxu0 0.0
    %6924 = vmatpush1.msra.mxu0 %v6703
    %6925 = vmatprep.subr.mxu0 0.0
    %6926 = vmatpush1.msra.mxu0 %v6702
    %6927 = vmatprep.subr.mxu0 0.0
    %6928 = vmatpush1.msra.mxu0 %v6701
    %6929 = vmatprep.subr.mxu0 0.0
    %6930 = vmatpush2.msra.mxu0 0.0
    %6931 = vmatprep.subr.mxu0 0.0
    %6932 = vmatpush2.msra.mxu0 0.0
    %6933 = vmatprep.subr.mxu0 0.0
    %6934 = vmatpush2.msra.mxu0 0.0
    %6935 = vmatprep.subr.mxu0 0.0
    %6936 = vmatpush2.msra.mxu0 0.0
    %6937 = vmatprep.subr.mxu0 0.0
    %6938 = vmatpush2.msra.mxu0 0.0
    %6939 = vmatprep.subr.mxu0 0.0
    %6940 = vmatpush2.msra.mxu0 0.0
    %6941 = vmatprep.subr.mxu0 0.0
    %6942 = vmatpush2.msra.mxu0 0.0
    %6943 = vmatprep.subr.mxu0 0.0
    %6944 = vmatpush2.msra.mxu0 0.0
    %6945 = vmatprep.subr.mxu0 0.0
    %6946 = vmatpush2.msra.mxu0 0.0
    %6947 = vmatprep.subr.mxu0 0.0
    %6948 = vmatpush2.msra.mxu0 0.0
    %6949 = vmatprep.subr.mxu0 0.0
    %6950 = vmatpush2.msra.mxu0 0.0
    %6951 = vmatprep.subr.mxu0 0.0
    %6952 = vmatpush2.msra.mxu0 0.0
    %6953 = vmatprep.subr.mxu0 0.0
    %6954 = vmatpush2.msra.mxu0 0.0
    %6955 = vmatprep.subr.mxu0 0.0
    %6956 = vmatpush2.msra.mxu0 0.0
    %6957 = vmatprep.subr.mxu0 0.0
    %6958 = vmatpush2.msra.mxu0 0.0
    %6959 = vmatprep.subr.mxu0 0.0
    %6960 = vmatpush2.msra.mxu0 0.0
    %6961 = vmatprep.mubr.f32.mxu0 0.0
    %6962 = vmatmul.mubr.f32.gmra.mxu0 %v6706
    %v6963 = vpop.f32.mrf.mxu0
    %v6964 = vadd.f32 0.0, %v6963
    %v6965 = vpop.f32.mrf.mxu0
    %6966 = vmatprep.mubr.f32.mxu0 0.0
    %6967 = vmatmul.mubr.f32.gmra.mxu0 %v6709
    %v6968 = vpop.f32.mrf.mxu0
    %v6969 = vadd.f32 0.0, %v6968
    %v6970 = vpop.f32.mrf.mxu0
    %6971 = vmatprep.mubr.f32.mxu0 0.0
    %6972 = vmatmul.mubr.f32.gmra.mxu0 %v6712
    %v6973 = vpop.f32.mrf.mxu0
    %v6974 = vadd.f32 0.0, %v6973
    %v6975 = vpop.f32.mrf.mxu0
    %6976 = vmatprep.mubr.f32.mxu0 0.0
    %6977 = vmatmul.mubr.f32.gmra.mxu0 %v6715
    %v6978 = vpop.f32.mrf.mxu0
    %v6979 = vadd.f32 0.0, %v6978
    %v6980 = vpop.f32.mrf.mxu0
    %6981 = vmatprep.mubr.f32.mxu0 0.0
    %6982 = vmatmul.mubr.f32.gmra.mxu0 %v6718
    %v6983 = vpop.f32.mrf.mxu0
    %v6984 = vadd.f32 0.0, %v6983
    %v6985 = vpop.f32.mrf.mxu0
    %6986 = vmatprep.mubr.f32.mxu0 0.0
    %6987 = vmatmul.mubr.f32.gmra.mxu0 %v6721
    %v6988 = vpop.f32.mrf.mxu0
    %v6989 = vadd.f32 0.0, %v6988
    %v6990 = vpop.f32.mrf.mxu0
    %6991 = vmatprep.mubr.f32.mxu0 0.0
    %6992 = vmatmul.mubr.f32.gmra.mxu0 %v6724
    %v6993 = vpop.f32.mrf.mxu0
    %v6994 = vadd.f32 0.0, %v6993
    %v6995 = vpop.f32.mrf.mxu0
    %6996 = vmatprep.mubr.f32.mxu0 0.0
    %6997 = vmatmul.mubr.f32.gmra.mxu0 %v6727
    %v6998 = vpop.f32.mrf.mxu0
    %v6999 = vadd.f32 0.0, %v6998
    %v7000 = vpop.f32.mrf.mxu0
    %7001 = vmatprep.mubr.f32.mxu0 0.0
    %7002 = vmatmul.mubr.f32.gmra.mxu0 %v6730
    %v7003 = vpop.f32.mrf.mxu0
    %v7004 = vadd.f32 0.0, %v7003
    %v7005 = vpop.f32.mrf.mxu0
    %7006 = vmatprep.mubr.f32.mxu0 0.0
    %7007 = vmatmul.mubr.f32.gmra.mxu0 %v6733
    %v7008 = vpop.f32.mrf.mxu0
    %v7009 = vadd.f32 0.0, %v7008
    %v7010 = vpop.f32.mrf.mxu0
    %7011 = vmatprep.mubr.f32.mxu0 0.0
    %7012 = vmatmul.mubr.f32.gmra.mxu0 %v6736
    %v7013 = vpop.f32.mrf.mxu0
    %v7014 = vadd.f32 0.0, %v7013
    %v7015 = vpop.f32.mrf.mxu0
    %7016 = vmatprep.mubr.f32.mxu0 0.0
    %7017 = vmatmul.mubr.f32.gmra.mxu0 %v6739
    %v7018 = vpop.f32.mrf.mxu0
    %v7019 = vadd.f32 0.0, %v7018
    %v7020 = vpop.f32.mrf.mxu0
    %7021 = vmatprep.mubr.f32.mxu0 0.0
    %7022 = vmatmul.mubr.f32.gmra.mxu0 %v6742
    %v7023 = vpop.f32.mrf.mxu0
    %v7024 = vadd.f32 0.0, %v7023
    %v7025 = vpop.f32.mrf.mxu0
    %7026 = vmatprep.mubr.f32.mxu0 0.0
    %7027 = vmatmul.mubr.f32.gmra.mxu0 %v6745
    %v7028 = vpop.f32.mrf.mxu0
    %v7029 = vadd.f32 0.0, %v7028
    %v7030 = vpop.f32.mrf.mxu0
    %7031 = vmatprep.mubr.f32.mxu0 0.0
    %7032 = vmatmul.mubr.f32.gmra.mxu0 %v6748
    %v7033 = vpop.f32.mrf.mxu0
    %v7034 = vadd.f32 0.0, %v7033
    %v7035 = vpop.f32.mrf.mxu0
    %7036 = vmatprep.mubr.f32.mxu0 0.0
    %7037 = vmatmul.mubr.f32.gmra.mxu0 %v6751
    %v7038 = vpop.f32.mrf.mxu0
    %v7039 = vadd.f32 0.0, %v7038
    %v7040 = vpop.f32.mrf.mxu0
    %7041 = vmatprep.mubr.f32.mxu0 0.0
    %7042 = vmatmul.mubr.f32.gmra.mxu0 %v6754
    %v7043 = vpop.f32.mrf.mxu0
    %v7044 = vadd.f32 0.0, %v7043
    %v7045 = vpop.f32.mrf.mxu0
    %7046 = vmatprep.mubr.f32.mxu0 0.0
    %7047 = vmatmul.mubr.f32.gmra.mxu0 %v6757
    %v7048 = vpop.f32.mrf.mxu0
    %v7049 = vadd.f32 0.0, %v7048
    %v7050 = vpop.f32.mrf.mxu0
    %7051 = vmatprep.mubr.f32.mxu0 0.0
    %7052 = vmatmul.mubr.f32.gmra.mxu0 %v6760
    %v7053 = vpop.f32.mrf.mxu0
    %v7054 = vadd.f32 0.0, %v7053
    %v7055 = vpop.f32.mrf.mxu0
    %7056 = vmatprep.mubr.f32.mxu0 0.0
    %7057 = vmatmul.mubr.f32.gmra.mxu0 %v6763
    %v7058 = vpop.f32.mrf.mxu0
    %v7059 = vadd.f32 0.0, %v7058
    %v7060 = vpop.f32.mrf.mxu0
    %7061 = vmatprep.mubr.f32.mxu0 0.0
    %7062 = vmatmul.mubr.f32.gmra.mxu0 %v6766
    %v7063 = vpop.f32.mrf.mxu0
    %v7064 = vadd.f32 0.0, %v7063
    %v7065 = vpop.f32.mrf.mxu0
    %7066 = vmatprep.mubr.f32.mxu0 0.0
    %7067 = vmatmul.mubr.f32.gmra.mxu0 %v6769
    %v7068 = vpop.f32.mrf.mxu0
    %v7069 = vadd.f32 0.0, %v7068
    %v7070 = vpop.f32.mrf.mxu0
    %7071 = vmatprep.mubr.f32.mxu0 0.0
    %7072 = vmatmul.mubr.f32.gmra.mxu0 %v6772
    %v7073 = vpop.f32.mrf.mxu0
    %v7074 = vadd.f32 0.0, %v7073
    %v7075 = vpop.f32.mrf.mxu0
    %7076 = vmatprep.mubr.f32.mxu0 0.0
    %7077 = vmatmul.mubr.f32.gmra.mxu0 %v6775
    %v7078 = vpop.f32.mrf.mxu0
    %v7079 = vadd.f32 0.0, %v7078
    %v7080 = vpop.f32.mrf.mxu0
    %7081 = vmatprep.mubr.f32.mxu0 0.0
    %7082 = vmatmul.mubr.f32.gmra.mxu0 %v6778
    %v7083 = vpop.f32.mrf.mxu0
    %v7084 = vadd.f32 0.0, %v7083
    %v7085 = vpop.f32.mrf.mxu0
    %7086 = vmatprep.mubr.f32.mxu0 0.0
    %7087 = vmatmul.mubr.f32.gmra.mxu0 %v6781
    %v7088 = vpop.f32.mrf.mxu0
    %v7089 = vadd.f32 0.0, %v7088
    %v7090 = vpop.f32.mrf.mxu0
    %7091 = vmatprep.mubr.f32.mxu0 0.0
    %7092 = vmatmul.mubr.f32.gmra.mxu0 %v6784
    %v7093 = vpop.f32.mrf.mxu0
    %v7094 = vadd.f32 0.0, %v7093
    %v7095 = vpop.f32.mrf.mxu0
    %7096 = vmatprep.mubr.f32.mxu0 0.0
    %7097 = vmatmul.mubr.f32.gmra.mxu0 %v6787
    %v7098 = vpop.f32.mrf.mxu0
    %v7099 = vadd.f32 0.0, %v7098
    %v7100 = vpop.f32.mrf.mxu0
    %7101 = vmatprep.mubr.f32.mxu0 0.0
    %7102 = vmatmul.mubr.f32.gmra.mxu0 %v6790
    %v7103 = vpop.f32.mrf.mxu0
    %v7104 = vadd.f32 0.0, %v7103
    %v7105 = vpop.f32.mrf.mxu0
    %7106 = vmatprep.mubr.f32.mxu0 0.0
    %7107 = vmatmul.mubr.f32.gmra.mxu0 %v6793
    %v7108 = vpop.f32.mrf.mxu0
    %v7109 = vadd.f32 0.0, %v7108
    %v7110 = vpop.f32.mrf.mxu0
    %7111 = vmatprep.mubr.f32.mxu0 0.0
    %7112 = vmatmul.mubr.f32.gmra.mxu0 %v6796
    %v7113 = vpop.f32.mrf.mxu0
    %v7114 = vadd.f32 0.0, %v7113
    %v7115 = vpop.f32.mrf.mxu0
    %7116 = vmatprep.mubr.f32.mxu0 0.0
    %7117 = vmatmul.mubr.f32.gmra.mxu0 %v6799
    %v7118 = vpop.f32.mrf.mxu0
    %v7119 = vadd.f32 0.0, %v7118
    %v7120 = vpop.f32.mrf.mxu0
    %7121 = vmatprep.mubr.f32.mxu0 0.0
    %7122 = vmatmul.mubr.f32.gmra.mxu0 %v6802
    %v7123 = vpop.f32.mrf.mxu0
    %v7124 = vadd.f32 0.0, %v7123
    %v7125 = vpop.f32.mrf.mxu0
    %7126 = vmatprep.mubr.f32.mxu0 0.0
    %7127 = vmatmul.mubr.f32.gmra.mxu0 %v6805
    %v7128 = vpop.f32.mrf.mxu0
    %v7129 = vadd.f32 0.0, %v7128
    %v7130 = vpop.f32.mrf.mxu0
    %7131 = vmatprep.mubr.f32.mxu0 0.0
    %7132 = vmatmul.mubr.f32.gmra.mxu0 %v6808
    %v7133 = vpop.f32.mrf.mxu0
    %v7134 = vadd.f32 0.0, %v7133
    %v7135 = vpop.f32.mrf.mxu0
    %7136 = vmatprep.mubr.f32.mxu0 0.0
    %7137 = vmatmul.mubr.f32.gmra.mxu0 %v6811
    %v7138 = vpop.f32.mrf.mxu0
    %v7139 = vadd.f32 0.0, %v7138
    %v7140 = vpop.f32.mrf.mxu0
    %7141 = vmatprep.mubr.f32.mxu0 0.0
    %7142 = vmatmul.mubr.f32.gmra.mxu0 %v6814
    %v7143 = vpop.f32.mrf.mxu0
    %v7144 = vadd.f32 0.0, %v7143
    %v7145 = vpop.f32.mrf.mxu0
    %7146 = vmatprep.mubr.f32.mxu0 0.0
    %7147 = vmatmul.mubr.f32.gmra.mxu0 %v6817
    %v7148 = vpop.f32.mrf.mxu0
    %v7149 = vadd.f32 0.0, %v7148
    %v7150 = vpop.f32.mrf.mxu0
    %7151 = vmatprep.mubr.f32.mxu0 0.0
    %7152 = vmatmul.mubr.f32.gmra.mxu0 %v6820
    %v7153 = vpop.f32.mrf.mxu0
    %v7154 = vadd.f32 0.0, %v7153
    %v7155 = vpop.f32.mrf.mxu0
    %7156 = vmatprep.mubr.f32.mxu0 0.0
    %7157 = vmatmul.mubr.f32.gmra.mxu0 %v6823
    %v7158 = vpop.f32.mrf.mxu0
    %v7159 = vadd.f32 0.0, %v7158
    %v7160 = vpop.f32.mrf.mxu0
    %7161 = vmatprep.mubr.f32.mxu0 0.0
    %7162 = vmatmul.mubr.f32.gmra.mxu0 %v6826
    %v7163 = vpop.f32.mrf.mxu0
    %v7164 = vadd.f32 0.0, %v7163
    %v7165 = vpop.f32.mrf.mxu0
    %7166 = vmatprep.mubr.f32.mxu0 0.0
    %7167 = vmatmul.mubr.f32.gmra.mxu0 %v6829
    %v7168 = vpop.f32.mrf.mxu0
    %v7169 = vadd.f32 0.0, %v7168
    %v7170 = vpop.f32.mrf.mxu0
    %7171 = vmatprep.mubr.f32.mxu0 0.0
    %7172 = vmatmul.mubr.f32.gmra.mxu0 %v6832
    %v7173 = vpop.f32.mrf.mxu0
    %v7174 = vadd.f32 0.0, %v7173
    %v7175 = vpop.f32.mrf.mxu0
    %7176 = vmatprep.mubr.f32.mxu0 0.0
    %7177 = vmatmul.mubr.f32.gmra.mxu0 %v6835
    %v7178 = vpop.f32.mrf.mxu0
    %v7179 = vadd.f32 0.0, %v7178
    %v7180 = vpop.f32.mrf.mxu0
    %7181 = vmatprep.mubr.f32.mxu0 0.0
    %7182 = vmatmul.mubr.f32.gmra.mxu0 %v6838
    %v7183 = vpop.f32.mrf.mxu0
    %v7184 = vadd.f32 0.0, %v7183
    %v7185 = vpop.f32.mrf.mxu0
    %7186 = vmatprep.mubr.f32.mxu0 0.0
    %7187 = vmatmul.mubr.f32.gmra.mxu0 %v6841
    %v7188 = vpop.f32.mrf.mxu0
    %v7189 = vadd.f32 0.0, %v7188
    %v7190 = vpop.f32.mrf.mxu0
    %7191 = vmatprep.mubr.f32.mxu0 0.0
    %7192 = vmatmul.mubr.f32.gmra.mxu0 %v6844
    %v7193 = vpop.f32.mrf.mxu0
    %v7194 = vadd.f32 0.0, %v7193
    %v7195 = vpop.f32.mrf.mxu0
    %7196 = vmatprep.mubr.f32.mxu0 0.0
    %7197 = vmatmul.mubr.f32.gmra.mxu0 %v6847
    %v7198 = vpop.f32.mrf.mxu0
    %v7199 = vadd.f32 0.0, %v7198
    %v7200 = vpop.f32.mrf.mxu0
    %7201 = vmatprep.mubr.f32.mxu0 0.0
    %7202 = vmatmul.mubr.f32.gmra.mxu0 %v6850
    %v7203 = vpop.f32.mrf.mxu0
    %v7204 = vadd.f32 0.0, %v7203
    %v7205 = vpop.f32.mrf.mxu0
    %7206 = vmatprep.mubr.f32.mxu0 0.0
    %7207 = vmatmul.mubr.f32.gmra.mxu0 %v6853
    %v7208 = vpop.f32.mrf.mxu0
    %v7209 = vadd.f32 0.0, %v7208
    %v7210 = vpop.f32.mrf.mxu0
    %7211 = vmatprep.mubr.f32.mxu0 0.0
    %7212 = vmatmul.mubr.f32.gmra.mxu0 %v6856
    %v7213 = vpop.f32.mrf.mxu0
    %v7214 = vadd.f32 0.0, %v7213
    %v7215 = vpop.f32.mrf.mxu0
    %7216 = vmatprep.mubr.f32.mxu0 0.0
    %7217 = vmatmul.mubr.f32.gmra.mxu0 %v6859
    %v7218 = vpop.f32.mrf.mxu0
    %v7219 = vadd.f32 0.0, %v7218
    %v7220 = vpop.f32.mrf.mxu0
    %7221 = vmatprep.mubr.f32.mxu0 0.0
    %7222 = vmatmul.mubr.f32.gmra.mxu0 %v6862
    %v7223 = vpop.f32.mrf.mxu0
    %v7224 = vadd.f32 0.0, %v7223
    %v7225 = vpop.f32.mrf.mxu0
    %7226 = vmatprep.mubr.f32.mxu0 0.0
    %7227 = vmatmul.mubr.f32.gmra.mxu0 %v6865
    %v7228 = vpop.f32.mrf.mxu0
    %v7229 = vadd.f32 0.0, %v7228
    %v7230 = vpop.f32.mrf.mxu0
    %7231 = vmatprep.mubr.f32.mxu0 0.0
    %7232 = vmatmul.mubr.f32.gmra.mxu0 %v6868
    %v7233 = vpop.f32.mrf.mxu0
    %v7234 = vadd.f32 0.0, %v7233
    %v7235 = vpop.f32.mrf.mxu0
    %7236 = vmatprep.mubr.f32.mxu0 0.0
    %7237 = vmatmul.mubr.f32.gmra.mxu0 %v6871
    %v7238 = vpop.f32.mrf.mxu0
    %v7239 = vadd.f32 0.0, %v7238
    %v7240 = vpop.f32.mrf.mxu0
    %7241 = vmatprep.mubr.f32.mxu0 0.0
    %7242 = vmatmul.mubr.f32.gmra.mxu0 %v6874
    %v7243 = vpop.f32.mrf.mxu0
    %v7244 = vadd.f32 0.0, %v7243
    %v7245 = vpop.f32.mrf.mxu0
    %7246 = vmatprep.mubr.f32.mxu0 0.0
    %7247 = vmatmul.mubr.f32.gmra.mxu0 %v6877
    %v7248 = vpop.f32.mrf.mxu0
    %v7249 = vadd.f32 0.0, %v7248
    %v7250 = vpop.f32.mrf.mxu0
    %7251 = vmatprep.mubr.f32.mxu0 0.0
    %7252 = vmatmul.mubr.f32.gmra.mxu0 %v6880
    %v7253 = vpop.f32.mrf.mxu0
    %v7254 = vadd.f32 0.0, %v7253
    %v7255 = vpop.f32.mrf.mxu0
    %7256 = vmatprep.mubr.f32.mxu0 0.0
    %7257 = vmatmul.mubr.f32.gmra.mxu0 %v6883
    %v7258 = vpop.f32.mrf.mxu0
    %v7259 = vadd.f32 0.0, %v7258
    %v7260 = vpop.f32.mrf.mxu0
    %7261 = vmatprep.mubr.f32.mxu0 0.0
    %7262 = vmatmul.mubr.f32.gmra.mxu0 %v6886
    %v7263 = vpop.f32.mrf.mxu0
    %v7264 = vadd.f32 0.0, %v7263
    %v7265 = vpop.f32.mrf.mxu0
    %7266 = vmatprep.mubr.f32.mxu0 0.0
    %7267 = vmatmul.mubr.f32.gmra.mxu0 %v6889
    %v7268 = vpop.f32.mrf.mxu0
    %v7269 = vadd.f32 0.0, %v7268
    %v7270 = vpop.f32.mrf.mxu0
    %7271 = vmatprep.mubr.f32.mxu0 0.0
    %7272 = vmatmul.mubr.f32.gmra.mxu0 %v6892
    %v7273 = vpop.f32.mrf.mxu0
    %v7274 = vadd.f32 0.0, %v7273
    %v7275 = vpop.f32.mrf.mxu0
    %7276 = vmatprep.mubr.f32.mxu0 0.0
    %7277 = vmatmul.mubr.f32.gmra.mxu0 %v6895
    %v7278 = vpop.f32.mrf.mxu0
    %v7279 = vadd.f32 0.0, %v7278
    %v7280 = vpop.f32.mrf.mxu0
    %7281 = vdwg.mxu0
    %vm7282 = vcmp.gt.f32.partialorder %v6964, 0.0
    %vm7283 = vcmp.gt.f32.partialorder %v6969, 0.0
    %vm7284 = vcmp.gt.f32.partialorder %v6974, 0.0
    %vm7285 = vcmp.gt.f32.partialorder %v6979, 0.0
    %vm7286 = vcmp.gt.f32.partialorder %v6984, 0.0
    %vm7287 = vcmp.gt.f32.partialorder %v6989, 0.0
    %vm7288 = vcmp.gt.f32.partialorder %v6994, 0.0
    %vm7289 = vcmp.gt.f32.partialorder %v6999, 0.0
    %vm7290 = vcmp.gt.f32.partialorder %v7004, 0.0
    %vm7291 = vcmp.gt.f32.partialorder %v7009, 0.0
    %vm7292 = vcmp.gt.f32.partialorder %v7014, 0.0
    %vm7293 = vcmp.gt.f32.partialorder %v7019, 0.0
    %vm7294 = vcmp.gt.f32.partialorder %v7024, 0.0
    %vm7295 = vcmp.gt.f32.partialorder %v7029, 0.0
    %vm7296 = vcmp.gt.f32.partialorder %v7034, 0.0
    %vm7297 = vcmp.gt.f32.partialorder %v7039, 0.0
    %vm7298 = vcmp.gt.f32.partialorder %v7044, 0.0
    %vm7299 = vcmp.gt.f32.partialorder %v7049, 0.0
    %vm7300 = vcmp.gt.f32.partialorder %v7054, 0.0
    %vm7301 = vcmp.gt.f32.partialorder %v7059, 0.0
    %vm7302 = vcmp.gt.f32.partialorder %v7064, 0.0
    %vm7303 = vcmp.gt.f32.partialorder %v7069, 0.0
    %vm7304 = vcmp.gt.f32.partialorder %v7074, 0.0
    %vm7305 = vcmp.gt.f32.partialorder %v7079, 0.0
    %vm7306 = vcmp.gt.f32.partialorder %v7084, 0.0
    %vm7307 = vcmp.gt.f32.partialorder %v7089, 0.0
    %vm7308 = vcmp.gt.f32.partialorder %v7094, 0.0
    %vm7309 = vcmp.gt.f32.partialorder %v7099, 0.0
    %vm7310 = vcmp.gt.f32.partialorder %v7104, 0.0
    %vm7311 = vcmp.gt.f32.partialorder %v7109, 0.0
    %vm7312 = vcmp.gt.f32.partialorder %v7114, 0.0
    %vm7313 = vcmp.gt.f32.partialorder %v7119, 0.0
    %vm7314 = vcmp.gt.f32.partialorder %v7124, 0.0
    %vm7315 = vcmp.gt.f32.partialorder %v7129, 0.0
    %vm7316 = vcmp.gt.f32.partialorder %v7134, 0.0
    %vm7317 = vcmp.gt.f32.partialorder %v7139, 0.0
    %vm7318 = vcmp.gt.f32.partialorder %v7144, 0.0
    %vm7319 = vcmp.gt.f32.partialorder %v7149, 0.0
    %vm7320 = vcmp.gt.f32.partialorder %v7154, 0.0
    %vm7321 = vcmp.gt.f32.partialorder %v7159, 0.0
    %vm7322 = vcmp.gt.f32.partialorder %v7164, 0.0
    %vm7323 = vcmp.gt.f32.partialorder %v7169, 0.0
    %vm7324 = vcmp.gt.f32.partialorder %v7174, 0.0
    %vm7325 = vcmp.gt.f32.partialorder %v7179, 0.0
    %vm7326 = vcmp.gt.f32.partialorder %v7184, 0.0
    %vm7327 = vcmp.gt.f32.partialorder %v7189, 0.0
    %vm7328 = vcmp.gt.f32.partialorder %v7194, 0.0
    %vm7329 = vcmp.gt.f32.partialorder %v7199, 0.0
    %vm7330 = vcmp.gt.f32.partialorder %v7204, 0.0
    %vm7331 = vcmp.gt.f32.partialorder %v7209, 0.0
    %vm7332 = vcmp.gt.f32.partialorder %v7214, 0.0
    %vm7333 = vcmp.gt.f32.partialorder %v7219, 0.0
    %vm7334 = vcmp.gt.f32.partialorder %v7224, 0.0
    %vm7335 = vcmp.gt.f32.partialorder %v7229, 0.0
    %vm7336 = vcmp.gt.f32.partialorder %v7234, 0.0
    %vm7337 = vcmp.gt.f32.partialorder %v7239, 0.0
    %vm7338 = vcmp.gt.f32.partialorder %v7244, 0.0
    %vm7339 = vcmp.gt.f32.partialorder %v7249, 0.0
    %vm7340 = vcmp.gt.f32.partialorder %v7254, 0.0
    %vm7341 = vcmp.gt.f32.partialorder %v7259, 0.0
    %vm7342 = vcmp.gt.f32.partialorder %v7264, 0.0
    %vm7343 = vcmp.gt.f32.partialorder %v7269, 0.0
    %vm7344 = vcmp.gt.f32.partialorder %v7274, 0.0
    %vm7345 = vcmp.gt.f32.partialorder %v7279, 0.0
    %v7346 = vmul.f32 %v6964, 0.01
    %v7347 = vmul.f32 %v6969, 0.01
    %v7348 = vmul.f32 %v6974, 0.01
    %v7349 = vmul.f32 %v6979, 0.01
    %v7350 = vmul.f32 %v6984, 0.01
    %v7351 = vmul.f32 %v6989, 0.01
    %v7352 = vmul.f32 %v6994, 0.01
    %v7353 = vmul.f32 %v6999, 0.01
    %v7354 = vmul.f32 %v7004, 0.01
    %v7355 = vmul.f32 %v7009, 0.01
    %v7356 = vmul.f32 %v7014, 0.01
    %v7357 = vmul.f32 %v7019, 0.01
    %v7358 = vmul.f32 %v7024, 0.01
    %v7359 = vmul.f32 %v7029, 0.01
    %v7360 = vmul.f32 %v7034, 0.01
    %v7361 = vmul.f32 %v7039, 0.01
    %v7362 = vmul.f32 %v7044, 0.01
    %v7363 = vmul.f32 %v7049, 0.01
    %v7364 = vmul.f32 %v7054, 0.01
    %v7365 = vmul.f32 %v7059, 0.01
    %v7366 = vmul.f32 %v7064, 0.01
    %v7367 = vmul.f32 %v7069, 0.01
    %v7368 = vmul.f32 %v7074, 0.01
    %v7369 = vmul.f32 %v7079, 0.01
    %v7370 = vmul.f32 %v7084, 0.01
    %v7371 = vmul.f32 %v7089, 0.01
    %v7372 = vmul.f32 %v7094, 0.01
    %v7373 = vmul.f32 %v7099, 0.01
    %v7374 = vmul.f32 %v7104, 0.01
    %v7375 = vmul.f32 %v7109, 0.01
    %v7376 = vmul.f32 %v7114, 0.01
    %v7377 = vmul.f32 %v7119, 0.01
    %v7378 = vmul.f32 %v7124, 0.01
    %v7379 = vmul.f32 %v7129, 0.01
    %v7380 = vmul.f32 %v7134, 0.01
    %v7381 = vmul.f32 %v7139, 0.01
    %v7382 = vmul.f32 %v7144, 0.01
    %v7383 = vmul.f32 %v7149, 0.01
    %v7384 = vmul.f32 %v7154, 0.01
    %v7385 = vmul.f32 %v7159, 0.01
    %v7386 = vmul.f32 %v7164, 0.01
    %v7387 = vmul.f32 %v7169, 0.01
    %v7388 = vmul.f32 %v7174, 0.01
    %v7389 = vmul.f32 %v7179, 0.01
    %v7390 = vmul.f32 %v7184, 0.01
    %v7391 = vmul.f32 %v7189, 0.01
    %v7392 = vmul.f32 %v7194, 0.01
    %v7393 = vmul.f32 %v7199, 0.01
    %v7394 = vmul.f32 %v7204, 0.01
    %v7395 = vmul.f32 %v7209, 0.01
    %v7396 = vmul.f32 %v7214, 0.01
    %v7397 = vmul.f32 %v7219, 0.01
    %v7398 = vmul.f32 %v7224, 0.01
    %v7399 = vmul.f32 %v7229, 0.01
    %v7400 = vmul.f32 %v7234, 0.01
    %v7401 = vmul.f32 %v7239, 0.01
    %v7402 = vmul.f32 %v7244, 0.01
    %v7403 = vmul.f32 %v7249, 0.01
    %v7404 = vmul.f32 %v7254, 0.01
    %v7405 = vmul.f32 %v7259, 0.01
    %v7406 = vmul.f32 %v7264, 0.01
    %v7407 = vmul.f32 %v7269, 0.01
    %v7408 = vmul.f32 %v7274, 0.01
    %v7409 = vmul.f32 %v7279, 0.01
    %v7410 = vsel %vm7282, %v6964, %v7346
    %v7411 = vsel %vm7283, %v6969, %v7347
    %v7412 = vsel %vm7284, %v6974, %v7348
    %v7413 = vsel %vm7285, %v6979, %v7349
    %v7414 = vsel %vm7286, %v6984, %v7350
    %v7415 = vsel %vm7287, %v6989, %v7351
    %v7416 = vsel %vm7288, %v6994, %v7352
    %v7417 = vsel %vm7289, %v6999, %v7353
    %v7418 = vsel %vm7290, %v7004, %v7354
    %v7419 = vsel %vm7291, %v7009, %v7355
    %v7420 = vsel %vm7292, %v7014, %v7356
    %v7421 = vsel %vm7293, %v7019, %v7357
    %v7422 = vsel %vm7294, %v7024, %v7358
    %v7423 = vsel %vm7295, %v7029, %v7359
    %v7424 = vsel %vm7296, %v7034, %v7360
    %v7425 = vsel %vm7297, %v7039, %v7361
    %v7426 = vsel %vm7298, %v7044, %v7362
    %v7427 = vsel %vm7299, %v7049, %v7363
    %v7428 = vsel %vm7300, %v7054, %v7364
    %v7429 = vsel %vm7301, %v7059, %v7365
    %v7430 = vsel %vm7302, %v7064, %v7366
    %v7431 = vsel %vm7303, %v7069, %v7367
    %v7432 = vsel %vm7304, %v7074, %v7368
    %v7433 = vsel %vm7305, %v7079, %v7369
    %v7434 = vsel %vm7306, %v7084, %v7370
    %v7435 = vsel %vm7307, %v7089, %v7371
    %v7436 = vsel %vm7308, %v7094, %v7372
    %v7437 = vsel %vm7309, %v7099, %v7373
    %v7438 = vsel %vm7310, %v7104, %v7374
    %v7439 = vsel %vm7311, %v7109, %v7375
    %v7440 = vsel %vm7312, %v7114, %v7376
    %v7441 = vsel %vm7313, %v7119, %v7377
    %v7442 = vsel %vm7314, %v7124, %v7378
    %v7443 = vsel %vm7315, %v7129, %v7379
    %v7444 = vsel %vm7316, %v7134, %v7380
    %v7445 = vsel %vm7317, %v7139, %v7381
    %v7446 = vsel %vm7318, %v7144, %v7382
    %v7447 = vsel %vm7319, %v7149, %v7383
    %v7448 = vsel %vm7320, %v7154, %v7384
    %v7449 = vsel %vm7321, %v7159, %v7385
    %v7450 = vsel %vm7322, %v7164, %v7386
    %v7451 = vsel %vm7323, %v7169, %v7387
    %v7452 = vsel %vm7324, %v7174, %v7388
    %v7453 = vsel %vm7325, %v7179, %v7389
    %v7454 = vsel %vm7326, %v7184, %v7390
    %v7455 = vsel %vm7327, %v7189, %v7391
    %v7456 = vsel %vm7328, %v7194, %v7392
    %v7457 = vsel %vm7329, %v7199, %v7393
    %v7458 = vsel %vm7330, %v7204, %v7394
    %v7459 = vsel %vm7331, %v7209, %v7395
    %v7460 = vsel %vm7332, %v7214, %v7396
    %v7461 = vsel %vm7333, %v7219, %v7397
    %v7462 = vsel %vm7334, %v7224, %v7398
    %v7463 = vsel %vm7335, %v7229, %v7399
    %v7464 = vsel %vm7336, %v7234, %v7400
    %v7465 = vsel %vm7337, %v7239, %v7401
    %v7466 = vsel %vm7338, %v7244, %v7402
    %v7467 = vsel %vm7339, %v7249, %v7403
    %v7468 = vsel %vm7340, %v7254, %v7404
    %v7469 = vsel %vm7341, %v7259, %v7405
    %v7470 = vsel %vm7342, %v7264, %v7406
    %v7471 = vsel %vm7343, %v7269, %v7407
    %v7472 = vsel %vm7344, %v7274, %v7408
    %v7473 = vsel %vm7345, %v7279, %v7409
    %v7474 = vld [vmem:[%s12] sm:$0xff]
    %v7475 = vld [vmem:[%s12 + $0x8] sm:$0xff]
    %v7476 = vld [vmem:[%s12 + $0x10] sm:$0xff]
    %v7477 = vld [vmem:[%s12 + $0x18] sm:$0xff]
    %v7478 = vld [vmem:[%s12 + $0x20] sm:$0xff]
    %v7479 = vld [vmem:[%s12 + $0x28] sm:$0xff]
    %v7480 = vld [vmem:[%s12 + $0x30] sm:$0xff]
    %v7481 = vld [vmem:[%s12 + $0x38] sm:$0xff]
    %v7483 = vsel %vm806, %v6637, 0
    %v7486 = vsel %vm806, %v6638, 0
    %v7489 = vsel %vm806, %v6639, 0
    %v7492 = vsel %vm806, %v6640, 0
    %v7495 = vsel %vm806, %v6641, 0
    %v7498 = vsel %vm806, %v6642, 0
    %v7501 = vsel %vm806, %v6643, 0
    %v7504 = vsel %vm806, %v6644, 0
    %v7507 = vsel %vm806, %v6645, 0
    %v7510 = vsel %vm806, %v6646, 0
    %v7513 = vsel %vm806, %v6647, 0
    %v7516 = vsel %vm806, %v6648, 0
    %v7519 = vsel %vm806, %v6649, 0
    %v7522 = vsel %vm806, %v6650, 0
    %v7525 = vsel %vm806, %v6651, 0
    %v7528 = vsel %vm806, %v6652, 0
    %v7531 = vsel %vm806, %v6653, 0
    %v7534 = vsel %vm806, %v6654, 0
    %v7537 = vsel %vm806, %v6655, 0
    %v7540 = vsel %vm806, %v6656, 0
    %v7543 = vsel %vm806, %v6657, 0
    %v7546 = vsel %vm806, %v6658, 0
    %v7549 = vsel %vm806, %v6659, 0
    %v7552 = vsel %vm806, %v6660, 0
    %v7555 = vsel %vm806, %v6661, 0
    %v7558 = vsel %vm806, %v6662, 0
    %v7561 = vsel %vm806, %v6663, 0
    %v7564 = vsel %vm806, %v6664, 0
    %v7567 = vsel %vm806, %v6665, 0
    %v7570 = vsel %vm806, %v6666, 0
    %v7573 = vsel %vm806, %v6667, 0
    %v7576 = vsel %vm806, %v6668, 0
    %v7579 = vsel %vm806, %v6669, 0
    %v7582 = vsel %vm806, %v6670, 0
    %v7585 = vsel %vm806, %v6671, 0
    %v7588 = vsel %vm806, %v6672, 0
    %v7591 = vsel %vm806, %v6673, 0
    %v7594 = vsel %vm806, %v6674, 0
    %v7597 = vsel %vm806, %v6675, 0
    %v7600 = vsel %vm806, %v6676, 0
    %v7603 = vsel %vm806, %v6677, 0
    %v7606 = vsel %vm806, %v6678, 0
    %v7609 = vsel %vm806, %v6679, 0
    %v7612 = vsel %vm806, %v6680, 0
    %v7615 = vsel %vm806, %v6681, 0
    %v7618 = vsel %vm806, %v6682, 0
    %v7621 = vsel %vm806, %v6683, 0
    %v7624 = vsel %vm806, %v6684, 0
    %v7627 = vsel %vm806, %v6685, 0
    %v7630 = vsel %vm806, %v6686, 0
    %v7633 = vsel %vm806, %v6687, 0
    %v7636 = vsel %vm806, %v6688, 0
    %v7639 = vsel %vm806, %v6689, 0
    %v7642 = vsel %vm806, %v6690, 0
    %v7645 = vsel %vm806, %v6691, 0
    %v7648 = vsel %vm806, %v6692, 0
    %v7651 = vsel %vm806, %v6693, 0
    %v7654 = vsel %vm806, %v6694, 0
    %v7657 = vsel %vm806, %v6695, 0
    %v7660 = vsel %vm806, %v6696, 0
    %v7663 = vsel %vm806, %v6697, 0
    %v7666 = vsel %vm806, %v6698, 0
    %v7669 = vsel %vm806, %v6699, 0
    %v7672 = vsel %vm806, %v6700, 0
    %7674 = vmatprep.subr.mxu0 0.0
    %7675 = vmatpush1.msra.mxu0 0.0
    %7676 = vmatprep.subr.mxu0 0.0
    %7677 = vmatpush1.msra.mxu0 0.0
    %7678 = vmatprep.subr.mxu0 0.0
    %7679 = vmatpush1.msra.mxu0 0.0
    %7680 = vmatprep.subr.mxu0 0.0
    %7681 = vmatpush1.msra.mxu0 0.0
    %7682 = vmatprep.subr.mxu0 0.0
    %7683 = vmatpush1.msra.mxu0 0.0
    %7684 = vmatprep.subr.mxu0 0.0
    %7685 = vmatpush1.msra.mxu0 0.0
    %7686 = vmatprep.subr.mxu0 0.0
    %7687 = vmatpush1.msra.mxu0 0.0
    %7688 = vmatprep.subr.mxu0 0.0
    %7689 = vmatpush1.msra.mxu0 0.0
    %7690 = vmatprep.subr.mxu0 0.0
    %7691 = vmatpush1.msra.mxu0 0.0
    %7692 = vmatprep.subr.mxu0 0.0
    %7693 = vmatpush1.msra.mxu0 0.0
    %7694 = vmatprep.subr.mxu0 0.0
    %7695 = vmatpush1.msra.mxu0 0.0
    %7696 = vmatprep.subr.mxu0 0.0
    %7697 = vmatpush1.msra.mxu0 0.0
    %7698 = vmatprep.subr.mxu0 0.0
    %7699 = vmatpush1.msra.mxu0 %v7481
    %7700 = vmatprep.subr.mxu0 0.0
    %7701 = vmatpush1.msra.mxu0 %v7480
    %7702 = vmatprep.subr.mxu0 0.0
    %7703 = vmatpush1.msra.mxu0 %v7479
    %7704 = vmatprep.subr.mxu0 0.0
    %7705 = vmatpush1.msra.mxu0 %v7478
    %7706 = vmatprep.subr.mxu0 0.0
    %7707 = vmatpush2.msra.mxu0 0.0
    %7708 = vmatprep.subr.mxu0 0.0
    %7709 = vmatpush2.msra.mxu0 0.0
    %7710 = vmatprep.subr.mxu0 0.0
    %7711 = vmatpush2.msra.mxu0 0.0
    %7712 = vmatprep.subr.mxu0 0.0
    %7713 = vmatpush2.msra.mxu0 0.0
    %7714 = vmatprep.subr.mxu0 0.0
    %7715 = vmatpush2.msra.mxu0 0.0
    %7716 = vmatprep.subr.mxu0 0.0
    %7717 = vmatpush2.msra.mxu0 0.0
    %7718 = vmatprep.subr.mxu0 0.0
    %7719 = vmatpush2.msra.mxu0 0.0
    %7720 = vmatprep.subr.mxu0 0.0
    %7721 = vmatpush2.msra.mxu0 0.0
    %7722 = vmatprep.subr.mxu0 0.0
    %7723 = vmatpush2.msra.mxu0 0.0
    %7724 = vmatprep.subr.mxu0 0.0
    %7725 = vmatpush2.msra.mxu0 0.0
    %7726 = vmatprep.subr.mxu0 0.0
    %7727 = vmatpush2.msra.mxu0 0.0
    %7728 = vmatprep.subr.mxu0 0.0
    %7729 = vmatpush2.msra.mxu0 0.0
    %7730 = vmatprep.subr.mxu0 0.0
    %7731 = vmatpush2.msra.mxu0 0.0
    %7732 = vmatprep.subr.mxu0 0.0
    %7733 = vmatpush2.msra.mxu0 0.0
    %7734 = vmatprep.subr.mxu0 0.0
    %7735 = vmatpush2.msra.mxu0 0.0
    %7736 = vmatprep.subr.mxu0 0.0
    %7737 = vmatpush2.msra.mxu0 0.0
    %7738 = vmatprep.mubr.f32.mxu0 0.0
    %7739 = vmatmul.mubr.f32.gmra.mxu0 %v7483
    %v7740 = vpop.f32.mrf.mxu0
    %v7741 = vadd.f32 0.0, %v7740
    %v7742 = vpop.f32.mrf.mxu0
    %7743 = vmatprep.mubr.f32.mxu0 0.0
    %7744 = vmatmul.mubr.f32.gmra.mxu0 %v7486
    %v7745 = vpop.f32.mrf.mxu0
    %v7746 = vadd.f32 0.0, %v7745
    %v7747 = vpop.f32.mrf.mxu0
    %7748 = vmatprep.mubr.f32.mxu0 0.0
    %7749 = vmatmul.mubr.f32.gmra.mxu0 %v7489
    %v7750 = vpop.f32.mrf.mxu0
    %v7751 = vadd.f32 0.0, %v7750
    %v7752 = vpop.f32.mrf.mxu0
    %7753 = vmatprep.mubr.f32.mxu0 0.0
    %7754 = vmatmul.mubr.f32.gmra.mxu0 %v7492
    %v7755 = vpop.f32.mrf.mxu0
    %v7756 = vadd.f32 0.0, %v7755
    %v7757 = vpop.f32.mrf.mxu0
    %7758 = vmatprep.mubr.f32.mxu0 0.0
    %7759 = vmatmul.mubr.f32.gmra.mxu0 %v7495
    %v7760 = vpop.f32.mrf.mxu0
    %v7761 = vadd.f32 0.0, %v7760
    %v7762 = vpop.f32.mrf.mxu0
    %7763 = vmatprep.mubr.f32.mxu0 0.0
    %7764 = vmatmul.mubr.f32.gmra.mxu0 %v7498
    %v7765 = vpop.f32.mrf.mxu0
    %v7766 = vadd.f32 0.0, %v7765
    %v7767 = vpop.f32.mrf.mxu0
    %7768 = vmatprep.mubr.f32.mxu0 0.0
    %7769 = vmatmul.mubr.f32.gmra.mxu0 %v7501
    %v7770 = vpop.f32.mrf.mxu0
    %v7771 = vadd.f32 0.0, %v7770
    %v7772 = vpop.f32.mrf.mxu0
    %7773 = vmatprep.mubr.f32.mxu0 0.0
    %7774 = vmatmul.mubr.f32.gmra.mxu0 %v7504
    %v7775 = vpop.f32.mrf.mxu0
    %v7776 = vadd.f32 0.0, %v7775
    %v7777 = vpop.f32.mrf.mxu0
    %7778 = vmatprep.mubr.f32.mxu0 0.0
    %7779 = vmatmul.mubr.f32.gmra.mxu0 %v7507
    %v7780 = vpop.f32.mrf.mxu0
    %v7781 = vadd.f32 0.0, %v7780
    %v7782 = vpop.f32.mrf.mxu0
    %7783 = vmatprep.mubr.f32.mxu0 0.0
    %7784 = vmatmul.mubr.f32.gmra.mxu0 %v7510
    %v7785 = vpop.f32.mrf.mxu0
    %v7786 = vadd.f32 0.0, %v7785
    %v7787 = vpop.f32.mrf.mxu0
    %7788 = vmatprep.mubr.f32.mxu0 0.0
    %7789 = vmatmul.mubr.f32.gmra.mxu0 %v7513
    %v7790 = vpop.f32.mrf.mxu0
    %v7791 = vadd.f32 0.0, %v7790
    %v7792 = vpop.f32.mrf.mxu0
    %7793 = vmatprep.mubr.f32.mxu0 0.0
    %7794 = vmatmul.mubr.f32.gmra.mxu0 %v7516
    %v7795 = vpop.f32.mrf.mxu0
    %v7796 = vadd.f32 0.0, %v7795
    %v7797 = vpop.f32.mrf.mxu0
    %7798 = vmatprep.mubr.f32.mxu0 0.0
    %7799 = vmatmul.mubr.f32.gmra.mxu0 %v7519
    %v7800 = vpop.f32.mrf.mxu0
    %v7801 = vadd.f32 0.0, %v7800
    %v7802 = vpop.f32.mrf.mxu0
    %7803 = vmatprep.mubr.f32.mxu0 0.0
    %7804 = vmatmul.mubr.f32.gmra.mxu0 %v7522
    %v7805 = vpop.f32.mrf.mxu0
    %v7806 = vadd.f32 0.0, %v7805
    %v7807 = vpop.f32.mrf.mxu0
    %7808 = vmatprep.mubr.f32.mxu0 0.0
    %7809 = vmatmul.mubr.f32.gmra.mxu0 %v7525
    %v7810 = vpop.f32.mrf.mxu0
    %v7811 = vadd.f32 0.0, %v7810
    %v7812 = vpop.f32.mrf.mxu0
    %7813 = vmatprep.mubr.f32.mxu0 0.0
    %7814 = vmatmul.mubr.f32.gmra.mxu0 %v7528
    %v7815 = vpop.f32.mrf.mxu0
    %v7816 = vadd.f32 0.0, %v7815
    %v7817 = vpop.f32.mrf.mxu0
    %7818 = vmatprep.mubr.f32.mxu0 0.0
    %7819 = vmatmul.mubr.f32.gmra.mxu0 %v7531
    %v7820 = vpop.f32.mrf.mxu0
    %v7821 = vadd.f32 0.0, %v7820
    %v7822 = vpop.f32.mrf.mxu0
    %7823 = vmatprep.mubr.f32.mxu0 0.0
    %7824 = vmatmul.mubr.f32.gmra.mxu0 %v7534
    %v7825 = vpop.f32.mrf.mxu0
    %v7826 = vadd.f32 0.0, %v7825
    %v7827 = vpop.f32.mrf.mxu0
    %7828 = vmatprep.mubr.f32.mxu0 0.0
    %7829 = vmatmul.mubr.f32.gmra.mxu0 %v7537
    %v7830 = vpop.f32.mrf.mxu0
    %v7831 = vadd.f32 0.0, %v7830
    %v7832 = vpop.f32.mrf.mxu0
    %7833 = vmatprep.mubr.f32.mxu0 0.0
    %7834 = vmatmul.mubr.f32.gmra.mxu0 %v7540
    %v7835 = vpop.f32.mrf.mxu0
    %v7836 = vadd.f32 0.0, %v7835
    %v7837 = vpop.f32.mrf.mxu0
    %7838 = vmatprep.mubr.f32.mxu0 0.0
    %7839 = vmatmul.mubr.f32.gmra.mxu0 %v7543
    %v7840 = vpop.f32.mrf.mxu0
    %v7841 = vadd.f32 0.0, %v7840
    %v7842 = vpop.f32.mrf.mxu0
    %7843 = vmatprep.mubr.f32.mxu0 0.0
    %7844 = vmatmul.mubr.f32.gmra.mxu0 %v7546
    %v7845 = vpop.f32.mrf.mxu0
    %v7846 = vadd.f32 0.0, %v7845
    %v7847 = vpop.f32.mrf.mxu0
    %7848 = vmatprep.mubr.f32.mxu0 0.0
    %7849 = vmatmul.mubr.f32.gmra.mxu0 %v7549
    %v7850 = vpop.f32.mrf.mxu0
    %v7851 = vadd.f32 0.0, %v7850
    %v7852 = vpop.f32.mrf.mxu0
    %7853 = vmatprep.mubr.f32.mxu0 0.0
    %7854 = vmatmul.mubr.f32.gmra.mxu0 %v7552
    %v7855 = vpop.f32.mrf.mxu0
    %v7856 = vadd.f32 0.0, %v7855
    %v7857 = vpop.f32.mrf.mxu0
    %7858 = vmatprep.mubr.f32.mxu0 0.0
    %7859 = vmatmul.mubr.f32.gmra.mxu0 %v7555
    %v7860 = vpop.f32.mrf.mxu0
    %v7861 = vadd.f32 0.0, %v7860
    %v7862 = vpop.f32.mrf.mxu0
    %7863 = vmatprep.mubr.f32.mxu0 0.0
    %7864 = vmatmul.mubr.f32.gmra.mxu0 %v7558
    %v7865 = vpop.f32.mrf.mxu0
    %v7866 = vadd.f32 0.0, %v7865
    %v7867 = vpop.f32.mrf.mxu0
    %7868 = vmatprep.mubr.f32.mxu0 0.0
    %7869 = vmatmul.mubr.f32.gmra.mxu0 %v7561
    %v7870 = vpop.f32.mrf.mxu0
    %v7871 = vadd.f32 0.0, %v7870
    %v7872 = vpop.f32.mrf.mxu0
    %7873 = vmatprep.mubr.f32.mxu0 0.0
    %7874 = vmatmul.mubr.f32.gmra.mxu0 %v7564
    %v7875 = vpop.f32.mrf.mxu0
    %v7876 = vadd.f32 0.0, %v7875
    %v7877 = vpop.f32.mrf.mxu0
    %7878 = vmatprep.mubr.f32.mxu0 0.0
    %7879 = vmatmul.mubr.f32.gmra.mxu0 %v7567
    %v7880 = vpop.f32.mrf.mxu0
    %v7881 = vadd.f32 0.0, %v7880
    %v7882 = vpop.f32.mrf.mxu0
    %7883 = vmatprep.mubr.f32.mxu0 0.0
    %7884 = vmatmul.mubr.f32.gmra.mxu0 %v7570
    %v7885 = vpop.f32.mrf.mxu0
    %v7886 = vadd.f32 0.0, %v7885
    %v7887 = vpop.f32.mrf.mxu0
    %7888 = vmatprep.mubr.f32.mxu0 0.0
    %7889 = vmatmul.mubr.f32.gmra.mxu0 %v7573
    %v7890 = vpop.f32.mrf.mxu0
    %v7891 = vadd.f32 0.0, %v7890
    %v7892 = vpop.f32.mrf.mxu0
    %7893 = vmatprep.mubr.f32.mxu0 0.0
    %7894 = vmatmul.mubr.f32.gmra.mxu0 %v7576
    %v7895 = vpop.f32.mrf.mxu0
    %v7896 = vadd.f32 0.0, %v7895
    %v7897 = vpop.f32.mrf.mxu0
    %7898 = vmatprep.mubr.f32.mxu0 0.0
    %7899 = vmatmul.mubr.f32.gmra.mxu0 %v7579
    %v7900 = vpop.f32.mrf.mxu0
    %v7901 = vadd.f32 0.0, %v7900
    %v7902 = vpop.f32.mrf.mxu0
    %7903 = vmatprep.mubr.f32.mxu0 0.0
    %7904 = vmatmul.mubr.f32.gmra.mxu0 %v7582
    %v7905 = vpop.f32.mrf.mxu0
    %v7906 = vadd.f32 0.0, %v7905
    %v7907 = vpop.f32.mrf.mxu0
    %7908 = vmatprep.mubr.f32.mxu0 0.0
    %7909 = vmatmul.mubr.f32.gmra.mxu0 %v7585
    %v7910 = vpop.f32.mrf.mxu0
    %v7911 = vadd.f32 0.0, %v7910
    %v7912 = vpop.f32.mrf.mxu0
    %7913 = vmatprep.mubr.f32.mxu0 0.0
    %7914 = vmatmul.mubr.f32.gmra.mxu0 %v7588
    %v7915 = vpop.f32.mrf.mxu0
    %v7916 = vadd.f32 0.0, %v7915
    %v7917 = vpop.f32.mrf.mxu0
    %7918 = vmatprep.mubr.f32.mxu0 0.0
    %7919 = vmatmul.mubr.f32.gmra.mxu0 %v7591
    %v7920 = vpop.f32.mrf.mxu0
    %v7921 = vadd.f32 0.0, %v7920
    %v7922 = vpop.f32.mrf.mxu0
    %7923 = vmatprep.mubr.f32.mxu0 0.0
    %7924 = vmatmul.mubr.f32.gmra.mxu0 %v7594
    %v7925 = vpop.f32.mrf.mxu0
    %v7926 = vadd.f32 0.0, %v7925
    %v7927 = vpop.f32.mrf.mxu0
    %7928 = vmatprep.mubr.f32.mxu0 0.0
    %7929 = vmatmul.mubr.f32.gmra.mxu0 %v7597
    %v7930 = vpop.f32.mrf.mxu0
    %v7931 = vadd.f32 0.0, %v7930
    %v7932 = vpop.f32.mrf.mxu0
    %7933 = vmatprep.mubr.f32.mxu0 0.0
    %7934 = vmatmul.mubr.f32.gmra.mxu0 %v7600
    %v7935 = vpop.f32.mrf.mxu0
    %v7936 = vadd.f32 0.0, %v7935
    %v7937 = vpop.f32.mrf.mxu0
    %7938 = vmatprep.mubr.f32.mxu0 0.0
    %7939 = vmatmul.mubr.f32.gmra.mxu0 %v7603
    %v7940 = vpop.f32.mrf.mxu0
    %v7941 = vadd.f32 0.0, %v7940
    %v7942 = vpop.f32.mrf.mxu0
    %7943 = vmatprep.mubr.f32.mxu0 0.0
    %7944 = vmatmul.mubr.f32.gmra.mxu0 %v7606
    %v7945 = vpop.f32.mrf.mxu0
    %v7946 = vadd.f32 0.0, %v7945
    %v7947 = vpop.f32.mrf.mxu0
    %7948 = vmatprep.mubr.f32.mxu0 0.0
    %7949 = vmatmul.mubr.f32.gmra.mxu0 %v7609
    %v7950 = vpop.f32.mrf.mxu0
    %v7951 = vadd.f32 0.0, %v7950
    %v7952 = vpop.f32.mrf.mxu0
    %7953 = vmatprep.mubr.f32.mxu0 0.0
    %7954 = vmatmul.mubr.f32.gmra.mxu0 %v7612
    %v7955 = vpop.f32.mrf.mxu0
    %v7956 = vadd.f32 0.0, %v7955
    %v7957 = vpop.f32.mrf.mxu0
    %7958 = vmatprep.mubr.f32.mxu0 0.0
    %7959 = vmatmul.mubr.f32.gmra.mxu0 %v7615
    %v7960 = vpop.f32.mrf.mxu0
    %v7961 = vadd.f32 0.0, %v7960
    %v7962 = vpop.f32.mrf.mxu0
    %7963 = vmatprep.mubr.f32.mxu0 0.0
    %7964 = vmatmul.mubr.f32.gmra.mxu0 %v7618
    %v7965 = vpop.f32.mrf.mxu0
    %v7966 = vadd.f32 0.0, %v7965
    %v7967 = vpop.f32.mrf.mxu0
    %7968 = vmatprep.mubr.f32.mxu0 0.0
    %7969 = vmatmul.mubr.f32.gmra.mxu0 %v7621
    %v7970 = vpop.f32.mrf.mxu0
    %v7971 = vadd.f32 0.0, %v7970
    %v7972 = vpop.f32.mrf.mxu0
    %7973 = vmatprep.mubr.f32.mxu0 0.0
    %7974 = vmatmul.mubr.f32.gmra.mxu0 %v7624
    %v7975 = vpop.f32.mrf.mxu0
    %v7976 = vadd.f32 0.0, %v7975
    %v7977 = vpop.f32.mrf.mxu0
    %7978 = vmatprep.mubr.f32.mxu0 0.0
    %7979 = vmatmul.mubr.f32.gmra.mxu0 %v7627
    %v7980 = vpop.f32.mrf.mxu0
    %v7981 = vadd.f32 0.0, %v7980
    %v7982 = vpop.f32.mrf.mxu0
    %7983 = vmatprep.mubr.f32.mxu0 0.0
    %7984 = vmatmul.mubr.f32.gmra.mxu0 %v7630
    %v7985 = vpop.f32.mrf.mxu0
    %v7986 = vadd.f32 0.0, %v7985
    %v7987 = vpop.f32.mrf.mxu0
    %7988 = vmatprep.mubr.f32.mxu0 0.0
    %7989 = vmatmul.mubr.f32.gmra.mxu0 %v7633
    %v7990 = vpop.f32.mrf.mxu0
    %v7991 = vadd.f32 0.0, %v7990
    %v7992 = vpop.f32.mrf.mxu0
    %7993 = vmatprep.mubr.f32.mxu0 0.0
    %7994 = vmatmul.mubr.f32.gmra.mxu0 %v7636
    %v7995 = vpop.f32.mrf.mxu0
    %v7996 = vadd.f32 0.0, %v7995
    %v7997 = vpop.f32.mrf.mxu0
    %7998 = vmatprep.mubr.f32.mxu0 0.0
    %7999 = vmatmul.mubr.f32.gmra.mxu0 %v7639
    %v8000 = vpop.f32.mrf.mxu0
    %v8001 = vadd.f32 0.0, %v8000
    %v8002 = vpop.f32.mrf.mxu0
    %8003 = vmatprep.mubr.f32.mxu0 0.0
    %8004 = vmatmul.mubr.f32.gmra.mxu0 %v7642
    %v8005 = vpop.f32.mrf.mxu0
    %v8006 = vadd.f32 0.0, %v8005
    %v8007 = vpop.f32.mrf.mxu0
    %8008 = vmatprep.mubr.f32.mxu0 0.0
    %8009 = vmatmul.mubr.f32.gmra.mxu0 %v7645
    %v8010 = vpop.f32.mrf.mxu0
    %v8011 = vadd.f32 0.0, %v8010
    %v8012 = vpop.f32.mrf.mxu0
    %8013 = vmatprep.mubr.f32.mxu0 0.0
    %8014 = vmatmul.mubr.f32.gmra.mxu0 %v7648
    %v8015 = vpop.f32.mrf.mxu0
    %v8016 = vadd.f32 0.0, %v8015
    %v8017 = vpop.f32.mrf.mxu0
    %8018 = vmatprep.mubr.f32.mxu0 0.0
    %8019 = vmatmul.mubr.f32.gmra.mxu0 %v7651
    %v8020 = vpop.f32.mrf.mxu0
    %v8021 = vadd.f32 0.0, %v8020
    %v8022 = vpop.f32.mrf.mxu0
    %8023 = vmatprep.mubr.f32.mxu0 0.0
    %8024 = vmatmul.mubr.f32.gmra.mxu0 %v7654
    %v8025 = vpop.f32.mrf.mxu0
    %v8026 = vadd.f32 0.0, %v8025
    %v8027 = vpop.f32.mrf.mxu0
    %8028 = vmatprep.mubr.f32.mxu0 0.0
    %8029 = vmatmul.mubr.f32.gmra.mxu0 %v7657
    %v8030 = vpop.f32.mrf.mxu0
    %v8031 = vadd.f32 0.0, %v8030
    %v8032 = vpop.f32.mrf.mxu0
    %8033 = vmatprep.mubr.f32.mxu0 0.0
    %8034 = vmatmul.mubr.f32.gmra.mxu0 %v7660
    %v8035 = vpop.f32.mrf.mxu0
    %v8036 = vadd.f32 0.0, %v8035
    %v8037 = vpop.f32.mrf.mxu0
    %8038 = vmatprep.mubr.f32.mxu0 0.0
    %8039 = vmatmul.mubr.f32.gmra.mxu0 %v7663
    %v8040 = vpop.f32.mrf.mxu0
    %v8041 = vadd.f32 0.0, %v8040
    %v8042 = vpop.f32.mrf.mxu0
    %8043 = vmatprep.mubr.f32.mxu0 0.0
    %8044 = vmatmul.mubr.f32.gmra.mxu0 %v7666
    %v8045 = vpop.f32.mrf.mxu0
    %v8046 = vadd.f32 0.0, %v8045
    %v8047 = vpop.f32.mrf.mxu0
    %8048 = vmatprep.mubr.f32.mxu0 0.0
    %8049 = vmatmul.mubr.f32.gmra.mxu0 %v7669
    %v8050 = vpop.f32.mrf.mxu0
    %v8051 = vadd.f32 0.0, %v8050
    %v8052 = vpop.f32.mrf.mxu0
    %8053 = vmatprep.mubr.f32.mxu0 0.0
    %8054 = vmatmul.mubr.f32.gmra.mxu0 %v7672
    %v8055 = vpop.f32.mrf.mxu0
    %v8056 = vadd.f32 0.0, %v8055
    %v8057 = vpop.f32.mrf.mxu0
    %8058 = vdwg.mxu0
    %v8060 = vsel %vm806, %v5864, 0
    %v8063 = vsel %vm806, %v5865, 0
    %v8066 = vsel %vm806, %v5866, 0
    %v8069 = vsel %vm806, %v5867, 0
    %v8072 = vsel %vm806, %v5868, 0
    %v8075 = vsel %vm806, %v5869, 0
    %v8078 = vsel %vm806, %v5870, 0
    %v8081 = vsel %vm806, %v5871, 0
    %v8084 = vsel %vm806, %v5872, 0
    %v8087 = vsel %vm806, %v5873, 0
    %v8090 = vsel %vm806, %v5874, 0
    %v8093 = vsel %vm806, %v5875, 0
    %v8096 = vsel %vm806, %v5876, 0
    %v8099 = vsel %vm806, %v5877, 0
    %v8102 = vsel %vm806, %v5878, 0
    %v8105 = vsel %vm806, %v5879, 0
    %v8108 = vsel %vm806, %v5880, 0
    %v8111 = vsel %vm806, %v5881, 0
    %v8114 = vsel %vm806, %v5882, 0
    %v8117 = vsel %vm806, %v5883, 0
    %v8120 = vsel %vm806, %v5884, 0
    %v8123 = vsel %vm806, %v5885, 0
    %v8126 = vsel %vm806, %v5886, 0
    %v8129 = vsel %vm806, %v5887, 0
    %v8132 = vsel %vm806, %v5888, 0
    %v8135 = vsel %vm806, %v5889, 0
    %v8138 = vsel %vm806, %v5890, 0
    %v8141 = vsel %vm806, %v5891, 0
    %v8144 = vsel %vm806, %v5892, 0
    %v8147 = vsel %vm806, %v5893, 0
    %v8150 = vsel %vm806, %v5894, 0
    %v8153 = vsel %vm806, %v5895, 0
    %v8156 = vsel %vm806, %v5896, 0
    %v8159 = vsel %vm806, %v5897, 0
    %v8162 = vsel %vm806, %v5898, 0
    %v8165 = vsel %vm806, %v5899, 0
    %v8168 = vsel %vm806, %v5900, 0
    %v8171 = vsel %vm806, %v5901, 0
    %v8174 = vsel %vm806, %v5902, 0
    %v8177 = vsel %vm806, %v5903, 0
    %v8180 = vsel %vm806, %v5904, 0
    %v8183 = vsel %vm806, %v5905, 0
    %v8186 = vsel %vm806, %v5906, 0
    %v8189 = vsel %vm806, %v5907, 0
    %v8192 = vsel %vm806, %v5908, 0
    %v8195 = vsel %vm806, %v5909, 0
    %v8198 = vsel %vm806, %v5910, 0
    %v8201 = vsel %vm806, %v5911, 0
    %v8204 = vsel %vm806, %v5912, 0
    %v8207 = vsel %vm806, %v5913, 0
    %v8210 = vsel %vm806, %v5914, 0
    %v8213 = vsel %vm806, %v5915, 0
    %v8216 = vsel %vm806, %v5916, 0
    %v8219 = vsel %vm806, %v5917, 0
    %v8222 = vsel %vm806, %v5918, 0
    %v8225 = vsel %vm806, %v5919, 0
    %v8228 = vsel %vm806, %v5920, 0
    %v8231 = vsel %vm806, %v5921, 0
    %v8234 = vsel %vm806, %v5922, 0
    %v8237 = vsel %vm806, %v5923, 0
    %v8240 = vsel %vm806, %v5924, 0
    %v8243 = vsel %vm806, %v5925, 0
    %v8246 = vsel %vm806, %v5926, 0
    %v8249 = vsel %vm806, %v5927, 0
    %8251 = vmatprep.subr.mxu0 0.0
    %8252 = vmatpush1.msra.mxu0 0.0
    %8253 = vmatprep.subr.mxu0 0.0
    %8254 = vmatpush1.msra.mxu0 0.0
    %8255 = vmatprep.subr.mxu0 0.0
    %8256 = vmatpush1.msra.mxu0 0.0
    %8257 = vmatprep.subr.mxu0 0.0
    %8258 = vmatpush1.msra.mxu0 0.0
    %8259 = vmatprep.subr.mxu0 0.0
    %8260 = vmatpush1.msra.mxu0 0.0
    %8261 = vmatprep.subr.mxu0 0.0
    %8262 = vmatpush1.msra.mxu0 0.0
    %8263 = vmatprep.subr.mxu0 0.0
    %8264 = vmatpush1.msra.mxu0 0.0
    %8265 = vmatprep.subr.mxu0 0.0
    %8266 = vmatpush1.msra.mxu0 0.0
    %8267 = vmatprep.subr.mxu0 0.0
    %8268 = vmatpush1.msra.mxu0 0.0
    %8269 = vmatprep.subr.mxu0 0.0
    %8270 = vmatpush1.msra.mxu0 0.0
    %8271 = vmatprep.subr.mxu0 0.0
    %8272 = vmatpush1.msra.mxu0 0.0
    %8273 = vmatprep.subr.mxu0 0.0
    %8274 = vmatpush1.msra.mxu0 0.0
    %8275 = vmatprep.subr.mxu0 0.0
    %8276 = vmatpush1.msra.mxu0 %v7477
    %8277 = vmatprep.subr.mxu0 0.0
    %8278 = vmatpush1.msra.mxu0 %v7476
    %8279 = vmatprep.subr.mxu0 0.0
    %8280 = vmatpush1.msra.mxu0 %v7475
    %8281 = vmatprep.subr.mxu0 0.0
    %8282 = vmatpush1.msra.mxu0 %v7474
    %8283 = vmatprep.subr.mxu0 0.0
    %8284 = vmatpush2.msra.mxu0 0.0
    %8285 = vmatprep.subr.mxu0 0.0
    %8286 = vmatpush2.msra.mxu0 0.0
    %8287 = vmatprep.subr.mxu0 0.0
    %8288 = vmatpush2.msra.mxu0 0.0
    %8289 = vmatprep.subr.mxu0 0.0
    %8290 = vmatpush2.msra.mxu0 0.0
    %8291 = vmatprep.subr.mxu0 0.0
    %8292 = vmatpush2.msra.mxu0 0.0
    %8293 = vmatprep.subr.mxu0 0.0
    %8294 = vmatpush2.msra.mxu0 0.0
    %8295 = vmatprep.subr.mxu0 0.0
    %8296 = vmatpush2.msra.mxu0 0.0
    %8297 = vmatprep.subr.mxu0 0.0
    %8298 = vmatpush2.msra.mxu0 0.0
    %8299 = vmatprep.subr.mxu0 0.0
    %8300 = vmatpush2.msra.mxu0 0.0
    %8301 = vmatprep.subr.mxu0 0.0
    %8302 = vmatpush2.msra.mxu0 0.0
    %8303 = vmatprep.subr.mxu0 0.0
    %8304 = vmatpush2.msra.mxu0 0.0
    %8305 = vmatprep.subr.mxu0 0.0
    %8306 = vmatpush2.msra.mxu0 0.0
    %8307 = vmatprep.subr.mxu0 0.0
    %8308 = vmatpush2.msra.mxu0 0.0
    %8309 = vmatprep.subr.mxu0 0.0
    %8310 = vmatpush2.msra.mxu0 0.0
    %8311 = vmatprep.subr.mxu0 0.0
    %8312 = vmatpush2.msra.mxu0 0.0
    %8313 = vmatprep.subr.mxu0 0.0
    %8314 = vmatpush2.msra.mxu0 0.0
    %8315 = vmatprep.mubr.f32.mxu0 0.0
    %8316 = vmatmul.mubr.f32.gmra.mxu0 %v8060
    %v8317 = vpop.f32.mrf.mxu0
    %v8318 = vadd.f32 %v7741, %v8317
    %v8319 = vpop.f32.mrf.mxu0
    %8320 = vmatprep.mubr.f32.mxu0 0.0
    %8321 = vmatmul.mubr.f32.gmra.mxu0 %v8063
    %v8322 = vpop.f32.mrf.mxu0
    %v8323 = vadd.f32 %v7746, %v8322
    %v8324 = vpop.f32.mrf.mxu0
    %8325 = vmatprep.mubr.f32.mxu0 0.0
    %8326 = vmatmul.mubr.f32.gmra.mxu0 %v8066
    %v8327 = vpop.f32.mrf.mxu0
    %v8328 = vadd.f32 %v7751, %v8327
    %v8329 = vpop.f32.mrf.mxu0
    %8330 = vmatprep.mubr.f32.mxu0 0.0
    %8331 = vmatmul.mubr.f32.gmra.mxu0 %v8069
    %v8332 = vpop.f32.mrf.mxu0
    %v8333 = vadd.f32 %v7756, %v8332
    %v8334 = vpop.f32.mrf.mxu0
    %8335 = vmatprep.mubr.f32.mxu0 0.0
    %8336 = vmatmul.mubr.f32.gmra.mxu0 %v8072
    %v8337 = vpop.f32.mrf.mxu0
    %v8338 = vadd.f32 %v7761, %v8337
    %v8339 = vpop.f32.mrf.mxu0
    %8340 = vmatprep.mubr.f32.mxu0 0.0
    %8341 = vmatmul.mubr.f32.gmra.mxu0 %v8075
    %v8342 = vpop.f32.mrf.mxu0
    %v8343 = vadd.f32 %v7766, %v8342
    %v8344 = vpop.f32.mrf.mxu0
    %8345 = vmatprep.mubr.f32.mxu0 0.0
    %8346 = vmatmul.mubr.f32.gmra.mxu0 %v8078
    %v8347 = vpop.f32.mrf.mxu0
    %v8348 = vadd.f32 %v7771, %v8347
    %v8349 = vpop.f32.mrf.mxu0
    %8350 = vmatprep.mubr.f32.mxu0 0.0
    %8351 = vmatmul.mubr.f32.gmra.mxu0 %v8081
    %v8352 = vpop.f32.mrf.mxu0
    %v8353 = vadd.f32 %v7776, %v8352
    %v8354 = vpop.f32.mrf.mxu0
    %8355 = vmatprep.mubr.f32.mxu0 0.0
    %8356 = vmatmul.mubr.f32.gmra.mxu0 %v8084
    %v8357 = vpop.f32.mrf.mxu0
    %v8358 = vadd.f32 %v7781, %v8357
    %v8359 = vpop.f32.mrf.mxu0
    %8360 = vmatprep.mubr.f32.mxu0 0.0
    %8361 = vmatmul.mubr.f32.gmra.mxu0 %v8087
    %v8362 = vpop.f32.mrf.mxu0
    %v8363 = vadd.f32 %v7786, %v8362
    %v8364 = vpop.f32.mrf.mxu0
    %8365 = vmatprep.mubr.f32.mxu0 0.0
    %8366 = vmatmul.mubr.f32.gmra.mxu0 %v8090
    %v8367 = vpop.f32.mrf.mxu0
    %v8368 = vadd.f32 %v7791, %v8367
    %v8369 = vpop.f32.mrf.mxu0
    %8370 = vmatprep.mubr.f32.mxu0 0.0
    %8371 = vmatmul.mubr.f32.gmra.mxu0 %v8093
    %v8372 = vpop.f32.mrf.mxu0
    %v8373 = vadd.f32 %v7796, %v8372
    %v8374 = vpop.f32.mrf.mxu0
    %8375 = vmatprep.mubr.f32.mxu0 0.0
    %8376 = vmatmul.mubr.f32.gmra.mxu0 %v8096
    %v8377 = vpop.f32.mrf.mxu0
    %v8378 = vadd.f32 %v7801, %v8377
    %v8379 = vpop.f32.mrf.mxu0
    %8380 = vmatprep.mubr.f32.mxu0 0.0
    %8381 = vmatmul.mubr.f32.gmra.mxu0 %v8099
    %v8382 = vpop.f32.mrf.mxu0
    %v8383 = vadd.f32 %v7806, %v8382
    %v8384 = vpop.f32.mrf.mxu0
    %8385 = vmatprep.mubr.f32.mxu0 0.0
    %8386 = vmatmul.mubr.f32.gmra.mxu0 %v8102
    %v8387 = vpop.f32.mrf.mxu0
    %v8388 = vadd.f32 %v7811, %v8387
    %v8389 = vpop.f32.mrf.mxu0
    %8390 = vmatprep.mubr.f32.mxu0 0.0
    %8391 = vmatmul.mubr.f32.gmra.mxu0 %v8105
    %v8392 = vpop.f32.mrf.mxu0
    %v8393 = vadd.f32 %v7816, %v8392
    %v8394 = vpop.f32.mrf.mxu0
    %8395 = vmatprep.mubr.f32.mxu0 0.0
    %8396 = vmatmul.mubr.f32.gmra.mxu0 %v8108
    %v8397 = vpop.f32.mrf.mxu0
    %v8398 = vadd.f32 %v7821, %v8397
    %v8399 = vpop.f32.mrf.mxu0
    %8400 = vmatprep.mubr.f32.mxu0 0.0
    %8401 = vmatmul.mubr.f32.gmra.mxu0 %v8111
    %v8402 = vpop.f32.mrf.mxu0
    %v8403 = vadd.f32 %v7826, %v8402
    %v8404 = vpop.f32.mrf.mxu0
    %8405 = vmatprep.mubr.f32.mxu0 0.0
    %8406 = vmatmul.mubr.f32.gmra.mxu0 %v8114
    %v8407 = vpop.f32.mrf.mxu0
    %v8408 = vadd.f32 %v7831, %v8407
    %v8409 = vpop.f32.mrf.mxu0
    %8410 = vmatprep.mubr.f32.mxu0 0.0
    %8411 = vmatmul.mubr.f32.gmra.mxu0 %v8117
    %v8412 = vpop.f32.mrf.mxu0
    %v8413 = vadd.f32 %v7836, %v8412
    %v8414 = vpop.f32.mrf.mxu0
    %8415 = vmatprep.mubr.f32.mxu0 0.0
    %8416 = vmatmul.mubr.f32.gmra.mxu0 %v8120
    %v8417 = vpop.f32.mrf.mxu0
    %v8418 = vadd.f32 %v7841, %v8417
    %v8419 = vpop.f32.mrf.mxu0
    %8420 = vmatprep.mubr.f32.mxu0 0.0
    %8421 = vmatmul.mubr.f32.gmra.mxu0 %v8123
    %v8422 = vpop.f32.mrf.mxu0
    %v8423 = vadd.f32 %v7846, %v8422
    %v8424 = vpop.f32.mrf.mxu0
    %8425 = vmatprep.mubr.f32.mxu0 0.0
    %8426 = vmatmul.mubr.f32.gmra.mxu0 %v8126
    %v8427 = vpop.f32.mrf.mxu0
    %v8428 = vadd.f32 %v7851, %v8427
    %v8429 = vpop.f32.mrf.mxu0
    %8430 = vmatprep.mubr.f32.mxu0 0.0
    %8431 = vmatmul.mubr.f32.gmra.mxu0 %v8129
    %v8432 = vpop.f32.mrf.mxu0
    %v8433 = vadd.f32 %v7856, %v8432
    %v8434 = vpop.f32.mrf.mxu0
    %8435 = vmatprep.mubr.f32.mxu0 0.0
    %8436 = vmatmul.mubr.f32.gmra.mxu0 %v8132
    %v8437 = vpop.f32.mrf.mxu0
    %v8438 = vadd.f32 %v7861, %v8437
    %v8439 = vpop.f32.mrf.mxu0
    %8440 = vmatprep.mubr.f32.mxu0 0.0
    %8441 = vmatmul.mubr.f32.gmra.mxu0 %v8135
    %v8442 = vpop.f32.mrf.mxu0
    %v8443 = vadd.f32 %v7866, %v8442
    %v8444 = vpop.f32.mrf.mxu0
    %8445 = vmatprep.mubr.f32.mxu0 0.0
    %8446 = vmatmul.mubr.f32.gmra.mxu0 %v8138
    %v8447 = vpop.f32.mrf.mxu0
    %v8448 = vadd.f32 %v7871, %v8447
    %v8449 = vpop.f32.mrf.mxu0
    %8450 = vmatprep.mubr.f32.mxu0 0.0
    %8451 = vmatmul.mubr.f32.gmra.mxu0 %v8141
    %v8452 = vpop.f32.mrf.mxu0
    %v8453 = vadd.f32 %v7876, %v8452
    %v8454 = vpop.f32.mrf.mxu0
    %8455 = vmatprep.mubr.f32.mxu0 0.0
    %8456 = vmatmul.mubr.f32.gmra.mxu0 %v8144
    %v8457 = vpop.f32.mrf.mxu0
    %v8458 = vadd.f32 %v7881, %v8457
    %v8459 = vpop.f32.mrf.mxu0
    %8460 = vmatprep.mubr.f32.mxu0 0.0
    %8461 = vmatmul.mubr.f32.gmra.mxu0 %v8147
    %v8462 = vpop.f32.mrf.mxu0
    %v8463 = vadd.f32 %v7886, %v8462
    %v8464 = vpop.f32.mrf.mxu0
    %8465 = vmatprep.mubr.f32.mxu0 0.0
    %8466 = vmatmul.mubr.f32.gmra.mxu0 %v8150
    %v8467 = vpop.f32.mrf.mxu0
    %v8468 = vadd.f32 %v7891, %v8467
    %v8469 = vpop.f32.mrf.mxu0
    %8470 = vmatprep.mubr.f32.mxu0 0.0
    %8471 = vmatmul.mubr.f32.gmra.mxu0 %v8153
    %v8472 = vpop.f32.mrf.mxu0
    %v8473 = vadd.f32 %v7896, %v8472
    %v8474 = vpop.f32.mrf.mxu0
    %8475 = vmatprep.mubr.f32.mxu0 0.0
    %8476 = vmatmul.mubr.f32.gmra.mxu0 %v8156
    %v8477 = vpop.f32.mrf.mxu0
    %v8478 = vadd.f32 %v7901, %v8477
    %v8479 = vpop.f32.mrf.mxu0
    %8480 = vmatprep.mubr.f32.mxu0 0.0
    %8481 = vmatmul.mubr.f32.gmra.mxu0 %v8159
    %v8482 = vpop.f32.mrf.mxu0
    %v8483 = vadd.f32 %v7906, %v8482
    %v8484 = vpop.f32.mrf.mxu0
    %8485 = vmatprep.mubr.f32.mxu0 0.0
    %8486 = vmatmul.mubr.f32.gmra.mxu0 %v8162
    %v8487 = vpop.f32.mrf.mxu0
    %v8488 = vadd.f32 %v7911, %v8487
    %v8489 = vpop.f32.mrf.mxu0
    %8490 = vmatprep.mubr.f32.mxu0 0.0
    %8491 = vmatmul.mubr.f32.gmra.mxu0 %v8165
    %v8492 = vpop.f32.mrf.mxu0
    %v8493 = vadd.f32 %v7916, %v8492
    %v8494 = vpop.f32.mrf.mxu0
    %8495 = vmatprep.mubr.f32.mxu0 0.0
    %8496 = vmatmul.mubr.f32.gmra.mxu0 %v8168
    %v8497 = vpop.f32.mrf.mxu0
    %v8498 = vadd.f32 %v7921, %v8497
    %v8499 = vpop.f32.mrf.mxu0
    %8500 = vmatprep.mubr.f32.mxu0 0.0
    %8501 = vmatmul.mubr.f32.gmra.mxu0 %v8171
    %v8502 = vpop.f32.mrf.mxu0
    %v8503 = vadd.f32 %v7926, %v8502
    %v8504 = vpop.f32.mrf.mxu0
    %8505 = vmatprep.mubr.f32.mxu0 0.0
    %8506 = vmatmul.mubr.f32.gmra.mxu0 %v8174
    %v8507 = vpop.f32.mrf.mxu0
    %v8508 = vadd.f32 %v7931, %v8507
    %v8509 = vpop.f32.mrf.mxu0
    %8510 = vmatprep.mubr.f32.mxu0 0.0
    %8511 = vmatmul.mubr.f32.gmra.mxu0 %v8177
    %v8512 = vpop.f32.mrf.mxu0
    %v8513 = vadd.f32 %v7936, %v8512
    %v8514 = vpop.f32.mrf.mxu0
    %8515 = vmatprep.mubr.f32.mxu0 0.0
    %8516 = vmatmul.mubr.f32.gmra.mxu0 %v8180
    %v8517 = vpop.f32.mrf.mxu0
    %v8518 = vadd.f32 %v7941, %v8517
    %v8519 = vpop.f32.mrf.mxu0
    %8520 = vmatprep.mubr.f32.mxu0 0.0
    %8521 = vmatmul.mubr.f32.gmra.mxu0 %v8183
    %v8522 = vpop.f32.mrf.mxu0
    %v8523 = vadd.f32 %v7946, %v8522
    %v8524 = vpop.f32.mrf.mxu0
    %8525 = vmatprep.mubr.f32.mxu0 0.0
    %8526 = vmatmul.mubr.f32.gmra.mxu0 %v8186
    %v8527 = vpop.f32.mrf.mxu0
    %v8528 = vadd.f32 %v7951, %v8527
    %v8529 = vpop.f32.mrf.mxu0
    %8530 = vmatprep.mubr.f32.mxu0 0.0
    %8531 = vmatmul.mubr.f32.gmra.mxu0 %v8189
    %v8532 = vpop.f32.mrf.mxu0
    %v8533 = vadd.f32 %v7956, %v8532
    %v8534 = vpop.f32.mrf.mxu0
    %8535 = vmatprep.mubr.f32.mxu0 0.0
    %8536 = vmatmul.mubr.f32.gmra.mxu0 %v8192
    %v8537 = vpop.f32.mrf.mxu0
    %v8538 = vadd.f32 %v7961, %v8537
    %v8539 = vpop.f32.mrf.mxu0
    %8540 = vmatprep.mubr.f32.mxu0 0.0
    %8541 = vmatmul.mubr.f32.gmra.mxu0 %v8195
    %v8542 = vpop.f32.mrf.mxu0
    %v8543 = vadd.f32 %v7966, %v8542
    %v8544 = vpop.f32.mrf.mxu0
    %8545 = vmatprep.mubr.f32.mxu0 0.0
    %8546 = vmatmul.mubr.f32.gmra.mxu0 %v8198
    %v8547 = vpop.f32.mrf.mxu0
    %v8548 = vadd.f32 %v7971, %v8547
    %v8549 = vpop.f32.mrf.mxu0
    %8550 = vmatprep.mubr.f32.mxu0 0.0
    %8551 = vmatmul.mubr.f32.gmra.mxu0 %v8201
    %v8552 = vpop.f32.mrf.mxu0
    %v8553 = vadd.f32 %v7976, %v8552
    %v8554 = vpop.f32.mrf.mxu0
    %8555 = vmatprep.mubr.f32.mxu0 0.0
    %8556 = vmatmul.mubr.f32.gmra.mxu0 %v8204
    %v8557 = vpop.f32.mrf.mxu0
    %v8558 = vadd.f32 %v7981, %v8557
    %v8559 = vpop.f32.mrf.mxu0
    %8560 = vmatprep.mubr.f32.mxu0 0.0
    %8561 = vmatmul.mubr.f32.gmra.mxu0 %v8207
    %v8562 = vpop.f32.mrf.mxu0
    %v8563 = vadd.f32 %v7986, %v8562
    %v8564 = vpop.f32.mrf.mxu0
    %8565 = vmatprep.mubr.f32.mxu0 0.0
    %8566 = vmatmul.mubr.f32.gmra.mxu0 %v8210
    %v8567 = vpop.f32.mrf.mxu0
    %v8568 = vadd.f32 %v7991, %v8567
    %v8569 = vpop.f32.mrf.mxu0
    %8570 = vmatprep.mubr.f32.mxu0 0.0
    %8571 = vmatmul.mubr.f32.gmra.mxu0 %v8213
    %v8572 = vpop.f32.mrf.mxu0
    %v8573 = vadd.f32 %v7996, %v8572
    %v8574 = vpop.f32.mrf.mxu0
    %8575 = vmatprep.mubr.f32.mxu0 0.0
    %8576 = vmatmul.mubr.f32.gmra.mxu0 %v8216
    %v8577 = vpop.f32.mrf.mxu0
    %v8578 = vadd.f32 %v8001, %v8577
    %v8579 = vpop.f32.mrf.mxu0
    %8580 = vmatprep.mubr.f32.mxu0 0.0
    %8581 = vmatmul.mubr.f32.gmra.mxu0 %v8219
    %v8582 = vpop.f32.mrf.mxu0
    %v8583 = vadd.f32 %v8006, %v8582
    %v8584 = vpop.f32.mrf.mxu0
    %8585 = vmatprep.mubr.f32.mxu0 0.0
    %8586 = vmatmul.mubr.f32.gmra.mxu0 %v8222
    %v8587 = vpop.f32.mrf.mxu0
    %v8588 = vadd.f32 %v8011, %v8587
    %v8589 = vpop.f32.mrf.mxu0
    %8590 = vmatprep.mubr.f32.mxu0 0.0
    %8591 = vmatmul.mubr.f32.gmra.mxu0 %v8225
    %v8592 = vpop.f32.mrf.mxu0
    %v8593 = vadd.f32 %v8016, %v8592
    %v8594 = vpop.f32.mrf.mxu0
    %8595 = vmatprep.mubr.f32.mxu0 0.0
    %8596 = vmatmul.mubr.f32.gmra.mxu0 %v8228
    %v8597 = vpop.f32.mrf.mxu0
    %v8598 = vadd.f32 %v8021, %v8597
    %v8599 = vpop.f32.mrf.mxu0
    %8600 = vmatprep.mubr.f32.mxu0 0.0
    %8601 = vmatmul.mubr.f32.gmra.mxu0 %v8231
    %v8602 = vpop.f32.mrf.mxu0
    %v8603 = vadd.f32 %v8026, %v8602
    %v8604 = vpop.f32.mrf.mxu0
    %8605 = vmatprep.mubr.f32.mxu0 0.0
    %8606 = vmatmul.mubr.f32.gmra.mxu0 %v8234
    %v8607 = vpop.f32.mrf.mxu0
    %v8608 = vadd.f32 %v8031, %v8607
    %v8609 = vpop.f32.mrf.mxu0
    %8610 = vmatprep.mubr.f32.mxu0 0.0
    %8611 = vmatmul.mubr.f32.gmra.mxu0 %v8237
    %v8612 = vpop.f32.mrf.mxu0
    %v8613 = vadd.f32 %v8036, %v8612
    %v8614 = vpop.f32.mrf.mxu0
    %8615 = vmatprep.mubr.f32.mxu0 0.0
    %8616 = vmatmul.mubr.f32.gmra.mxu0 %v8240
    %v8617 = vpop.f32.mrf.mxu0
    %v8618 = vadd.f32 %v8041, %v8617
    %v8619 = vpop.f32.mrf.mxu0
    %8620 = vmatprep.mubr.f32.mxu0 0.0
    %8621 = vmatmul.mubr.f32.gmra.mxu0 %v8243
    %v8622 = vpop.f32.mrf.mxu0
    %v8623 = vadd.f32 %v8046, %v8622
    %v8624 = vpop.f32.mrf.mxu0
    %8625 = vmatprep.mubr.f32.mxu0 0.0
    %8626 = vmatmul.mubr.f32.gmra.mxu0 %v8246
    %v8627 = vpop.f32.mrf.mxu0
    %v8628 = vadd.f32 %v8051, %v8627
    %v8629 = vpop.f32.mrf.mxu0
    %8630 = vmatprep.mubr.f32.mxu0 0.0
    %8631 = vmatmul.mubr.f32.gmra.mxu0 %v8249
    %v8632 = vpop.f32.mrf.mxu0
    %v8633 = vadd.f32 %v8056, %v8632
    %v8634 = vpop.f32.mrf.mxu0
    %8635 = vdwg.mxu0
    %v8636 = vld [vmem:[%s12 + $0x40] sm:$0xff]
    %v8637 = vld [vmem:[%s12 + $0x48] sm:$0xff]
    %v8638 = vld [vmem:[%s12 + $0x50] sm:$0xff]
    %v8639 = vld [vmem:[%s12 + $0x58] sm:$0xff]
    %v8641 = vsel %vm806, %v7410, 0
    %v8644 = vsel %vm806, %v7411, 0
    %v8647 = vsel %vm806, %v7412, 0
    %v8650 = vsel %vm806, %v7413, 0
    %v8653 = vsel %vm806, %v7414, 0
    %v8656 = vsel %vm806, %v7415, 0
    %v8659 = vsel %vm806, %v7416, 0
    %v8662 = vsel %vm806, %v7417, 0
    %v8665 = vsel %vm806, %v7418, 0
    %v8668 = vsel %vm806, %v7419, 0
    %v8671 = vsel %vm806, %v7420, 0
    %v8674 = vsel %vm806, %v7421, 0
    %v8677 = vsel %vm806, %v7422, 0
    %v8680 = vsel %vm806, %v7423, 0
    %v8683 = vsel %vm806, %v7424, 0
    %v8686 = vsel %vm806, %v7425, 0
    %v8689 = vsel %vm806, %v7426, 0
    %v8692 = vsel %vm806, %v7427, 0
    %v8695 = vsel %vm806, %v7428, 0
    %v8698 = vsel %vm806, %v7429, 0
    %v8701 = vsel %vm806, %v7430, 0
    %v8704 = vsel %vm806, %v7431, 0
    %v8707 = vsel %vm806, %v7432, 0
    %v8710 = vsel %vm806, %v7433, 0
    %v8713 = vsel %vm806, %v7434, 0
    %v8716 = vsel %vm806, %v7435, 0
    %v8719 = vsel %vm806, %v7436, 0
    %v8722 = vsel %vm806, %v7437, 0
    %v8725 = vsel %vm806, %v7438, 0
    %v8728 = vsel %vm806, %v7439, 0
    %v8731 = vsel %vm806, %v7440, 0
    %v8734 = vsel %vm806, %v7441, 0
    %v8737 = vsel %vm806, %v7442, 0
    %v8740 = vsel %vm806, %v7443, 0
    %v8743 = vsel %vm806, %v7444, 0
    %v8746 = vsel %vm806, %v7445, 0
    %v8749 = vsel %vm806, %v7446, 0
    %v8752 = vsel %vm806, %v7447, 0
    %v8755 = vsel %vm806, %v7448, 0
    %v8758 = vsel %vm806, %v7449, 0
    %v8761 = vsel %vm806, %v7450, 0
    %v8764 = vsel %vm806, %v7451, 0
    %v8767 = vsel %vm806, %v7452, 0
    %v8770 = vsel %vm806, %v7453, 0
    %v8773 = vsel %vm806, %v7454, 0
    %v8776 = vsel %vm806, %v7455, 0
    %v8779 = vsel %vm806, %v7456, 0
    %v8782 = vsel %vm806, %v7457, 0
    %v8785 = vsel %vm806, %v7458, 0
    %v8788 = vsel %vm806, %v7459, 0
    %v8791 = vsel %vm806, %v7460, 0
    %v8794 = vsel %vm806, %v7461, 0
    %v8797 = vsel %vm806, %v7462, 0
    %v8800 = vsel %vm806, %v7463, 0
    %v8803 = vsel %vm806, %v7464, 0
    %v8806 = vsel %vm806, %v7465, 0
    %v8809 = vsel %vm806, %v7466, 0
    %v8812 = vsel %vm806, %v7467, 0
    %v8815 = vsel %vm806, %v7468, 0
    %v8818 = vsel %vm806, %v7469, 0
    %v8821 = vsel %vm806, %v7470, 0
    %v8824 = vsel %vm806, %v7471, 0
    %v8827 = vsel %vm806, %v7472, 0
    %v8830 = vsel %vm806, %v7473, 0
    %8832 = vmatprep.subr.mxu0 0.0
    %8833 = vmatpush1.msra.mxu0 0.0
    %8834 = vmatprep.subr.mxu0 0.0
    %8835 = vmatpush1.msra.mxu0 0.0
    %8836 = vmatprep.subr.mxu0 0.0
    %8837 = vmatpush1.msra.mxu0 0.0
    %8838 = vmatprep.subr.mxu0 0.0
    %8839 = vmatpush1.msra.mxu0 0.0
    %8840 = vmatprep.subr.mxu0 0.0
    %8841 = vmatpush1.msra.mxu0 0.0
    %8842 = vmatprep.subr.mxu0 0.0
    %8843 = vmatpush1.msra.mxu0 0.0
    %8844 = vmatprep.subr.mxu0 0.0
    %8845 = vmatpush1.msra.mxu0 0.0
    %8846 = vmatprep.subr.mxu0 0.0
    %8847 = vmatpush1.msra.mxu0 0.0
    %8848 = vmatprep.subr.mxu0 0.0
    %8849 = vmatpush1.msra.mxu0 0.0
    %8850 = vmatprep.subr.mxu0 0.0
    %8851 = vmatpush1.msra.mxu0 0.0
    %8852 = vmatprep.subr.mxu0 0.0
    %8853 = vmatpush1.msra.mxu0 0.0
    %8854 = vmatprep.subr.mxu0 0.0
    %8855 = vmatpush1.msra.mxu0 0.0
    %8856 = vmatprep.subr.mxu0 0.0
    %8857 = vmatpush1.msra.mxu0 %v8639
    %8858 = vmatprep.subr.mxu0 0.0
    %8859 = vmatpush1.msra.mxu0 %v8638
    %8860 = vmatprep.subr.mxu0 0.0
    %8861 = vmatpush1.msra.mxu0 %v8637
    %8862 = vmatprep.subr.mxu0 0.0
    %8863 = vmatpush1.msra.mxu0 %v8636
    %8864 = vmatprep.subr.mxu0 0.0
    %8865 = vmatpush2.msra.mxu0 0.0
    %8866 = vmatprep.subr.mxu0 0.0
    %8867 = vmatpush2.msra.mxu0 0.0
    %8868 = vmatprep.subr.mxu0 0.0
    %8869 = vmatpush2.msra.mxu0 0.0
    %8870 = vmatprep.subr.mxu0 0.0
    %8871 = vmatpush2.msra.mxu0 0.0
    %8872 = vmatprep.subr.mxu0 0.0
    %8873 = vmatpush2.msra.mxu0 0.0
    %8874 = vmatprep.subr.mxu0 0.0
    %8875 = vmatpush2.msra.mxu0 0.0
    %8876 = vmatprep.subr.mxu0 0.0
    %8877 = vmatpush2.msra.mxu0 0.0
    %8878 = vmatprep.subr.mxu0 0.0
    %8879 = vmatpush2.msra.mxu0 0.0
    %8880 = vmatprep.subr.mxu0 0.0
    %8881 = vmatpush2.msra.mxu0 0.0
    %8882 = vmatprep.subr.mxu0 0.0
    %8883 = vmatpush2.msra.mxu0 0.0
    %8884 = vmatprep.subr.mxu0 0.0
    %8885 = vmatpush2.msra.mxu0 0.0
    %8886 = vmatprep.subr.mxu0 0.0
    %8887 = vmatpush2.msra.mxu0 0.0
    %8888 = vmatprep.subr.mxu0 0.0
    %8889 = vmatpush2.msra.mxu0 0.0
    %8890 = vmatprep.subr.mxu0 0.0
    %8891 = vmatpush2.msra.mxu0 0.0
    %8892 = vmatprep.subr.mxu0 0.0
    %8893 = vmatpush2.msra.mxu0 0.0
    %8894 = vmatprep.subr.mxu0 0.0
    %8895 = vmatpush2.msra.mxu0 0.0
    %8896 = vmatprep.mubr.f32.mxu0 0.0
    %8897 = vmatmul.mubr.f32.gmra.mxu0 %v8641
    %v8898 = vpop.f32.mrf.mxu0
    %v8899 = vadd.f32 0.0, %v8898
    %v8900 = vpop.f32.mrf.mxu0
    %8901 = vmatprep.mubr.f32.mxu0 0.0
    %8902 = vmatmul.mubr.f32.gmra.mxu0 %v8644
    %v8903 = vpop.f32.mrf.mxu0
    %v8904 = vadd.f32 0.0, %v8903
    %v8905 = vpop.f32.mrf.mxu0
    %8906 = vmatprep.mubr.f32.mxu0 0.0
    %8907 = vmatmul.mubr.f32.gmra.mxu0 %v8647
    %v8908 = vpop.f32.mrf.mxu0
    %v8909 = vadd.f32 0.0, %v8908
    %v8910 = vpop.f32.mrf.mxu0
    %8911 = vmatprep.mubr.f32.mxu0 0.0
    %8912 = vmatmul.mubr.f32.gmra.mxu0 %v8650
    %v8913 = vpop.f32.mrf.mxu0
    %v8914 = vadd.f32 0.0, %v8913
    %v8915 = vpop.f32.mrf.mxu0
    %8916 = vmatprep.mubr.f32.mxu0 0.0
    %8917 = vmatmul.mubr.f32.gmra.mxu0 %v8653
    %v8918 = vpop.f32.mrf.mxu0
    %v8919 = vadd.f32 0.0, %v8918
    %v8920 = vpop.f32.mrf.mxu0
    %8921 = vmatprep.mubr.f32.mxu0 0.0
    %8922 = vmatmul.mubr.f32.gmra.mxu0 %v8656
    %v8923 = vpop.f32.mrf.mxu0
    %v8924 = vadd.f32 0.0, %v8923
    %v8925 = vpop.f32.mrf.mxu0
    %8926 = vmatprep.mubr.f32.mxu0 0.0
    %8927 = vmatmul.mubr.f32.gmra.mxu0 %v8659
    %v8928 = vpop.f32.mrf.mxu0
    %v8929 = vadd.f32 0.0, %v8928
    %v8930 = vpop.f32.mrf.mxu0
    %8931 = vmatprep.mubr.f32.mxu0 0.0
    %8932 = vmatmul.mubr.f32.gmra.mxu0 %v8662
    %v8933 = vpop.f32.mrf.mxu0
    %v8934 = vadd.f32 0.0, %v8933
    %v8935 = vpop.f32.mrf.mxu0
    %8936 = vmatprep.mubr.f32.mxu0 0.0
    %8937 = vmatmul.mubr.f32.gmra.mxu0 %v8665
    %v8938 = vpop.f32.mrf.mxu0
    %v8939 = vadd.f32 0.0, %v8938
    %v8940 = vpop.f32.mrf.mxu0
    %8941 = vmatprep.mubr.f32.mxu0 0.0
    %8942 = vmatmul.mubr.f32.gmra.mxu0 %v8668
    %v8943 = vpop.f32.mrf.mxu0
    %v8944 = vadd.f32 0.0, %v8943
    %v8945 = vpop.f32.mrf.mxu0
    %8946 = vmatprep.mubr.f32.mxu0 0.0
    %8947 = vmatmul.mubr.f32.gmra.mxu0 %v8671
    %v8948 = vpop.f32.mrf.mxu0
    %v8949 = vadd.f32 0.0, %v8948
    %v8950 = vpop.f32.mrf.mxu0
    %8951 = vmatprep.mubr.f32.mxu0 0.0
    %8952 = vmatmul.mubr.f32.gmra.mxu0 %v8674
    %v8953 = vpop.f32.mrf.mxu0
    %v8954 = vadd.f32 0.0, %v8953
    %v8955 = vpop.f32.mrf.mxu0
    %8956 = vmatprep.mubr.f32.mxu0 0.0
    %8957 = vmatmul.mubr.f32.gmra.mxu0 %v8677
    %v8958 = vpop.f32.mrf.mxu0
    %v8959 = vadd.f32 0.0, %v8958
    %v8960 = vpop.f32.mrf.mxu0
    %8961 = vmatprep.mubr.f32.mxu0 0.0
    %8962 = vmatmul.mubr.f32.gmra.mxu0 %v8680
    %v8963 = vpop.f32.mrf.mxu0
    %v8964 = vadd.f32 0.0, %v8963
    %v8965 = vpop.f32.mrf.mxu0
    %8966 = vmatprep.mubr.f32.mxu0 0.0
    %8967 = vmatmul.mubr.f32.gmra.mxu0 %v8683
    %v8968 = vpop.f32.mrf.mxu0
    %v8969 = vadd.f32 0.0, %v8968
    %v8970 = vpop.f32.mrf.mxu0
    %8971 = vmatprep.mubr.f32.mxu0 0.0
    %8972 = vmatmul.mubr.f32.gmra.mxu0 %v8686
    %v8973 = vpop.f32.mrf.mxu0
    %v8974 = vadd.f32 0.0, %v8973
    %v8975 = vpop.f32.mrf.mxu0
    %8976 = vmatprep.mubr.f32.mxu0 0.0
    %8977 = vmatmul.mubr.f32.gmra.mxu0 %v8689
    %v8978 = vpop.f32.mrf.mxu0
    %v8979 = vadd.f32 0.0, %v8978
    %v8980 = vpop.f32.mrf.mxu0
    %8981 = vmatprep.mubr.f32.mxu0 0.0
    %8982 = vmatmul.mubr.f32.gmra.mxu0 %v8692
    %v8983 = vpop.f32.mrf.mxu0
    %v8984 = vadd.f32 0.0, %v8983
    %v8985 = vpop.f32.mrf.mxu0
    %8986 = vmatprep.mubr.f32.mxu0 0.0
    %8987 = vmatmul.mubr.f32.gmra.mxu0 %v8695
    %v8988 = vpop.f32.mrf.mxu0
    %v8989 = vadd.f32 0.0, %v8988
    %v8990 = vpop.f32.mrf.mxu0
    %8991 = vmatprep.mubr.f32.mxu0 0.0
    %8992 = vmatmul.mubr.f32.gmra.mxu0 %v8698
    %v8993 = vpop.f32.mrf.mxu0
    %v8994 = vadd.f32 0.0, %v8993
    %v8995 = vpop.f32.mrf.mxu0
    %8996 = vmatprep.mubr.f32.mxu0 0.0
    %8997 = vmatmul.mubr.f32.gmra.mxu0 %v8701
    %v8998 = vpop.f32.mrf.mxu0
    %v8999 = vadd.f32 0.0, %v8998
    %v9000 = vpop.f32.mrf.mxu0
    %9001 = vmatprep.mubr.f32.mxu0 0.0
    %9002 = vmatmul.mubr.f32.gmra.mxu0 %v8704
    %v9003 = vpop.f32.mrf.mxu0
    %v9004 = vadd.f32 0.0, %v9003
    %v9005 = vpop.f32.mrf.mxu0
    %9006 = vmatprep.mubr.f32.mxu0 0.0
    %9007 = vmatmul.mubr.f32.gmra.mxu0 %v8707
    %v9008 = vpop.f32.mrf.mxu0
    %v9009 = vadd.f32 0.0, %v9008
    %v9010 = vpop.f32.mrf.mxu0
    %9011 = vmatprep.mubr.f32.mxu0 0.0
    %9012 = vmatmul.mubr.f32.gmra.mxu0 %v8710
    %v9013 = vpop.f32.mrf.mxu0
    %v9014 = vadd.f32 0.0, %v9013
    %v9015 = vpop.f32.mrf.mxu0
    %9016 = vmatprep.mubr.f32.mxu0 0.0
    %9017 = vmatmul.mubr.f32.gmra.mxu0 %v8713
    %v9018 = vpop.f32.mrf.mxu0
    %v9019 = vadd.f32 0.0, %v9018
    %v9020 = vpop.f32.mrf.mxu0
    %9021 = vmatprep.mubr.f32.mxu0 0.0
    %9022 = vmatmul.mubr.f32.gmra.mxu0 %v8716
    %v9023 = vpop.f32.mrf.mxu0
    %v9024 = vadd.f32 0.0, %v9023
    %v9025 = vpop.f32.mrf.mxu0
    %9026 = vmatprep.mubr.f32.mxu0 0.0
    %9027 = vmatmul.mubr.f32.gmra.mxu0 %v8719
    %v9028 = vpop.f32.mrf.mxu0
    %v9029 = vadd.f32 0.0, %v9028
    %v9030 = vpop.f32.mrf.mxu0
    %9031 = vmatprep.mubr.f32.mxu0 0.0
    %9032 = vmatmul.mubr.f32.gmra.mxu0 %v8722
    %v9033 = vpop.f32.mrf.mxu0
    %v9034 = vadd.f32 0.0, %v9033
    %v9035 = vpop.f32.mrf.mxu0
    %9036 = vmatprep.mubr.f32.mxu0 0.0
    %9037 = vmatmul.mubr.f32.gmra.mxu0 %v8725
    %v9038 = vpop.f32.mrf.mxu0
    %v9039 = vadd.f32 0.0, %v9038
    %v9040 = vpop.f32.mrf.mxu0
    %9041 = vmatprep.mubr.f32.mxu0 0.0
    %9042 = vmatmul.mubr.f32.gmra.mxu0 %v8728
    %v9043 = vpop.f32.mrf.mxu0
    %v9044 = vadd.f32 0.0, %v9043
    %v9045 = vpop.f32.mrf.mxu0
    %9046 = vmatprep.mubr.f32.mxu0 0.0
    %9047 = vmatmul.mubr.f32.gmra.mxu0 %v8731
    %v9048 = vpop.f32.mrf.mxu0
    %v9049 = vadd.f32 0.0, %v9048
    %v9050 = vpop.f32.mrf.mxu0
    %9051 = vmatprep.mubr.f32.mxu0 0.0
    %9052 = vmatmul.mubr.f32.gmra.mxu0 %v8734
    %v9053 = vpop.f32.mrf.mxu0
    %v9054 = vadd.f32 0.0, %v9053
    %v9055 = vpop.f32.mrf.mxu0
    %9056 = vmatprep.mubr.f32.mxu0 0.0
    %9057 = vmatmul.mubr.f32.gmra.mxu0 %v8737
    %v9058 = vpop.f32.mrf.mxu0
    %v9059 = vadd.f32 0.0, %v9058
    %v9060 = vpop.f32.mrf.mxu0
    %9061 = vmatprep.mubr.f32.mxu0 0.0
    %9062 = vmatmul.mubr.f32.gmra.mxu0 %v8740
    %v9063 = vpop.f32.mrf.mxu0
    %v9064 = vadd.f32 0.0, %v9063
    %v9065 = vpop.f32.mrf.mxu0
    %9066 = vmatprep.mubr.f32.mxu0 0.0
    %9067 = vmatmul.mubr.f32.gmra.mxu0 %v8743
    %v9068 = vpop.f32.mrf.mxu0
    %v9069 = vadd.f32 0.0, %v9068
    %v9070 = vpop.f32.mrf.mxu0
    %9071 = vmatprep.mubr.f32.mxu0 0.0
    %9072 = vmatmul.mubr.f32.gmra.mxu0 %v8746
    %v9073 = vpop.f32.mrf.mxu0
    %v9074 = vadd.f32 0.0, %v9073
    %v9075 = vpop.f32.mrf.mxu0
    %9076 = vmatprep.mubr.f32.mxu0 0.0
    %9077 = vmatmul.mubr.f32.gmra.mxu0 %v8749
    %v9078 = vpop.f32.mrf.mxu0
    %v9079 = vadd.f32 0.0, %v9078
    %v9080 = vpop.f32.mrf.mxu0
    %9081 = vmatprep.mubr.f32.mxu0 0.0
    %9082 = vmatmul.mubr.f32.gmra.mxu0 %v8752
    %v9083 = vpop.f32.mrf.mxu0
    %v9084 = vadd.f32 0.0, %v9083
    %v9085 = vpop.f32.mrf.mxu0
    %9086 = vmatprep.mubr.f32.mxu0 0.0
    %9087 = vmatmul.mubr.f32.gmra.mxu0 %v8755
    %v9088 = vpop.f32.mrf.mxu0
    %v9089 = vadd.f32 0.0, %v9088
    %v9090 = vpop.f32.mrf.mxu0
    %9091 = vmatprep.mubr.f32.mxu0 0.0
    %9092 = vmatmul.mubr.f32.gmra.mxu0 %v8758
    %v9093 = vpop.f32.mrf.mxu0
    %v9094 = vadd.f32 0.0, %v9093
    %v9095 = vpop.f32.mrf.mxu0
    %9096 = vmatprep.mubr.f32.mxu0 0.0
    %9097 = vmatmul.mubr.f32.gmra.mxu0 %v8761
    %v9098 = vpop.f32.mrf.mxu0
    %v9099 = vadd.f32 0.0, %v9098
    %v9100 = vpop.f32.mrf.mxu0
    %9101 = vmatprep.mubr.f32.mxu0 0.0
    %9102 = vmatmul.mubr.f32.gmra.mxu0 %v8764
    %v9103 = vpop.f32.mrf.mxu0
    %v9104 = vadd.f32 0.0, %v9103
    %v9105 = vpop.f32.mrf.mxu0
    %9106 = vmatprep.mubr.f32.mxu0 0.0
    %9107 = vmatmul.mubr.f32.gmra.mxu0 %v8767
    %v9108 = vpop.f32.mrf.mxu0
    %v9109 = vadd.f32 0.0, %v9108
    %v9110 = vpop.f32.mrf.mxu0
    %9111 = vmatprep.mubr.f32.mxu0 0.0
    %9112 = vmatmul.mubr.f32.gmra.mxu0 %v8770
    %v9113 = vpop.f32.mrf.mxu0
    %v9114 = vadd.f32 0.0, %v9113
    %v9115 = vpop.f32.mrf.mxu0
    %9116 = vmatprep.mubr.f32.mxu0 0.0
    %9117 = vmatmul.mubr.f32.gmra.mxu0 %v8773
    %v9118 = vpop.f32.mrf.mxu0
    %v9119 = vadd.f32 0.0, %v9118
    %v9120 = vpop.f32.mrf.mxu0
    %9121 = vmatprep.mubr.f32.mxu0 0.0
    %9122 = vmatmul.mubr.f32.gmra.mxu0 %v8776
    %v9123 = vpop.f32.mrf.mxu0
    %v9124 = vadd.f32 0.0, %v9123
    %v9125 = vpop.f32.mrf.mxu0
    %9126 = vmatprep.mubr.f32.mxu0 0.0
    %9127 = vmatmul.mubr.f32.gmra.mxu0 %v8779
    %v9128 = vpop.f32.mrf.mxu0
    %v9129 = vadd.f32 0.0, %v9128
    %v9130 = vpop.f32.mrf.mxu0
    %9131 = vmatprep.mubr.f32.mxu0 0.0
    %9132 = vmatmul.mubr.f32.gmra.mxu0 %v8782
    %v9133 = vpop.f32.mrf.mxu0
    %v9134 = vadd.f32 0.0, %v9133
    %v9135 = vpop.f32.mrf.mxu0
    %9136 = vmatprep.mubr.f32.mxu0 0.0
    %9137 = vmatmul.mubr.f32.gmra.mxu0 %v8785
    %v9138 = vpop.f32.mrf.mxu0
    %v9139 = vadd.f32 0.0, %v9138
    %v9140 = vpop.f32.mrf.mxu0
    %9141 = vmatprep.mubr.f32.mxu0 0.0
    %9142 = vmatmul.mubr.f32.gmra.mxu0 %v8788
    %v9143 = vpop.f32.mrf.mxu0
    %v9144 = vadd.f32 0.0, %v9143
    %v9145 = vpop.f32.mrf.mxu0
    %9146 = vmatprep.mubr.f32.mxu0 0.0
    %9147 = vmatmul.mubr.f32.gmra.mxu0 %v8791
    %v9148 = vpop.f32.mrf.mxu0
    %v9149 = vadd.f32 0.0, %v9148
    %v9150 = vpop.f32.mrf.mxu0
    %9151 = vmatprep.mubr.f32.mxu0 0.0
    %9152 = vmatmul.mubr.f32.gmra.mxu0 %v8794
    %v9153 = vpop.f32.mrf.mxu0
    %v9154 = vadd.f32 0.0, %v9153
    %v9155 = vpop.f32.mrf.mxu0
    %9156 = vmatprep.mubr.f32.mxu0 0.0
    %9157 = vmatmul.mubr.f32.gmra.mxu0 %v8797
    %v9158 = vpop.f32.mrf.mxu0
    %v9159 = vadd.f32 0.0, %v9158
    %v9160 = vpop.f32.mrf.mxu0
    %9161 = vmatprep.mubr.f32.mxu0 0.0
    %9162 = vmatmul.mubr.f32.gmra.mxu0 %v8800
    %v9163 = vpop.f32.mrf.mxu0
    %v9164 = vadd.f32 0.0, %v9163
    %v9165 = vpop.f32.mrf.mxu0
    %9166 = vmatprep.mubr.f32.mxu0 0.0
    %9167 = vmatmul.mubr.f32.gmra.mxu0 %v8803
    %v9168 = vpop.f32.mrf.mxu0
    %v9169 = vadd.f32 0.0, %v9168
    %v9170 = vpop.f32.mrf.mxu0
    %9171 = vmatprep.mubr.f32.mxu0 0.0
    %9172 = vmatmul.mubr.f32.gmra.mxu0 %v8806
    %v9173 = vpop.f32.mrf.mxu0
    %v9174 = vadd.f32 0.0, %v9173
    %v9175 = vpop.f32.mrf.mxu0
    %9176 = vmatprep.mubr.f32.mxu0 0.0
    %9177 = vmatmul.mubr.f32.gmra.mxu0 %v8809
    %v9178 = vpop.f32.mrf.mxu0
    %v9179 = vadd.f32 0.0, %v9178
    %v9180 = vpop.f32.mrf.mxu0
    %9181 = vmatprep.mubr.f32.mxu0 0.0
    %9182 = vmatmul.mubr.f32.gmra.mxu0 %v8812
    %v9183 = vpop.f32.mrf.mxu0
    %v9184 = vadd.f32 0.0, %v9183
    %v9185 = vpop.f32.mrf.mxu0
    %9186 = vmatprep.mubr.f32.mxu0 0.0
    %9187 = vmatmul.mubr.f32.gmra.mxu0 %v8815
    %v9188 = vpop.f32.mrf.mxu0
    %v9189 = vadd.f32 0.0, %v9188
    %v9190 = vpop.f32.mrf.mxu0
    %9191 = vmatprep.mubr.f32.mxu0 0.0
    %9192 = vmatmul.mubr.f32.gmra.mxu0 %v8818
    %v9193 = vpop.f32.mrf.mxu0
    %v9194 = vadd.f32 0.0, %v9193
    %v9195 = vpop.f32.mrf.mxu0
    %9196 = vmatprep.mubr.f32.mxu0 0.0
    %9197 = vmatmul.mubr.f32.gmra.mxu0 %v8821
    %v9198 = vpop.f32.mrf.mxu0
    %v9199 = vadd.f32 0.0, %v9198
    %v9200 = vpop.f32.mrf.mxu0
    %9201 = vmatprep.mubr.f32.mxu0 0.0
    %9202 = vmatmul.mubr.f32.gmra.mxu0 %v8824
    %v9203 = vpop.f32.mrf.mxu0
    %v9204 = vadd.f32 0.0, %v9203
    %v9205 = vpop.f32.mrf.mxu0
    %9206 = vmatprep.mubr.f32.mxu0 0.0
    %9207 = vmatmul.mubr.f32.gmra.mxu0 %v8827
    %v9208 = vpop.f32.mrf.mxu0
    %v9209 = vadd.f32 0.0, %v9208
    %v9210 = vpop.f32.mrf.mxu0
    %9211 = vmatprep.mubr.f32.mxu0 0.0
    %9212 = vmatmul.mubr.f32.gmra.mxu0 %v8830
    %v9213 = vpop.f32.mrf.mxu0
    %v9214 = vadd.f32 0.0, %v9213
    %v9215 = vpop.f32.mrf.mxu0
    %9216 = vdwg.mxu0
    %v9217 = vadd.f32 %v8318, %v8899
    %v9218 = vadd.f32 %v8323, %v8904
    %v9219 = vadd.f32 %v8328, %v8909
    %v9220 = vadd.f32 %v8333, %v8914
    %v9221 = vadd.f32 %v8338, %v8919
    %v9222 = vadd.f32 %v8343, %v8924
    %v9223 = vadd.f32 %v8348, %v8929
    %v9224 = vadd.f32 %v8353, %v8934
    %v9225 = vadd.f32 %v8358, %v8939
    %v9226 = vadd.f32 %v8363, %v8944
    %v9227 = vadd.f32 %v8368, %v8949
    %v9228 = vadd.f32 %v8373, %v8954
    %v9229 = vadd.f32 %v8378, %v8959
    %v9230 = vadd.f32 %v8383, %v8964
    %v9231 = vadd.f32 %v8388, %v8969
    %v9232 = vadd.f32 %v8393, %v8974
    %v9233 = vadd.f32 %v8398, %v8979
    %v9234 = vadd.f32 %v8403, %v8984
    %v9235 = vadd.f32 %v8408, %v8989
    %v9236 = vadd.f32 %v8413, %v8994
    %v9237 = vadd.f32 %v8418, %v8999
    %v9238 = vadd.f32 %v8423, %v9004
    %v9239 = vadd.f32 %v8428, %v9009
    %v9240 = vadd.f32 %v8433, %v9014
    %v9241 = vadd.f32 %v8438, %v9019
    %v9242 = vadd.f32 %v8443, %v9024
    %v9243 = vadd.f32 %v8448, %v9029
    %v9244 = vadd.f32 %v8453, %v9034
    %v9245 = vadd.f32 %v8458, %v9039
    %v9246 = vadd.f32 %v8463, %v9044
    %v9247 = vadd.f32 %v8468, %v9049
    %v9248 = vadd.f32 %v8473, %v9054
    %v9249 = vadd.f32 %v8478, %v9059
    %v9250 = vadd.f32 %v8483, %v9064
    %v9251 = vadd.f32 %v8488, %v9069
    %v9252 = vadd.f32 %v8493, %v9074
    %v9253 = vadd.f32 %v8498, %v9079
    %v9254 = vadd.f32 %v8503, %v9084
    %v9255 = vadd.f32 %v8508, %v9089
    %v9256 = vadd.f32 %v8513, %v9094
    %v9257 = vadd.f32 %v8518, %v9099
    %v9258 = vadd.f32 %v8523, %v9104
    %v9259 = vadd.f32 %v8528, %v9109
    %v9260 = vadd.f32 %v8533, %v9114
    %v9261 = vadd.f32 %v8538, %v9119
    %v9262 = vadd.f32 %v8543, %v9124
    %v9263 = vadd.f32 %v8548, %v9129
    %v9264 = vadd.f32 %v8553, %v9134
    %v9265 = vadd.f32 %v8558, %v9139
    %v9266 = vadd.f32 %v8563, %v9144
    %v9267 = vadd.f32 %v8568, %v9149
    %v9268 = vadd.f32 %v8573, %v9154
    %v9269 = vadd.f32 %v8578, %v9159
    %v9270 = vadd.f32 %v8583, %v9164
    %v9271 = vadd.f32 %v8588, %v9169
    %v9272 = vadd.f32 %v8593, %v9174
    %v9273 = vadd.f32 %v8598, %v9179
    %v9274 = vadd.f32 %v8603, %v9184
    %v9275 = vadd.f32 %v8608, %v9189
    %v9276 = vadd.f32 %v8613, %v9194
    %v9277 = vadd.f32 %v8618, %v9199
    %v9278 = vadd.f32 %v8623, %v9204
    %v9279 = vadd.f32 %v8628, %v9209
    %v9280 = vadd.f32 %v8633, %v9214
    %v9281 = vld [vmem:[%s13] sm:$0x1]
    %v9283 = vlaneseq
    %v9284 = vshrl.u32 %v9283, 7
    %v9285 = vsub.s32 0, %v9284
    %v9286 = vrot.slane %v9281, %v9285
    %v9288 = vadd.f32 %v9217, %v9286
    %v9289 = vadd.f32 %v9218, %v9286
    %v9290 = vadd.f32 %v9219, %v9286
    %v9291 = vadd.f32 %v9220, %v9286
    %v9292 = vadd.f32 %v9221, %v9286
    %v9293 = vadd.f32 %v9222, %v9286
    %v9294 = vadd.f32 %v9223, %v9286
    %v9295 = vadd.f32 %v9224, %v9286
    %v9296 = vadd.f32 %v9225, %v9286
    %v9297 = vadd.f32 %v9226, %v9286
    %v9298 = vadd.f32 %v9227, %v9286
    %v9299 = vadd.f32 %v9228, %v9286
    %v9300 = vadd.f32 %v9229, %v9286
    %v9301 = vadd.f32 %v9230, %v9286
    %v9302 = vadd.f32 %v9231, %v9286
    %v9303 = vadd.f32 %v9232, %v9286
    %v9304 = vadd.f32 %v9233, %v9286
    %v9305 = vadd.f32 %v9234, %v9286
    %v9306 = vadd.f32 %v9235, %v9286
    %v9307 = vadd.f32 %v9236, %v9286
    %v9308 = vadd.f32 %v9237, %v9286
    %v9309 = vadd.f32 %v9238, %v9286
    %v9310 = vadd.f32 %v9239, %v9286
    %v9311 = vadd.f32 %v9240, %v9286
    %v9312 = vadd.f32 %v9241, %v9286
    %v9313 = vadd.f32 %v9242, %v9286
    %v9314 = vadd.f32 %v9243, %v9286
    %v9315 = vadd.f32 %v9244, %v9286
    %v9316 = vadd.f32 %v9245, %v9286
    %v9317 = vadd.f32 %v9246, %v9286
    %v9318 = vadd.f32 %v9247, %v9286
    %v9319 = vadd.f32 %v9248, %v9286
    %v9320 = vadd.f32 %v9249, %v9286
    %v9321 = vadd.f32 %v9250, %v9286
    %v9322 = vadd.f32 %v9251, %v9286
    %v9323 = vadd.f32 %v9252, %v9286
    %v9324 = vadd.f32 %v9253, %v9286
    %v9325 = vadd.f32 %v9254, %v9286
    %v9326 = vadd.f32 %v9255, %v9286
    %v9327 = vadd.f32 %v9256, %v9286
    %v9328 = vadd.f32 %v9257, %v9286
    %v9329 = vadd.f32 %v9258, %v9286
    %v9330 = vadd.f32 %v9259, %v9286
    %v9331 = vadd.f32 %v9260, %v9286
    %v9332 = vadd.f32 %v9261, %v9286
    %v9333 = vadd.f32 %v9262, %v9286
    %v9334 = vadd.f32 %v9263, %v9286
    %v9335 = vadd.f32 %v9264, %v9286
    %v9336 = vadd.f32 %v9265, %v9286
    %v9337 = vadd.f32 %v9266, %v9286
    %v9338 = vadd.f32 %v9267, %v9286
    %v9339 = vadd.f32 %v9268, %v9286
    %v9340 = vadd.f32 %v9269, %v9286
    %v9341 = vadd.f32 %v9270, %v9286
    %v9342 = vadd.f32 %v9271, %v9286
    %v9343 = vadd.f32 %v9272, %v9286
    %v9344 = vadd.f32 %v9273, %v9286
    %v9345 = vadd.f32 %v9274, %v9286
    %v9346 = vadd.f32 %v9275, %v9286
    %v9347 = vadd.f32 %v9276, %v9286
    %v9348 = vadd.f32 %v9277, %v9286
    %v9349 = vadd.f32 %v9278, %v9286
    %v9350 = vadd.f32 %v9279, %v9286
    %v9351 = vadd.f32 %v9280, %v9286
    %v9352 = vmax.f32 %v9288, 0.0
    %v9353 = vmax.f32 %v9289, 0.0
    %v9354 = vmax.f32 %v9290, 0.0
    %v9355 = vmax.f32 %v9291, 0.0
    %v9356 = vmax.f32 %v9292, 0.0
    %v9357 = vmax.f32 %v9293, 0.0
    %v9358 = vmax.f32 %v9294, 0.0
    %v9359 = vmax.f32 %v9295, 0.0
    %v9360 = vmax.f32 %v9296, 0.0
    %v9361 = vmax.f32 %v9297, 0.0
    %v9362 = vmax.f32 %v9298, 0.0
    %v9363 = vmax.f32 %v9299, 0.0
    %v9364 = vmax.f32 %v9300, 0.0
    %v9365 = vmax.f32 %v9301, 0.0
    %v9366 = vmax.f32 %v9302, 0.0
    %v9367 = vmax.f32 %v9303, 0.0
    %v9368 = vmax.f32 %v9304, 0.0
    %v9369 = vmax.f32 %v9305, 0.0
    %v9370 = vmax.f32 %v9306, 0.0
    %v9371 = vmax.f32 %v9307, 0.0
    %v9372 = vmax.f32 %v9308, 0.0
    %v9373 = vmax.f32 %v9309, 0.0
    %v9374 = vmax.f32 %v9310, 0.0
    %v9375 = vmax.f32 %v9311, 0.0
    %v9376 = vmax.f32 %v9312, 0.0
    %v9377 = vmax.f32 %v9313, 0.0
    %v9378 = vmax.f32 %v9314, 0.0
    %v9379 = vmax.f32 %v9315, 0.0
    %v9380 = vmax.f32 %v9316, 0.0
    %v9381 = vmax.f32 %v9317, 0.0
    %v9382 = vmax.f32 %v9318, 0.0
    %v9383 = vmax.f32 %v9319, 0.0
    %v9384 = vmax.f32 %v9320, 0.0
    %v9385 = vmax.f32 %v9321, 0.0
    %v9386 = vmax.f32 %v9322, 0.0
    %v9387 = vmax.f32 %v9323, 0.0
    %v9388 = vmax.f32 %v9324, 0.0
    %v9389 = vmax.f32 %v9325, 0.0
    %v9390 = vmax.f32 %v9326, 0.0
    %v9391 = vmax.f32 %v9327, 0.0
    %v9392 = vmax.f32 %v9328, 0.0
    %v9393 = vmax.f32 %v9329, 0.0
    %v9394 = vmax.f32 %v9330, 0.0
    %v9395 = vmax.f32 %v9331, 0.0
    %v9396 = vmax.f32 %v9332, 0.0
    %v9397 = vmax.f32 %v9333, 0.0
    %v9398 = vmax.f32 %v9334, 0.0
    %v9399 = vmax.f32 %v9335, 0.0
    %v9400 = vmax.f32 %v9336, 0.0
    %v9401 = vmax.f32 %v9337, 0.0
    %v9402 = vmax.f32 %v9338, 0.0
    %v9403 = vmax.f32 %v9339, 0.0
    %v9404 = vmax.f32 %v9340, 0.0
    %v9405 = vmax.f32 %v9341, 0.0
    %v9406 = vmax.f32 %v9342, 0.0
    %v9407 = vmax.f32 %v9343, 0.0
    %v9408 = vmax.f32 %v9344, 0.0
    %v9409 = vmax.f32 %v9345, 0.0
    %v9410 = vmax.f32 %v9346, 0.0
    %v9411 = vmax.f32 %v9347, 0.0
    %v9412 = vmax.f32 %v9348, 0.0
    %v9413 = vmax.f32 %v9349, 0.0
    %v9414 = vmax.f32 %v9350, 0.0
    %v9415 = vmax.f32 %v9351, 0.0
    %v9416 = vld [vmem:[%s14] sm:$0xff]
    %v9417 = vld [vmem:[%s14 + $0x8] sm:$0xff]
    %v9418 = vld [vmem:[%s14 + $0x10] sm:$0xff]
    %v9419 = vld [vmem:[%s14 + $0x18] sm:$0xff]
    %v9420 = vld [vmem:[%s15] sm:$0x1]
    %v9422 = vlaneseq
    %v9423 = vshrl.u32 %v9422, 7
    %v9424 = vsub.s32 0, %v9423
    %v9425 = vrot.slane %v9420, %v9424
    %v9428 = vsel %vm806, %v9352, 0
    %v9431 = vsel %vm806, %v9353, 0
    %v9434 = vsel %vm806, %v9354, 0
    %v9437 = vsel %vm806, %v9355, 0
    %v9440 = vsel %vm806, %v9356, 0
    %v9443 = vsel %vm806, %v9357, 0
    %v9446 = vsel %vm806, %v9358, 0
    %v9449 = vsel %vm806, %v9359, 0
    %v9452 = vsel %vm806, %v9360, 0
    %v9455 = vsel %vm806, %v9361, 0
    %v9458 = vsel %vm806, %v9362, 0
    %v9461 = vsel %vm806, %v9363, 0
    %v9464 = vsel %vm806, %v9364, 0
    %v9467 = vsel %vm806, %v9365, 0
    %v9470 = vsel %vm806, %v9366, 0
    %v9473 = vsel %vm806, %v9367, 0
    %v9476 = vsel %vm806, %v9368, 0
    %v9479 = vsel %vm806, %v9369, 0
    %v9482 = vsel %vm806, %v9370, 0
    %v9485 = vsel %vm806, %v9371, 0
    %v9488 = vsel %vm806, %v9372, 0
    %v9491 = vsel %vm806, %v9373, 0
    %v9494 = vsel %vm806, %v9374, 0
    %v9497 = vsel %vm806, %v9375, 0
    %v9500 = vsel %vm806, %v9376, 0
    %v9503 = vsel %vm806, %v9377, 0
    %v9506 = vsel %vm806, %v9378, 0
    %v9509 = vsel %vm806, %v9379, 0
    %v9512 = vsel %vm806, %v9380, 0
    %v9515 = vsel %vm806, %v9381, 0
    %v9518 = vsel %vm806, %v9382, 0
    %v9521 = vsel %vm806, %v9383, 0
    %v9524 = vsel %vm806, %v9384, 0
    %v9527 = vsel %vm806, %v9385, 0
    %v9530 = vsel %vm806, %v9386, 0
    %v9533 = vsel %vm806, %v9387, 0
    %v9536 = vsel %vm806, %v9388, 0
    %v9539 = vsel %vm806, %v9389, 0
    %v9542 = vsel %vm806, %v9390, 0
    %v9545 = vsel %vm806, %v9391, 0
    %v9548 = vsel %vm806, %v9392, 0
    %v9551 = vsel %vm806, %v9393, 0
    %v9554 = vsel %vm806, %v9394, 0
    %v9557 = vsel %vm806, %v9395, 0
    %v9560 = vsel %vm806, %v9396, 0
    %v9563 = vsel %vm806, %v9397, 0
    %v9566 = vsel %vm806, %v9398, 0
    %v9569 = vsel %vm806, %v9399, 0
    %v9572 = vsel %vm806, %v9400, 0
    %v9575 = vsel %vm806, %v9401, 0
    %v9578 = vsel %vm806, %v9402, 0
    %v9581 = vsel %vm806, %v9403, 0
    %v9584 = vsel %vm806, %v9404, 0
    %v9587 = vsel %vm806, %v9405, 0
    %v9590 = vsel %vm806, %v9406, 0
    %v9593 = vsel %vm806, %v9407, 0
    %v9596 = vsel %vm806, %v9408, 0
    %v9599 = vsel %vm806, %v9409, 0
    %v9602 = vsel %vm806, %v9410, 0
    %v9605 = vsel %vm806, %v9411, 0
    %v9608 = vsel %vm806, %v9412, 0
    %v9611 = vsel %vm806, %v9413, 0
    %v9614 = vsel %vm806, %v9414, 0
    %v9617 = vsel %vm806, %v9415, 0
    %9619 = vmatprep.subr.mxu0 0.0
    %9620 = vmatpush1.msra.mxu0 0.0
    %9621 = vmatprep.subr.mxu0 0.0
    %9622 = vmatpush1.msra.mxu0 0.0
    %9623 = vmatprep.subr.mxu0 0.0
    %9624 = vmatpush1.msra.mxu0 0.0
    %9625 = vmatprep.subr.mxu0 0.0
    %9626 = vmatpush1.msra.mxu0 0.0
    %9627 = vmatprep.subr.mxu0 0.0
    %9628 = vmatpush1.msra.mxu0 0.0
    %9629 = vmatprep.subr.mxu0 0.0
    %9630 = vmatpush1.msra.mxu0 0.0
    %9631 = vmatprep.subr.mxu0 0.0
    %9632 = vmatpush1.msra.mxu0 0.0
    %9633 = vmatprep.subr.mxu0 0.0
    %9634 = vmatpush1.msra.mxu0 0.0
    %9635 = vmatprep.subr.mxu0 0.0
    %9636 = vmatpush1.msra.mxu0 0.0
    %9637 = vmatprep.subr.mxu0 0.0
    %9638 = vmatpush1.msra.mxu0 0.0
    %9639 = vmatprep.subr.mxu0 0.0
    %9640 = vmatpush1.msra.mxu0 0.0
    %9641 = vmatprep.subr.mxu0 0.0
    %9642 = vmatpush1.msra.mxu0 0.0
    %9643 = vmatprep.subr.mxu0 0.0
    %9644 = vmatpush1.msra.mxu0 %v9419
    %9645 = vmatprep.subr.mxu0 0.0
    %9646 = vmatpush1.msra.mxu0 %v9418
    %9647 = vmatprep.subr.mxu0 0.0
    %9648 = vmatpush1.msra.mxu0 %v9417
    %9649 = vmatprep.subr.mxu0 0.0
    %9650 = vmatpush1.msra.mxu0 %v9416
    %9651 = vmatprep.subr.mxu0 0.0
    %9652 = vmatpush2.msra.mxu0 0.0
    %9653 = vmatprep.subr.mxu0 0.0
    %9654 = vmatpush2.msra.mxu0 0.0
    %9655 = vmatprep.subr.mxu0 0.0
    %9656 = vmatpush2.msra.mxu0 0.0
    %9657 = vmatprep.subr.mxu0 0.0
    %9658 = vmatpush2.msra.mxu0 0.0
    %9659 = vmatprep.subr.mxu0 0.0
    %9660 = vmatpush2.msra.mxu0 0.0
    %9661 = vmatprep.subr.mxu0 0.0
    %9662 = vmatpush2.msra.mxu0 0.0
    %9663 = vmatprep.subr.mxu0 0.0
    %9664 = vmatpush2.msra.mxu0 0.0
    %9665 = vmatprep.subr.mxu0 0.0
    %9666 = vmatpush2.msra.mxu0 0.0
    %9667 = vmatprep.subr.mxu0 0.0
    %9668 = vmatpush2.msra.mxu0 0.0
    %9669 = vmatprep.subr.mxu0 0.0
    %9670 = vmatpush2.msra.mxu0 0.0
    %9671 = vmatprep.subr.mxu0 0.0
    %9672 = vmatpush2.msra.mxu0 0.0
    %9673 = vmatprep.subr.mxu0 0.0
    %9674 = vmatpush2.msra.mxu0 0.0
    %9675 = vmatprep.subr.mxu0 0.0
    %9676 = vmatpush2.msra.mxu0 0.0
    %9677 = vmatprep.subr.mxu0 0.0
    %9678 = vmatpush2.msra.mxu0 0.0
    %9679 = vmatprep.subr.mxu0 0.0
    %9680 = vmatpush2.msra.mxu0 0.0
    %9681 = vmatprep.subr.mxu0 0.0
    %9682 = vmatpush2.msra.mxu0 0.0
    %9683 = vmatprep.mubr.f32.mxu0 0.0
    %9684 = vmatmul.mubr.f32.gmra.mxu0 %v9428
    %v9685 = vpop.f32.mrf.mxu0
    %v9686 = vadd.f32 %v9425, %v9685
    %v9687 = vpop.f32.mrf.mxu0
    %9688 = vmatprep.mubr.f32.mxu0 0.0
    %9689 = vmatmul.mubr.f32.gmra.mxu0 %v9431
    %v9690 = vpop.f32.mrf.mxu0
    %v9691 = vadd.f32 %v9425, %v9690
    %v9692 = vpop.f32.mrf.mxu0
    %9693 = vmatprep.mubr.f32.mxu0 0.0
    %9694 = vmatmul.mubr.f32.gmra.mxu0 %v9434
    %v9695 = vpop.f32.mrf.mxu0
    %v9696 = vadd.f32 %v9425, %v9695
    %v9697 = vpop.f32.mrf.mxu0
    %9698 = vmatprep.mubr.f32.mxu0 0.0
    %9699 = vmatmul.mubr.f32.gmra.mxu0 %v9437
    %v9700 = vpop.f32.mrf.mxu0
    %v9701 = vadd.f32 %v9425, %v9700
    %v9702 = vpop.f32.mrf.mxu0
    %9703 = vmatprep.mubr.f32.mxu0 0.0
    %9704 = vmatmul.mubr.f32.gmra.mxu0 %v9440
    %v9705 = vpop.f32.mrf.mxu0
    %v9706 = vadd.f32 %v9425, %v9705
    %v9707 = vpop.f32.mrf.mxu0
    %9708 = vmatprep.mubr.f32.mxu0 0.0
    %9709 = vmatmul.mubr.f32.gmra.mxu0 %v9443
    %v9710 = vpop.f32.mrf.mxu0
    %v9711 = vadd.f32 %v9425, %v9710
    %v9712 = vpop.f32.mrf.mxu0
    %9713 = vmatprep.mubr.f32.mxu0 0.0
    %9714 = vmatmul.mubr.f32.gmra.mxu0 %v9446
    %v9715 = vpop.f32.mrf.mxu0
    %v9716 = vadd.f32 %v9425, %v9715
    %v9717 = vpop.f32.mrf.mxu0
    %9718 = vmatprep.mubr.f32.mxu0 0.0
    %9719 = vmatmul.mubr.f32.gmra.mxu0 %v9449
    %v9720 = vpop.f32.mrf.mxu0
    %v9721 = vadd.f32 %v9425, %v9720
    %v9722 = vpop.f32.mrf.mxu0
    %9723 = vmatprep.mubr.f32.mxu0 0.0
    %9724 = vmatmul.mubr.f32.gmra.mxu0 %v9452
    %v9725 = vpop.f32.mrf.mxu0
    %v9726 = vadd.f32 %v9425, %v9725
    %v9727 = vpop.f32.mrf.mxu0
    %9728 = vmatprep.mubr.f32.mxu0 0.0
    %9729 = vmatmul.mubr.f32.gmra.mxu0 %v9455
    %v9730 = vpop.f32.mrf.mxu0
    %v9731 = vadd.f32 %v9425, %v9730
    %v9732 = vpop.f32.mrf.mxu0
    %9733 = vmatprep.mubr.f32.mxu0 0.0
    %9734 = vmatmul.mubr.f32.gmra.mxu0 %v9458
    %v9735 = vpop.f32.mrf.mxu0
    %v9736 = vadd.f32 %v9425, %v9735
    %v9737 = vpop.f32.mrf.mxu0
    %9738 = vmatprep.mubr.f32.mxu0 0.0
    %9739 = vmatmul.mubr.f32.gmra.mxu0 %v9461
    %v9740 = vpop.f32.mrf.mxu0
    %v9741 = vadd.f32 %v9425, %v9740
    %v9742 = vpop.f32.mrf.mxu0
    %9743 = vmatprep.mubr.f32.mxu0 0.0
    %9744 = vmatmul.mubr.f32.gmra.mxu0 %v9464
    %v9745 = vpop.f32.mrf.mxu0
    %v9746 = vadd.f32 %v9425, %v9745
    %v9747 = vpop.f32.mrf.mxu0
    %9748 = vmatprep.mubr.f32.mxu0 0.0
    %9749 = vmatmul.mubr.f32.gmra.mxu0 %v9467
    %v9750 = vpop.f32.mrf.mxu0
    %v9751 = vadd.f32 %v9425, %v9750
    %v9752 = vpop.f32.mrf.mxu0
    %9753 = vmatprep.mubr.f32.mxu0 0.0
    %9754 = vmatmul.mubr.f32.gmra.mxu0 %v9470
    %v9755 = vpop.f32.mrf.mxu0
    %v9756 = vadd.f32 %v9425, %v9755
    %v9757 = vpop.f32.mrf.mxu0
    %9758 = vmatprep.mubr.f32.mxu0 0.0
    %9759 = vmatmul.mubr.f32.gmra.mxu0 %v9473
    %v9760 = vpop.f32.mrf.mxu0
    %v9761 = vadd.f32 %v9425, %v9760
    %v9762 = vpop.f32.mrf.mxu0
    %9763 = vmatprep.mubr.f32.mxu0 0.0
    %9764 = vmatmul.mubr.f32.gmra.mxu0 %v9476
    %v9765 = vpop.f32.mrf.mxu0
    %v9766 = vadd.f32 %v9425, %v9765
    %v9767 = vpop.f32.mrf.mxu0
    %9768 = vmatprep.mubr.f32.mxu0 0.0
    %9769 = vmatmul.mubr.f32.gmra.mxu0 %v9479
    %v9770 = vpop.f32.mrf.mxu0
    %v9771 = vadd.f32 %v9425, %v9770
    %v9772 = vpop.f32.mrf.mxu0
    %9773 = vmatprep.mubr.f32.mxu0 0.0
    %9774 = vmatmul.mubr.f32.gmra.mxu0 %v9482
    %v9775 = vpop.f32.mrf.mxu0
    %v9776 = vadd.f32 %v9425, %v9775
    %v9777 = vpop.f32.mrf.mxu0
    %9778 = vmatprep.mubr.f32.mxu0 0.0
    %9779 = vmatmul.mubr.f32.gmra.mxu0 %v9485
    %v9780 = vpop.f32.mrf.mxu0
    %v9781 = vadd.f32 %v9425, %v9780
    %v9782 = vpop.f32.mrf.mxu0
    %9783 = vmatprep.mubr.f32.mxu0 0.0
    %9784 = vmatmul.mubr.f32.gmra.mxu0 %v9488
    %v9785 = vpop.f32.mrf.mxu0
    %v9786 = vadd.f32 %v9425, %v9785
    %v9787 = vpop.f32.mrf.mxu0
    %9788 = vmatprep.mubr.f32.mxu0 0.0
    %9789 = vmatmul.mubr.f32.gmra.mxu0 %v9491
    %v9790 = vpop.f32.mrf.mxu0
    %v9791 = vadd.f32 %v9425, %v9790
    %v9792 = vpop.f32.mrf.mxu0
    %9793 = vmatprep.mubr.f32.mxu0 0.0
    %9794 = vmatmul.mubr.f32.gmra.mxu0 %v9494
    %v9795 = vpop.f32.mrf.mxu0
    %v9796 = vadd.f32 %v9425, %v9795
    %v9797 = vpop.f32.mrf.mxu0
    %9798 = vmatprep.mubr.f32.mxu0 0.0
    %9799 = vmatmul.mubr.f32.gmra.mxu0 %v9497
    %v9800 = vpop.f32.mrf.mxu0
    %v9801 = vadd.f32 %v9425, %v9800
    %v9802 = vpop.f32.mrf.mxu0
    %9803 = vmatprep.mubr.f32.mxu0 0.0
    %9804 = vmatmul.mubr.f32.gmra.mxu0 %v9500
    %v9805 = vpop.f32.mrf.mxu0
    %v9806 = vadd.f32 %v9425, %v9805
    %v9807 = vpop.f32.mrf.mxu0
    %9808 = vmatprep.mubr.f32.mxu0 0.0
    %9809 = vmatmul.mubr.f32.gmra.mxu0 %v9503
    %v9810 = vpop.f32.mrf.mxu0
    %v9811 = vadd.f32 %v9425, %v9810
    %v9812 = vpop.f32.mrf.mxu0
    %9813 = vmatprep.mubr.f32.mxu0 0.0
    %9814 = vmatmul.mubr.f32.gmra.mxu0 %v9506
    %v9815 = vpop.f32.mrf.mxu0
    %v9816 = vadd.f32 %v9425, %v9815
    %v9817 = vpop.f32.mrf.mxu0
    %9818 = vmatprep.mubr.f32.mxu0 0.0
    %9819 = vmatmul.mubr.f32.gmra.mxu0 %v9509
    %v9820 = vpop.f32.mrf.mxu0
    %v9821 = vadd.f32 %v9425, %v9820
    %v9822 = vpop.f32.mrf.mxu0
    %9823 = vmatprep.mubr.f32.mxu0 0.0
    %9824 = vmatmul.mubr.f32.gmra.mxu0 %v9512
    %v9825 = vpop.f32.mrf.mxu0
    %v9826 = vadd.f32 %v9425, %v9825
    %v9827 = vpop.f32.mrf.mxu0
    %9828 = vmatprep.mubr.f32.mxu0 0.0
    %9829 = vmatmul.mubr.f32.gmra.mxu0 %v9515
    %v9830 = vpop.f32.mrf.mxu0
    %v9831 = vadd.f32 %v9425, %v9830
    %v9832 = vpop.f32.mrf.mxu0
    %9833 = vmatprep.mubr.f32.mxu0 0.0
    %9834 = vmatmul.mubr.f32.gmra.mxu0 %v9518
    %v9835 = vpop.f32.mrf.mxu0
    %v9836 = vadd.f32 %v9425, %v9835
    %v9837 = vpop.f32.mrf.mxu0
    %9838 = vmatprep.mubr.f32.mxu0 0.0
    %9839 = vmatmul.mubr.f32.gmra.mxu0 %v9521
    %v9840 = vpop.f32.mrf.mxu0
    %v9841 = vadd.f32 %v9425, %v9840
    %v9842 = vpop.f32.mrf.mxu0
    %9843 = vmatprep.mubr.f32.mxu0 0.0
    %9844 = vmatmul.mubr.f32.gmra.mxu0 %v9524
    %v9845 = vpop.f32.mrf.mxu0
    %v9846 = vadd.f32 %v9425, %v9845
    %v9847 = vpop.f32.mrf.mxu0
    %9848 = vmatprep.mubr.f32.mxu0 0.0
    %9849 = vmatmul.mubr.f32.gmra.mxu0 %v9527
    %v9850 = vpop.f32.mrf.mxu0
    %v9851 = vadd.f32 %v9425, %v9850
    %v9852 = vpop.f32.mrf.mxu0
    %9853 = vmatprep.mubr.f32.mxu0 0.0
    %9854 = vmatmul.mubr.f32.gmra.mxu0 %v9530
    %v9855 = vpop.f32.mrf.mxu0
    %v9856 = vadd.f32 %v9425, %v9855
    %v9857 = vpop.f32.mrf.mxu0
    %9858 = vmatprep.mubr.f32.mxu0 0.0
    %9859 = vmatmul.mubr.f32.gmra.mxu0 %v9533
    %v9860 = vpop.f32.mrf.mxu0
    %v9861 = vadd.f32 %v9425, %v9860
    %v9862 = vpop.f32.mrf.mxu0
    %9863 = vmatprep.mubr.f32.mxu0 0.0
    %9864 = vmatmul.mubr.f32.gmra.mxu0 %v9536
    %v9865 = vpop.f32.mrf.mxu0
    %v9866 = vadd.f32 %v9425, %v9865
    %v9867 = vpop.f32.mrf.mxu0
    %9868 = vmatprep.mubr.f32.mxu0 0.0
    %9869 = vmatmul.mubr.f32.gmra.mxu0 %v9539
    %v9870 = vpop.f32.mrf.mxu0
    %v9871 = vadd.f32 %v9425, %v9870
    %v9872 = vpop.f32.mrf.mxu0
    %9873 = vmatprep.mubr.f32.mxu0 0.0
    %9874 = vmatmul.mubr.f32.gmra.mxu0 %v9542
    %v9875 = vpop.f32.mrf.mxu0
    %v9876 = vadd.f32 %v9425, %v9875
    %v9877 = vpop.f32.mrf.mxu0
    %9878 = vmatprep.mubr.f32.mxu0 0.0
    %9879 = vmatmul.mubr.f32.gmra.mxu0 %v9545
    %v9880 = vpop.f32.mrf.mxu0
    %v9881 = vadd.f32 %v9425, %v9880
    %v9882 = vpop.f32.mrf.mxu0
    %9883 = vmatprep.mubr.f32.mxu0 0.0
    %9884 = vmatmul.mubr.f32.gmra.mxu0 %v9548
    %v9885 = vpop.f32.mrf.mxu0
    %v9886 = vadd.f32 %v9425, %v9885
    %v9887 = vpop.f32.mrf.mxu0
    %9888 = vmatprep.mubr.f32.mxu0 0.0
    %9889 = vmatmul.mubr.f32.gmra.mxu0 %v9551
    %v9890 = vpop.f32.mrf.mxu0
    %v9891 = vadd.f32 %v9425, %v9890
    %v9892 = vpop.f32.mrf.mxu0
    %9893 = vmatprep.mubr.f32.mxu0 0.0
    %9894 = vmatmul.mubr.f32.gmra.mxu0 %v9554
    %v9895 = vpop.f32.mrf.mxu0
    %v9896 = vadd.f32 %v9425, %v9895
    %v9897 = vpop.f32.mrf.mxu0
    %9898 = vmatprep.mubr.f32.mxu0 0.0
    %9899 = vmatmul.mubr.f32.gmra.mxu0 %v9557
    %v9900 = vpop.f32.mrf.mxu0
    %v9901 = vadd.f32 %v9425, %v9900
    %v9902 = vpop.f32.mrf.mxu0
    %9903 = vmatprep.mubr.f32.mxu0 0.0
    %9904 = vmatmul.mubr.f32.gmra.mxu0 %v9560
    %v9905 = vpop.f32.mrf.mxu0
    %v9906 = vadd.f32 %v9425, %v9905
    %v9907 = vpop.f32.mrf.mxu0
    %9908 = vmatprep.mubr.f32.mxu0 0.0
    %9909 = vmatmul.mubr.f32.gmra.mxu0 %v9563
    %v9910 = vpop.f32.mrf.mxu0
    %v9911 = vadd.f32 %v9425, %v9910
    %v9912 = vpop.f32.mrf.mxu0
    %9913 = vmatprep.mubr.f32.mxu0 0.0
    %9914 = vmatmul.mubr.f32.gmra.mxu0 %v9566
    %v9915 = vpop.f32.mrf.mxu0
    %v9916 = vadd.f32 %v9425, %v9915
    %v9917 = vpop.f32.mrf.mxu0
    %9918 = vmatprep.mubr.f32.mxu0 0.0
    %9919 = vmatmul.mubr.f32.gmra.mxu0 %v9569
    %v9920 = vpop.f32.mrf.mxu0
    %v9921 = vadd.f32 %v9425, %v9920
    %v9922 = vpop.f32.mrf.mxu0
    %9923 = vmatprep.mubr.f32.mxu0 0.0
    %9924 = vmatmul.mubr.f32.gmra.mxu0 %v9572
    %v9925 = vpop.f32.mrf.mxu0
    %v9926 = vadd.f32 %v9425, %v9925
    %v9927 = vpop.f32.mrf.mxu0
    %9928 = vmatprep.mubr.f32.mxu0 0.0
    %9929 = vmatmul.mubr.f32.gmra.mxu0 %v9575
    %v9930 = vpop.f32.mrf.mxu0
    %v9931 = vadd.f32 %v9425, %v9930
    %v9932 = vpop.f32.mrf.mxu0
    %9933 = vmatprep.mubr.f32.mxu0 0.0
    %9934 = vmatmul.mubr.f32.gmra.mxu0 %v9578
    %v9935 = vpop.f32.mrf.mxu0
    %v9936 = vadd.f32 %v9425, %v9935
    %v9937 = vpop.f32.mrf.mxu0
    %9938 = vmatprep.mubr.f32.mxu0 0.0
    %9939 = vmatmul.mubr.f32.gmra.mxu0 %v9581
    %v9940 = vpop.f32.mrf.mxu0
    %v9941 = vadd.f32 %v9425, %v9940
    %v9942 = vpop.f32.mrf.mxu0
    %9943 = vmatprep.mubr.f32.mxu0 0.0
    %9944 = vmatmul.mubr.f32.gmra.mxu0 %v9584
    %v9945 = vpop.f32.mrf.mxu0
    %v9946 = vadd.f32 %v9425, %v9945
    %v9947 = vpop.f32.mrf.mxu0
    %9948 = vmatprep.mubr.f32.mxu0 0.0
    %9949 = vmatmul.mubr.f32.gmra.mxu0 %v9587
    %v9950 = vpop.f32.mrf.mxu0
    %v9951 = vadd.f32 %v9425, %v9950
    %v9952 = vpop.f32.mrf.mxu0
    %9953 = vmatprep.mubr.f32.mxu0 0.0
    %9954 = vmatmul.mubr.f32.gmra.mxu0 %v9590
    %v9955 = vpop.f32.mrf.mxu0
    %v9956 = vadd.f32 %v9425, %v9955
    %v9957 = vpop.f32.mrf.mxu0
    %9958 = vmatprep.mubr.f32.mxu0 0.0
    %9959 = vmatmul.mubr.f32.gmra.mxu0 %v9593
    %v9960 = vpop.f32.mrf.mxu0
    %v9961 = vadd.f32 %v9425, %v9960
    %v9962 = vpop.f32.mrf.mxu0
    %9963 = vmatprep.mubr.f32.mxu0 0.0
    %9964 = vmatmul.mubr.f32.gmra.mxu0 %v9596
    %v9965 = vpop.f32.mrf.mxu0
    %v9966 = vadd.f32 %v9425, %v9965
    %v9967 = vpop.f32.mrf.mxu0
    %9968 = vmatprep.mubr.f32.mxu0 0.0
    %9969 = vmatmul.mubr.f32.gmra.mxu0 %v9599
    %v9970 = vpop.f32.mrf.mxu0
    %v9971 = vadd.f32 %v9425, %v9970
    %v9972 = vpop.f32.mrf.mxu0
    %9973 = vmatprep.mubr.f32.mxu0 0.0
    %9974 = vmatmul.mubr.f32.gmra.mxu0 %v9602
    %v9975 = vpop.f32.mrf.mxu0
    %v9976 = vadd.f32 %v9425, %v9975
    %v9977 = vpop.f32.mrf.mxu0
    %9978 = vmatprep.mubr.f32.mxu0 0.0
    %9979 = vmatmul.mubr.f32.gmra.mxu0 %v9605
    %v9980 = vpop.f32.mrf.mxu0
    %v9981 = vadd.f32 %v9425, %v9980
    %v9982 = vpop.f32.mrf.mxu0
    %9983 = vmatprep.mubr.f32.mxu0 0.0
    %9984 = vmatmul.mubr.f32.gmra.mxu0 %v9608
    %v9985 = vpop.f32.mrf.mxu0
    %v9986 = vadd.f32 %v9425, %v9985
    %v9987 = vpop.f32.mrf.mxu0
    %9988 = vmatprep.mubr.f32.mxu0 0.0
    %9989 = vmatmul.mubr.f32.gmra.mxu0 %v9611
    %v9990 = vpop.f32.mrf.mxu0
    %v9991 = vadd.f32 %v9425, %v9990
    %v9992 = vpop.f32.mrf.mxu0
    %9993 = vmatprep.mubr.f32.mxu0 0.0
    %9994 = vmatmul.mubr.f32.gmra.mxu0 %v9614
    %v9995 = vpop.f32.mrf.mxu0
    %v9996 = vadd.f32 %v9425, %v9995
    %v9997 = vpop.f32.mrf.mxu0
    %9998 = vmatprep.mubr.f32.mxu0 0.0
    %9999 = vmatmul.mubr.f32.gmra.mxu0 %v9617
    %v10000 = vpop.f32.mrf.mxu0
    %v10001 = vadd.f32 %v9425, %v10000
    %v10002 = vpop.f32.mrf.mxu0
    %10003 = vdwg.mxu0
    %10004 = vst [vmem:[%s16] sm:$0xff] %v9686
    %10005 = vst [vmem:[%s16 + $0x8] sm:$0xff] %v9691
    %10006 = vst [vmem:[%s16 + $0x10] sm:$0xff] %v9696
    %10007 = vst [vmem:[%s16 + $0x18] sm:$0xff] %v9701
    %10008 = vst [vmem:[%s16 + $0x20] sm:$0xff] %v9706
    %10009 = vst [vmem:[%s16 + $0x28] sm:$0xff] %v9711
    %10010 = vst [vmem:[%s16 + $0x30] sm:$0xff] %v9716
    %10011 = vst [vmem:[%s16 + $0x38] sm:$0xff] %v9721
    %10012 = vst [vmem:[%s16 + $0x40] sm:$0xff] %v9726
    %10013 = vst [vmem:[%s16 + $0x48] sm:$0xff] %v9731
    %10014 = vst [vmem:[%s16 + $0x50] sm:$0xff] %v9736
    %10015 = vst [vmem:[%s16 + $0x58] sm:$0xff] %v9741
    %10016 = vst [vmem:[%s16 + $0x60] sm:$0xff] %v9746
    %10017 = vst [vmem:[%s16 + $0x68] sm:$0xff] %v9751
    %10018 = vst [vmem:[%s16 + $0x70] sm:$0xff] %v9756
    %10019 = vst [vmem:[%s16 + $0x78] sm:$0xff] %v9761
    %10020 = vst [vmem:[%s16 + $0x80] sm:$0xff] %v9766
    %10021 = vst [vmem:[%s16 + $0x88] sm:$0xff] %v9771
    %10022 = vst [vmem:[%s16 + $0x90] sm:$0xff] %v9776
    %10023 = vst [vmem:[%s16 + $0x98] sm:$0xff] %v9781
    %10024 = vst [vmem:[%s16 + $0xa0] sm:$0xff] %v9786
    %10025 = vst [vmem:[%s16 + $0xa8] sm:$0xff] %v9791
    %10026 = vst [vmem:[%s16 + $0xb0] sm:$0xff] %v9796
    %10027 = vst [vmem:[%s16 + $0xb8] sm:$0xff] %v9801
    %10028 = vst [vmem:[%s16 + $0xc0] sm:$0xff] %v9806
    %10029 = vst [vmem:[%s16 + $0xc8] sm:$0xff] %v9811
    %10030 = vst [vmem:[%s16 + $0xd0] sm:$0xff] %v9816
    %10031 = vst [vmem:[%s16 + $0xd8] sm:$0xff] %v9821
    %10032 = vst [vmem:[%s16 + $0xe0] sm:$0xff] %v9826
    %10033 = vst [vmem:[%s16 + $0xe8] sm:$0xff] %v9831
    %10034 = vst [vmem:[%s16 + $0xf0] sm:$0xff] %v9836
    %10035 = vst [vmem:[%s16 + $0xf8] sm:$0xff] %v9841
    %10036 = vst [vmem:[%s16 + $0x100] sm:$0xff] %v9846
    %10037 = vst [vmem:[%s16 + $0x108] sm:$0xff] %v9851
    %10038 = vst [vmem:[%s16 + $0x110] sm:$0xff] %v9856
    %10039 = vst [vmem:[%s16 + $0x118] sm:$0xff] %v9861
    %10040 = vst [vmem:[%s16 + $0x120] sm:$0xff] %v9866
    %10041 = vst [vmem:[%s16 + $0x128] sm:$0xff] %v9871
    %10042 = vst [vmem:[%s16 + $0x130] sm:$0xff] %v9876
    %10043 = vst [vmem:[%s16 + $0x138] sm:$0xff] %v9881
    %10044 = vst [vmem:[%s16 + $0x140] sm:$0xff] %v9886
    %10045 = vst [vmem:[%s16 + $0x148] sm:$0xff] %v9891
    %10046 = vst [vmem:[%s16 + $0x150] sm:$0xff] %v9896
    %10047 = vst [vmem:[%s16 + $0x158] sm:$0xff] %v9901
    %10048 = vst [vmem:[%s16 + $0x160] sm:$0xff] %v9906
    %10049 = vst [vmem:[%s16 + $0x168] sm:$0xff] %v9911
    %10050 = vst [vmem:[%s16 + $0x170] sm:$0xff] %v9916
    %10051 = vst [vmem:[%s16 + $0x178] sm:$0xff] %v9921
    %10052 = vst [vmem:[%s16 + $0x180] sm:$0xff] %v9926
    %10053 = vst [vmem:[%s16 + $0x188] sm:$0xff] %v9931
    %10054 = vst [vmem:[%s16 + $0x190] sm:$0xff] %v9936
    %10055 = vst [vmem:[%s16 + $0x198] sm:$0xff] %v9941
    %10056 = vst [vmem:[%s16 + $0x1a0] sm:$0xff] %v9946
    %10057 = vst [vmem:[%s16 + $0x1a8] sm:$0xff] %v9951
    %10058 = vst [vmem:[%s16 + $0x1b0] sm:$0xff] %v9956
    %10059 = vst [vmem:[%s16 + $0x1b8] sm:$0xff] %v9961
    %10060 = vst [vmem:[%s16 + $0x1c0] sm:$0xff] %v9966
    %10061 = vst [vmem:[%s16 + $0x1c8] sm:$0xff] %v9971
    %10062 = vst [vmem:[%s16 + $0x1d0] sm:$0xff] %v9976
    %10063 = vst [vmem:[%s16 + $0x1d8] sm:$0xff] %v9981
    %10064 = vst [vmem:[%s16 + $0x1e0] sm:$0xff] %v9986
    %10065 = vst [vmem:[%s16 + $0x1e8] sm:$0xff] %v9991
    %10066 = vst [vmem:[%s16 + $0x1f0] sm:$0xff] %v9996
    %10067 = vst [vmem:[%s16 + $0x1f8] sm:$0xff] %v10001
    // Predicated region
    $region74: #{_lambda_.1} parent=1 // pred_check
      _
    $region75: #{_lambda_.1} parent=1 // pred_check_branch
      %10069 = sbr.rel (0) target = $region77
    $region76: #{_lambda_.1} parent=1 // pred_region
      _
    $region77: #{_lambda_.1} parent=1 // pred_fallthru
      _
    // Predicated region
    $region78: #{_lambda_.1} parent=1 // pred_check
      _
    $region79: #{_lambda_.1} parent=1 // pred_check_branch
      %10071 = sbr.rel (0) target = $region81
    $region80: #{_lambda_.1} parent=1 // pred_region
      _
    $region81: #{_lambda_.1} parent=1 // pred_fallthru
      _
    %10072 = vsyncpa [#allocation4], 1
    %10073 = vsyncpa [#allocation6], 1

</llo_original>
